<compile_context>
chip_gen: v5e
topology: v5e:2x2
jax: 0.10.0
libtpu: 0.0.40
codegen_flags: <defaults>
</compile_context>

<pallas_src>
import numpy as np

import jax
import jax.numpy as jnp
from jax.experimental import pallas as pl
from jax.experimental.pallas import tpu as pltpu


# --------------------------- static layer specs ---------------------------- #

def _layer_specs(in_c, hc, lc, L):
    """Static per-layer config for the BeatGAN Generator at input length L."""
    specs = []
    chans = [in_c, hc, hc * 2, hc * 4, hc * 8, hc * 16]
    Lcur = L
    # Encoder: 5x (Conv1d k4 s2 p1, bias=False) + LeakyReLU(0.2)
    for i in range(5):
        Lout = (Lcur + 2 * 1 - 4) // 2 + 1
        specs.append(dict(kind="conv", K=4, S=2, P=1, cin=chans[i], cout=chans[i + 1],
                          Lin=Lcur, Lout=Lout, act="leaky", bn=False))
        Lcur = Lout
    # Encoder last: Conv1d(16hc, lc, 10, 1, 0, bias=False)
    Lout = (Lcur - 10) // 1 + 1
    specs.append(dict(kind="conv", K=10, S=1, P=0, cin=hc * 16, cout=lc,
                      Lin=Lcur, Lout=Lout, act="none", bn=False))
    Lcur = Lout
    # Decoder: 5x (ConvTranspose1d, bias=False) + BatchNorm1d + ReLU
    dec = [(lc, hc * 16, 10, 1, 0), (hc * 16, hc * 8, 4, 2, 1), (hc * 8, hc * 4, 4, 2, 1),
           (hc * 4, hc * 2, 4, 2, 1), (hc * 2, hc, 4, 2, 1)]
    for cin, cout, K, S, P in dec:
        Lout = (Lcur - 1) * S - 2 * P + K
        specs.append(dict(kind="convT", K=K, S=S, P=P, cin=cin, cout=cout,
                          Lin=Lcur, Lout=Lout, act="relu", bn=True))
        Lcur = Lout
    # Decoder last: ConvTranspose1d(hc, in_c, 4, 2, 1, bias=False) + Tanh
    Lout = (Lcur - 1) * 2 - 2 * 1 + 4
    specs.append(dict(kind="convT", K=4, S=2, P=1, cin=hc, cout=in_c,
                      Lin=Lcur, Lout=Lout, act="tanh", bn=False))
    return specs


def _selection_mats(spec):
    """Per-tap 0/1 gather (conv) / scatter (convT) matrices: (K, L_in, L_out)."""
    K, S, P, Lin, Lout = spec["K"], spec["S"], spec["P"], spec["Lin"], spec["Lout"]
    j = np.arange(Lin)[:, None]                       # input positions (rows)
    o = np.arange(Lout)[None, :]                      # output positions (cols)
    if spec["kind"] == "conv":
        # out[l] consumes input j = l*S + k - P  (out-of-range => zero padding)
        G = np.stack([(j == (o * S + k - P)) for k in range(K)])
    else:
        # ConvTranspose1d: input l contributes to output m = l*S - P + k
        G = np.stack([(o == (j * S - P + k)) for k in range(K)])
    return G.astype(np.float32)


def _pack_weight(spec, w, bn, eps=1e-5):
    """PyTorch weight -> (K, C_out, C_in) with eval-mode BN scale folded in."""
    w = np.asarray(w, np.float32)
    if spec["kind"] == "conv":        # Conv1d weight (C_out, C_in, K)
        Wk = np.transpose(w, (2, 0, 1))
    else:                             # ConvTranspose1d weight (C_in, C_out, K)
        Wk = np.transpose(w, (2, 1, 0))
    shift = None
    if bn is not None:
        gamma, beta, mean, var = (np.asarray(a, np.float32) for a in bn)
        scale = gamma / np.sqrt(var + eps)
        shift = (beta - mean * scale).reshape(-1, 1).astype(np.float32)
        Wk = Wk * scale[None, :, None]                # fold scale into weights
    return Wk.astype(np.float32), shift


# ------------------------------ fused kernel ------------------------------- #

def _make_kernel(specs, z_layer_idx):
    """Single-program kernel: full Encoder->Decoder for one batch sample."""

    def kernel(*refs):
        x_ref = refs[0]
        pos = 1
        layer_refs = []
        for s in specs:
            w_ref, g_ref = refs[pos], refs[pos + 1]
            pos += 2
            sh_ref = None
            if s["bn"]:
                sh_ref = refs[pos]
                pos += 1
            layer_refs.append((w_ref, g_ref, sh_ref))
        recon_ref, z_ref = refs[pos], refs[pos + 1]

        h = x_ref[0]                                              # (C_in, L) f32
        for li, (s, (w_ref, g_ref, sh_ref)) in enumerate(zip(specs, layer_refs)):
            hb = h.astype(jnp.bfloat16)                           # bf16 MXU operands
            acc = None
            for k in range(s["K"]):
                # Gather/scatter the spatial axis for tap k (exact: G is 0/1).
                gathered = jnp.dot(hb, g_ref[k],
                                   preferred_element_type=jnp.float32)
                gathered = gathered.astype(jnp.bfloat16)
                term = jnp.dot(w_ref[k], gathered,
                               preferred_element_type=jnp.float32)  # (C_out, L_out)
                acc = term if acc is None else acc + term
            if sh_ref is not None:                                # folded-BN shift
                acc = acc + sh_ref[...]
            act = s["act"]
            if act == "leaky":
                acc = jnp.where(acc > 0, acc, 0.2 * acc)
            elif act == "relu":
                acc = jnp.maximum(acc, 0.0)
            elif act == "tanh":
                acc = jnp.tanh(acc)
            h = acc
            if li == z_layer_idx:
                z_ref[0] = h.astype(z_ref.dtype)                  # latent output
        recon_ref[0] = h.astype(recon_ref.dtype)

    return kernel


def make_generator_fn(params, in_c, hc, lc, L, B):
    specs = _layer_specs(in_c, hc, lc, L)
    assert specs[-1]["Lout"] == L and specs[-1]["cout"] == in_c, \
        "input length must satisfy L % 32 == 0 and L // 32 == 10 (BeatGAN L=320)"

    weights = list(params["enc_w"]) + list(params["dec_w"])
    bns = [None] * 6 + list(params["dec_bn"]) + [None]

    consts, const_specs = [], []
    for s, wgt, bn in zip(specs, weights, bns):
        Wk, shift = _pack_weight(s, wgt, bn)
        G = _selection_mats(s)
        consts.append(jnp.asarray(Wk, dtype=jnp.bfloat16))
        const_specs.append(pl.BlockSpec(Wk.shape, lambda b: (0, 0, 0)))
        consts.append(jnp.asarray(G, dtype=jnp.bfloat16))
        const_specs.append(pl.BlockSpec(G.shape, lambda b: (0, 0, 0)))
        if shift is not None:
            consts.append(jnp.asarray(shift, dtype=jnp.float32))
            const_specs.append(pl.BlockSpec(shift.shape, lambda b: (0, 0)))

    z_idx = 5
    zL, zC = specs[z_idx]["Lout"], specs[z_idx]["cout"]
    kernel = _make_kernel(specs, z_idx)

    fwd = pl.pallas_call(
        kernel,
        out_shape=(jax.ShapeDtypeStruct((B, in_c, L), jnp.float32),
                   jax.ShapeDtypeStruct((B, zC, zL), jnp.float32)),
        grid=(B,),
        in_specs=[pl.BlockSpec((1, in_c, L), lambda b: (b, 0, 0))] + const_specs,
        out_specs=(pl.BlockSpec((1, in_c, L), lambda b: (b, 0, 0)),
                   pl.BlockSpec((1, zC, zL), lambda b: (b, 0, 0))),
        compiler_params=pltpu.CompilerParams(
            dimension_semantics=("parallel",)),   # one sample per TensorCore on v7x
    )

    @jax.jit
    def generator_forward(x_ncl):
        recon_x, latent_z = fwd(x_ncl, *consts)
        return recon_x, latent_z

    return generator_forward


# --------------------- pure-JAX f32 reference (for check) ------------------ #

def _im2col(x, K, S, P):
    Bn, Ln, C = x.shape
    xp = jnp.pad(x, ((0, 0), (P, P), (0, 0)))
    L_out = (Ln + 2 * P - K) // S + 1
    idx = jnp.arange(L_out)[:, None] * S + jnp.arange(K)[None, :]
    patches = xp[:, idx, :]                                  # (B, L_out, K, C)
    return patches.reshape(Bn, L_out, K * C), L_out


def _ref_conv1d(x_nlc, w, S, P):
    C_out, C_in, K = w.shape
    patches, _ = _im2col(x_nlc, K, S, P)
    wmat = jnp.transpose(w, (2, 1, 0)).reshape(K * C_in, C_out)
    return patches @ wmat


def _ref_convT1d(x_nlc, w, S, P):
    C_in, C_out, K = w.shape
    Bn, Ln, _ = x_nlc.shape
    if S > 1:
        up = jnp.zeros((Bn, (Ln - 1) * S + 1, C_in), x_nlc.dtype).at[:, ::S, :].set(x_nlc)
    else:
        up = x_nlc
    w_eq = jnp.transpose(jnp.flip(w, axis=2), (2, 0, 1)).reshape(K * C_in, C_out)
    patches, _ = _im2col(up, K, 1, K - 1 - P)
    return patches @ w_eq


@jax.jit
def reference_forward(x_ncl, params):
    h = jnp.transpose(x_ncl, (0, 2, 1)).astype(jnp.float32)
    for w in params["enc_w"][:5]:
        h = _ref_conv1d(h, w, 2, 1)
        h = jnp.where(h > 0, h, 0.2 * h)
    z = _ref_conv1d(h, params["enc_w"][5], 1, 0)
    h = z
    strides = [(1, 0), (2, 1), (2, 1), (2, 1), (2, 1)]
    for w, bn, (S, P) in zip(params["dec_w"][:5], params["dec_bn"], strides):
        h = _ref_convT1d(h, w, S, P)
        gamma, beta, mean, var = bn
        scale = gamma / jnp.sqrt(var + 1e-5)
        h = h * scale + (beta - mean * scale)
        h = jnp.maximum(h, 0.0)
    h = jnp.tanh(_ref_convT1d(h, params["dec_w"][5], 2, 1))
    return jnp.transpose(h, (0, 2, 1)), jnp.transpose(z, (0, 2, 1))


# ------------------------------- parameters -------------------------------- #

def init_params(key, in_c, hc, lc):
    keys = iter(jax.random.split(key, 64))

    def w(shape, fan_in):
        return jax.random.normal(next(keys), shape, jnp.float32) * np.sqrt(2.0 / fan_in)

    enc = [(in_c, hc), (hc, hc * 2), (hc * 2, hc * 4), (hc * 4, hc * 8), (hc * 8, hc * 16)]
    enc_w = [w((co, ci, 4), ci * 4) for ci, co in enc]
    enc_w.append(w((lc, hc * 16, 10), hc * 16 * 10))         # Conv1d(16hc, lc, 10, 1, 0)

    dec = [(lc, hc * 16, 10), (hc * 16, hc * 8, 4), (hc * 8, hc * 4, 4),
           (hc * 4, hc * 2, 4), (hc * 2, hc, 4)]
    dec_w = [w((ci, co, k), ci * k) for ci, co, k in dec]
    dec_w.append(w((hc, in_c, 4), hc * 4))                   # ConvTranspose1d(hc, in_c, 4, 2, 1)

    dec_bn = []
    for _, co, _ in dec:
        gamma = 1.0 + 0.1 * jax.random.normal(next(keys), (co,), jnp.float32)
        beta = 0.1 * jax.random.normal(next(keys), (co,), jnp.float32)
        mean = jnp.zeros((co,), jnp.float32)                 # eval-mode running stats
        var = jnp.ones((co,), jnp.float32)
        dec_bn.append((gamma, beta, mean, var))
    return {"enc_w": enc_w, "dec_w": dec_w, "dec_bn": dec_bn}


# ----------------------------------- main ----------------------------------- #

if __name__ == "__main__":
    in_c, hidden_c, latent_c = 4, 4, 8
    B, L = 2, 320                       # BeatGAN canonical length: L // 32 == 10

    key = jax.random.PRNGKey(0)
    params = init_params(key, in_c, hidden_c, latent_c)
    x = jax.random.normal(jax.random.fold_in(key, 123), (B, in_c, L), jnp.float32)

    generator = make_generator_fn(params, in_c, hidden_c, latent_c, L, B)
    recon_x, latent_z = jax.block_until_ready(generator(x))

    assert recon_x.shape == (B, in_c, L), recon_x.shape
    assert latent_z.shape == (B, latent_c, 1), latent_z.shape
    assert bool(jnp.all(jnp.isfinite(recon_x))) and bool(jnp.all(jnp.isfinite(latent_z)))

    # Numerical check against the pure-JAX f32 reference (bf16-MXU tolerance).
    recon_ref, z_ref = jax.block_until_ready(reference_forward(x, params))
    for got, ref, name in ((recon_x, recon_ref, "recon_x"), (latent_z, z_ref, "latent_z")):
        scale = float(jnp.max(jnp.abs(ref)))
        err = float(jnp.max(jnp.abs(got - ref)))
        assert err <= 0.1 * scale + 1e-6, (name, err, scale)

    print("KERNEL_OK")
</pallas_src>

<mosaic_0001>
module attributes {stable_mosaic.version = 11 : i64} {
  func.func @kernel(%arg0: i32, %arg1: memref<1x4x320xf32, #tpu.memory_space<vmem>>, %arg2: memref<4x4x4xbf16, #tpu.memory_space<vmem>>, %arg3: memref<4x320x160xbf16, #tpu.memory_space<vmem>>, %arg4: memref<4x8x4xbf16, #tpu.memory_space<vmem>>, %arg5: memref<4x160x80xbf16, #tpu.memory_space<vmem>>, %arg6: memref<4x16x8xbf16, #tpu.memory_space<vmem>>, %arg7: memref<4x80x40xbf16, #tpu.memory_space<vmem>>, %arg8: memref<4x32x16xbf16, #tpu.memory_space<vmem>>, %arg9: memref<4x40x20xbf16, #tpu.memory_space<vmem>>, %arg10: memref<4x64x32xbf16, #tpu.memory_space<vmem>>, %arg11: memref<4x20x10xbf16, #tpu.memory_space<vmem>>, %arg12: memref<10x8x64xbf16, #tpu.memory_space<vmem>>, %arg13: memref<10x10x1xbf16, #tpu.memory_space<vmem>>, %arg14: memref<10x64x8xbf16, #tpu.memory_space<vmem>>, %arg15: memref<10x1x10xbf16, #tpu.memory_space<vmem>>, %arg16: memref<64x1xf32, #tpu.memory_space<vmem>>, %arg17: memref<4x32x64xbf16, #tpu.memory_space<vmem>>, %arg18: memref<4x10x20xbf16, #tpu.memory_space<vmem>>, %arg19: memref<32x1xf32, #tpu.memory_space<vmem>>, %arg20: memref<4x16x32xbf16, #tpu.memory_space<vmem>>, %arg21: memref<4x20x40xbf16, #tpu.memory_space<vmem>>, %arg22: memref<16x1xf32, #tpu.memory_space<vmem>>, %arg23: memref<4x8x16xbf16, #tpu.memory_space<vmem>>, %arg24: memref<4x40x80xbf16, #tpu.memory_space<vmem>>, %arg25: memref<8x1xf32, #tpu.memory_space<vmem>>, %arg26: memref<4x4x8xbf16, #tpu.memory_space<vmem>>, %arg27: memref<4x80x160xbf16, #tpu.memory_space<vmem>>, %arg28: memref<4x1xf32, #tpu.memory_space<vmem>>, %arg29: memref<4x4x4xbf16, #tpu.memory_space<vmem>>, %arg30: memref<4x160x320xbf16, #tpu.memory_space<vmem>>, %arg31: memref<1x4x320xf32, #tpu.memory_space<vmem>>, %arg32: memref<1x8x1xf32, #tpu.memory_space<vmem>>) attributes {dimension_semantics = [#tpu.dimension_semantics<parallel>], iteration_bounds = array<i64: 2>, scalar_prefetch = 0 : i64, scratch_operands = 0 : i64, tpu.core_type = #tpu.core_type<tc>, window_params = [{transform_indices = @transform_0, window_bounds = array<i64: 1, 4, 320>}, {pipeline_mode = #tpu.pipeline_mode<synchronous>, transform_indices = @transform_1, window_bounds = array<i64: 4, 4, 4>}, {pipeline_mode = #tpu.pipeline_mode<synchronous>, transform_indices = @transform_2, window_bounds = array<i64: 4, 320, 160>}, {pipeline_mode = #tpu.pipeline_mode<synchronous>, transform_indices = @transform_3, window_bounds = array<i64: 4, 8, 4>}, {pipeline_mode = #tpu.pipeline_mode<synchronous>, transform_indices = @transform_4, window_bounds = array<i64: 4, 160, 80>}, {pipeline_mode = #tpu.pipeline_mode<synchronous>, transform_indices = @transform_5, window_bounds = array<i64: 4, 16, 8>}, {pipeline_mode = #tpu.pipeline_mode<synchronous>, transform_indices = @transform_6, window_bounds = array<i64: 4, 80, 40>}, {pipeline_mode = #tpu.pipeline_mode<synchronous>, transform_indices = @transform_7, window_bounds = array<i64: 4, 32, 16>}, {pipeline_mode = #tpu.pipeline_mode<synchronous>, transform_indices = @transform_8, window_bounds = array<i64: 4, 40, 20>}, {pipeline_mode = #tpu.pipeline_mode<synchronous>, transform_indices = @transform_9, window_bounds = array<i64: 4, 64, 32>}, {pipeline_mode = #tpu.pipeline_mode<synchronous>, transform_indices = @transform_10, window_bounds = array<i64: 4, 20, 10>}, {pipeline_mode = #tpu.pipeline_mode<synchronous>, transform_indices = @transform_11, window_bounds = array<i64: 10, 8, 64>}, {pipeline_mode = #tpu.pipeline_mode<synchronous>, transform_indices = @transform_12, window_bounds = array<i64: 10, 10, 1>}, {pipeline_mode = #tpu.pipeline_mode<synchronous>, transform_indices = @transform_13, window_bounds = array<i64: 10, 64, 8>}, {pipeline_mode = #tpu.pipeline_mode<synchronous>, transform_indices = @transform_14, window_bounds = array<i64: 10, 1, 10>}, {pipeline_mode = #tpu.pipeline_mode<synchronous>, transform_indices = @transform_15, window_bounds = array<i64: 64, 1>}, {pipeline_mode = #tpu.pipeline_mode<synchronous>, transform_indices = @transform_16, window_bounds = array<i64: 4, 32, 64>}, {pipeline_mode = #tpu.pipeline_mode<synchronous>, transform_indices = @transform_17, window_bounds = array<i64: 4, 10, 20>}, {pipeline_mode = #tpu.pipeline_mode<synchronous>, transform_indices = @transform_18, window_bounds = array<i64: 32, 1>}, {pipeline_mode = #tpu.pipeline_mode<synchronous>, transform_indices = @transform_19, window_bounds = array<i64: 4, 16, 32>}, {pipeline_mode = #tpu.pipeline_mode<synchronous>, transform_indices = @transform_20, window_bounds = array<i64: 4, 20, 40>}, {pipeline_mode = #tpu.pipeline_mode<synchronous>, transform_indices = @transform_21, window_bounds = array<i64: 16, 1>}, {pipeline_mode = #tpu.pipeline_mode<synchronous>, transform_indices = @transform_22, window_bounds = array<i64: 4, 8, 16>}, {pipeline_mode = #tpu.pipeline_mode<synchronous>, transform_indices = @transform_23, window_bounds = array<i64: 4, 40, 80>}, {pipeline_mode = #tpu.pipeline_mode<synchronous>, transform_indices = @transform_24, window_bounds = array<i64: 8, 1>}, {pipeline_mode = #tpu.pipeline_mode<synchronous>, transform_indices = @transform_25, window_bounds = array<i64: 4, 4, 8>}, {pipeline_mode = #tpu.pipeline_mode<synchronous>, transform_indices = @transform_26, window_bounds = array<i64: 4, 80, 160>}, {pipeline_mode = #tpu.pipeline_mode<synchronous>, transform_indices = @transform_27, window_bounds = array<i64: 4, 1>}, {pipeline_mode = #tpu.pipeline_mode<synchronous>, transform_indices = @transform_28, window_bounds = array<i64: 4, 4, 4>}, {pipeline_mode = #tpu.pipeline_mode<synchronous>, transform_indices = @transform_29, window_bounds = array<i64: 4, 160, 320>}, {transform_indices = @transform_30, window_bounds = array<i64: 1, 4, 320>}, {transform_indices = @transform_31, window_bounds = array<i64: 1, 8, 1>}]} {
    %c0 = arith.constant 0 : index
    %c0_0 = arith.constant 0 : index
    %c0_1 = arith.constant 0 : index
    %0 = vector.load %arg1[%c0, %c0_0, %c0_1] : memref<1x4x320xf32, #tpu.memory_space<vmem>>, vector<1x4x320xf32>
    %1 = vector.shape_cast %0 : vector<1x4x320xf32> to vector<4x320xf32>
    %2 = arith.truncf %1 : vector<4x320xf32> to vector<4x320xbf16>
    %c0_2 = arith.constant 0 : index
    %c0_3 = arith.constant 0 : index
    %c0_4 = arith.constant 0 : index
    %3 = vector.load %arg3[%c0_2, %c0_3, %c0_4] : memref<4x320x160xbf16, #tpu.memory_space<vmem>>, vector<1x320x160xbf16>
    %4 = vector.shape_cast %3 : vector<1x320x160xbf16> to vector<320x160xbf16>
    %cst = arith.constant dense<0.000000e+00> : vector<4x160xf32>
    %5 = tpu.matmul %2, %4, %cst {dimension_numbers = #tpu.dot_dimension_numbers<[1], [0], [0], [1], [0, 0, 1, 1], [], []>} : vector<4x320xbf16>, vector<320x160xbf16>, vector<4x160xf32> -> vector<4x160xf32>
    %6 = arith.truncf %5 : vector<4x160xf32> to vector<4x160xbf16>
    %c0_5 = arith.constant 0 : index
    %c0_6 = arith.constant 0 : index
    %c0_7 = arith.constant 0 : index
    %7 = vector.load %arg2[%c0_5, %c0_6, %c0_7] : memref<4x4x4xbf16, #tpu.memory_space<vmem>>, vector<1x4x4xbf16>
    %8 = vector.shape_cast %7 : vector<1x4x4xbf16> to vector<4x4xbf16>
    %cst_8 = arith.constant dense<0.000000e+00> : vector<4x160xf32>
    %9 = tpu.matmul %8, %6, %cst_8 {dimension_numbers = #tpu.dot_dimension_numbers<[1], [0], [0], [1], [0, 0, 1, 1], [], []>} : vector<4x4xbf16>, vector<4x160xbf16>, vector<4x160xf32> -> vector<4x160xf32>
    %c1 = arith.constant 1 : index
    %c0_9 = arith.constant 0 : index
    %c0_10 = arith.constant 0 : index
    %10 = vector.load %arg3[%c1, %c0_9, %c0_10] : memref<4x320x160xbf16, #tpu.memory_space<vmem>>, vector<1x320x160xbf16>
    %11 = vector.shape_cast %10 : vector<1x320x160xbf16> to vector<320x160xbf16>
    %cst_11 = arith.constant dense<0.000000e+00> : vector<4x160xf32>
    %12 = tpu.matmul %2, %11, %cst_11 {dimension_numbers = #tpu.dot_dimension_numbers<[1], [0], [0], [1], [0, 0, 1, 1], [], []>} : vector<4x320xbf16>, vector<320x160xbf16>, vector<4x160xf32> -> vector<4x160xf32>
    %13 = arith.truncf %12 : vector<4x160xf32> to vector<4x160xbf16>
    %c1_12 = arith.constant 1 : index
    %c0_13 = arith.constant 0 : index
    %c0_14 = arith.constant 0 : index
    %14 = vector.load %arg2[%c1_12, %c0_13, %c0_14] : memref<4x4x4xbf16, #tpu.memory_space<vmem>>, vector<1x4x4xbf16>
    %15 = vector.shape_cast %14 : vector<1x4x4xbf16> to vector<4x4xbf16>
    %cst_15 = arith.constant dense<0.000000e+00> : vector<4x160xf32>
    %16 = tpu.matmul %15, %13, %cst_15 {dimension_numbers = #tpu.dot_dimension_numbers<[1], [0], [0], [1], [0, 0, 1, 1], [], []>} : vector<4x4xbf16>, vector<4x160xbf16>, vector<4x160xf32> -> vector<4x160xf32>
    %17 = arith.addf %9, %16 : vector<4x160xf32>
    %c2 = arith.constant 2 : index
    %c0_16 = arith.constant 0 : index
    %c0_17 = arith.constant 0 : index
    %18 = vector.load %arg3[%c2, %c0_16, %c0_17] : memref<4x320x160xbf16, #tpu.memory_space<vmem>>, vector<1x320x160xbf16>
    %19 = vector.shape_cast %18 : vector<1x320x160xbf16> to vector<320x160xbf16>
    %cst_18 = arith.constant dense<0.000000e+00> : vector<4x160xf32>
    %20 = tpu.matmul %2, %19, %cst_18 {dimension_numbers = #tpu.dot_dimension_numbers<[1], [0], [0], [1], [0, 0, 1, 1], [], []>} : vector<4x320xbf16>, vector<320x160xbf16>, vector<4x160xf32> -> vector<4x160xf32>
    %21 = arith.truncf %20 : vector<4x160xf32> to vector<4x160xbf16>
    %c2_19 = arith.constant 2 : index
    %c0_20 = arith.constant 0 : index
    %c0_21 = arith.constant 0 : index
    %22 = vector.load %arg2[%c2_19, %c0_20, %c0_21] : memref<4x4x4xbf16, #tpu.memory_space<vmem>>, vector<1x4x4xbf16>
    %23 = vector.shape_cast %22 : vector<1x4x4xbf16> to vector<4x4xbf16>
    %cst_22 = arith.constant dense<0.000000e+00> : vector<4x160xf32>
    %24 = tpu.matmul %23, %21, %cst_22 {dimension_numbers = #tpu.dot_dimension_numbers<[1], [0], [0], [1], [0, 0, 1, 1], [], []>} : vector<4x4xbf16>, vector<4x160xbf16>, vector<4x160xf32> -> vector<4x160xf32>
    %25 = arith.addf %17, %24 : vector<4x160xf32>
    %c3 = arith.constant 3 : index
    %c0_23 = arith.constant 0 : index
    %c0_24 = arith.constant 0 : index
    %26 = vector.load %arg3[%c3, %c0_23, %c0_24] : memref<4x320x160xbf16, #tpu.memory_space<vmem>>, vector<1x320x160xbf16>
    %27 = vector.shape_cast %26 : vector<1x320x160xbf16> to vector<320x160xbf16>
    %cst_25 = arith.constant dense<0.000000e+00> : vector<4x160xf32>
    %28 = tpu.matmul %2, %27, %cst_25 {dimension_numbers = #tpu.dot_dimension_numbers<[1], [0], [0], [1], [0, 0, 1, 1], [], []>} : vector<4x320xbf16>, vector<320x160xbf16>, vector<4x160xf32> -> vector<4x160xf32>
    %29 = arith.truncf %28 : vector<4x160xf32> to vector<4x160xbf16>
    %c3_26 = arith.constant 3 : index
    %c0_27 = arith.constant 0 : index
    %c0_28 = arith.constant 0 : index
    %30 = vector.load %arg2[%c3_26, %c0_27, %c0_28] : memref<4x4x4xbf16, #tpu.memory_space<vmem>>, vector<1x4x4xbf16>
    %31 = vector.shape_cast %30 : vector<1x4x4xbf16> to vector<4x4xbf16>
    %cst_29 = arith.constant dense<0.000000e+00> : vector<4x160xf32>
    %32 = tpu.matmul %31, %29, %cst_29 {dimension_numbers = #tpu.dot_dimension_numbers<[1], [0], [0], [1], [0, 0, 1, 1], [], []>} : vector<4x4xbf16>, vector<4x160xbf16>, vector<4x160xf32> -> vector<4x160xf32>
    %33 = arith.addf %25, %32 : vector<4x160xf32>
    %cst_30 = arith.constant 0.000000e+00 : f32
    %34 = vector.broadcast %cst_30 : f32 to vector<4x160xf32>
    %35 = arith.cmpf ogt, %33, %34 : vector<4x160xf32>
    %cst_31 = arith.constant 2.000000e-01 : f32
    %36 = vector.broadcast %cst_31 : f32 to vector<4x160xf32>
    %37 = arith.mulf %36, %33 : vector<4x160xf32>
    %38 = arith.select %35, %33, %37 : vector<4x160xi1>, vector<4x160xf32>
    %39 = arith.truncf %38 : vector<4x160xf32> to vector<4x160xbf16>
    %c0_32 = arith.constant 0 : index
    %c0_33 = arith.constant 0 : index
    %c0_34 = arith.constant 0 : index
    %40 = vector.load %arg5[%c0_32, %c0_33, %c0_34] : memref<4x160x80xbf16, #tpu.memory_space<vmem>>, vector<1x160x80xbf16>
    %41 = vector.shape_cast %40 : vector<1x160x80xbf16> to vector<160x80xbf16>
    %cst_35 = arith.constant dense<0.000000e+00> : vector<4x80xf32>
    %42 = tpu.matmul %39, %41, %cst_35 {dimension_numbers = #tpu.dot_dimension_numbers<[1], [0], [0], [1], [0, 0, 1, 1], [], []>} : vector<4x160xbf16>, vector<160x80xbf16>, vector<4x80xf32> -> vector<4x80xf32>
    %43 = arith.truncf %42 : vector<4x80xf32> to vector<4x80xbf16>
    %c0_36 = arith.constant 0 : index
    %c0_37 = arith.constant 0 : index
    %c0_38 = arith.constant 0 : index
    %44 = vector.load %arg4[%c0_36, %c0_37, %c0_38] : memref<4x8x4xbf16, #tpu.memory_space<vmem>>, vector<1x8x4xbf16>
    %45 = vector.shape_cast %44 : vector<1x8x4xbf16> to vector<8x4xbf16>
    %cst_39 = arith.constant dense<0.000000e+00> : vector<8x80xf32>
    %46 = tpu.matmul %45, %43, %cst_39 {dimension_numbers = #tpu.dot_dimension_numbers<[1], [0], [0], [1], [0, 0, 1, 1], [], []>} : vector<8x4xbf16>, vector<4x80xbf16>, vector<8x80xf32> -> vector<8x80xf32>
    %c1_40 = arith.constant 1 : index
    %c0_41 = arith.constant 0 : index
    %c0_42 = arith.constant 0 : index
    %47 = vector.load %arg5[%c1_40, %c0_41, %c0_42] : memref<4x160x80xbf16, #tpu.memory_space<vmem>>, vector<1x160x80xbf16>
    %48 = vector.shape_cast %47 : vector<1x160x80xbf16> to vector<160x80xbf16>
    %cst_43 = arith.constant dense<0.000000e+00> : vector<4x80xf32>
    %49 = tpu.matmul %39, %48, %cst_43 {dimension_numbers = #tpu.dot_dimension_numbers<[1], [0], [0], [1], [0, 0, 1, 1], [], []>} : vector<4x160xbf16>, vector<160x80xbf16>, vector<4x80xf32> -> vector<4x80xf32>
    %50 = arith.truncf %49 : vector<4x80xf32> to vector<4x80xbf16>
    %c1_44 = arith.constant 1 : index
    %c0_45 = arith.constant 0 : index
    %c0_46 = arith.constant 0 : index
    %51 = vector.load %arg4[%c1_44, %c0_45, %c0_46] : memref<4x8x4xbf16, #tpu.memory_space<vmem>>, vector<1x8x4xbf16>
    %52 = vector.shape_cast %51 : vector<1x8x4xbf16> to vector<8x4xbf16>
    %cst_47 = arith.constant dense<0.000000e+00> : vector<8x80xf32>
    %53 = tpu.matmul %52, %50, %cst_47 {dimension_numbers = #tpu.dot_dimension_numbers<[1], [0], [0], [1], [0, 0, 1, 1], [], []>} : vector<8x4xbf16>, vector<4x80xbf16>, vector<8x80xf32> -> vector<8x80xf32>
    %54 = arith.addf %46, %53 : vector<8x80xf32>
    %c2_48 = arith.constant 2 : index
    %c0_49 = arith.constant 0 : index
    %c0_50 = arith.constant 0 : index
    %55 = vector.load %arg5[%c2_48, %c0_49, %c0_50] : memref<4x160x80xbf16, #tpu.memory_space<vmem>>, vector<1x160x80xbf16>
    %56 = vector.shape_cast %55 : vector<1x160x80xbf16> to vector<160x80xbf16>
    %cst_51 = arith.constant dense<0.000000e+00> : vector<4x80xf32>
    %57 = tpu.matmul %39, %56, %cst_51 {dimension_numbers = #tpu.dot_dimension_numbers<[1], [0], [0], [1], [0, 0, 1, 1], [], []>} : vector<4x160xbf16>, vector<160x80xbf16>, vector<4x80xf32> -> vector<4x80xf32>
    %58 = arith.truncf %57 : vector<4x80xf32> to vector<4x80xbf16>
    %c2_52 = arith.constant 2 : index
    %c0_53 = arith.constant 0 : index
    %c0_54 = arith.constant 0 : index
    %59 = vector.load %arg4[%c2_52, %c0_53, %c0_54] : memref<4x8x4xbf16, #tpu.memory_space<vmem>>, vector<1x8x4xbf16>
    %60 = vector.shape_cast %59 : vector<1x8x4xbf16> to vector<8x4xbf16>
    %cst_55 = arith.constant dense<0.000000e+00> : vector<8x80xf32>
    %61 = tpu.matmul %60, %58, %cst_55 {dimension_numbers = #tpu.dot_dimension_numbers<[1], [0], [0], [1], [0, 0, 1, 1], [], []>} : vector<8x4xbf16>, vector<4x80xbf16>, vector<8x80xf32> -> vector<8x80xf32>
    %62 = arith.addf %54, %61 : vector<8x80xf32>
    %c3_56 = arith.constant 3 : index
    %c0_57 = arith.constant 0 : index
    %c0_58 = arith.constant 0 : index
    %63 = vector.load %arg5[%c3_56, %c0_57, %c0_58] : memref<4x160x80xbf16, #tpu.memory_space<vmem>>, vector<1x160x80xbf16>
    %64 = vector.shape_cast %63 : vector<1x160x80xbf16> to vector<160x80xbf16>
    %cst_59 = arith.constant dense<0.000000e+00> : vector<4x80xf32>
    %65 = tpu.matmul %39, %64, %cst_59 {dimension_numbers = #tpu.dot_dimension_numbers<[1], [0], [0], [1], [0, 0, 1, 1], [], []>} : vector<4x160xbf16>, vector<160x80xbf16>, vector<4x80xf32> -> vector<4x80xf32>
    %66 = arith.truncf %65 : vector<4x80xf32> to vector<4x80xbf16>
    %c3_60 = arith.constant 3 : index
    %c0_61 = arith.constant 0 : index
    %c0_62 = arith.constant 0 : index
    %67 = vector.load %arg4[%c3_60, %c0_61, %c0_62] : memref<4x8x4xbf16, #tpu.memory_space<vmem>>, vector<1x8x4xbf16>
    %68 = vector.shape_cast %67 : vector<1x8x4xbf16> to vector<8x4xbf16>
    %cst_63 = arith.constant dense<0.000000e+00> : vector<8x80xf32>
    %69 = tpu.matmul %68, %66, %cst_63 {dimension_numbers = #tpu.dot_dimension_numbers<[1], [0], [0], [1], [0, 0, 1, 1], [], []>} : vector<8x4xbf16>, vector<4x80xbf16>, vector<8x80xf32> -> vector<8x80xf32>
    %70 = arith.addf %62, %69 : vector<8x80xf32>
    %cst_64 = arith.constant 0.000000e+00 : f32
    %71 = vector.broadcast %cst_64 : f32 to vector<8x80xf32>
    %72 = arith.cmpf ogt, %70, %71 : vector<8x80xf32>
    %cst_65 = arith.constant 2.000000e-01 : f32
    %73 = vector.broadcast %cst_65 : f32 to vector<8x80xf32>
    %74 = arith.mulf %73, %70 : vector<8x80xf32>
    %75 = arith.select %72, %70, %74 : vector<8x80xi1>, vector<8x80xf32>
    %76 = arith.truncf %75 : vector<8x80xf32> to vector<8x80xbf16>
    %c0_66 = arith.constant 0 : index
    %c0_67 = arith.constant 0 : index
    %c0_68 = arith.constant 0 : index
    %77 = vector.load %arg7[%c0_66, %c0_67, %c0_68] : memref<4x80x40xbf16, #tpu.memory_space<vmem>>, vector<1x80x40xbf16>
    %78 = vector.shape_cast %77 : vector<1x80x40xbf16> to vector<80x40xbf16>
    %cst_69 = arith.constant dense<0.000000e+00> : vector<8x40xf32>
    %79 = tpu.matmul %76, %78, %cst_69 {dimension_numbers = #tpu.dot_dimension_numbers<[1], [0], [0], [1], [0, 0, 1, 1], [], []>} : vector<8x80xbf16>, vector<80x40xbf16>, vector<8x40xf32> -> vector<8x40xf32>
    %80 = arith.truncf %79 : vector<8x40xf32> to vector<8x40xbf16>
    %c0_70 = arith.constant 0 : index
    %c0_71 = arith.constant 0 : index
    %c0_72 = arith.constant 0 : index
    %81 = vector.load %arg6[%c0_70, %c0_71, %c0_72] : memref<4x16x8xbf16, #tpu.memory_space<vmem>>, vector<1x16x8xbf16>
    %82 = vector.shape_cast %81 : vector<1x16x8xbf16> to vector<16x8xbf16>
    %cst_73 = arith.constant dense<0.000000e+00> : vector<16x40xf32>
    %83 = tpu.matmul %82, %80, %cst_73 {dimension_numbers = #tpu.dot_dimension_numbers<[1], [0], [0], [1], [0, 0, 1, 1], [], []>} : vector<16x8xbf16>, vector<8x40xbf16>, vector<16x40xf32> -> vector<16x40xf32>
    %c1_74 = arith.constant 1 : index
    %c0_75 = arith.constant 0 : index
    %c0_76 = arith.constant 0 : index
    %84 = vector.load %arg7[%c1_74, %c0_75, %c0_76] : memref<4x80x40xbf16, #tpu.memory_space<vmem>>, vector<1x80x40xbf16>
    %85 = vector.shape_cast %84 : vector<1x80x40xbf16> to vector<80x40xbf16>
    %cst_77 = arith.constant dense<0.000000e+00> : vector<8x40xf32>
    %86 = tpu.matmul %76, %85, %cst_77 {dimension_numbers = #tpu.dot_dimension_numbers<[1], [0], [0], [1], [0, 0, 1, 1], [], []>} : vector<8x80xbf16>, vector<80x40xbf16>, vector<8x40xf32> -> vector<8x40xf32>
    %87 = arith.truncf %86 : vector<8x40xf32> to vector<8x40xbf16>
    %c1_78 = arith.constant 1 : index
    %c0_79 = arith.constant 0 : index
    %c0_80 = arith.constant 0 : index
    %88 = vector.load %arg6[%c1_78, %c0_79, %c0_80] : memref<4x16x8xbf16, #tpu.memory_space<vmem>>, vector<1x16x8xbf16>
    %89 = vector.shape_cast %88 : vector<1x16x8xbf16> to vector<16x8xbf16>
    %cst_81 = arith.constant dense<0.000000e+00> : vector<16x40xf32>
    %90 = tpu.matmul %89, %87, %cst_81 {dimension_numbers = #tpu.dot_dimension_numbers<[1], [0], [0], [1], [0, 0, 1, 1], [], []>} : vector<16x8xbf16>, vector<8x40xbf16>, vector<16x40xf32> -> vector<16x40xf32>
    %91 = arith.addf %83, %90 : vector<16x40xf32>
    %c2_82 = arith.constant 2 : index
    %c0_83 = arith.constant 0 : index
    %c0_84 = arith.constant 0 : index
    %92 = vector.load %arg7[%c2_82, %c0_83, %c0_84] : memref<4x80x40xbf16, #tpu.memory_space<vmem>>, vector<1x80x40xbf16>
    %93 = vector.shape_cast %92 : vector<1x80x40xbf16> to vector<80x40xbf16>
    %cst_85 = arith.constant dense<0.000000e+00> : vector<8x40xf32>
    %94 = tpu.matmul %76, %93, %cst_85 {dimension_numbers = #tpu.dot_dimension_numbers<[1], [0], [0], [1], [0, 0, 1, 1], [], []>} : vector<8x80xbf16>, vector<80x40xbf16>, vector<8x40xf32> -> vector<8x40xf32>
    %95 = arith.truncf %94 : vector<8x40xf32> to vector<8x40xbf16>
    %c2_86 = arith.constant 2 : index
    %c0_87 = arith.constant 0 : index
    %c0_88 = arith.constant 0 : index
    %96 = vector.load %arg6[%c2_86, %c0_87, %c0_88] : memref<4x16x8xbf16, #tpu.memory_space<vmem>>, vector<1x16x8xbf16>
    %97 = vector.shape_cast %96 : vector<1x16x8xbf16> to vector<16x8xbf16>
    %cst_89 = arith.constant dense<0.000000e+00> : vector<16x40xf32>
    %98 = tpu.matmul %97, %95, %cst_89 {dimension_numbers = #tpu.dot_dimension_numbers<[1], [0], [0], [1], [0, 0, 1, 1], [], []>} : vector<16x8xbf16>, vector<8x40xbf16>, vector<16x40xf32> -> vector<16x40xf32>
    %99 = arith.addf %91, %98 : vector<16x40xf32>
    %c3_90 = arith.constant 3 : index
    %c0_91 = arith.constant 0 : index
    %c0_92 = arith.constant 0 : index
    %100 = vector.load %arg7[%c3_90, %c0_91, %c0_92] : memref<4x80x40xbf16, #tpu.memory_space<vmem>>, vector<1x80x40xbf16>
    %101 = vector.shape_cast %100 : vector<1x80x40xbf16> to vector<80x40xbf16>
    %cst_93 = arith.constant dense<0.000000e+00> : vector<8x40xf32>
    %102 = tpu.matmul %76, %101, %cst_93 {dimension_numbers = #tpu.dot_dimension_numbers<[1], [0], [0], [1], [0, 0, 1, 1], [], []>} : vector<8x80xbf16>, vector<80x40xbf16>, vector<8x40xf32> -> vector<8x40xf32>
    %103 = arith.truncf %102 : vector<8x40xf32> to vector<8x40xbf16>
    %c3_94 = arith.constant 3 : index
    %c0_95 = arith.constant 0 : index
    %c0_96 = arith.constant 0 : index
    %104 = vector.load %arg6[%c3_94, %c0_95, %c0_96] : memref<4x16x8xbf16, #tpu.memory_space<vmem>>, vector<1x16x8xbf16>
    %105 = vector.shape_cast %104 : vector<1x16x8xbf16> to vector<16x8xbf16>
    %cst_97 = arith.constant dense<0.000000e+00> : vector<16x40xf32>
    %106 = tpu.matmul %105, %103, %cst_97 {dimension_numbers = #tpu.dot_dimension_numbers<[1], [0], [0], [1], [0, 0, 1, 1], [], []>} : vector<16x8xbf16>, vector<8x40xbf16>, vector<16x40xf32> -> vector<16x40xf32>
    %107 = arith.addf %99, %106 : vector<16x40xf32>
    %cst_98 = arith.constant 0.000000e+00 : f32
    %108 = vector.broadcast %cst_98 : f32 to vector<16x40xf32>
    %109 = arith.cmpf ogt, %107, %108 : vector<16x40xf32>
    %cst_99 = arith.constant 2.000000e-01 : f32
    %110 = vector.broadcast %cst_99 : f32 to vector<16x40xf32>
    %111 = arith.mulf %110, %107 : vector<16x40xf32>
    %112 = arith.select %109, %107, %111 : vector<16x40xi1>, vector<16x40xf32>
    %113 = arith.truncf %112 : vector<16x40xf32> to vector<16x40xbf16>
    %c0_100 = arith.constant 0 : index
    %c0_101 = arith.constant 0 : index
    %c0_102 = arith.constant 0 : index
    %114 = vector.load %arg9[%c0_100, %c0_101, %c0_102] : memref<4x40x20xbf16, #tpu.memory_space<vmem>>, vector<1x40x20xbf16>
    %115 = vector.shape_cast %114 : vector<1x40x20xbf16> to vector<40x20xbf16>
    %cst_103 = arith.constant dense<0.000000e+00> : vector<16x20xf32>
    %116 = tpu.matmul %113, %115, %cst_103 {dimension_numbers = #tpu.dot_dimension_numbers<[1], [0], [0], [1], [0, 0, 1, 1], [], []>} : vector<16x40xbf16>, vector<40x20xbf16>, vector<16x20xf32> -> vector<16x20xf32>
    %117 = arith.truncf %116 : vector<16x20xf32> to vector<16x20xbf16>
    %c0_104 = arith.constant 0 : index
    %c0_105 = arith.constant 0 : index
    %c0_106 = arith.constant 0 : index
    %118 = vector.load %arg8[%c0_104, %c0_105, %c0_106] : memref<4x32x16xbf16, #tpu.memory_space<vmem>>, vector<1x32x16xbf16>
    %119 = vector.shape_cast %118 : vector<1x32x16xbf16> to vector<32x16xbf16>
    %cst_107 = arith.constant dense<0.000000e+00> : vector<32x20xf32>
    %120 = tpu.matmul %119, %117, %cst_107 {dimension_numbers = #tpu.dot_dimension_numbers<[1], [0], [0], [1], [0, 0, 1, 1], [], []>} : vector<32x16xbf16>, vector<16x20xbf16>, vector<32x20xf32> -> vector<32x20xf32>
    %c1_108 = arith.constant 1 : index
    %c0_109 = arith.constant 0 : index
    %c0_110 = arith.constant 0 : index
    %121 = vector.load %arg9[%c1_108, %c0_109, %c0_110] : memref<4x40x20xbf16, #tpu.memory_space<vmem>>, vector<1x40x20xbf16>
    %122 = vector.shape_cast %121 : vector<1x40x20xbf16> to vector<40x20xbf16>
    %cst_111 = arith.constant dense<0.000000e+00> : vector<16x20xf32>
    %123 = tpu.matmul %113, %122, %cst_111 {dimension_numbers = #tpu.dot_dimension_numbers<[1], [0], [0], [1], [0, 0, 1, 1], [], []>} : vector<16x40xbf16>, vector<40x20xbf16>, vector<16x20xf32> -> vector<16x20xf32>
    %124 = arith.truncf %123 : vector<16x20xf32> to vector<16x20xbf16>
    %c1_112 = arith.constant 1 : index
    %c0_113 = arith.constant 0 : index
    %c0_114 = arith.constant 0 : index
    %125 = vector.load %arg8[%c1_112, %c0_113, %c0_114] : memref<4x32x16xbf16, #tpu.memory_space<vmem>>, vector<1x32x16xbf16>
    %126 = vector.shape_cast %125 : vector<1x32x16xbf16> to vector<32x16xbf16>
    %cst_115 = arith.constant dense<0.000000e+00> : vector<32x20xf32>
    %127 = tpu.matmul %126, %124, %cst_115 {dimension_numbers = #tpu.dot_dimension_numbers<[1], [0], [0], [1], [0, 0, 1, 1], [], []>} : vector<32x16xbf16>, vector<16x20xbf16>, vector<32x20xf32> -> vector<32x20xf32>
    %128 = arith.addf %120, %127 : vector<32x20xf32>
    %c2_116 = arith.constant 2 : index
    %c0_117 = arith.constant 0 : index
    %c0_118 = arith.constant 0 : index
    %129 = vector.load %arg9[%c2_116, %c0_117, %c0_118] : memref<4x40x20xbf16, #tpu.memory_space<vmem>>, vector<1x40x20xbf16>
    %130 = vector.shape_cast %129 : vector<1x40x20xbf16> to vector<40x20xbf16>
    %cst_119 = arith.constant dense<0.000000e+00> : vector<16x20xf32>
    %131 = tpu.matmul %113, %130, %cst_119 {dimension_numbers = #tpu.dot_dimension_numbers<[1], [0], [0], [1], [0, 0, 1, 1], [], []>} : vector<16x40xbf16>, vector<40x20xbf16>, vector<16x20xf32> -> vector<16x20xf32>
    %132 = arith.truncf %131 : vector<16x20xf32> to vector<16x20xbf16>
    %c2_120 = arith.constant 2 : index
    %c0_121 = arith.constant 0 : index
    %c0_122 = arith.constant 0 : index
    %133 = vector.load %arg8[%c2_120, %c0_121, %c0_122] : memref<4x32x16xbf16, #tpu.memory_space<vmem>>, vector<1x32x16xbf16>
    %134 = vector.shape_cast %133 : vector<1x32x16xbf16> to vector<32x16xbf16>
    %cst_123 = arith.constant dense<0.000000e+00> : vector<32x20xf32>
    %135 = tpu.matmul %134, %132, %cst_123 {dimension_numbers = #tpu.dot_dimension_numbers<[1], [0], [0], [1], [0, 0, 1, 1], [], []>} : vector<32x16xbf16>, vector<16x20xbf16>, vector<32x20xf32> -> vector<32x20xf32>
    %136 = arith.addf %128, %135 : vector<32x20xf32>
    %c3_124 = arith.constant 3 : index
    %c0_125 = arith.constant 0 : index
    %c0_126 = arith.constant 0 : index
    %137 = vector.load %arg9[%c3_124, %c0_125, %c0_126] : memref<4x40x20xbf16, #tpu.memory_space<vmem>>, vector<1x40x20xbf16>
    %138 = vector.shape_cast %137 : vector<1x40x20xbf16> to vector<40x20xbf16>
    %cst_127 = arith.constant dense<0.000000e+00> : vector<16x20xf32>
    %139 = tpu.matmul %113, %138, %cst_127 {dimension_numbers = #tpu.dot_dimension_numbers<[1], [0], [0], [1], [0, 0, 1, 1], [], []>} : vector<16x40xbf16>, vector<40x20xbf16>, vector<16x20xf32> -> vector<16x20xf32>
    %140 = arith.truncf %139 : vector<16x20xf32> to vector<16x20xbf16>
    %c3_128 = arith.constant 3 : index
    %c0_129 = arith.constant 0 : index
    %c0_130 = arith.constant 0 : index
    %141 = vector.load %arg8[%c3_128, %c0_129, %c0_130] : memref<4x32x16xbf16, #tpu.memory_space<vmem>>, vector<1x32x16xbf16>
    %142 = vector.shape_cast %141 : vector<1x32x16xbf16> to vector<32x16xbf16>
    %cst_131 = arith.constant dense<0.000000e+00> : vector<32x20xf32>
    %143 = tpu.matmul %142, %140, %cst_131 {dimension_numbers = #tpu.dot_dimension_numbers<[1], [0], [0], [1], [0, 0, 1, 1], [], []>} : vector<32x16xbf16>, vector<16x20xbf16>, vector<32x20xf32> -> vector<32x20xf32>
    %144 = arith.addf %136, %143 : vector<32x20xf32>
    %cst_132 = arith.constant 0.000000e+00 : f32
    %145 = vector.broadcast %cst_132 : f32 to vector<32x20xf32>
    %146 = arith.cmpf ogt, %144, %145 : vector<32x20xf32>
    %cst_133 = arith.constant 2.000000e-01 : f32
    %147 = vector.broadcast %cst_133 : f32 to vector<32x20xf32>
    %148 = arith.mulf %147, %144 : vector<32x20xf32>
    %149 = arith.select %146, %144, %148 : vector<32x20xi1>, vector<32x20xf32>
    %150 = arith.truncf %149 : vector<32x20xf32> to vector<32x20xbf16>
    %c0_134 = arith.constant 0 : index
    %c0_135 = arith.constant 0 : index
    %c0_136 = arith.constant 0 : index
    %151 = vector.load %arg11[%c0_134, %c0_135, %c0_136] : memref<4x20x10xbf16, #tpu.memory_space<vmem>>, vector<1x20x10xbf16>
    %152 = vector.shape_cast %151 : vector<1x20x10xbf16> to vector<20x10xbf16>
    %cst_137 = arith.constant dense<0.000000e+00> : vector<32x10xf32>
    %153 = tpu.matmul %150, %152, %cst_137 {dimension_numbers = #tpu.dot_dimension_numbers<[1], [0], [0], [1], [0, 0, 1, 1], [], []>} : vector<32x20xbf16>, vector<20x10xbf16>, vector<32x10xf32> -> vector<32x10xf32>
    %154 = arith.truncf %153 : vector<32x10xf32> to vector<32x10xbf16>
    %c0_138 = arith.constant 0 : index
    %c0_139 = arith.constant 0 : index
    %c0_140 = arith.constant 0 : index
    %155 = vector.load %arg10[%c0_138, %c0_139, %c0_140] : memref<4x64x32xbf16, #tpu.memory_space<vmem>>, vector<1x64x32xbf16>
    %156 = vector.shape_cast %155 : vector<1x64x32xbf16> to vector<64x32xbf16>
    %cst_141 = arith.constant dense<0.000000e+00> : vector<64x10xf32>
    %157 = tpu.matmul %156, %154, %cst_141 {dimension_numbers = #tpu.dot_dimension_numbers<[1], [0], [0], [1], [0, 0, 1, 1], [], []>} : vector<64x32xbf16>, vector<32x10xbf16>, vector<64x10xf32> -> vector<64x10xf32>
    %c1_142 = arith.constant 1 : index
    %c0_143 = arith.constant 0 : index
    %c0_144 = arith.constant 0 : index
    %158 = vector.load %arg11[%c1_142, %c0_143, %c0_144] : memref<4x20x10xbf16, #tpu.memory_space<vmem>>, vector<1x20x10xbf16>
    %159 = vector.shape_cast %158 : vector<1x20x10xbf16> to vector<20x10xbf16>
    %cst_145 = arith.constant dense<0.000000e+00> : vector<32x10xf32>
    %160 = tpu.matmul %150, %159, %cst_145 {dimension_numbers = #tpu.dot_dimension_numbers<[1], [0], [0], [1], [0, 0, 1, 1], [], []>} : vector<32x20xbf16>, vector<20x10xbf16>, vector<32x10xf32> -> vector<32x10xf32>
    %161 = arith.truncf %160 : vector<32x10xf32> to vector<32x10xbf16>
    %c1_146 = arith.constant 1 : index
    %c0_147 = arith.constant 0 : index
    %c0_148 = arith.constant 0 : index
    %162 = vector.load %arg10[%c1_146, %c0_147, %c0_148] : memref<4x64x32xbf16, #tpu.memory_space<vmem>>, vector<1x64x32xbf16>
    %163 = vector.shape_cast %162 : vector<1x64x32xbf16> to vector<64x32xbf16>
    %cst_149 = arith.constant dense<0.000000e+00> : vector<64x10xf32>
    %164 = tpu.matmul %163, %161, %cst_149 {dimension_numbers = #tpu.dot_dimension_numbers<[1], [0], [0], [1], [0, 0, 1, 1], [], []>} : vector<64x32xbf16>, vector<32x10xbf16>, vector<64x10xf32> -> vector<64x10xf32>
    %165 = arith.addf %157, %164 : vector<64x10xf32>
    %c2_150 = arith.constant 2 : index
    %c0_151 = arith.constant 0 : index
    %c0_152 = arith.constant 0 : index
    %166 = vector.load %arg11[%c2_150, %c0_151, %c0_152] : memref<4x20x10xbf16, #tpu.memory_space<vmem>>, vector<1x20x10xbf16>
    %167 = vector.shape_cast %166 : vector<1x20x10xbf16> to vector<20x10xbf16>
    %cst_153 = arith.constant dense<0.000000e+00> : vector<32x10xf32>
    %168 = tpu.matmul %150, %167, %cst_153 {dimension_numbers = #tpu.dot_dimension_numbers<[1], [0], [0], [1], [0, 0, 1, 1], [], []>} : vector<32x20xbf16>, vector<20x10xbf16>, vector<32x10xf32> -> vector<32x10xf32>
    %169 = arith.truncf %168 : vector<32x10xf32> to vector<32x10xbf16>
    %c2_154 = arith.constant 2 : index
    %c0_155 = arith.constant 0 : index
    %c0_156 = arith.constant 0 : index
    %170 = vector.load %arg10[%c2_154, %c0_155, %c0_156] : memref<4x64x32xbf16, #tpu.memory_space<vmem>>, vector<1x64x32xbf16>
    %171 = vector.shape_cast %170 : vector<1x64x32xbf16> to vector<64x32xbf16>
    %cst_157 = arith.constant dense<0.000000e+00> : vector<64x10xf32>
    %172 = tpu.matmul %171, %169, %cst_157 {dimension_numbers = #tpu.dot_dimension_numbers<[1], [0], [0], [1], [0, 0, 1, 1], [], []>} : vector<64x32xbf16>, vector<32x10xbf16>, vector<64x10xf32> -> vector<64x10xf32>
    %173 = arith.addf %165, %172 : vector<64x10xf32>
    %c3_158 = arith.constant 3 : index
    %c0_159 = arith.constant 0 : index
    %c0_160 = arith.constant 0 : index
    %174 = vector.load %arg11[%c3_158, %c0_159, %c0_160] : memref<4x20x10xbf16, #tpu.memory_space<vmem>>, vector<1x20x10xbf16>
    %175 = vector.shape_cast %174 : vector<1x20x10xbf16> to vector<20x10xbf16>
    %cst_161 = arith.constant dense<0.000000e+00> : vector<32x10xf32>
    %176 = tpu.matmul %150, %175, %cst_161 {dimension_numbers = #tpu.dot_dimension_numbers<[1], [0], [0], [1], [0, 0, 1, 1], [], []>} : vector<32x20xbf16>, vector<20x10xbf16>, vector<32x10xf32> -> vector<32x10xf32>
    %177 = arith.truncf %176 : vector<32x10xf32> to vector<32x10xbf16>
    %c3_162 = arith.constant 3 : index
    %c0_163 = arith.constant 0 : index
    %c0_164 = arith.constant 0 : index
    %178 = vector.load %arg10[%c3_162, %c0_163, %c0_164] : memref<4x64x32xbf16, #tpu.memory_space<vmem>>, vector<1x64x32xbf16>
    %179 = vector.shape_cast %178 : vector<1x64x32xbf16> to vector<64x32xbf16>
    %cst_165 = arith.constant dense<0.000000e+00> : vector<64x10xf32>
    %180 = tpu.matmul %179, %177, %cst_165 {dimension_numbers = #tpu.dot_dimension_numbers<[1], [0], [0], [1], [0, 0, 1, 1], [], []>} : vector<64x32xbf16>, vector<32x10xbf16>, vector<64x10xf32> -> vector<64x10xf32>
    %181 = arith.addf %173, %180 : vector<64x10xf32>
    %cst_166 = arith.constant 0.000000e+00 : f32
    %182 = vector.broadcast %cst_166 : f32 to vector<64x10xf32>
    %183 = arith.cmpf ogt, %181, %182 : vector<64x10xf32>
    %cst_167 = arith.constant 2.000000e-01 : f32
    %184 = vector.broadcast %cst_167 : f32 to vector<64x10xf32>
    %185 = arith.mulf %184, %181 : vector<64x10xf32>
    %186 = arith.select %183, %181, %185 : vector<64x10xi1>, vector<64x10xf32>
    %187 = arith.truncf %186 : vector<64x10xf32> to vector<64x10xbf16>
    %c0_168 = arith.constant 0 : index
    %c0_169 = arith.constant 0 : index
    %c0_170 = arith.constant 0 : index
    %188 = vector.load %arg13[%c0_168, %c0_169, %c0_170] : memref<10x10x1xbf16, #tpu.memory_space<vmem>>, vector<1x10x1xbf16>
    %189 = vector.shape_cast %188 : vector<1x10x1xbf16> to vector<10x1xbf16>
    %cst_171 = arith.constant dense<0.000000e+00> : vector<64x1xf32>
    %190 = tpu.matmul %187, %189, %cst_171 {dimension_numbers = #tpu.dot_dimension_numbers<[1], [0], [0], [1], [0, 0, 1, 1], [], []>} : vector<64x10xbf16>, vector<10x1xbf16>, vector<64x1xf32> -> vector<64x1xf32>
    %191 = arith.truncf %190 : vector<64x1xf32> to vector<64x1xbf16>
    %c0_172 = arith.constant 0 : index
    %c0_173 = arith.constant 0 : index
    %c0_174 = arith.constant 0 : index
    %192 = vector.load %arg12[%c0_172, %c0_173, %c0_174] : memref<10x8x64xbf16, #tpu.memory_space<vmem>>, vector<1x8x64xbf16>
    %193 = vector.shape_cast %192 : vector<1x8x64xbf16> to vector<8x64xbf16>
    %cst_175 = arith.constant dense<0.000000e+00> : vector<8x1xf32>
    %194 = tpu.matmul %193, %191, %cst_175 {dimension_numbers = #tpu.dot_dimension_numbers<[1], [0], [0], [1], [0, 0, 1, 1], [], []>} : vector<8x64xbf16>, vector<64x1xbf16>, vector<8x1xf32> -> vector<8x1xf32>
    %c1_176 = arith.constant 1 : index
    %c0_177 = arith.constant 0 : index
    %c0_178 = arith.constant 0 : index
    %195 = vector.load %arg13[%c1_176, %c0_177, %c0_178] : memref<10x10x1xbf16, #tpu.memory_space<vmem>>, vector<1x10x1xbf16>
    %196 = vector.shape_cast %195 : vector<1x10x1xbf16> to vector<10x1xbf16>
    %cst_179 = arith.constant dense<0.000000e+00> : vector<64x1xf32>
    %197 = tpu.matmul %187, %196, %cst_179 {dimension_numbers = #tpu.dot_dimension_numbers<[1], [0], [0], [1], [0, 0, 1, 1], [], []>} : vector<64x10xbf16>, vector<10x1xbf16>, vector<64x1xf32> -> vector<64x1xf32>
    %198 = arith.truncf %197 : vector<64x1xf32> to vector<64x1xbf16>
    %c1_180 = arith.constant 1 : index
    %c0_181 = arith.constant 0 : index
    %c0_182 = arith.constant 0 : index
    %199 = vector.load %arg12[%c1_180, %c0_181, %c0_182] : memref<10x8x64xbf16, #tpu.memory_space<vmem>>, vector<1x8x64xbf16>
    %200 = vector.shape_cast %199 : vector<1x8x64xbf16> to vector<8x64xbf16>
    %cst_183 = arith.constant dense<0.000000e+00> : vector<8x1xf32>
    %201 = tpu.matmul %200, %198, %cst_183 {dimension_numbers = #tpu.dot_dimension_numbers<[1], [0], [0], [1], [0, 0, 1, 1], [], []>} : vector<8x64xbf16>, vector<64x1xbf16>, vector<8x1xf32> -> vector<8x1xf32>
    %202 = arith.addf %194, %201 : vector<8x1xf32>
    %c2_184 = arith.constant 2 : index
    %c0_185 = arith.constant 0 : index
    %c0_186 = arith.constant 0 : index
    %203 = vector.load %arg13[%c2_184, %c0_185, %c0_186] : memref<10x10x1xbf16, #tpu.memory_space<vmem>>, vector<1x10x1xbf16>
    %204 = vector.shape_cast %203 : vector<1x10x1xbf16> to vector<10x1xbf16>
    %cst_187 = arith.constant dense<0.000000e+00> : vector<64x1xf32>
    %205 = tpu.matmul %187, %204, %cst_187 {dimension_numbers = #tpu.dot_dimension_numbers<[1], [0], [0], [1], [0, 0, 1, 1], [], []>} : vector<64x10xbf16>, vector<10x1xbf16>, vector<64x1xf32> -> vector<64x1xf32>
    %206 = arith.truncf %205 : vector<64x1xf32> to vector<64x1xbf16>
    %c2_188 = arith.constant 2 : index
    %c0_189 = arith.constant 0 : index
    %c0_190 = arith.constant 0 : index
    %207 = vector.load %arg12[%c2_188, %c0_189, %c0_190] : memref<10x8x64xbf16, #tpu.memory_space<vmem>>, vector<1x8x64xbf16>
    %208 = vector.shape_cast %207 : vector<1x8x64xbf16> to vector<8x64xbf16>
    %cst_191 = arith.constant dense<0.000000e+00> : vector<8x1xf32>
    %209 = tpu.matmul %208, %206, %cst_191 {dimension_numbers = #tpu.dot_dimension_numbers<[1], [0], [0], [1], [0, 0, 1, 1], [], []>} : vector<8x64xbf16>, vector<64x1xbf16>, vector<8x1xf32> -> vector<8x1xf32>
    %210 = arith.addf %202, %209 : vector<8x1xf32>
    %c3_192 = arith.constant 3 : index
    %c0_193 = arith.constant 0 : index
    %c0_194 = arith.constant 0 : index
    %211 = vector.load %arg13[%c3_192, %c0_193, %c0_194] : memref<10x10x1xbf16, #tpu.memory_space<vmem>>, vector<1x10x1xbf16>
    %212 = vector.shape_cast %211 : vector<1x10x1xbf16> to vector<10x1xbf16>
    %cst_195 = arith.constant dense<0.000000e+00> : vector<64x1xf32>
    %213 = tpu.matmul %187, %212, %cst_195 {dimension_numbers = #tpu.dot_dimension_numbers<[1], [0], [0], [1], [0, 0, 1, 1], [], []>} : vector<64x10xbf16>, vector<10x1xbf16>, vector<64x1xf32> -> vector<64x1xf32>
    %214 = arith.truncf %213 : vector<64x1xf32> to vector<64x1xbf16>
    %c3_196 = arith.constant 3 : index
    %c0_197 = arith.constant 0 : index
    %c0_198 = arith.constant 0 : index
    %215 = vector.load %arg12[%c3_196, %c0_197, %c0_198] : memref<10x8x64xbf16, #tpu.memory_space<vmem>>, vector<1x8x64xbf16>
    %216 = vector.shape_cast %215 : vector<1x8x64xbf16> to vector<8x64xbf16>
    %cst_199 = arith.constant dense<0.000000e+00> : vector<8x1xf32>
    %217 = tpu.matmul %216, %214, %cst_199 {dimension_numbers = #tpu.dot_dimension_numbers<[1], [0], [0], [1], [0, 0, 1, 1], [], []>} : vector<8x64xbf16>, vector<64x1xbf16>, vector<8x1xf32> -> vector<8x1xf32>
    %218 = arith.addf %210, %217 : vector<8x1xf32>
    %c4 = arith.constant 4 : index
    %c0_200 = arith.constant 0 : index
    %c0_201 = arith.constant 0 : index
    %219 = vector.load %arg13[%c4, %c0_200, %c0_201] : memref<10x10x1xbf16, #tpu.memory_space<vmem>>, vector<1x10x1xbf16>
    %220 = vector.shape_cast %219 : vector<1x10x1xbf16> to vector<10x1xbf16>
    %cst_202 = arith.constant dense<0.000000e+00> : vector<64x1xf32>
    %221 = tpu.matmul %187, %220, %cst_202 {dimension_numbers = #tpu.dot_dimension_numbers<[1], [0], [0], [1], [0, 0, 1, 1], [], []>} : vector<64x10xbf16>, vector<10x1xbf16>, vector<64x1xf32> -> vector<64x1xf32>
    %222 = arith.truncf %221 : vector<64x1xf32> to vector<64x1xbf16>
    %c4_203 = arith.constant 4 : index
    %c0_204 = arith.constant 0 : index
    %c0_205 = arith.constant 0 : index
    %223 = vector.load %arg12[%c4_203, %c0_204, %c0_205] : memref<10x8x64xbf16, #tpu.memory_space<vmem>>, vector<1x8x64xbf16>
    %224 = vector.shape_cast %223 : vector<1x8x64xbf16> to vector<8x64xbf16>
    %cst_206 = arith.constant dense<0.000000e+00> : vector<8x1xf32>
    %225 = tpu.matmul %224, %222, %cst_206 {dimension_numbers = #tpu.dot_dimension_numbers<[1], [0], [0], [1], [0, 0, 1, 1], [], []>} : vector<8x64xbf16>, vector<64x1xbf16>, vector<8x1xf32> -> vector<8x1xf32>
    %226 = arith.addf %218, %225 : vector<8x1xf32>
    %c5 = arith.constant 5 : index
    %c0_207 = arith.constant 0 : index
    %c0_208 = arith.constant 0 : index
    %227 = vector.load %arg13[%c5, %c0_207, %c0_208] : memref<10x10x1xbf16, #tpu.memory_space<vmem>>, vector<1x10x1xbf16>
    %228 = vector.shape_cast %227 : vector<1x10x1xbf16> to vector<10x1xbf16>
    %cst_209 = arith.constant dense<0.000000e+00> : vector<64x1xf32>
    %229 = tpu.matmul %187, %228, %cst_209 {dimension_numbers = #tpu.dot_dimension_numbers<[1], [0], [0], [1], [0, 0, 1, 1], [], []>} : vector<64x10xbf16>, vector<10x1xbf16>, vector<64x1xf32> -> vector<64x1xf32>
    %230 = arith.truncf %229 : vector<64x1xf32> to vector<64x1xbf16>
    %c5_210 = arith.constant 5 : index
    %c0_211 = arith.constant 0 : index
    %c0_212 = arith.constant 0 : index
    %231 = vector.load %arg12[%c5_210, %c0_211, %c0_212] : memref<10x8x64xbf16, #tpu.memory_space<vmem>>, vector<1x8x64xbf16>
    %232 = vector.shape_cast %231 : vector<1x8x64xbf16> to vector<8x64xbf16>
    %cst_213 = arith.constant dense<0.000000e+00> : vector<8x1xf32>
    %233 = tpu.matmul %232, %230, %cst_213 {dimension_numbers = #tpu.dot_dimension_numbers<[1], [0], [0], [1], [0, 0, 1, 1], [], []>} : vector<8x64xbf16>, vector<64x1xbf16>, vector<8x1xf32> -> vector<8x1xf32>
    %234 = arith.addf %226, %233 : vector<8x1xf32>
    %c6 = arith.constant 6 : index
    %c0_214 = arith.constant 0 : index
    %c0_215 = arith.constant 0 : index
    %235 = vector.load %arg13[%c6, %c0_214, %c0_215] : memref<10x10x1xbf16, #tpu.memory_space<vmem>>, vector<1x10x1xbf16>
    %236 = vector.shape_cast %235 : vector<1x10x1xbf16> to vector<10x1xbf16>
    %cst_216 = arith.constant dense<0.000000e+00> : vector<64x1xf32>
    %237 = tpu.matmul %187, %236, %cst_216 {dimension_numbers = #tpu.dot_dimension_numbers<[1], [0], [0], [1], [0, 0, 1, 1], [], []>} : vector<64x10xbf16>, vector<10x1xbf16>, vector<64x1xf32> -> vector<64x1xf32>
    %238 = arith.truncf %237 : vector<64x1xf32> to vector<64x1xbf16>
    %c6_217 = arith.constant 6 : index
    %c0_218 = arith.constant 0 : index
    %c0_219 = arith.constant 0 : index
    %239 = vector.load %arg12[%c6_217, %c0_218, %c0_219] : memref<10x8x64xbf16, #tpu.memory_space<vmem>>, vector<1x8x64xbf16>
    %240 = vector.shape_cast %239 : vector<1x8x64xbf16> to vector<8x64xbf16>
    %cst_220 = arith.constant dense<0.000000e+00> : vector<8x1xf32>
    %241 = tpu.matmul %240, %238, %cst_220 {dimension_numbers = #tpu.dot_dimension_numbers<[1], [0], [0], [1], [0, 0, 1, 1], [], []>} : vector<8x64xbf16>, vector<64x1xbf16>, vector<8x1xf32> -> vector<8x1xf32>
    %242 = arith.addf %234, %241 : vector<8x1xf32>
    %c7 = arith.constant 7 : index
    %c0_221 = arith.constant 0 : index
    %c0_222 = arith.constant 0 : index
    %243 = vector.load %arg13[%c7, %c0_221, %c0_222] : memref<10x10x1xbf16, #tpu.memory_space<vmem>>, vector<1x10x1xbf16>
    %244 = vector.shape_cast %243 : vector<1x10x1xbf16> to vector<10x1xbf16>
    %cst_223 = arith.constant dense<0.000000e+00> : vector<64x1xf32>
    %245 = tpu.matmul %187, %244, %cst_223 {dimension_numbers = #tpu.dot_dimension_numbers<[1], [0], [0], [1], [0, 0, 1, 1], [], []>} : vector<64x10xbf16>, vector<10x1xbf16>, vector<64x1xf32> -> vector<64x1xf32>
    %246 = arith.truncf %245 : vector<64x1xf32> to vector<64x1xbf16>
    %c7_224 = arith.constant 7 : index
    %c0_225 = arith.constant 0 : index
    %c0_226 = arith.constant 0 : index
    %247 = vector.load %arg12[%c7_224, %c0_225, %c0_226] : memref<10x8x64xbf16, #tpu.memory_space<vmem>>, vector<1x8x64xbf16>
    %248 = vector.shape_cast %247 : vector<1x8x64xbf16> to vector<8x64xbf16>
    %cst_227 = arith.constant dense<0.000000e+00> : vector<8x1xf32>
    %249 = tpu.matmul %248, %246, %cst_227 {dimension_numbers = #tpu.dot_dimension_numbers<[1], [0], [0], [1], [0, 0, 1, 1], [], []>} : vector<8x64xbf16>, vector<64x1xbf16>, vector<8x1xf32> -> vector<8x1xf32>
    %250 = arith.addf %242, %249 : vector<8x1xf32>
    %c8 = arith.constant 8 : index
    %c0_228 = arith.constant 0 : index
    %c0_229 = arith.constant 0 : index
    %251 = vector.load %arg13[%c8, %c0_228, %c0_229] : memref<10x10x1xbf16, #tpu.memory_space<vmem>>, vector<1x10x1xbf16>
    %252 = vector.shape_cast %251 : vector<1x10x1xbf16> to vector<10x1xbf16>
    %cst_230 = arith.constant dense<0.000000e+00> : vector<64x1xf32>
    %253 = tpu.matmul %187, %252, %cst_230 {dimension_numbers = #tpu.dot_dimension_numbers<[1], [0], [0], [1], [0, 0, 1, 1], [], []>} : vector<64x10xbf16>, vector<10x1xbf16>, vector<64x1xf32> -> vector<64x1xf32>
    %254 = arith.truncf %253 : vector<64x1xf32> to vector<64x1xbf16>
    %c8_231 = arith.constant 8 : index
    %c0_232 = arith.constant 0 : index
    %c0_233 = arith.constant 0 : index
    %255 = vector.load %arg12[%c8_231, %c0_232, %c0_233] : memref<10x8x64xbf16, #tpu.memory_space<vmem>>, vector<1x8x64xbf16>
    %256 = vector.shape_cast %255 : vector<1x8x64xbf16> to vector<8x64xbf16>
    %cst_234 = arith.constant dense<0.000000e+00> : vector<8x1xf32>
    %257 = tpu.matmul %256, %254, %cst_234 {dimension_numbers = #tpu.dot_dimension_numbers<[1], [0], [0], [1], [0, 0, 1, 1], [], []>} : vector<8x64xbf16>, vector<64x1xbf16>, vector<8x1xf32> -> vector<8x1xf32>
    %258 = arith.addf %250, %257 : vector<8x1xf32>
    %c9 = arith.constant 9 : index
    %c0_235 = arith.constant 0 : index
    %c0_236 = arith.constant 0 : index
    %259 = vector.load %arg13[%c9, %c0_235, %c0_236] : memref<10x10x1xbf16, #tpu.memory_space<vmem>>, vector<1x10x1xbf16>
    %260 = vector.shape_cast %259 : vector<1x10x1xbf16> to vector<10x1xbf16>
    %cst_237 = arith.constant dense<0.000000e+00> : vector<64x1xf32>
    %261 = tpu.matmul %187, %260, %cst_237 {dimension_numbers = #tpu.dot_dimension_numbers<[1], [0], [0], [1], [0, 0, 1, 1], [], []>} : vector<64x10xbf16>, vector<10x1xbf16>, vector<64x1xf32> -> vector<64x1xf32>
    %262 = arith.truncf %261 : vector<64x1xf32> to vector<64x1xbf16>
    %c9_238 = arith.constant 9 : index
    %c0_239 = arith.constant 0 : index
    %c0_240 = arith.constant 0 : index
    %263 = vector.load %arg12[%c9_238, %c0_239, %c0_240] : memref<10x8x64xbf16, #tpu.memory_space<vmem>>, vector<1x8x64xbf16>
    %264 = vector.shape_cast %263 : vector<1x8x64xbf16> to vector<8x64xbf16>
    %cst_241 = arith.constant dense<0.000000e+00> : vector<8x1xf32>
    %265 = tpu.matmul %264, %262, %cst_241 {dimension_numbers = #tpu.dot_dimension_numbers<[1], [0], [0], [1], [0, 0, 1, 1], [], []>} : vector<8x64xbf16>, vector<64x1xbf16>, vector<8x1xf32> -> vector<8x1xf32>
    %266 = arith.addf %258, %265 : vector<8x1xf32>
    %c0_242 = arith.constant 0 : index
    %c0_243 = arith.constant 0 : index
    %c0_244 = arith.constant 0 : index
    %267 = vector.load %arg32[%c0_242, %c0_243, %c0_244] : memref<1x8x1xf32, #tpu.memory_space<vmem>>, vector<1x8x1xf32>
    %268 = vector.shape_cast %267 : vector<1x8x1xf32> to vector<8x1xf32>
    %269 = vector.shape_cast %266 : vector<8x1xf32> to vector<1x8x1xf32>
    tpu.vector_store %arg32[%c0_242, %c0_243, %c0_244], %269 {strides = array<i32>} : memref<1x8x1xf32, #tpu.memory_space<vmem>>, vector<1x8x1xf32>,
    %270 = arith.truncf %266 : vector<8x1xf32> to vector<8x1xbf16>
    %c0_245 = arith.constant 0 : index
    %c0_246 = arith.constant 0 : index
    %c0_247 = arith.constant 0 : index
    %271 = vector.load %arg15[%c0_245, %c0_246, %c0_247] : memref<10x1x10xbf16, #tpu.memory_space<vmem>>, vector<1x1x10xbf16>
    %272 = vector.shape_cast %271 : vector<1x1x10xbf16> to vector<1x10xbf16>
    %cst_248 = arith.constant dense<0.000000e+00> : vector<8x10xf32>
    %273 = tpu.matmul %270, %272, %cst_248 {dimension_numbers = #tpu.dot_dimension_numbers<[1], [0], [0], [1], [0, 0, 1, 1], [], []>} : vector<8x1xbf16>, vector<1x10xbf16>, vector<8x10xf32> -> vector<8x10xf32>
    %274 = arith.truncf %273 : vector<8x10xf32> to vector<8x10xbf16>
    %c0_249 = arith.constant 0 : index
    %c0_250 = arith.constant 0 : index
    %c0_251 = arith.constant 0 : index
    %275 = vector.load %arg14[%c0_249, %c0_250, %c0_251] : memref<10x64x8xbf16, #tpu.memory_space<vmem>>, vector<1x64x8xbf16>
    %276 = vector.shape_cast %275 : vector<1x64x8xbf16> to vector<64x8xbf16>
    %cst_252 = arith.constant dense<0.000000e+00> : vector<64x10xf32>
    %277 = tpu.matmul %276, %274, %cst_252 {dimension_numbers = #tpu.dot_dimension_numbers<[1], [0], [0], [1], [0, 0, 1, 1], [], []>} : vector<64x8xbf16>, vector<8x10xbf16>, vector<64x10xf32> -> vector<64x10xf32>
    %c1_253 = arith.constant 1 : index
    %c0_254 = arith.constant 0 : index
    %c0_255 = arith.constant 0 : index
    %278 = vector.load %arg15[%c1_253, %c0_254, %c0_255] : memref<10x1x10xbf16, #tpu.memory_space<vmem>>, vector<1x1x10xbf16>
    %279 = vector.shape_cast %278 : vector<1x1x10xbf16> to vector<1x10xbf16>
    %cst_256 = arith.constant dense<0.000000e+00> : vector<8x10xf32>
    %280 = tpu.matmul %270, %279, %cst_256 {dimension_numbers = #tpu.dot_dimension_numbers<[1], [0], [0], [1], [0, 0, 1, 1], [], []>} : vector<8x1xbf16>, vector<1x10xbf16>, vector<8x10xf32> -> vector<8x10xf32>
    %281 = arith.truncf %280 : vector<8x10xf32> to vector<8x10xbf16>
    %c1_257 = arith.constant 1 : index
    %c0_258 = arith.constant 0 : index
    %c0_259 = arith.constant 0 : index
    %282 = vector.load %arg14[%c1_257, %c0_258, %c0_259] : memref<10x64x8xbf16, #tpu.memory_space<vmem>>, vector<1x64x8xbf16>
    %283 = vector.shape_cast %282 : vector<1x64x8xbf16> to vector<64x8xbf16>
    %cst_260 = arith.constant dense<0.000000e+00> : vector<64x10xf32>
    %284 = tpu.matmul %283, %281, %cst_260 {dimension_numbers = #tpu.dot_dimension_numbers<[1], [0], [0], [1], [0, 0, 1, 1], [], []>} : vector<64x8xbf16>, vector<8x10xbf16>, vector<64x10xf32> -> vector<64x10xf32>
    %285 = arith.addf %277, %284 : vector<64x10xf32>
    %c2_261 = arith.constant 2 : index
    %c0_262 = arith.constant 0 : index
    %c0_263 = arith.constant 0 : index
    %286 = vector.load %arg15[%c2_261, %c0_262, %c0_263] : memref<10x1x10xbf16, #tpu.memory_space<vmem>>, vector<1x1x10xbf16>
    %287 = vector.shape_cast %286 : vector<1x1x10xbf16> to vector<1x10xbf16>
    %cst_264 = arith.constant dense<0.000000e+00> : vector<8x10xf32>
    %288 = tpu.matmul %270, %287, %cst_264 {dimension_numbers = #tpu.dot_dimension_numbers<[1], [0], [0], [1], [0, 0, 1, 1], [], []>} : vector<8x1xbf16>, vector<1x10xbf16>, vector<8x10xf32> -> vector<8x10xf32>
    %289 = arith.truncf %288 : vector<8x10xf32> to vector<8x10xbf16>
    %c2_265 = arith.constant 2 : index
    %c0_266 = arith.constant 0 : index
    %c0_267 = arith.constant 0 : index
    %290 = vector.load %arg14[%c2_265, %c0_266, %c0_267] : memref<10x64x8xbf16, #tpu.memory_space<vmem>>, vector<1x64x8xbf16>
    %291 = vector.shape_cast %290 : vector<1x64x8xbf16> to vector<64x8xbf16>
    %cst_268 = arith.constant dense<0.000000e+00> : vector<64x10xf32>
    %292 = tpu.matmul %291, %289, %cst_268 {dimension_numbers = #tpu.dot_dimension_numbers<[1], [0], [0], [1], [0, 0, 1, 1], [], []>} : vector<64x8xbf16>, vector<8x10xbf16>, vector<64x10xf32> -> vector<64x10xf32>
    %293 = arith.addf %285, %292 : vector<64x10xf32>
    %c3_269 = arith.constant 3 : index
    %c0_270 = arith.constant 0 : index
    %c0_271 = arith.constant 0 : index
    %294 = vector.load %arg15[%c3_269, %c0_270, %c0_271] : memref<10x1x10xbf16, #tpu.memory_space<vmem>>, vector<1x1x10xbf16>
    %295 = vector.shape_cast %294 : vector<1x1x10xbf16> to vector<1x10xbf16>
    %cst_272 = arith.constant dense<0.000000e+00> : vector<8x10xf32>
    %296 = tpu.matmul %270, %295, %cst_272 {dimension_numbers = #tpu.dot_dimension_numbers<[1], [0], [0], [1], [0, 0, 1, 1], [], []>} : vector<8x1xbf16>, vector<1x10xbf16>, vector<8x10xf32> -> vector<8x10xf32>
    %297 = arith.truncf %296 : vector<8x10xf32> to vector<8x10xbf16>
    %c3_273 = arith.constant 3 : index
    %c0_274 = arith.constant 0 : index
    %c0_275 = arith.constant 0 : index
    %298 = vector.load %arg14[%c3_273, %c0_274, %c0_275] : memref<10x64x8xbf16, #tpu.memory_space<vmem>>, vector<1x64x8xbf16>
    %299 = vector.shape_cast %298 : vector<1x64x8xbf16> to vector<64x8xbf16>
    %cst_276 = arith.constant dense<0.000000e+00> : vector<64x10xf32>
    %300 = tpu.matmul %299, %297, %cst_276 {dimension_numbers = #tpu.dot_dimension_numbers<[1], [0], [0], [1], [0, 0, 1, 1], [], []>} : vector<64x8xbf16>, vector<8x10xbf16>, vector<64x10xf32> -> vector<64x10xf32>
    %301 = arith.addf %293, %300 : vector<64x10xf32>
    %c4_277 = arith.constant 4 : index
    %c0_278 = arith.constant 0 : index
    %c0_279 = arith.constant 0 : index
    %302 = vector.load %arg15[%c4_277, %c0_278, %c0_279] : memref<10x1x10xbf16, #tpu.memory_space<vmem>>, vector<1x1x10xbf16>
    %303 = vector.shape_cast %302 : vector<1x1x10xbf16> to vector<1x10xbf16>
    %cst_280 = arith.constant dense<0.000000e+00> : vector<8x10xf32>
    %304 = tpu.matmul %270, %303, %cst_280 {dimension_numbers = #tpu.dot_dimension_numbers<[1], [0], [0], [1], [0, 0, 1, 1], [], []>} : vector<8x1xbf16>, vector<1x10xbf16>, vector<8x10xf32> -> vector<8x10xf32>
    %305 = arith.truncf %304 : vector<8x10xf32> to vector<8x10xbf16>
    %c4_281 = arith.constant 4 : index
    %c0_282 = arith.constant 0 : index
    %c0_283 = arith.constant 0 : index
    %306 = vector.load %arg14[%c4_281, %c0_282, %c0_283] : memref<10x64x8xbf16, #tpu.memory_space<vmem>>, vector<1x64x8xbf16>
    %307 = vector.shape_cast %306 : vector<1x64x8xbf16> to vector<64x8xbf16>
    %cst_284 = arith.constant dense<0.000000e+00> : vector<64x10xf32>
    %308 = tpu.matmul %307, %305, %cst_284 {dimension_numbers = #tpu.dot_dimension_numbers<[1], [0], [0], [1], [0, 0, 1, 1], [], []>} : vector<64x8xbf16>, vector<8x10xbf16>, vector<64x10xf32> -> vector<64x10xf32>
    %309 = arith.addf %301, %308 : vector<64x10xf32>
    %c5_285 = arith.constant 5 : index
    %c0_286 = arith.constant 0 : index
    %c0_287 = arith.constant 0 : index
    %310 = vector.load %arg15[%c5_285, %c0_286, %c0_287] : memref<10x1x10xbf16, #tpu.memory_space<vmem>>, vector<1x1x10xbf16>
    %311 = vector.shape_cast %310 : vector<1x1x10xbf16> to vector<1x10xbf16>
    %cst_288 = arith.constant dense<0.000000e+00> : vector<8x10xf32>
    %312 = tpu.matmul %270, %311, %cst_288 {dimension_numbers = #tpu.dot_dimension_numbers<[1], [0], [0], [1], [0, 0, 1, 1], [], []>} : vector<8x1xbf16>, vector<1x10xbf16>, vector<8x10xf32> -> vector<8x10xf32>
    %313 = arith.truncf %312 : vector<8x10xf32> to vector<8x10xbf16>
    %c5_289 = arith.constant 5 : index
    %c0_290 = arith.constant 0 : index
    %c0_291 = arith.constant 0 : index
    %314 = vector.load %arg14[%c5_289, %c0_290, %c0_291] : memref<10x64x8xbf16, #tpu.memory_space<vmem>>, vector<1x64x8xbf16>
    %315 = vector.shape_cast %314 : vector<1x64x8xbf16> to vector<64x8xbf16>
    %cst_292 = arith.constant dense<0.000000e+00> : vector<64x10xf32>
    %316 = tpu.matmul %315, %313, %cst_292 {dimension_numbers = #tpu.dot_dimension_numbers<[1], [0], [0], [1], [0, 0, 1, 1], [], []>} : vector<64x8xbf16>, vector<8x10xbf16>, vector<64x10xf32> -> vector<64x10xf32>
    %317 = arith.addf %309, %316 : vector<64x10xf32>
    %c6_293 = arith.constant 6 : index
    %c0_294 = arith.constant 0 : index
    %c0_295 = arith.constant 0 : index
    %318 = vector.load %arg15[%c6_293, %c0_294, %c0_295] : memref<10x1x10xbf16, #tpu.memory_space<vmem>>, vector<1x1x10xbf16>
    %319 = vector.shape_cast %318 : vector<1x1x10xbf16> to vector<1x10xbf16>
    %cst_296 = arith.constant dense<0.000000e+00> : vector<8x10xf32>
    %320 = tpu.matmul %270, %319, %cst_296 {dimension_numbers = #tpu.dot_dimension_numbers<[1], [0], [0], [1], [0, 0, 1, 1], [], []>} : vector<8x1xbf16>, vector<1x10xbf16>, vector<8x10xf32> -> vector<8x10xf32>
    %321 = arith.truncf %320 : vector<8x10xf32> to vector<8x10xbf16>
    %c6_297 = arith.constant 6 : index
    %c0_298 = arith.constant 0 : index
    %c0_299 = arith.constant 0 : index
    %322 = vector.load %arg14[%c6_297, %c0_298, %c0_299] : memref<10x64x8xbf16, #tpu.memory_space<vmem>>, vector<1x64x8xbf16>
    %323 = vector.shape_cast %322 : vector<1x64x8xbf16> to vector<64x8xbf16>
    %cst_300 = arith.constant dense<0.000000e+00> : vector<64x10xf32>
    %324 = tpu.matmul %323, %321, %cst_300 {dimension_numbers = #tpu.dot_dimension_numbers<[1], [0], [0], [1], [0, 0, 1, 1], [], []>} : vector<64x8xbf16>, vector<8x10xbf16>, vector<64x10xf32> -> vector<64x10xf32>
    %325 = arith.addf %317, %324 : vector<64x10xf32>
    %c7_301 = arith.constant 7 : index
    %c0_302 = arith.constant 0 : index
    %c0_303 = arith.constant 0 : index
    %326 = vector.load %arg15[%c7_301, %c0_302, %c0_303] : memref<10x1x10xbf16, #tpu.memory_space<vmem>>, vector<1x1x10xbf16>
    %327 = vector.shape_cast %326 : vector<1x1x10xbf16> to vector<1x10xbf16>
    %cst_304 = arith.constant dense<0.000000e+00> : vector<8x10xf32>
    %328 = tpu.matmul %270, %327, %cst_304 {dimension_numbers = #tpu.dot_dimension_numbers<[1], [0], [0], [1], [0, 0, 1, 1], [], []>} : vector<8x1xbf16>, vector<1x10xbf16>, vector<8x10xf32> -> vector<8x10xf32>
    %329 = arith.truncf %328 : vector<8x10xf32> to vector<8x10xbf16>
    %c7_305 = arith.constant 7 : index
    %c0_306 = arith.constant 0 : index
    %c0_307 = arith.constant 0 : index
    %330 = vector.load %arg14[%c7_305, %c0_306, %c0_307] : memref<10x64x8xbf16, #tpu.memory_space<vmem>>, vector<1x64x8xbf16>
    %331 = vector.shape_cast %330 : vector<1x64x8xbf16> to vector<64x8xbf16>
    %cst_308 = arith.constant dense<0.000000e+00> : vector<64x10xf32>
    %332 = tpu.matmul %331, %329, %cst_308 {dimension_numbers = #tpu.dot_dimension_numbers<[1], [0], [0], [1], [0, 0, 1, 1], [], []>} : vector<64x8xbf16>, vector<8x10xbf16>, vector<64x10xf32> -> vector<64x10xf32>
    %333 = arith.addf %325, %332 : vector<64x10xf32>
    %c8_309 = arith.constant 8 : index
    %c0_310 = arith.constant 0 : index
    %c0_311 = arith.constant 0 : index
    %334 = vector.load %arg15[%c8_309, %c0_310, %c0_311] : memref<10x1x10xbf16, #tpu.memory_space<vmem>>, vector<1x1x10xbf16>
    %335 = vector.shape_cast %334 : vector<1x1x10xbf16> to vector<1x10xbf16>
    %cst_312 = arith.constant dense<0.000000e+00> : vector<8x10xf32>
    %336 = tpu.matmul %270, %335, %cst_312 {dimension_numbers = #tpu.dot_dimension_numbers<[1], [0], [0], [1], [0, 0, 1, 1], [], []>} : vector<8x1xbf16>, vector<1x10xbf16>, vector<8x10xf32> -> vector<8x10xf32>
    %337 = arith.truncf %336 : vector<8x10xf32> to vector<8x10xbf16>
    %c8_313 = arith.constant 8 : index
    %c0_314 = arith.constant 0 : index
    %c0_315 = arith.constant 0 : index
    %338 = vector.load %arg14[%c8_313, %c0_314, %c0_315] : memref<10x64x8xbf16, #tpu.memory_space<vmem>>, vector<1x64x8xbf16>
    %339 = vector.shape_cast %338 : vector<1x64x8xbf16> to vector<64x8xbf16>
    %cst_316 = arith.constant dense<0.000000e+00> : vector<64x10xf32>
    %340 = tpu.matmul %339, %337, %cst_316 {dimension_numbers = #tpu.dot_dimension_numbers<[1], [0], [0], [1], [0, 0, 1, 1], [], []>} : vector<64x8xbf16>, vector<8x10xbf16>, vector<64x10xf32> -> vector<64x10xf32>
    %341 = arith.addf %333, %340 : vector<64x10xf32>
    %c9_317 = arith.constant 9 : index
    %c0_318 = arith.constant 0 : index
    %c0_319 = arith.constant 0 : index
    %342 = vector.load %arg15[%c9_317, %c0_318, %c0_319] : memref<10x1x10xbf16, #tpu.memory_space<vmem>>, vector<1x1x10xbf16>
    %343 = vector.shape_cast %342 : vector<1x1x10xbf16> to vector<1x10xbf16>
    %cst_320 = arith.constant dense<0.000000e+00> : vector<8x10xf32>
    %344 = tpu.matmul %270, %343, %cst_320 {dimension_numbers = #tpu.dot_dimension_numbers<[1], [0], [0], [1], [0, 0, 1, 1], [], []>} : vector<8x1xbf16>, vector<1x10xbf16>, vector<8x10xf32> -> vector<8x10xf32>
    %345 = arith.truncf %344 : vector<8x10xf32> to vector<8x10xbf16>
    %c9_321 = arith.constant 9 : index
    %c0_322 = arith.constant 0 : index
    %c0_323 = arith.constant 0 : index
    %346 = vector.load %arg14[%c9_321, %c0_322, %c0_323] : memref<10x64x8xbf16, #tpu.memory_space<vmem>>, vector<1x64x8xbf16>
    %347 = vector.shape_cast %346 : vector<1x64x8xbf16> to vector<64x8xbf16>
    %cst_324 = arith.constant dense<0.000000e+00> : vector<64x10xf32>
    %348 = tpu.matmul %347, %345, %cst_324 {dimension_numbers = #tpu.dot_dimension_numbers<[1], [0], [0], [1], [0, 0, 1, 1], [], []>} : vector<64x8xbf16>, vector<8x10xbf16>, vector<64x10xf32> -> vector<64x10xf32>
    %349 = arith.addf %341, %348 : vector<64x10xf32>
    %c0_325 = arith.constant 0 : index
    %c0_326 = arith.constant 0 : index
    %350 = vector.load %arg16[%c0_325, %c0_326] : memref<64x1xf32, #tpu.memory_space<vmem>>, vector<64x1xf32>
    %351 = vector.broadcast %350 : vector<64x1xf32> to vector<64x10xf32>
    %352 = arith.addf %349, %351 : vector<64x10xf32>
    %cst_327 = arith.constant 0.000000e+00 : f32
    %353 = vector.broadcast %cst_327 : f32 to vector<64x10xf32>
    %354 = arith.maximumf %352, %353 : vector<64x10xf32>
    %355 = arith.truncf %354 : vector<64x10xf32> to vector<64x10xbf16>
    %c0_328 = arith.constant 0 : index
    %c0_329 = arith.constant 0 : index
    %c0_330 = arith.constant 0 : index
    %356 = vector.load %arg18[%c0_328, %c0_329, %c0_330] : memref<4x10x20xbf16, #tpu.memory_space<vmem>>, vector<1x10x20xbf16>
    %357 = vector.shape_cast %356 : vector<1x10x20xbf16> to vector<10x20xbf16>
    %cst_331 = arith.constant dense<0.000000e+00> : vector<64x20xf32>
    %358 = tpu.matmul %355, %357, %cst_331 {dimension_numbers = #tpu.dot_dimension_numbers<[1], [0], [0], [1], [0, 0, 1, 1], [], []>} : vector<64x10xbf16>, vector<10x20xbf16>, vector<64x20xf32> -> vector<64x20xf32>
    %359 = arith.truncf %358 : vector<64x20xf32> to vector<64x20xbf16>
    %c0_332 = arith.constant 0 : index
    %c0_333 = arith.constant 0 : index
    %c0_334 = arith.constant 0 : index
    %360 = vector.load %arg17[%c0_332, %c0_333, %c0_334] : memref<4x32x64xbf16, #tpu.memory_space<vmem>>, vector<1x32x64xbf16>
    %361 = vector.shape_cast %360 : vector<1x32x64xbf16> to vector<32x64xbf16>
    %cst_335 = arith.constant dense<0.000000e+00> : vector<32x20xf32>
    %362 = tpu.matmul %361, %359, %cst_335 {dimension_numbers = #tpu.dot_dimension_numbers<[1], [0], [0], [1], [0, 0, 1, 1], [], []>} : vector<32x64xbf16>, vector<64x20xbf16>, vector<32x20xf32> -> vector<32x20xf32>
    %c1_336 = arith.constant 1 : index
    %c0_337 = arith.constant 0 : index
    %c0_338 = arith.constant 0 : index
    %363 = vector.load %arg18[%c1_336, %c0_337, %c0_338] : memref<4x10x20xbf16, #tpu.memory_space<vmem>>, vector<1x10x20xbf16>
    %364 = vector.shape_cast %363 : vector<1x10x20xbf16> to vector<10x20xbf16>
    %cst_339 = arith.constant dense<0.000000e+00> : vector<64x20xf32>
    %365 = tpu.matmul %355, %364, %cst_339 {dimension_numbers = #tpu.dot_dimension_numbers<[1], [0], [0], [1], [0, 0, 1, 1], [], []>} : vector<64x10xbf16>, vector<10x20xbf16>, vector<64x20xf32> -> vector<64x20xf32>
    %366 = arith.truncf %365 : vector<64x20xf32> to vector<64x20xbf16>
    %c1_340 = arith.constant 1 : index
    %c0_341 = arith.constant 0 : index
    %c0_342 = arith.constant 0 : index
    %367 = vector.load %arg17[%c1_340, %c0_341, %c0_342] : memref<4x32x64xbf16, #tpu.memory_space<vmem>>, vector<1x32x64xbf16>
    %368 = vector.shape_cast %367 : vector<1x32x64xbf16> to vector<32x64xbf16>
    %cst_343 = arith.constant dense<0.000000e+00> : vector<32x20xf32>
    %369 = tpu.matmul %368, %366, %cst_343 {dimension_numbers = #tpu.dot_dimension_numbers<[1], [0], [0], [1], [0, 0, 1, 1], [], []>} : vector<32x64xbf16>, vector<64x20xbf16>, vector<32x20xf32> -> vector<32x20xf32>
    %370 = arith.addf %362, %369 : vector<32x20xf32>
    %c2_344 = arith.constant 2 : index
    %c0_345 = arith.constant 0 : index
    %c0_346 = arith.constant 0 : index
    %371 = vector.load %arg18[%c2_344, %c0_345, %c0_346] : memref<4x10x20xbf16, #tpu.memory_space<vmem>>, vector<1x10x20xbf16>
    %372 = vector.shape_cast %371 : vector<1x10x20xbf16> to vector<10x20xbf16>
    %cst_347 = arith.constant dense<0.000000e+00> : vector<64x20xf32>
    %373 = tpu.matmul %355, %372, %cst_347 {dimension_numbers = #tpu.dot_dimension_numbers<[1], [0], [0], [1], [0, 0, 1, 1], [], []>} : vector<64x10xbf16>, vector<10x20xbf16>, vector<64x20xf32> -> vector<64x20xf32>
    %374 = arith.truncf %373 : vector<64x20xf32> to vector<64x20xbf16>
    %c2_348 = arith.constant 2 : index
    %c0_349 = arith.constant 0 : index
    %c0_350 = arith.constant 0 : index
    %375 = vector.load %arg17[%c2_348, %c0_349, %c0_350] : memref<4x32x64xbf16, #tpu.memory_space<vmem>>, vector<1x32x64xbf16>
    %376 = vector.shape_cast %375 : vector<1x32x64xbf16> to vector<32x64xbf16>
    %cst_351 = arith.constant dense<0.000000e+00> : vector<32x20xf32>
    %377 = tpu.matmul %376, %374, %cst_351 {dimension_numbers = #tpu.dot_dimension_numbers<[1], [0], [0], [1], [0, 0, 1, 1], [], []>} : vector<32x64xbf16>, vector<64x20xbf16>, vector<32x20xf32> -> vector<32x20xf32>
    %378 = arith.addf %370, %377 : vector<32x20xf32>
    %c3_352 = arith.constant 3 : index
    %c0_353 = arith.constant 0 : index
    %c0_354 = arith.constant 0 : index
    %379 = vector.load %arg18[%c3_352, %c0_353, %c0_354] : memref<4x10x20xbf16, #tpu.memory_space<vmem>>, vector<1x10x20xbf16>
    %380 = vector.shape_cast %379 : vector<1x10x20xbf16> to vector<10x20xbf16>
    %cst_355 = arith.constant dense<0.000000e+00> : vector<64x20xf32>
    %381 = tpu.matmul %355, %380, %cst_355 {dimension_numbers = #tpu.dot_dimension_numbers<[1], [0], [0], [1], [0, 0, 1, 1], [], []>} : vector<64x10xbf16>, vector<10x20xbf16>, vector<64x20xf32> -> vector<64x20xf32>
    %382 = arith.truncf %381 : vector<64x20xf32> to vector<64x20xbf16>
    %c3_356 = arith.constant 3 : index
    %c0_357 = arith.constant 0 : index
    %c0_358 = arith.constant 0 : index
    %383 = vector.load %arg17[%c3_356, %c0_357, %c0_358] : memref<4x32x64xbf16, #tpu.memory_space<vmem>>, vector<1x32x64xbf16>
    %384 = vector.shape_cast %383 : vector<1x32x64xbf16> to vector<32x64xbf16>
    %cst_359 = arith.constant dense<0.000000e+00> : vector<32x20xf32>
    %385 = tpu.matmul %384, %382, %cst_359 {dimension_numbers = #tpu.dot_dimension_numbers<[1], [0], [0], [1], [0, 0, 1, 1], [], []>} : vector<32x64xbf16>, vector<64x20xbf16>, vector<32x20xf32> -> vector<32x20xf32>
    %386 = arith.addf %378, %385 : vector<32x20xf32>
    %c0_360 = arith.constant 0 : index
    %c0_361 = arith.constant 0 : index
    %387 = vector.load %arg19[%c0_360, %c0_361] : memref<32x1xf32, #tpu.memory_space<vmem>>, vector<32x1xf32>
    %388 = vector.broadcast %387 : vector<32x1xf32> to vector<32x20xf32>
    %389 = arith.addf %386, %388 : vector<32x20xf32>
    %cst_362 = arith.constant 0.000000e+00 : f32
    %390 = vector.broadcast %cst_362 : f32 to vector<32x20xf32>
    %391 = arith.maximumf %389, %390 : vector<32x20xf32>
    %392 = arith.truncf %391 : vector<32x20xf32> to vector<32x20xbf16>
    %c0_363 = arith.constant 0 : index
    %c0_364 = arith.constant 0 : index
    %c0_365 = arith.constant 0 : index
    %393 = vector.load %arg21[%c0_363, %c0_364, %c0_365] : memref<4x20x40xbf16, #tpu.memory_space<vmem>>, vector<1x20x40xbf16>
    %394 = vector.shape_cast %393 : vector<1x20x40xbf16> to vector<20x40xbf16>
    %cst_366 = arith.constant dense<0.000000e+00> : vector<32x40xf32>
    %395 = tpu.matmul %392, %394, %cst_366 {dimension_numbers = #tpu.dot_dimension_numbers<[1], [0], [0], [1], [0, 0, 1, 1], [], []>} : vector<32x20xbf16>, vector<20x40xbf16>, vector<32x40xf32> -> vector<32x40xf32>
    %396 = arith.truncf %395 : vector<32x40xf32> to vector<32x40xbf16>
    %c0_367 = arith.constant 0 : index
    %c0_368 = arith.constant 0 : index
    %c0_369 = arith.constant 0 : index
    %397 = vector.load %arg20[%c0_367, %c0_368, %c0_369] : memref<4x16x32xbf16, #tpu.memory_space<vmem>>, vector<1x16x32xbf16>
    %398 = vector.shape_cast %397 : vector<1x16x32xbf16> to vector<16x32xbf16>
    %cst_370 = arith.constant dense<0.000000e+00> : vector<16x40xf32>
    %399 = tpu.matmul %398, %396, %cst_370 {dimension_numbers = #tpu.dot_dimension_numbers<[1], [0], [0], [1], [0, 0, 1, 1], [], []>} : vector<16x32xbf16>, vector<32x40xbf16>, vector<16x40xf32> -> vector<16x40xf32>
    %c1_371 = arith.constant 1 : index
    %c0_372 = arith.constant 0 : index
    %c0_373 = arith.constant 0 : index
    %400 = vector.load %arg21[%c1_371, %c0_372, %c0_373] : memref<4x20x40xbf16, #tpu.memory_space<vmem>>, vector<1x20x40xbf16>
    %401 = vector.shape_cast %400 : vector<1x20x40xbf16> to vector<20x40xbf16>
    %cst_374 = arith.constant dense<0.000000e+00> : vector<32x40xf32>
    %402 = tpu.matmul %392, %401, %cst_374 {dimension_numbers = #tpu.dot_dimension_numbers<[1], [0], [0], [1], [0, 0, 1, 1], [], []>} : vector<32x20xbf16>, vector<20x40xbf16>, vector<32x40xf32> -> vector<32x40xf32>
    %403 = arith.truncf %402 : vector<32x40xf32> to vector<32x40xbf16>
    %c1_375 = arith.constant 1 : index
    %c0_376 = arith.constant 0 : index
    %c0_377 = arith.constant 0 : index
    %404 = vector.load %arg20[%c1_375, %c0_376, %c0_377] : memref<4x16x32xbf16, #tpu.memory_space<vmem>>, vector<1x16x32xbf16>
    %405 = vector.shape_cast %404 : vector<1x16x32xbf16> to vector<16x32xbf16>
    %cst_378 = arith.constant dense<0.000000e+00> : vector<16x40xf32>
    %406 = tpu.matmul %405, %403, %cst_378 {dimension_numbers = #tpu.dot_dimension_numbers<[1], [0], [0], [1], [0, 0, 1, 1], [], []>} : vector<16x32xbf16>, vector<32x40xbf16>, vector<16x40xf32> -> vector<16x40xf32>
    %407 = arith.addf %399, %406 : vector<16x40xf32>
    %c2_379 = arith.constant 2 : index
    %c0_380 = arith.constant 0 : index
    %c0_381 = arith.constant 0 : index
    %408 = vector.load %arg21[%c2_379, %c0_380, %c0_381] : memref<4x20x40xbf16, #tpu.memory_space<vmem>>, vector<1x20x40xbf16>
    %409 = vector.shape_cast %408 : vector<1x20x40xbf16> to vector<20x40xbf16>
    %cst_382 = arith.constant dense<0.000000e+00> : vector<32x40xf32>
    %410 = tpu.matmul %392, %409, %cst_382 {dimension_numbers = #tpu.dot_dimension_numbers<[1], [0], [0], [1], [0, 0, 1, 1], [], []>} : vector<32x20xbf16>, vector<20x40xbf16>, vector<32x40xf32> -> vector<32x40xf32>
    %411 = arith.truncf %410 : vector<32x40xf32> to vector<32x40xbf16>
    %c2_383 = arith.constant 2 : index
    %c0_384 = arith.constant 0 : index
    %c0_385 = arith.constant 0 : index
    %412 = vector.load %arg20[%c2_383, %c0_384, %c0_385] : memref<4x16x32xbf16, #tpu.memory_space<vmem>>, vector<1x16x32xbf16>
    %413 = vector.shape_cast %412 : vector<1x16x32xbf16> to vector<16x32xbf16>
    %cst_386 = arith.constant dense<0.000000e+00> : vector<16x40xf32>
    %414 = tpu.matmul %413, %411, %cst_386 {dimension_numbers = #tpu.dot_dimension_numbers<[1], [0], [0], [1], [0, 0, 1, 1], [], []>} : vector<16x32xbf16>, vector<32x40xbf16>, vector<16x40xf32> -> vector<16x40xf32>
    %415 = arith.addf %407, %414 : vector<16x40xf32>
    %c3_387 = arith.constant 3 : index
    %c0_388 = arith.constant 0 : index
    %c0_389 = arith.constant 0 : index
    %416 = vector.load %arg21[%c3_387, %c0_388, %c0_389] : memref<4x20x40xbf16, #tpu.memory_space<vmem>>, vector<1x20x40xbf16>
    %417 = vector.shape_cast %416 : vector<1x20x40xbf16> to vector<20x40xbf16>
    %cst_390 = arith.constant dense<0.000000e+00> : vector<32x40xf32>
    %418 = tpu.matmul %392, %417, %cst_390 {dimension_numbers = #tpu.dot_dimension_numbers<[1], [0], [0], [1], [0, 0, 1, 1], [], []>} : vector<32x20xbf16>, vector<20x40xbf16>, vector<32x40xf32> -> vector<32x40xf32>
    %419 = arith.truncf %418 : vector<32x40xf32> to vector<32x40xbf16>
    %c3_391 = arith.constant 3 : index
    %c0_392 = arith.constant 0 : index
    %c0_393 = arith.constant 0 : index
    %420 = vector.load %arg20[%c3_391, %c0_392, %c0_393] : memref<4x16x32xbf16, #tpu.memory_space<vmem>>, vector<1x16x32xbf16>
    %421 = vector.shape_cast %420 : vector<1x16x32xbf16> to vector<16x32xbf16>
    %cst_394 = arith.constant dense<0.000000e+00> : vector<16x40xf32>
    %422 = tpu.matmul %421, %419, %cst_394 {dimension_numbers = #tpu.dot_dimension_numbers<[1], [0], [0], [1], [0, 0, 1, 1], [], []>} : vector<16x32xbf16>, vector<32x40xbf16>, vector<16x40xf32> -> vector<16x40xf32>
    %423 = arith.addf %415, %422 : vector<16x40xf32>
    %c0_395 = arith.constant 0 : index
    %c0_396 = arith.constant 0 : index
    %424 = vector.load %arg22[%c0_395, %c0_396] : memref<16x1xf32, #tpu.memory_space<vmem>>, vector<16x1xf32>
    %425 = vector.broadcast %424 : vector<16x1xf32> to vector<16x40xf32>
    %426 = arith.addf %423, %425 : vector<16x40xf32>
    %cst_397 = arith.constant 0.000000e+00 : f32
    %427 = vector.broadcast %cst_397 : f32 to vector<16x40xf32>
    %428 = arith.maximumf %426, %427 : vector<16x40xf32>
    %429 = arith.truncf %428 : vector<16x40xf32> to vector<16x40xbf16>
    %c0_398 = arith.constant 0 : index
    %c0_399 = arith.constant 0 : index
    %c0_400 = arith.constant 0 : index
    %430 = vector.load %arg24[%c0_398, %c0_399, %c0_400] : memref<4x40x80xbf16, #tpu.memory_space<vmem>>, vector<1x40x80xbf16>
    %431 = vector.shape_cast %430 : vector<1x40x80xbf16> to vector<40x80xbf16>
    %cst_401 = arith.constant dense<0.000000e+00> : vector<16x80xf32>
    %432 = tpu.matmul %429, %431, %cst_401 {dimension_numbers = #tpu.dot_dimension_numbers<[1], [0], [0], [1], [0, 0, 1, 1], [], []>} : vector<16x40xbf16>, vector<40x80xbf16>, vector<16x80xf32> -> vector<16x80xf32>
    %433 = arith.truncf %432 : vector<16x80xf32> to vector<16x80xbf16>
    %c0_402 = arith.constant 0 : index
    %c0_403 = arith.constant 0 : index
    %c0_404 = arith.constant 0 : index
    %434 = vector.load %arg23[%c0_402, %c0_403, %c0_404] : memref<4x8x16xbf16, #tpu.memory_space<vmem>>, vector<1x8x16xbf16>
    %435 = vector.shape_cast %434 : vector<1x8x16xbf16> to vector<8x16xbf16>
    %cst_405 = arith.constant dense<0.000000e+00> : vector<8x80xf32>
    %436 = tpu.matmul %435, %433, %cst_405 {dimension_numbers = #tpu.dot_dimension_numbers<[1], [0], [0], [1], [0, 0, 1, 1], [], []>} : vector<8x16xbf16>, vector<16x80xbf16>, vector<8x80xf32> -> vector<8x80xf32>
    %c1_406 = arith.constant 1 : index
    %c0_407 = arith.constant 0 : index
    %c0_408 = arith.constant 0 : index
    %437 = vector.load %arg24[%c1_406, %c0_407, %c0_408] : memref<4x40x80xbf16, #tpu.memory_space<vmem>>, vector<1x40x80xbf16>
    %438 = vector.shape_cast %437 : vector<1x40x80xbf16> to vector<40x80xbf16>
    %cst_409 = arith.constant dense<0.000000e+00> : vector<16x80xf32>
    %439 = tpu.matmul %429, %438, %cst_409 {dimension_numbers = #tpu.dot_dimension_numbers<[1], [0], [0], [1], [0, 0, 1, 1], [], []>} : vector<16x40xbf16>, vector<40x80xbf16>, vector<16x80xf32> -> vector<16x80xf32>
    %440 = arith.truncf %439 : vector<16x80xf32> to vector<16x80xbf16>
    %c1_410 = arith.constant 1 : index
    %c0_411 = arith.constant 0 : index
    %c0_412 = arith.constant 0 : index
    %441 = vector.load %arg23[%c1_410, %c0_411, %c0_412] : memref<4x8x16xbf16, #tpu.memory_space<vmem>>, vector<1x8x16xbf16>
    %442 = vector.shape_cast %441 : vector<1x8x16xbf16> to vector<8x16xbf16>
    %cst_413 = arith.constant dense<0.000000e+00> : vector<8x80xf32>
    %443 = tpu.matmul %442, %440, %cst_413 {dimension_numbers = #tpu.dot_dimension_numbers<[1], [0], [0], [1], [0, 0, 1, 1], [], []>} : vector<8x16xbf16>, vector<16x80xbf16>, vector<8x80xf32> -> vector<8x80xf32>
    %444 = arith.addf %436, %443 : vector<8x80xf32>
    %c2_414 = arith.constant 2 : index
    %c0_415 = arith.constant 0 : index
    %c0_416 = arith.constant 0 : index
    %445 = vector.load %arg24[%c2_414, %c0_415, %c0_416] : memref<4x40x80xbf16, #tpu.memory_space<vmem>>, vector<1x40x80xbf16>
    %446 = vector.shape_cast %445 : vector<1x40x80xbf16> to vector<40x80xbf16>
    %cst_417 = arith.constant dense<0.000000e+00> : vector<16x80xf32>
    %447 = tpu.matmul %429, %446, %cst_417 {dimension_numbers = #tpu.dot_dimension_numbers<[1], [0], [0], [1], [0, 0, 1, 1], [], []>} : vector<16x40xbf16>, vector<40x80xbf16>, vector<16x80xf32> -> vector<16x80xf32>
    %448 = arith.truncf %447 : vector<16x80xf32> to vector<16x80xbf16>
    %c2_418 = arith.constant 2 : index
    %c0_419 = arith.constant 0 : index
    %c0_420 = arith.constant 0 : index
    %449 = vector.load %arg23[%c2_418, %c0_419, %c0_420] : memref<4x8x16xbf16, #tpu.memory_space<vmem>>, vector<1x8x16xbf16>
    %450 = vector.shape_cast %449 : vector<1x8x16xbf16> to vector<8x16xbf16>
    %cst_421 = arith.constant dense<0.000000e+00> : vector<8x80xf32>
    %451 = tpu.matmul %450, %448, %cst_421 {dimension_numbers = #tpu.dot_dimension_numbers<[1], [0], [0], [1], [0, 0, 1, 1], [], []>} : vector<8x16xbf16>, vector<16x80xbf16>, vector<8x80xf32> -> vector<8x80xf32>
    %452 = arith.addf %444, %451 : vector<8x80xf32>
    %c3_422 = arith.constant 3 : index
    %c0_423 = arith.constant 0 : index
    %c0_424 = arith.constant 0 : index
    %453 = vector.load %arg24[%c3_422, %c0_423, %c0_424] : memref<4x40x80xbf16, #tpu.memory_space<vmem>>, vector<1x40x80xbf16>
    %454 = vector.shape_cast %453 : vector<1x40x80xbf16> to vector<40x80xbf16>
    %cst_425 = arith.constant dense<0.000000e+00> : vector<16x80xf32>
    %455 = tpu.matmul %429, %454, %cst_425 {dimension_numbers = #tpu.dot_dimension_numbers<[1], [0], [0], [1], [0, 0, 1, 1], [], []>} : vector<16x40xbf16>, vector<40x80xbf16>, vector<16x80xf32> -> vector<16x80xf32>
    %456 = arith.truncf %455 : vector<16x80xf32> to vector<16x80xbf16>
    %c3_426 = arith.constant 3 : index
    %c0_427 = arith.constant 0 : index
    %c0_428 = arith.constant 0 : index
    %457 = vector.load %arg23[%c3_426, %c0_427, %c0_428] : memref<4x8x16xbf16, #tpu.memory_space<vmem>>, vector<1x8x16xbf16>
    %458 = vector.shape_cast %457 : vector<1x8x16xbf16> to vector<8x16xbf16>
    %cst_429 = arith.constant dense<0.000000e+00> : vector<8x80xf32>
    %459 = tpu.matmul %458, %456, %cst_429 {dimension_numbers = #tpu.dot_dimension_numbers<[1], [0], [0], [1], [0, 0, 1, 1], [], []>} : vector<8x16xbf16>, vector<16x80xbf16>, vector<8x80xf32> -> vector<8x80xf32>
    %460 = arith.addf %452, %459 : vector<8x80xf32>
    %c0_430 = arith.constant 0 : index
    %c0_431 = arith.constant 0 : index
    %461 = vector.load %arg25[%c0_430, %c0_431] : memref<8x1xf32, #tpu.memory_space<vmem>>, vector<8x1xf32>
    %462 = vector.broadcast %461 : vector<8x1xf32> to vector<8x80xf32>
    %463 = arith.addf %460, %462 : vector<8x80xf32>
    %cst_432 = arith.constant 0.000000e+00 : f32
    %464 = vector.broadcast %cst_432 : f32 to vector<8x80xf32>
    %465 = arith.maximumf %463, %464 : vector<8x80xf32>
    %466 = arith.truncf %465 : vector<8x80xf32> to vector<8x80xbf16>
    %c0_433 = arith.constant 0 : index
    %c0_434 = arith.constant 0 : index
    %c0_435 = arith.constant 0 : index
    %467 = vector.load %arg27[%c0_433, %c0_434, %c0_435] : memref<4x80x160xbf16, #tpu.memory_space<vmem>>, vector<1x80x160xbf16>
    %468 = vector.shape_cast %467 : vector<1x80x160xbf16> to vector<80x160xbf16>
    %cst_436 = arith.constant dense<0.000000e+00> : vector<8x160xf32>
    %469 = tpu.matmul %466, %468, %cst_436 {dimension_numbers = #tpu.dot_dimension_numbers<[1], [0], [0], [1], [0, 0, 1, 1], [], []>} : vector<8x80xbf16>, vector<80x160xbf16>, vector<8x160xf32> -> vector<8x160xf32>
    %470 = arith.truncf %469 : vector<8x160xf32> to vector<8x160xbf16>
    %c0_437 = arith.constant 0 : index
    %c0_438 = arith.constant 0 : index
    %c0_439 = arith.constant 0 : index
    %471 = vector.load %arg26[%c0_437, %c0_438, %c0_439] : memref<4x4x8xbf16, #tpu.memory_space<vmem>>, vector<1x4x8xbf16>
    %472 = vector.shape_cast %471 : vector<1x4x8xbf16> to vector<4x8xbf16>
    %cst_440 = arith.constant dense<0.000000e+00> : vector<4x160xf32>
    %473 = tpu.matmul %472, %470, %cst_440 {dimension_numbers = #tpu.dot_dimension_numbers<[1], [0], [0], [1], [0, 0, 1, 1], [], []>} : vector<4x8xbf16>, vector<8x160xbf16>, vector<4x160xf32> -> vector<4x160xf32>
    %c1_441 = arith.constant 1 : index
    %c0_442 = arith.constant 0 : index
    %c0_443 = arith.constant 0 : index
    %474 = vector.load %arg27[%c1_441, %c0_442, %c0_443] : memref<4x80x160xbf16, #tpu.memory_space<vmem>>, vector<1x80x160xbf16>
    %475 = vector.shape_cast %474 : vector<1x80x160xbf16> to vector<80x160xbf16>
    %cst_444 = arith.constant dense<0.000000e+00> : vector<8x160xf32>
    %476 = tpu.matmul %466, %475, %cst_444 {dimension_numbers = #tpu.dot_dimension_numbers<[1], [0], [0], [1], [0, 0, 1, 1], [], []>} : vector<8x80xbf16>, vector<80x160xbf16>, vector<8x160xf32> -> vector<8x160xf32>
    %477 = arith.truncf %476 : vector<8x160xf32> to vector<8x160xbf16>
    %c1_445 = arith.constant 1 : index
    %c0_446 = arith.constant 0 : index
    %c0_447 = arith.constant 0 : index
    %478 = vector.load %arg26[%c1_445, %c0_446, %c0_447] : memref<4x4x8xbf16, #tpu.memory_space<vmem>>, vector<1x4x8xbf16>
    %479 = vector.shape_cast %478 : vector<1x4x8xbf16> to vector<4x8xbf16>
    %cst_448 = arith.constant dense<0.000000e+00> : vector<4x160xf32>
    %480 = tpu.matmul %479, %477, %cst_448 {dimension_numbers = #tpu.dot_dimension_numbers<[1], [0], [0], [1], [0, 0, 1, 1], [], []>} : vector<4x8xbf16>, vector<8x160xbf16>, vector<4x160xf32> -> vector<4x160xf32>
    %481 = arith.addf %473, %480 : vector<4x160xf32>
    %c2_449 = arith.constant 2 : index
    %c0_450 = arith.constant 0 : index
    %c0_451 = arith.constant 0 : index
    %482 = vector.load %arg27[%c2_449, %c0_450, %c0_451] : memref<4x80x160xbf16, #tpu.memory_space<vmem>>, vector<1x80x160xbf16>
    %483 = vector.shape_cast %482 : vector<1x80x160xbf16> to vector<80x160xbf16>
    %cst_452 = arith.constant dense<0.000000e+00> : vector<8x160xf32>
    %484 = tpu.matmul %466, %483, %cst_452 {dimension_numbers = #tpu.dot_dimension_numbers<[1], [0], [0], [1], [0, 0, 1, 1], [], []>} : vector<8x80xbf16>, vector<80x160xbf16>, vector<8x160xf32> -> vector<8x160xf32>
    %485 = arith.truncf %484 : vector<8x160xf32> to vector<8x160xbf16>
    %c2_453 = arith.constant 2 : index
    %c0_454 = arith.constant 0 : index
    %c0_455 = arith.constant 0 : index
    %486 = vector.load %arg26[%c2_453, %c0_454, %c0_455] : memref<4x4x8xbf16, #tpu.memory_space<vmem>>, vector<1x4x8xbf16>
    %487 = vector.shape_cast %486 : vector<1x4x8xbf16> to vector<4x8xbf16>
    %cst_456 = arith.constant dense<0.000000e+00> : vector<4x160xf32>
    %488 = tpu.matmul %487, %485, %cst_456 {dimension_numbers = #tpu.dot_dimension_numbers<[1], [0], [0], [1], [0, 0, 1, 1], [], []>} : vector<4x8xbf16>, vector<8x160xbf16>, vector<4x160xf32> -> vector<4x160xf32>
    %489 = arith.addf %481, %488 : vector<4x160xf32>
    %c3_457 = arith.constant 3 : index
    %c0_458 = arith.constant 0 : index
    %c0_459 = arith.constant 0 : index
    %490 = vector.load %arg27[%c3_457, %c0_458, %c0_459] : memref<4x80x160xbf16, #tpu.memory_space<vmem>>, vector<1x80x160xbf16>
    %491 = vector.shape_cast %490 : vector<1x80x160xbf16> to vector<80x160xbf16>
    %cst_460 = arith.constant dense<0.000000e+00> : vector<8x160xf32>
    %492 = tpu.matmul %466, %491, %cst_460 {dimension_numbers = #tpu.dot_dimension_numbers<[1], [0], [0], [1], [0, 0, 1, 1], [], []>} : vector<8x80xbf16>, vector<80x160xbf16>, vector<8x160xf32> -> vector<8x160xf32>
    %493 = arith.truncf %492 : vector<8x160xf32> to vector<8x160xbf16>
    %c3_461 = arith.constant 3 : index
    %c0_462 = arith.constant 0 : index
    %c0_463 = arith.constant 0 : index
    %494 = vector.load %arg26[%c3_461, %c0_462, %c0_463] : memref<4x4x8xbf16, #tpu.memory_space<vmem>>, vector<1x4x8xbf16>
    %495 = vector.shape_cast %494 : vector<1x4x8xbf16> to vector<4x8xbf16>
    %cst_464 = arith.constant dense<0.000000e+00> : vector<4x160xf32>
    %496 = tpu.matmul %495, %493, %cst_464 {dimension_numbers = #tpu.dot_dimension_numbers<[1], [0], [0], [1], [0, 0, 1, 1], [], []>} : vector<4x8xbf16>, vector<8x160xbf16>, vector<4x160xf32> -> vector<4x160xf32>
    %497 = arith.addf %489, %496 : vector<4x160xf32>
    %c0_465 = arith.constant 0 : index
    %c0_466 = arith.constant 0 : index
    %498 = vector.load %arg28[%c0_465, %c0_466] : memref<4x1xf32, #tpu.memory_space<vmem>>, vector<4x1xf32>
    %499 = vector.broadcast %498 : vector<4x1xf32> to vector<4x160xf32>
    %500 = arith.addf %497, %499 : vector<4x160xf32>
    %cst_467 = arith.constant 0.000000e+00 : f32
    %501 = vector.broadcast %cst_467 : f32 to vector<4x160xf32>
    %502 = arith.maximumf %500, %501 : vector<4x160xf32>
    %503 = arith.truncf %502 : vector<4x160xf32> to vector<4x160xbf16>
    %c0_468 = arith.constant 0 : index
    %c0_469 = arith.constant 0 : index
    %c0_470 = arith.constant 0 : index
    %504 = vector.load %arg30[%c0_468, %c0_469, %c0_470] : memref<4x160x320xbf16, #tpu.memory_space<vmem>>, vector<1x160x320xbf16>
    %505 = vector.shape_cast %504 : vector<1x160x320xbf16> to vector<160x320xbf16>
    %cst_471 = arith.constant dense<0.000000e+00> : vector<4x320xf32>
    %506 = tpu.matmul %503, %505, %cst_471 {dimension_numbers = #tpu.dot_dimension_numbers<[1], [0], [0], [1], [0, 0, 1, 1], [], []>} : vector<4x160xbf16>, vector<160x320xbf16>, vector<4x320xf32> -> vector<4x320xf32>
    %507 = arith.truncf %506 : vector<4x320xf32> to vector<4x320xbf16>
    %c0_472 = arith.constant 0 : index
    %c0_473 = arith.constant 0 : index
    %c0_474 = arith.constant 0 : index
    %508 = vector.load %arg29[%c0_472, %c0_473, %c0_474] : memref<4x4x4xbf16, #tpu.memory_space<vmem>>, vector<1x4x4xbf16>
    %509 = vector.shape_cast %508 : vector<1x4x4xbf16> to vector<4x4xbf16>
    %cst_475 = arith.constant dense<0.000000e+00> : vector<4x320xf32>
    %510 = tpu.matmul %509, %507, %cst_475 {dimension_numbers = #tpu.dot_dimension_numbers<[1], [0], [0], [1], [0, 0, 1, 1], [], []>} : vector<4x4xbf16>, vector<4x320xbf16>, vector<4x320xf32> -> vector<4x320xf32>
    %c1_476 = arith.constant 1 : index
    %c0_477 = arith.constant 0 : index
    %c0_478 = arith.constant 0 : index
    %511 = vector.load %arg30[%c1_476, %c0_477, %c0_478] : memref<4x160x320xbf16, #tpu.memory_space<vmem>>, vector<1x160x320xbf16>
    %512 = vector.shape_cast %511 : vector<1x160x320xbf16> to vector<160x320xbf16>
    %cst_479 = arith.constant dense<0.000000e+00> : vector<4x320xf32>
    %513 = tpu.matmul %503, %512, %cst_479 {dimension_numbers = #tpu.dot_dimension_numbers<[1], [0], [0], [1], [0, 0, 1, 1], [], []>} : vector<4x160xbf16>, vector<160x320xbf16>, vector<4x320xf32> -> vector<4x320xf32>
    %514 = arith.truncf %513 : vector<4x320xf32> to vector<4x320xbf16>
    %c1_480 = arith.constant 1 : index
    %c0_481 = arith.constant 0 : index
    %c0_482 = arith.constant 0 : index
    %515 = vector.load %arg29[%c1_480, %c0_481, %c0_482] : memref<4x4x4xbf16, #tpu.memory_space<vmem>>, vector<1x4x4xbf16>
    %516 = vector.shape_cast %515 : vector<1x4x4xbf16> to vector<4x4xbf16>
    %cst_483 = arith.constant dense<0.000000e+00> : vector<4x320xf32>
    %517 = tpu.matmul %516, %514, %cst_483 {dimension_numbers = #tpu.dot_dimension_numbers<[1], [0], [0], [1], [0, 0, 1, 1], [], []>} : vector<4x4xbf16>, vector<4x320xbf16>, vector<4x320xf32> -> vector<4x320xf32>
    %518 = arith.addf %510, %517 : vector<4x320xf32>
    %c2_484 = arith.constant 2 : index
    %c0_485 = arith.constant 0 : index
    %c0_486 = arith.constant 0 : index
    %519 = vector.load %arg30[%c2_484, %c0_485, %c0_486] : memref<4x160x320xbf16, #tpu.memory_space<vmem>>, vector<1x160x320xbf16>
    %520 = vector.shape_cast %519 : vector<1x160x320xbf16> to vector<160x320xbf16>
    %cst_487 = arith.constant dense<0.000000e+00> : vector<4x320xf32>
    %521 = tpu.matmul %503, %520, %cst_487 {dimension_numbers = #tpu.dot_dimension_numbers<[1], [0], [0], [1], [0, 0, 1, 1], [], []>} : vector<4x160xbf16>, vector<160x320xbf16>, vector<4x320xf32> -> vector<4x320xf32>
    %522 = arith.truncf %521 : vector<4x320xf32> to vector<4x320xbf16>
    %c2_488 = arith.constant 2 : index
    %c0_489 = arith.constant 0 : index
    %c0_490 = arith.constant 0 : index
    %523 = vector.load %arg29[%c2_488, %c0_489, %c0_490] : memref<4x4x4xbf16, #tpu.memory_space<vmem>>, vector<1x4x4xbf16>
    %524 = vector.shape_cast %523 : vector<1x4x4xbf16> to vector<4x4xbf16>
    %cst_491 = arith.constant dense<0.000000e+00> : vector<4x320xf32>
    %525 = tpu.matmul %524, %522, %cst_491 {dimension_numbers = #tpu.dot_dimension_numbers<[1], [0], [0], [1], [0, 0, 1, 1], [], []>} : vector<4x4xbf16>, vector<4x320xbf16>, vector<4x320xf32> -> vector<4x320xf32>
    %526 = arith.addf %518, %525 : vector<4x320xf32>
    %c3_492 = arith.constant 3 : index
    %c0_493 = arith.constant 0 : index
    %c0_494 = arith.constant 0 : index
    %527 = vector.load %arg30[%c3_492, %c0_493, %c0_494] : memref<4x160x320xbf16, #tpu.memory_space<vmem>>, vector<1x160x320xbf16>
    %528 = vector.shape_cast %527 : vector<1x160x320xbf16> to vector<160x320xbf16>
    %cst_495 = arith.constant dense<0.000000e+00> : vector<4x320xf32>
    %529 = tpu.matmul %503, %528, %cst_495 {dimension_numbers = #tpu.dot_dimension_numbers<[1], [0], [0], [1], [0, 0, 1, 1], [], []>} : vector<4x160xbf16>, vector<160x320xbf16>, vector<4x320xf32> -> vector<4x320xf32>
    %530 = arith.truncf %529 : vector<4x320xf32> to vector<4x320xbf16>
    %c3_496 = arith.constant 3 : index
    %c0_497 = arith.constant 0 : index
    %c0_498 = arith.constant 0 : index
    %531 = vector.load %arg29[%c3_496, %c0_497, %c0_498] : memref<4x4x4xbf16, #tpu.memory_space<vmem>>, vector<1x4x4xbf16>
    %532 = vector.shape_cast %531 : vector<1x4x4xbf16> to vector<4x4xbf16>
    %cst_499 = arith.constant dense<0.000000e+00> : vector<4x320xf32>
    %533 = tpu.matmul %532, %530, %cst_499 {dimension_numbers = #tpu.dot_dimension_numbers<[1], [0], [0], [1], [0, 0, 1, 1], [], []>} : vector<4x4xbf16>, vector<4x320xbf16>, vector<4x320xf32> -> vector<4x320xf32>
    %534 = arith.addf %526, %533 : vector<4x320xf32>
    %535 = math.tanh %534 : vector<4x320xf32>
    %c0_500 = arith.constant 0 : index
    %c0_501 = arith.constant 0 : index
    %c0_502 = arith.constant 0 : index
    %536 = vector.load %arg31[%c0_500, %c0_501, %c0_502] : memref<1x4x320xf32, #tpu.memory_space<vmem>>, vector<1x4x320xf32>
    %537 = vector.shape_cast %536 : vector<1x4x320xf32> to vector<4x320xf32>
    %538 = vector.shape_cast %535 : vector<4x320xf32> to vector<1x4x320xf32>
    tpu.vector_store %arg31[%c0_500, %c0_501, %c0_502], %538 {strides = array<i32>} : memref<1x4x320xf32, #tpu.memory_space<vmem>>, vector<1x4x320xf32>,
    return
  }
  func.func @transform_0(%arg0: i32) -> (i32, i32, i32) {
    %c0_i32 = arith.constant 0 : i32
    %c0_i32_0 = arith.constant 0 : i32
    %c0_i32_1 = arith.constant 0 : i32
    return %arg0, %c0_i32, %c0_i32_0 : i32, i32, i32
  }
  func.func @transform_1(%arg0: i32) -> (i32, i32, i32) {
    %c0_i32 = arith.constant 0 : i32
    %c0_i32_0 = arith.constant 0 : i32
    %c0_i32_1 = arith.constant 0 : i32
    %c0_i32_2 = arith.constant 0 : i32
    return %c0_i32, %c0_i32_0, %c0_i32_1 : i32, i32, i32
  }
  func.func @transform_2(%arg0: i32) -> (i32, i32, i32) {
    %c0_i32 = arith.constant 0 : i32
    %c0_i32_0 = arith.constant 0 : i32
    %c0_i32_1 = arith.constant 0 : i32
    %c0_i32_2 = arith.constant 0 : i32
    return %c0_i32, %c0_i32_0, %c0_i32_1 : i32, i32, i32
  }
  func.func @transform_3(%arg0: i32) -> (i32, i32, i32) {
    %c0_i32 = arith.constant 0 : i32
    %c0_i32_0 = arith.constant 0 : i32
    %c0_i32_1 = arith.constant 0 : i32
    %c0_i32_2 = arith.constant 0 : i32
    return %c0_i32, %c0_i32_0, %c0_i32_1 : i32, i32, i32
  }
  func.func @transform_4(%arg0: i32) -> (i32, i32, i32) {
    %c0_i32 = arith.constant 0 : i32
    %c0_i32_0 = arith.constant 0 : i32
    %c0_i32_1 = arith.constant 0 : i32
    %c0_i32_2 = arith.constant 0 : i32
    return %c0_i32, %c0_i32_0, %c0_i32_1 : i32, i32, i32
  }
  func.func @transform_5(%arg0: i32) -> (i32, i32, i32) {
    %c0_i32 = arith.constant 0 : i32
    %c0_i32_0 = arith.constant 0 : i32
    %c0_i32_1 = arith.constant 0 : i32
    %c0_i32_2 = arith.constant 0 : i32
    return %c0_i32, %c0_i32_0, %c0_i32_1 : i32, i32, i32
  }
  func.func @transform_6(%arg0: i32) -> (i32, i32, i32) {
    %c0_i32 = arith.constant 0 : i32
    %c0_i32_0 = arith.constant 0 : i32
    %c0_i32_1 = arith.constant 0 : i32
    %c0_i32_2 = arith.constant 0 : i32
    return %c0_i32, %c0_i32_0, %c0_i32_1 : i32, i32, i32
  }
  func.func @transform_7(%arg0: i32) -> (i32, i32, i32) {
    %c0_i32 = arith.constant 0 : i32
    %c0_i32_0 = arith.constant 0 : i32
    %c0_i32_1 = arith.constant 0 : i32
    %c0_i32_2 = arith.constant 0 : i32
    return %c0_i32, %c0_i32_0, %c0_i32_1 : i32, i32, i32
  }
  func.func @transform_8(%arg0: i32) -> (i32, i32, i32) {
    %c0_i32 = arith.constant 0 : i32
    %c0_i32_0 = arith.constant 0 : i32
    %c0_i32_1 = arith.constant 0 : i32
    %c0_i32_2 = arith.constant 0 : i32
    return %c0_i32, %c0_i32_0, %c0_i32_1 : i32, i32, i32
  }
  func.func @transform_9(%arg0: i32) -> (i32, i32, i32) {
    %c0_i32 = arith.constant 0 : i32
    %c0_i32_0 = arith.constant 0 : i32
    %c0_i32_1 = arith.constant 0 : i32
    %c0_i32_2 = arith.constant 0 : i32
    return %c0_i32, %c0_i32_0, %c0_i32_1 : i32, i32, i32
  }
  func.func @transform_10(%arg0: i32) -> (i32, i32, i32) {
    %c0_i32 = arith.constant 0 : i32
    %c0_i32_0 = arith.constant 0 : i32
    %c0_i32_1 = arith.constant 0 : i32
    %c0_i32_2 = arith.constant 0 : i32
    return %c0_i32, %c0_i32_0, %c0_i32_1 : i32, i32, i32
  }
  func.func @transform_11(%arg0: i32) -> (i32, i32, i32) {
    %c0_i32 = arith.constant 0 : i32
    %c0_i32_0 = arith.constant 0 : i32
    %c0_i32_1 = arith.constant 0 : i32
    %c0_i32_2 = arith.constant 0 : i32
    return %c0_i32, %c0_i32_0, %c0_i32_1 : i32, i32, i32
  }
  func.func @transform_12(%arg0: i32) -> (i32, i32, i32) {
    %c0_i32 = arith.constant 0 : i32
    %c0_i32_0 = arith.constant 0 : i32
    %c0_i32_1 = arith.constant 0 : i32
    %c0_i32_2 = arith.constant 0 : i32
    return %c0_i32, %c0_i32_0, %c0_i32_1 : i32, i32, i32
  }
  func.func @transform_13(%arg0: i32) -> (i32, i32, i32) {
    %c0_i32 = arith.constant 0 : i32
    %c0_i32_0 = arith.constant 0 : i32
    %c0_i32_1 = arith.constant 0 : i32
    %c0_i32_2 = arith.constant 0 : i32
    return %c0_i32, %c0_i32_0, %c0_i32_1 : i32, i32, i32
  }
  func.func @transform_14(%arg0: i32) -> (i32, i32, i32) {
    %c0_i32 = arith.constant 0 : i32
    %c0_i32_0 = arith.constant 0 : i32
    %c0_i32_1 = arith.constant 0 : i32
    %c0_i32_2 = arith.constant 0 : i32
    return %c0_i32, %c0_i32_0, %c0_i32_1 : i32, i32, i32
  }
  func.func @transform_15(%arg0: i32) -> (i32, i32) {
    %c0_i32 = arith.constant 0 : i32
    %c0_i32_0 = arith.constant 0 : i32
    %c0_i32_1 = arith.constant 0 : i32
    return %c0_i32, %c0_i32_0 : i32, i32
  }
  func.func @transform_16(%arg0: i32) -> (i32, i32, i32) {
    %c0_i32 = arith.constant 0 : i32
    %c0_i32_0 = arith.constant 0 : i32
    %c0_i32_1 = arith.constant 0 : i32
    %c0_i32_2 = arith.constant 0 : i32
    return %c0_i32, %c0_i32_0, %c0_i32_1 : i32, i32, i32
  }
  func.func @transform_17(%arg0: i32) -> (i32, i32, i32) {
    %c0_i32 = arith.constant 0 : i32
    %c0_i32_0 = arith.constant 0 : i32
    %c0_i32_1 = arith.constant 0 : i32
    %c0_i32_2 = arith.constant 0 : i32
    return %c0_i32, %c0_i32_0, %c0_i32_1 : i32, i32, i32
  }
  func.func @transform_18(%arg0: i32) -> (i32, i32) {
    %c0_i32 = arith.constant 0 : i32
    %c0_i32_0 = arith.constant 0 : i32
    %c0_i32_1 = arith.constant 0 : i32
    return %c0_i32, %c0_i32_0 : i32, i32
  }
  func.func @transform_19(%arg0: i32) -> (i32, i32, i32) {
    %c0_i32 = arith.constant 0 : i32
    %c0_i32_0 = arith.constant 0 : i32
    %c0_i32_1 = arith.constant 0 : i32
    %c0_i32_2 = arith.constant 0 : i32
    return %c0_i32, %c0_i32_0, %c0_i32_1 : i32, i32, i32
  }
  func.func @transform_20(%arg0: i32) -> (i32, i32, i32) {
    %c0_i32 = arith.constant 0 : i32
    %c0_i32_0 = arith.constant 0 : i32
    %c0_i32_1 = arith.constant 0 : i32
    %c0_i32_2 = arith.constant 0 : i32
    return %c0_i32, %c0_i32_0, %c0_i32_1 : i32, i32, i32
  }
  func.func @transform_21(%arg0: i32) -> (i32, i32) {
    %c0_i32 = arith.constant 0 : i32
    %c0_i32_0 = arith.constant 0 : i32
    %c0_i32_1 = arith.constant 0 : i32
    return %c0_i32, %c0_i32_0 : i32, i32
  }
  func.func @transform_22(%arg0: i32) -> (i32, i32, i32) {
    %c0_i32 = arith.constant 0 : i32
    %c0_i32_0 = arith.constant 0 : i32
    %c0_i32_1 = arith.constant 0 : i32
    %c0_i32_2 = arith.constant 0 : i32
    return %c0_i32, %c0_i32_0, %c0_i32_1 : i32, i32, i32
  }
  func.func @transform_23(%arg0: i32) -> (i32, i32, i32) {
    %c0_i32 = arith.constant 0 : i32
    %c0_i32_0 = arith.constant 0 : i32
    %c0_i32_1 = arith.constant 0 : i32
    %c0_i32_2 = arith.constant 0 : i32
    return %c0_i32, %c0_i32_0, %c0_i32_1 : i32, i32, i32
  }
  func.func @transform_24(%arg0: i32) -> (i32, i32) {
    %c0_i32 = arith.constant 0 : i32
    %c0_i32_0 = arith.constant 0 : i32
    %c0_i32_1 = arith.constant 0 : i32
    return %c0_i32, %c0_i32_0 : i32, i32
  }
  func.func @transform_25(%arg0: i32) -> (i32, i32, i32) {
    %c0_i32 = arith.constant 0 : i32
    %c0_i32_0 = arith.constant 0 : i32
    %c0_i32_1 = arith.constant 0 : i32
    %c0_i32_2 = arith.constant 0 : i32
    return %c0_i32, %c0_i32_0, %c0_i32_1 : i32, i32, i32
  }
  func.func @transform_26(%arg0: i32) -> (i32, i32, i32) {
    %c0_i32 = arith.constant 0 : i32
    %c0_i32_0 = arith.constant 0 : i32
    %c0_i32_1 = arith.constant 0 : i32
    %c0_i32_2 = arith.constant 0 : i32
    return %c0_i32, %c0_i32_0, %c0_i32_1 : i32, i32, i32
  }
  func.func @transform_27(%arg0: i32) -> (i32, i32) {
    %c0_i32 = arith.constant 0 : i32
    %c0_i32_0 = arith.constant 0 : i32
    %c0_i32_1 = arith.constant 0 : i32
    return %c0_i32, %c0_i32_0 : i32, i32
  }
  func.func @transform_28(%arg0: i32) -> (i32, i32, i32) {
    %c0_i32 = arith.constant 0 : i32
    %c0_i32_0 = arith.constant 0 : i32
    %c0_i32_1 = arith.constant 0 : i32
    %c0_i32_2 = arith.constant 0 : i32
    return %c0_i32, %c0_i32_0, %c0_i32_1 : i32, i32, i32
  }
  func.func @transform_29(%arg0: i32) -> (i32, i32, i32) {
    %c0_i32 = arith.constant 0 : i32
    %c0_i32_0 = arith.constant 0 : i32
    %c0_i32_1 = arith.constant 0 : i32
    %c0_i32_2 = arith.constant 0 : i32
    return %c0_i32, %c0_i32_0, %c0_i32_1 : i32, i32, i32
  }
  func.func @transform_30(%arg0: i32) -> (i32, i32, i32) {
    %c0_i32 = arith.constant 0 : i32
    %c0_i32_0 = arith.constant 0 : i32
    %c0_i32_1 = arith.constant 0 : i32
    return %arg0, %c0_i32, %c0_i32_0 : i32, i32, i32
  }
  func.func @transform_31(%arg0: i32) -> (i32, i32, i32) {
    %c0_i32 = arith.constant 0 : i32
    %c0_i32_0 = arith.constant 0 : i32
    %c0_i32_1 = arith.constant 0 : i32
    return %arg0, %c0_i32, %c0_i32_0 : i32, i32, i32
  }
}

</mosaic_0001>

<llo_original>
// kernel: generator_forward.1
$region0: #{generator_forward.1}
  #allocation0 [shape = 'u32[]', space=smem, size = 0x4, offset = 0x4, fixed_abs, tag = 'smem constant byte address 0x4 - core index']
  #allocation1 [shape = 'u32[72,128]{1,0:T(1,128)}', space=vmem, size = 0x9000, scoped, tag = 'internal scratch']
  %s0 = inlined_call_operand.smem [shape: u32[32], index: -1, kind: input, shape index: {}]
  %s1 = sld [smem:[%s0]]
  %s2 = scalar_lea.smem %s0, 1
  %s3 = sld [smem:[%s2]]
  %s4 = scalar_lea.smem %s0, 2
  %s5 = sld [smem:[%s4]]
  %s6 = scalar_lea.smem %s0, 3
  %s7 = sld [smem:[%s6]]
  %s8 = scalar_lea.smem %s0, 4
  %s9 = sld [smem:[%s8]]
  %s10 = scalar_lea.smem %s0, 5
  %s11 = sld [smem:[%s10]]
  %s12 = scalar_lea.smem %s0, 6
  %s13 = sld [smem:[%s12]]
  %s14 = scalar_lea.smem %s0, 7
  %s15 = sld [smem:[%s14]]
  %s16 = scalar_lea.smem %s0, 8
  %s17 = sld [smem:[%s16]]
  %s18 = scalar_lea.smem %s0, 9
  %s19 = sld [smem:[%s18]]
  %s20 = scalar_lea.smem %s0, 10
  %s21 = sld [smem:[%s20]]
  %s22 = scalar_lea.smem %s0, 11
  %s23 = sld [smem:[%s22]]
  %s24 = scalar_lea.smem %s0, 12
  %s25 = sld [smem:[%s24]]
  %s26 = scalar_lea.smem %s0, 13
  %s27 = sld [smem:[%s26]]
  %s28 = scalar_lea.smem %s0, 14
  %s29 = sld [smem:[%s28]]
  %s30 = scalar_lea.smem %s0, 15
  %s31 = sld [smem:[%s30]]
  %s32 = scalar_lea.smem %s0, 16
  %s33 = sld [smem:[%s32]]
  %s34 = scalar_lea.smem %s0, 17
  %s35 = sld [smem:[%s34]]
  %s36 = scalar_lea.smem %s0, 18
  %s37 = sld [smem:[%s36]]
  %s38 = scalar_lea.smem %s0, 19
  %s39 = sld [smem:[%s38]]
  %s40 = scalar_lea.smem %s0, 20
  %s41 = sld [smem:[%s40]]
  %s42 = scalar_lea.smem %s0, 21
  %s43 = sld [smem:[%s42]]
  %s44 = scalar_lea.smem %s0, 22
  %s45 = sld [smem:[%s44]]
  %s46 = scalar_lea.smem %s0, 23
  %s47 = sld [smem:[%s46]]
  %s48 = scalar_lea.smem %s0, 24
  %s49 = sld [smem:[%s48]]
  %s50 = scalar_lea.smem %s0, 25
  %s51 = sld [smem:[%s50]]
  %s52 = scalar_lea.smem %s0, 26
  %s53 = sld [smem:[%s52]]
  %s54 = scalar_lea.smem %s0, 27
  %s55 = sld [smem:[%s54]]
  %s56 = scalar_lea.smem %s0, 28
  %s57 = sld [smem:[%s56]]
  %s58 = scalar_lea.smem %s0, 29
  %s59 = sld [smem:[%s58]]
  %s60 = scalar_lea.smem %s0, 30
  %s61 = sld [smem:[%s60]]
  %s62 = scalar_lea.smem %s0, 31
  %s63 = sld [smem:[%s62]]
  %64 = xla_tuple %s61, %s63
  %s65 = sld [smem:[#allocation0]]
  $region273: #{generator_forward.1} parent=0
    _
  %s67 = ssub.s32 1, %s65
  %s68 = scalar_select 0, %s67, %s65
  $region1: #{generator_forward.1} parent=0
    #allocation2 [shape = 'u8[12288]{0}', space=vmem, size = 0x3000, scoped, tag = 'input window, operand 0']
    #allocation3 [shape = 's32[2]{0}', space=sflag, size = 0x8, scoped, tag = 'scoped memory for generator_forward.1']
    #allocation4 [shape = 's32[2]{0}', space=sflag, size = 0x8, scoped, tag = 'scoped memory for generator_forward.1']
    #allocation5 [shape = 'u8[4096]{0}', space=vmem, size = 0x1000, scoped, tag = 'input window, operand 1, single buffered']
    #allocation6 [shape = 's32[1]{0}', space=sflag, size = 0x4, scoped, tag = 'scoped memory for generator_forward.1']
    #allocation7 [shape = 'u8[655360]{0}', space=vmem, size = 0xa0000, scoped, tag = 'input window, operand 2, single buffered']
    #allocation8 [shape = 'u8[8192]{0}', space=vmem, size = 0x2000, scoped, tag = 'input window, operand 3, single buffered']
    #allocation9 [shape = 's32[1]{0}', space=sflag, size = 0x4, scoped, tag = 'scoped memory for generator_forward.1']
    #allocation10 [shape = 'u8[163840]{0}', space=vmem, size = 0x28000, scoped, tag = 'input window, operand 4, single buffered']
    #allocation11 [shape = 'u8[16384]{0}', space=vmem, size = 0x4000, scoped, tag = 'input window, operand 5, single buffered']
    #allocation12 [shape = 's32[1]{0}', space=sflag, size = 0x4, scoped, tag = 'scoped memory for generator_forward.1']
    #allocation13 [shape = 'u8[81920]{0}', space=vmem, size = 0x14000, scoped, tag = 'input window, operand 6, single buffered']
    #allocation14 [shape = 'u8[32768]{0}', space=vmem, size = 0x8000, scoped, tag = 'input window, operand 7, single buffered']
    #allocation15 [shape = 's32[1]{0}', space=sflag, size = 0x4, scoped, tag = 'scoped memory for generator_forward.1']
    #allocation16 [shape = 'u8[40960]{0}', space=vmem, size = 0xa000, scoped, tag = 'input window, operand 8, single buffered']
    #allocation17 [shape = 'u8[65536]{0}', space=vmem, size = 0x10000, scoped, tag = 'input window, operand 9, single buffered']
    #allocation18 [shape = 's32[1]{0}', space=sflag, size = 0x4, scoped, tag = 'scoped memory for generator_forward.1']
    #allocation19 [shape = 'u8[24576]{0}', space=vmem, size = 0x6000, scoped, tag = 'input window, operand 10, single buffered']
    #allocation20 [shape = 'u8[20480]{0}', space=vmem, size = 0x5000, scoped, tag = 'input window, operand 11, single buffered']
    #allocation21 [shape = 's32[1]{0}', space=sflag, size = 0x4, scoped, tag = 'scoped memory for generator_forward.1']
    #allocation22 [shape = 'u8[40960]{0}', space=vmem, size = 0xa000, scoped, tag = 'input window, operand 12, single buffered']
    #allocation23 [shape = 'u8[163840]{0}', space=vmem, size = 0x28000, scoped, tag = 'input window, operand 13, single buffered']
    #allocation24 [shape = 's32[1]{0}', space=sflag, size = 0x4, scoped, tag = 'scoped memory for generator_forward.1']
    #allocation25 [shape = 'u8[5120]{0}', space=vmem, size = 0x1400, scoped, tag = 'input window, operand 14, single buffered']
    #allocation26 [shape = 'u8[32768]{0}', space=vmem, size = 0x8000, scoped, tag = 'input window, operand 15, single buffered']
    #allocation27 [shape = 's32[1]{0}', space=sflag, size = 0x4, scoped, tag = 'scoped memory for generator_forward.1']
    #allocation28 [shape = 'u8[32768]{0}', space=vmem, size = 0x8000, scoped, tag = 'input window, operand 16, single buffered']
    #allocation29 [shape = 'u8[16384]{0}', space=vmem, size = 0x4000, scoped, tag = 'input window, operand 17, single buffered']
    #allocation30 [shape = 's32[1]{0}', space=sflag, size = 0x4, scoped, tag = 'scoped memory for generator_forward.1']
    #allocation31 [shape = 'u8[16384]{0}', space=vmem, size = 0x4000, scoped, tag = 'input window, operand 18, single buffered']
    #allocation32 [shape = 'u8[16384]{0}', space=vmem, size = 0x4000, scoped, tag = 'input window, operand 19, single buffered']
    #allocation33 [shape = 's32[1]{0}', space=sflag, size = 0x4, scoped, tag = 'scoped memory for generator_forward.1']
    #allocation34 [shape = 'u8[24576]{0}', space=vmem, size = 0x6000, scoped, tag = 'input window, operand 20, single buffered']
    #allocation35 [shape = 'u8[8192]{0}', space=vmem, size = 0x2000, scoped, tag = 'input window, operand 21, single buffered']
    #allocation36 [shape = 's32[1]{0}', space=sflag, size = 0x4, scoped, tag = 'scoped memory for generator_forward.1']
    #allocation37 [shape = 'u8[40960]{0}', space=vmem, size = 0xa000, scoped, tag = 'input window, operand 23, single buffered']
    #allocation38 [shape = 'u8[4096]{0}', space=vmem, size = 0x1000, scoped, tag = 'input window, operand 24, single buffered']
    #allocation39 [shape = 's32[1]{0}', space=sflag, size = 0x4, scoped, tag = 'scoped memory for generator_forward.1']
    #allocation40 [shape = 'u8[4096]{0}', space=vmem, size = 0x1000, scoped, tag = 'input window, operand 25, single buffered']
    #allocation41 [shape = 'u8[163840]{0}', space=vmem, size = 0x28000, scoped, tag = 'input window, operand 26, single buffered']
    #allocation42 [shape = 's32[1]{0}', space=sflag, size = 0x4, scoped, tag = 'scoped memory for generator_forward.1']
    #allocation43 [shape = 'u8[2048]{0}', space=vmem, size = 0x800, scoped, tag = 'input window, operand 27, single buffered']
    #allocation44 [shape = 'u8[491520]{0}', space=vmem, size = 0x78000, scoped, tag = 'input window, operand 29, single buffered']
    #allocation45 [shape = 's32[1]{0}', space=sflag, size = 0x4, scoped, tag = 'scoped memory for generator_forward.1']
    #allocation46 [shape = 'u8[12288]{0}', space=vmem, size = 0x3000, scoped, tag = 'output window, operand 0']
    %69 = vsyncpa [#allocation3], 0
    %s70 = scalar_lea.sflag [#allocation3], 1
    %71 = vsyncpa %s70, 0
    %72 = vsyncpa [#allocation6], 0
    %73 = vsyncpa [#allocation9], 0
    %74 = vsyncpa [#allocation12], 0
    %75 = vsyncpa [#allocation15], 0
    %76 = vsyncpa [#allocation18], 0
    %77 = vsyncpa [#allocation21], 0
    %78 = vsyncpa [#allocation24], 0
    %79 = vsyncpa [#allocation27], 0
    %80 = vsyncpa [#allocation30], 0
    %81 = vsyncpa [#allocation33], 0
    %82 = vsyncpa [#allocation36], 0
    %83 = vsyncpa [#allocation39], 0
    %84 = vsyncpa [#allocation42], 0
    %85 = vsyncpa [#allocation45], 0
    %86 = vsyncpa [#allocation4], 0
    %s87 = scalar_lea.sflag [#allocation4], 1
    %88 = vsyncpa %s87, 0
    loop: start=0, step=1, limit=4
    $region2: #{generator_forward.1} parent=1 // loop_pre_header
      _
    $region3: #{generator_forward.1} parent=1 // loop_header
      %s90 = sphi 0, %s94
      %p91 = scmp.ge.s32.totalorder %s90, 4
      %s100 = sphi 0, %s102
      %s103 = sphi 0, %s100
      %s104 = sphi 0, %s103
      %s120 = sphi 0, %s104
      %s124 = sphi 0, %s124
      %s126 = sphi 0, %s124
      %s127 = sphi 0, %s126
      %s141 = sphi 0, %s127
      %s145 = sphi 0, %s145
      %s147 = sphi 0, %s145
      %s148 = sphi 0, %s147
      %s162 = sphi 0, %s148
      %s166 = sphi 0, %s166
      %s168 = sphi 0, %s166
      %s169 = sphi 0, %s168
      %s183 = sphi 0, %s169
      %s187 = sphi 0, %s187
      %s189 = sphi 0, %s187
      %s190 = sphi 0, %s189
      %s204 = sphi 0, %s190
      %s208 = sphi 0, %s208
      %s210 = sphi 0, %s208
      %s211 = sphi 0, %s210
      %s225 = sphi 0, %s211
      %s229 = sphi 0, %s229
      %s231 = sphi 0, %s229
      %s232 = sphi 0, %s231
      %s246 = sphi 0, %s232
      %s250 = sphi 0, %s250
      %s252 = sphi 0, %s250
      %s253 = sphi 0, %s252
      %s267 = sphi 0, %s253
      %s271 = sphi 0, %s271
      %s273 = sphi 0, %s271
      %s274 = sphi 0, %s273
      %s288 = sphi 0, %s274
      %s292 = sphi 0, %s292
      %s294 = sphi 0, %s292
      %s295 = sphi 0, %s294
      %s309 = sphi 0, %s295
      %s313 = sphi 0, %s313
      %s315 = sphi 0, %s313
      %s316 = sphi 0, %s315
      %s330 = sphi 0, %s316
      %s334 = sphi 0, %s334
      %s336 = sphi 0, %s334
      %s337 = sphi 0, %s336
      %s351 = sphi 0, %s337
      %s355 = sphi 0, %s355
      %s357 = sphi 0, %s355
      %s358 = sphi 0, %s357
      %s372 = sphi 0, %s358
      %s376 = sphi 0, %s376
      %s378 = sphi 0, %s376
      %s379 = sphi 0, %s378
      %s393 = sphi 0, %s379
      %s397 = sphi 0, %s397
      %s399 = sphi 0, %s397
      %s400 = sphi 0, %s399
      %s414 = sphi 0, %s400
      %s418 = sphi 0, %s418
      %s420 = sphi 0, %s418
      %s421 = sphi 0, %s420
      %s435 = sphi 0, %s421
      %s439 = sphi 0, %s439
      %s441 = sphi 0, %s439
      %s442 = sphi 0, %s441
      %s456 = sphi 0, %s442
      %s460 = sphi 0, %s460
      %s462 = sphi 0, %s460
      %s463 = sphi 0, %s462
      %s477 = sphi 0, %s463
      %s481 = sphi 0, %s481
      %s483 = sphi 0, %s481
      %s484 = sphi 0, %s483
      %s498 = sphi 0, %s484
      %s502 = sphi 0, %s502
      %s504 = sphi 0, %s502
      %s505 = sphi 0, %s504
      %s519 = sphi 0, %s505
      %s523 = sphi 0, %s523
      %s525 = sphi 0, %s523
      %s526 = sphi 0, %s525
      %s540 = sphi 0, %s526
      %s544 = sphi 0, %s544
      %s546 = sphi 0, %s544
      %s547 = sphi 0, %s546
      %s561 = sphi 0, %s547
      %s565 = sphi 0, %s565
      %s567 = sphi 0, %s565
      %s568 = sphi 0, %s567
      %s582 = sphi 0, %s568
      %s586 = sphi 0, %s586
      %s588 = sphi 0, %s586
      %s589 = sphi 0, %s588
      %s603 = sphi 0, %s589
      %s607 = sphi 0, %s607
      %s609 = sphi 0, %s607
      %s610 = sphi 0, %s609
      %s624 = sphi 0, %s610
      %s628 = sphi 0, %s628
      %s630 = sphi 0, %s628
      %s631 = sphi 0, %s630
      %s645 = sphi 0, %s631
      %s649 = sphi 0, %s649
      %s651 = sphi 0, %s649
      %s652 = sphi 0, %s651
      %s666 = sphi 0, %s652
      %s670 = sphi 0, %s670
      %s672 = sphi 0, %s670
      %s673 = sphi 0, %s672
      %s687 = sphi 0, %s673
      %s691 = sphi 0, %s691
      %s693 = sphi 0, %s691
      %s694 = sphi 0, %s693
      %s708 = sphi 0, %s694
      %s712 = sphi 0, %s712
      %s714 = sphi 0, %s712
      %s715 = sphi 0, %s714
      %s729 = sphi 0, %s715
      %s735 = sphi 0, %s737
      %s738 = sphi 0, %s735
      %s739 = sphi 0, %s738
      %s755 = sphi 0, %s739
      %s761 = sphi 0, %s763
      %s764 = sphi 0, %s761
      %s765 = sphi 0, %s764
      %s781 = sphi 0, %s765
    $region4: #{generator_forward.1} parent=1 // loop_header_branch
      %93 = sbr.rel (%p91) target = $region8
    $region5: #{generator_forward.1} parent=1 // loop_body
      %s95 = ssub.s32 %s90, 1
      %s96 = ssub.s32 %s90, 2
      %s97 = sadd.s32 %s90, 1
      %s98 = ssub.s32 %s90, %s97
      %p99 = scmp.eq.s32.totalorder %s98, 0
      %s101 = sadd.s32 %s100, 1
      %s102 = scalar_select %p99, %s100, %s101
      %p105 = pneg %p99
      %p106 = scmp.eq.s32.totalorder %s90, 1
      %p107 = por %p105, %p106
      %p108 = scmp.ne.s32.totalorder %s100, %s103
      %p109 = scmp.eq.s32.totalorder %s90, 0
      %p110 = por %p108, %p109
      %p111 = scmp.ne.s32.totalorder %s100, %s103
      %p112 = scmp.eq.s32.totalorder %s95, 1
      %p113 = por %p111, %p112
      %p114 = scmp.ne.s32.totalorder %s103, %s104
      %p115 = scmp.eq.s32.totalorder %s95, 0
      %p116 = por %p114, %p115
      %p117 = scmp.ne.s32.totalorder %s103, %s104
      %p118 = scmp.eq.s32.totalorder %s96, 1
      %p119 = por %p117, %p118
      %p121 = scmp.ne.s32.totalorder %s104, %s120
      %p122 = scmp.eq.s32.totalorder %s96, 0
      %p123 = por %p121, %p122
      %s125 = sadd.s32 %s124, 1
      %p128 = scmp.eq.s32.totalorder %s90, 1
      %p129 = scmp.ne.s32.totalorder %s124, %s126
      %p130 = scmp.eq.s32.totalorder %s90, 0
      %p131 = por %p129, %p130
      %p132 = scmp.ne.s32.totalorder %s124, %s126
      %p133 = scmp.eq.s32.totalorder %s95, 1
      %p134 = por %p132, %p133
      %p135 = scmp.ne.s32.totalorder %s126, %s127
      %p136 = scmp.eq.s32.totalorder %s95, 0
      %p137 = por %p135, %p136
      %p138 = scmp.ne.s32.totalorder %s126, %s127
      %p139 = scmp.eq.s32.totalorder %s96, 1
      %p140 = por %p138, %p139
      %p142 = scmp.ne.s32.totalorder %s127, %s141
      %p143 = scmp.eq.s32.totalorder %s96, 0
      %p144 = por %p142, %p143
      %s146 = sadd.s32 %s145, 1
      %p149 = scmp.eq.s32.totalorder %s90, 1
      %p150 = scmp.ne.s32.totalorder %s145, %s147
      %p151 = scmp.eq.s32.totalorder %s90, 0
      %p152 = por %p150, %p151
      %p153 = scmp.ne.s32.totalorder %s145, %s147
      %p154 = scmp.eq.s32.totalorder %s95, 1
      %p155 = por %p153, %p154
      %p156 = scmp.ne.s32.totalorder %s147, %s148
      %p157 = scmp.eq.s32.totalorder %s95, 0
      %p158 = por %p156, %p157
      %p159 = scmp.ne.s32.totalorder %s147, %s148
      %p160 = scmp.eq.s32.totalorder %s96, 1
      %p161 = por %p159, %p160
      %p163 = scmp.ne.s32.totalorder %s148, %s162
      %p164 = scmp.eq.s32.totalorder %s96, 0
      %p165 = por %p163, %p164
      %s167 = sadd.s32 %s166, 1
      %p170 = scmp.eq.s32.totalorder %s90, 1
      %p171 = scmp.ne.s32.totalorder %s166, %s168
      %p172 = scmp.eq.s32.totalorder %s90, 0
      %p173 = por %p171, %p172
      %p174 = scmp.ne.s32.totalorder %s166, %s168
      %p175 = scmp.eq.s32.totalorder %s95, 1
      %p176 = por %p174, %p175
      %p177 = scmp.ne.s32.totalorder %s168, %s169
      %p178 = scmp.eq.s32.totalorder %s95, 0
      %p179 = por %p177, %p178
      %p180 = scmp.ne.s32.totalorder %s168, %s169
      %p181 = scmp.eq.s32.totalorder %s96, 1
      %p182 = por %p180, %p181
      %p184 = scmp.ne.s32.totalorder %s169, %s183
      %p185 = scmp.eq.s32.totalorder %s96, 0
      %p186 = por %p184, %p185
      %s188 = sadd.s32 %s187, 1
      %p191 = scmp.eq.s32.totalorder %s90, 1
      %p192 = scmp.ne.s32.totalorder %s187, %s189
      %p193 = scmp.eq.s32.totalorder %s90, 0
      %p194 = por %p192, %p193
      %p195 = scmp.ne.s32.totalorder %s187, %s189
      %p196 = scmp.eq.s32.totalorder %s95, 1
      %p197 = por %p195, %p196
      %p198 = scmp.ne.s32.totalorder %s189, %s190
      %p199 = scmp.eq.s32.totalorder %s95, 0
      %p200 = por %p198, %p199
      %p201 = scmp.ne.s32.totalorder %s189, %s190
      %p202 = scmp.eq.s32.totalorder %s96, 1
      %p203 = por %p201, %p202
      %p205 = scmp.ne.s32.totalorder %s190, %s204
      %p206 = scmp.eq.s32.totalorder %s96, 0
      %p207 = por %p205, %p206
      %s209 = sadd.s32 %s208, 1
      %p212 = scmp.eq.s32.totalorder %s90, 1
      %p213 = scmp.ne.s32.totalorder %s208, %s210
      %p214 = scmp.eq.s32.totalorder %s90, 0
      %p215 = por %p213, %p214
      %p216 = scmp.ne.s32.totalorder %s208, %s210
      %p217 = scmp.eq.s32.totalorder %s95, 1
      %p218 = por %p216, %p217
      %p219 = scmp.ne.s32.totalorder %s210, %s211
      %p220 = scmp.eq.s32.totalorder %s95, 0
      %p221 = por %p219, %p220
      %p222 = scmp.ne.s32.totalorder %s210, %s211
      %p223 = scmp.eq.s32.totalorder %s96, 1
      %p224 = por %p222, %p223
      %p226 = scmp.ne.s32.totalorder %s211, %s225
      %p227 = scmp.eq.s32.totalorder %s96, 0
      %p228 = por %p226, %p227
      %s230 = sadd.s32 %s229, 1
      %p233 = scmp.eq.s32.totalorder %s90, 1
      %p234 = scmp.ne.s32.totalorder %s229, %s231
      %p235 = scmp.eq.s32.totalorder %s90, 0
      %p236 = por %p234, %p235
      %p237 = scmp.ne.s32.totalorder %s229, %s231
      %p238 = scmp.eq.s32.totalorder %s95, 1
      %p239 = por %p237, %p238
      %p240 = scmp.ne.s32.totalorder %s231, %s232
      %p241 = scmp.eq.s32.totalorder %s95, 0
      %p242 = por %p240, %p241
      %p243 = scmp.ne.s32.totalorder %s231, %s232
      %p244 = scmp.eq.s32.totalorder %s96, 1
      %p245 = por %p243, %p244
      %p247 = scmp.ne.s32.totalorder %s232, %s246
      %p248 = scmp.eq.s32.totalorder %s96, 0
      %p249 = por %p247, %p248
      %s251 = sadd.s32 %s250, 1
      %p254 = scmp.eq.s32.totalorder %s90, 1
      %p255 = scmp.ne.s32.totalorder %s250, %s252
      %p256 = scmp.eq.s32.totalorder %s90, 0
      %p257 = por %p255, %p256
      %p258 = scmp.ne.s32.totalorder %s250, %s252
      %p259 = scmp.eq.s32.totalorder %s95, 1
      %p260 = por %p258, %p259
      %p261 = scmp.ne.s32.totalorder %s252, %s253
      %p262 = scmp.eq.s32.totalorder %s95, 0
      %p263 = por %p261, %p262
      %p264 = scmp.ne.s32.totalorder %s252, %s253
      %p265 = scmp.eq.s32.totalorder %s96, 1
      %p266 = por %p264, %p265
      %p268 = scmp.ne.s32.totalorder %s253, %s267
      %p269 = scmp.eq.s32.totalorder %s96, 0
      %p270 = por %p268, %p269
      %s272 = sadd.s32 %s271, 1
      %p275 = scmp.eq.s32.totalorder %s90, 1
      %p276 = scmp.ne.s32.totalorder %s271, %s273
      %p277 = scmp.eq.s32.totalorder %s90, 0
      %p278 = por %p276, %p277
      %p279 = scmp.ne.s32.totalorder %s271, %s273
      %p280 = scmp.eq.s32.totalorder %s95, 1
      %p281 = por %p279, %p280
      %p282 = scmp.ne.s32.totalorder %s273, %s274
      %p283 = scmp.eq.s32.totalorder %s95, 0
      %p284 = por %p282, %p283
      %p285 = scmp.ne.s32.totalorder %s273, %s274
      %p286 = scmp.eq.s32.totalorder %s96, 1
      %p287 = por %p285, %p286
      %p289 = scmp.ne.s32.totalorder %s274, %s288
      %p290 = scmp.eq.s32.totalorder %s96, 0
      %p291 = por %p289, %p290
      %s293 = sadd.s32 %s292, 1
      %p296 = scmp.eq.s32.totalorder %s90, 1
      %p297 = scmp.ne.s32.totalorder %s292, %s294
      %p298 = scmp.eq.s32.totalorder %s90, 0
      %p299 = por %p297, %p298
      %p300 = scmp.ne.s32.totalorder %s292, %s294
      %p301 = scmp.eq.s32.totalorder %s95, 1
      %p302 = por %p300, %p301
      %p303 = scmp.ne.s32.totalorder %s294, %s295
      %p304 = scmp.eq.s32.totalorder %s95, 0
      %p305 = por %p303, %p304
      %p306 = scmp.ne.s32.totalorder %s294, %s295
      %p307 = scmp.eq.s32.totalorder %s96, 1
      %p308 = por %p306, %p307
      %p310 = scmp.ne.s32.totalorder %s295, %s309
      %p311 = scmp.eq.s32.totalorder %s96, 0
      %p312 = por %p310, %p311
      %s314 = sadd.s32 %s313, 1
      %p317 = scmp.eq.s32.totalorder %s90, 1
      %p318 = scmp.ne.s32.totalorder %s313, %s315
      %p319 = scmp.eq.s32.totalorder %s90, 0
      %p320 = por %p318, %p319
      %p321 = scmp.ne.s32.totalorder %s313, %s315
      %p322 = scmp.eq.s32.totalorder %s95, 1
      %p323 = por %p321, %p322
      %p324 = scmp.ne.s32.totalorder %s315, %s316
      %p325 = scmp.eq.s32.totalorder %s95, 0
      %p326 = por %p324, %p325
      %p327 = scmp.ne.s32.totalorder %s315, %s316
      %p328 = scmp.eq.s32.totalorder %s96, 1
      %p329 = por %p327, %p328
      %p331 = scmp.ne.s32.totalorder %s316, %s330
      %p332 = scmp.eq.s32.totalorder %s96, 0
      %p333 = por %p331, %p332
      %s335 = sadd.s32 %s334, 1
      %p338 = scmp.eq.s32.totalorder %s90, 1
      %p339 = scmp.ne.s32.totalorder %s334, %s336
      %p340 = scmp.eq.s32.totalorder %s90, 0
      %p341 = por %p339, %p340
      %p342 = scmp.ne.s32.totalorder %s334, %s336
      %p343 = scmp.eq.s32.totalorder %s95, 1
      %p344 = por %p342, %p343
      %p345 = scmp.ne.s32.totalorder %s336, %s337
      %p346 = scmp.eq.s32.totalorder %s95, 0
      %p347 = por %p345, %p346
      %p348 = scmp.ne.s32.totalorder %s336, %s337
      %p349 = scmp.eq.s32.totalorder %s96, 1
      %p350 = por %p348, %p349
      %p352 = scmp.ne.s32.totalorder %s337, %s351
      %p353 = scmp.eq.s32.totalorder %s96, 0
      %p354 = por %p352, %p353
      %s356 = sadd.s32 %s355, 1
      %p359 = scmp.eq.s32.totalorder %s90, 1
      %p360 = scmp.ne.s32.totalorder %s355, %s357
      %p361 = scmp.eq.s32.totalorder %s90, 0
      %p362 = por %p360, %p361
      %p363 = scmp.ne.s32.totalorder %s355, %s357
      %p364 = scmp.eq.s32.totalorder %s95, 1
      %p365 = por %p363, %p364
      %p366 = scmp.ne.s32.totalorder %s357, %s358
      %p367 = scmp.eq.s32.totalorder %s95, 0
      %p368 = por %p366, %p367
      %p369 = scmp.ne.s32.totalorder %s357, %s358
      %p370 = scmp.eq.s32.totalorder %s96, 1
      %p371 = por %p369, %p370
      %p373 = scmp.ne.s32.totalorder %s358, %s372
      %p374 = scmp.eq.s32.totalorder %s96, 0
      %p375 = por %p373, %p374
      %s377 = sadd.s32 %s376, 1
      %p380 = scmp.eq.s32.totalorder %s90, 1
      %p381 = scmp.ne.s32.totalorder %s376, %s378
      %p382 = scmp.eq.s32.totalorder %s90, 0
      %p383 = por %p381, %p382
      %p384 = scmp.ne.s32.totalorder %s376, %s378
      %p385 = scmp.eq.s32.totalorder %s95, 1
      %p386 = por %p384, %p385
      %p387 = scmp.ne.s32.totalorder %s378, %s379
      %p388 = scmp.eq.s32.totalorder %s95, 0
      %p389 = por %p387, %p388
      %p390 = scmp.ne.s32.totalorder %s378, %s379
      %p391 = scmp.eq.s32.totalorder %s96, 1
      %p392 = por %p390, %p391
      %p394 = scmp.ne.s32.totalorder %s379, %s393
      %p395 = scmp.eq.s32.totalorder %s96, 0
      %p396 = por %p394, %p395
      %s398 = sadd.s32 %s397, 1
      %p401 = scmp.eq.s32.totalorder %s90, 1
      %p402 = scmp.ne.s32.totalorder %s397, %s399
      %p403 = scmp.eq.s32.totalorder %s90, 0
      %p404 = por %p402, %p403
      %p405 = scmp.ne.s32.totalorder %s397, %s399
      %p406 = scmp.eq.s32.totalorder %s95, 1
      %p407 = por %p405, %p406
      %p408 = scmp.ne.s32.totalorder %s399, %s400
      %p409 = scmp.eq.s32.totalorder %s95, 0
      %p410 = por %p408, %p409
      %p411 = scmp.ne.s32.totalorder %s399, %s400
      %p412 = scmp.eq.s32.totalorder %s96, 1
      %p413 = por %p411, %p412
      %p415 = scmp.ne.s32.totalorder %s400, %s414
      %p416 = scmp.eq.s32.totalorder %s96, 0
      %p417 = por %p415, %p416
      %s419 = sadd.s32 %s418, 1
      %p422 = scmp.eq.s32.totalorder %s90, 1
      %p423 = scmp.ne.s32.totalorder %s418, %s420
      %p424 = scmp.eq.s32.totalorder %s90, 0
      %p425 = por %p423, %p424
      %p426 = scmp.ne.s32.totalorder %s418, %s420
      %p427 = scmp.eq.s32.totalorder %s95, 1
      %p428 = por %p426, %p427
      %p429 = scmp.ne.s32.totalorder %s420, %s421
      %p430 = scmp.eq.s32.totalorder %s95, 0
      %p431 = por %p429, %p430
      %p432 = scmp.ne.s32.totalorder %s420, %s421
      %p433 = scmp.eq.s32.totalorder %s96, 1
      %p434 = por %p432, %p433
      %p436 = scmp.ne.s32.totalorder %s421, %s435
      %p437 = scmp.eq.s32.totalorder %s96, 0
      %p438 = por %p436, %p437
      %s440 = sadd.s32 %s439, 1
      %p443 = scmp.eq.s32.totalorder %s90, 1
      %p444 = scmp.ne.s32.totalorder %s439, %s441
      %p445 = scmp.eq.s32.totalorder %s90, 0
      %p446 = por %p444, %p445
      %p447 = scmp.ne.s32.totalorder %s439, %s441
      %p448 = scmp.eq.s32.totalorder %s95, 1
      %p449 = por %p447, %p448
      %p450 = scmp.ne.s32.totalorder %s441, %s442
      %p451 = scmp.eq.s32.totalorder %s95, 0
      %p452 = por %p450, %p451
      %p453 = scmp.ne.s32.totalorder %s441, %s442
      %p454 = scmp.eq.s32.totalorder %s96, 1
      %p455 = por %p453, %p454
      %p457 = scmp.ne.s32.totalorder %s442, %s456
      %p458 = scmp.eq.s32.totalorder %s96, 0
      %p459 = por %p457, %p458
      %s461 = sadd.s32 %s460, 1
      %p464 = scmp.eq.s32.totalorder %s90, 1
      %p465 = scmp.ne.s32.totalorder %s460, %s462
      %p466 = scmp.eq.s32.totalorder %s90, 0
      %p467 = por %p465, %p466
      %p468 = scmp.ne.s32.totalorder %s460, %s462
      %p469 = scmp.eq.s32.totalorder %s95, 1
      %p470 = por %p468, %p469
      %p471 = scmp.ne.s32.totalorder %s462, %s463
      %p472 = scmp.eq.s32.totalorder %s95, 0
      %p473 = por %p471, %p472
      %p474 = scmp.ne.s32.totalorder %s462, %s463
      %p475 = scmp.eq.s32.totalorder %s96, 1
      %p476 = por %p474, %p475
      %p478 = scmp.ne.s32.totalorder %s463, %s477
      %p479 = scmp.eq.s32.totalorder %s96, 0
      %p480 = por %p478, %p479
      %s482 = sadd.s32 %s481, 1
      %p485 = scmp.eq.s32.totalorder %s90, 1
      %p486 = scmp.ne.s32.totalorder %s481, %s483
      %p487 = scmp.eq.s32.totalorder %s90, 0
      %p488 = por %p486, %p487
      %p489 = scmp.ne.s32.totalorder %s481, %s483
      %p490 = scmp.eq.s32.totalorder %s95, 1
      %p491 = por %p489, %p490
      %p492 = scmp.ne.s32.totalorder %s483, %s484
      %p493 = scmp.eq.s32.totalorder %s95, 0
      %p494 = por %p492, %p493
      %p495 = scmp.ne.s32.totalorder %s483, %s484
      %p496 = scmp.eq.s32.totalorder %s96, 1
      %p497 = por %p495, %p496
      %p499 = scmp.ne.s32.totalorder %s484, %s498
      %p500 = scmp.eq.s32.totalorder %s96, 0
      %p501 = por %p499, %p500
      %s503 = sadd.s32 %s502, 1
      %p506 = scmp.eq.s32.totalorder %s90, 1
      %p507 = scmp.ne.s32.totalorder %s502, %s504
      %p508 = scmp.eq.s32.totalorder %s90, 0
      %p509 = por %p507, %p508
      %p510 = scmp.ne.s32.totalorder %s502, %s504
      %p511 = scmp.eq.s32.totalorder %s95, 1
      %p512 = por %p510, %p511
      %p513 = scmp.ne.s32.totalorder %s504, %s505
      %p514 = scmp.eq.s32.totalorder %s95, 0
      %p515 = por %p513, %p514
      %p516 = scmp.ne.s32.totalorder %s504, %s505
      %p517 = scmp.eq.s32.totalorder %s96, 1
      %p518 = por %p516, %p517
      %p520 = scmp.ne.s32.totalorder %s505, %s519
      %p521 = scmp.eq.s32.totalorder %s96, 0
      %p522 = por %p520, %p521
      %s524 = sadd.s32 %s523, 1
      %p527 = scmp.eq.s32.totalorder %s90, 1
      %p528 = scmp.ne.s32.totalorder %s523, %s525
      %p529 = scmp.eq.s32.totalorder %s90, 0
      %p530 = por %p528, %p529
      %p531 = scmp.ne.s32.totalorder %s523, %s525
      %p532 = scmp.eq.s32.totalorder %s95, 1
      %p533 = por %p531, %p532
      %p534 = scmp.ne.s32.totalorder %s525, %s526
      %p535 = scmp.eq.s32.totalorder %s95, 0
      %p536 = por %p534, %p535
      %p537 = scmp.ne.s32.totalorder %s525, %s526
      %p538 = scmp.eq.s32.totalorder %s96, 1
      %p539 = por %p537, %p538
      %p541 = scmp.ne.s32.totalorder %s526, %s540
      %p542 = scmp.eq.s32.totalorder %s96, 0
      %p543 = por %p541, %p542
      %s545 = sadd.s32 %s544, 1
      %p548 = scmp.eq.s32.totalorder %s90, 1
      %p549 = scmp.ne.s32.totalorder %s544, %s546
      %p550 = scmp.eq.s32.totalorder %s90, 0
      %p551 = por %p549, %p550
      %p552 = scmp.ne.s32.totalorder %s544, %s546
      %p553 = scmp.eq.s32.totalorder %s95, 1
      %p554 = por %p552, %p553
      %p555 = scmp.ne.s32.totalorder %s546, %s547
      %p556 = scmp.eq.s32.totalorder %s95, 0
      %p557 = por %p555, %p556
      %p558 = scmp.ne.s32.totalorder %s546, %s547
      %p559 = scmp.eq.s32.totalorder %s96, 1
      %p560 = por %p558, %p559
      %p562 = scmp.ne.s32.totalorder %s547, %s561
      %p563 = scmp.eq.s32.totalorder %s96, 0
      %p564 = por %p562, %p563
      %s566 = sadd.s32 %s565, 1
      %p569 = scmp.eq.s32.totalorder %s90, 1
      %p570 = scmp.ne.s32.totalorder %s565, %s567
      %p571 = scmp.eq.s32.totalorder %s90, 0
      %p572 = por %p570, %p571
      %p573 = scmp.ne.s32.totalorder %s565, %s567
      %p574 = scmp.eq.s32.totalorder %s95, 1
      %p575 = por %p573, %p574
      %p576 = scmp.ne.s32.totalorder %s567, %s568
      %p577 = scmp.eq.s32.totalorder %s95, 0
      %p578 = por %p576, %p577
      %p579 = scmp.ne.s32.totalorder %s567, %s568
      %p580 = scmp.eq.s32.totalorder %s96, 1
      %p581 = por %p579, %p580
      %p583 = scmp.ne.s32.totalorder %s568, %s582
      %p584 = scmp.eq.s32.totalorder %s96, 0
      %p585 = por %p583, %p584
      %s587 = sadd.s32 %s586, 1
      %p590 = scmp.eq.s32.totalorder %s90, 1
      %p591 = scmp.ne.s32.totalorder %s586, %s588
      %p592 = scmp.eq.s32.totalorder %s90, 0
      %p593 = por %p591, %p592
      %p594 = scmp.ne.s32.totalorder %s586, %s588
      %p595 = scmp.eq.s32.totalorder %s95, 1
      %p596 = por %p594, %p595
      %p597 = scmp.ne.s32.totalorder %s588, %s589
      %p598 = scmp.eq.s32.totalorder %s95, 0
      %p599 = por %p597, %p598
      %p600 = scmp.ne.s32.totalorder %s588, %s589
      %p601 = scmp.eq.s32.totalorder %s96, 1
      %p602 = por %p600, %p601
      %p604 = scmp.ne.s32.totalorder %s589, %s603
      %p605 = scmp.eq.s32.totalorder %s96, 0
      %p606 = por %p604, %p605
      %s608 = sadd.s32 %s607, 1
      %p611 = scmp.eq.s32.totalorder %s90, 1
      %p612 = scmp.ne.s32.totalorder %s607, %s609
      %p613 = scmp.eq.s32.totalorder %s90, 0
      %p614 = por %p612, %p613
      %p615 = scmp.ne.s32.totalorder %s607, %s609
      %p616 = scmp.eq.s32.totalorder %s95, 1
      %p617 = por %p615, %p616
      %p618 = scmp.ne.s32.totalorder %s609, %s610
      %p619 = scmp.eq.s32.totalorder %s95, 0
      %p620 = por %p618, %p619
      %p621 = scmp.ne.s32.totalorder %s609, %s610
      %p622 = scmp.eq.s32.totalorder %s96, 1
      %p623 = por %p621, %p622
      %p625 = scmp.ne.s32.totalorder %s610, %s624
      %p626 = scmp.eq.s32.totalorder %s96, 0
      %p627 = por %p625, %p626
      %s629 = sadd.s32 %s628, 1
      %p632 = scmp.eq.s32.totalorder %s90, 1
      %p633 = scmp.ne.s32.totalorder %s628, %s630
      %p634 = scmp.eq.s32.totalorder %s90, 0
      %p635 = por %p633, %p634
      %p636 = scmp.ne.s32.totalorder %s628, %s630
      %p637 = scmp.eq.s32.totalorder %s95, 1
      %p638 = por %p636, %p637
      %p639 = scmp.ne.s32.totalorder %s630, %s631
      %p640 = scmp.eq.s32.totalorder %s95, 0
      %p641 = por %p639, %p640
      %p642 = scmp.ne.s32.totalorder %s630, %s631
      %p643 = scmp.eq.s32.totalorder %s96, 1
      %p644 = por %p642, %p643
      %p646 = scmp.ne.s32.totalorder %s631, %s645
      %p647 = scmp.eq.s32.totalorder %s96, 0
      %p648 = por %p646, %p647
      %s650 = sadd.s32 %s649, 1
      %p653 = scmp.eq.s32.totalorder %s90, 1
      %p654 = scmp.ne.s32.totalorder %s649, %s651
      %p655 = scmp.eq.s32.totalorder %s90, 0
      %p656 = por %p654, %p655
      %p657 = scmp.ne.s32.totalorder %s649, %s651
      %p658 = scmp.eq.s32.totalorder %s95, 1
      %p659 = por %p657, %p658
      %p660 = scmp.ne.s32.totalorder %s651, %s652
      %p661 = scmp.eq.s32.totalorder %s95, 0
      %p662 = por %p660, %p661
      %p663 = scmp.ne.s32.totalorder %s651, %s652
      %p664 = scmp.eq.s32.totalorder %s96, 1
      %p665 = por %p663, %p664
      %p667 = scmp.ne.s32.totalorder %s652, %s666
      %p668 = scmp.eq.s32.totalorder %s96, 0
      %p669 = por %p667, %p668
      %s671 = sadd.s32 %s670, 1
      %p674 = scmp.eq.s32.totalorder %s90, 1
      %p675 = scmp.ne.s32.totalorder %s670, %s672
      %p676 = scmp.eq.s32.totalorder %s90, 0
      %p677 = por %p675, %p676
      %p678 = scmp.ne.s32.totalorder %s670, %s672
      %p679 = scmp.eq.s32.totalorder %s95, 1
      %p680 = por %p678, %p679
      %p681 = scmp.ne.s32.totalorder %s672, %s673
      %p682 = scmp.eq.s32.totalorder %s95, 0
      %p683 = por %p681, %p682
      %p684 = scmp.ne.s32.totalorder %s672, %s673
      %p685 = scmp.eq.s32.totalorder %s96, 1
      %p686 = por %p684, %p685
      %p688 = scmp.ne.s32.totalorder %s673, %s687
      %p689 = scmp.eq.s32.totalorder %s96, 0
      %p690 = por %p688, %p689
      %s692 = sadd.s32 %s691, 1
      %p695 = scmp.eq.s32.totalorder %s90, 1
      %p696 = scmp.ne.s32.totalorder %s691, %s693
      %p697 = scmp.eq.s32.totalorder %s90, 0
      %p698 = por %p696, %p697
      %p699 = scmp.ne.s32.totalorder %s691, %s693
      %p700 = scmp.eq.s32.totalorder %s95, 1
      %p701 = por %p699, %p700
      %p702 = scmp.ne.s32.totalorder %s693, %s694
      %p703 = scmp.eq.s32.totalorder %s95, 0
      %p704 = por %p702, %p703
      %p705 = scmp.ne.s32.totalorder %s693, %s694
      %p706 = scmp.eq.s32.totalorder %s96, 1
      %p707 = por %p705, %p706
      %p709 = scmp.ne.s32.totalorder %s694, %s708
      %p710 = scmp.eq.s32.totalorder %s96, 0
      %p711 = por %p709, %p710
      %s713 = sadd.s32 %s712, 1
      %p716 = scmp.eq.s32.totalorder %s90, 1
      %p717 = scmp.ne.s32.totalorder %s712, %s714
      %p718 = scmp.eq.s32.totalorder %s90, 0
      %p719 = por %p717, %p718
      %p720 = scmp.ne.s32.totalorder %s712, %s714
      %p721 = scmp.eq.s32.totalorder %s95, 1
      %p722 = por %p720, %p721
      %p723 = scmp.ne.s32.totalorder %s714, %s715
      %p724 = scmp.eq.s32.totalorder %s95, 0
      %p725 = por %p723, %p724
      %p726 = scmp.ne.s32.totalorder %s714, %s715
      %p727 = scmp.eq.s32.totalorder %s96, 1
      %p728 = por %p726, %p727
      %p730 = scmp.ne.s32.totalorder %s715, %s729
      %p731 = scmp.eq.s32.totalorder %s96, 0
      %p732 = por %p730, %p731
      %s733 = ssub.s32 %s90, %s97
      %p734 = scmp.eq.s32.totalorder %s733, 0
      %s736 = sadd.s32 %s735, 1
      %s737 = scalar_select %p734, %s735, %s736
      %p740 = pneg %p734
      %p741 = scmp.eq.s32.totalorder %s90, 1
      %p742 = por %p740, %p741
      %p743 = scmp.ne.s32.totalorder %s735, %s738
      %p744 = scmp.eq.s32.totalorder %s90, 0
      %p745 = por %p743, %p744
      %p746 = scmp.ne.s32.totalorder %s735, %s738
      %p747 = scmp.eq.s32.totalorder %s95, 1
      %p748 = por %p746, %p747
      %p749 = scmp.ne.s32.totalorder %s738, %s739
      %p750 = scmp.eq.s32.totalorder %s95, 0
      %p751 = por %p749, %p750
      %p752 = scmp.ne.s32.totalorder %s738, %s739
      %p753 = scmp.eq.s32.totalorder %s96, 1
      %p754 = por %p752, %p753
      %p756 = scmp.ne.s32.totalorder %s739, %s755
      %p757 = scmp.eq.s32.totalorder %s96, 0
      %p758 = por %p756, %p757
      %s759 = ssub.s32 %s90, %s97
      %p760 = scmp.eq.s32.totalorder %s759, 0
      %s762 = sadd.s32 %s761, 1
      %s763 = scalar_select %p760, %s761, %s762
      %p766 = pneg %p760
      %p767 = scmp.eq.s32.totalorder %s90, 1
      %p768 = por %p766, %p767
      %p769 = scmp.ne.s32.totalorder %s761, %s764
      %p770 = scmp.eq.s32.totalorder %s90, 0
      %p771 = por %p769, %p770
      %p772 = scmp.ne.s32.totalorder %s761, %s764
      %p773 = scmp.eq.s32.totalorder %s95, 1
      %p774 = por %p772, %p773
      %p775 = scmp.ne.s32.totalorder %s764, %s765
      %p776 = scmp.eq.s32.totalorder %s95, 0
      %p777 = por %p775, %p776
      %p778 = scmp.ne.s32.totalorder %s764, %s765
      %p779 = scmp.eq.s32.totalorder %s96, 1
      %p780 = por %p778, %p779
      %p782 = scmp.ne.s32.totalorder %s765, %s781
      %p783 = scmp.eq.s32.totalorder %s96, 0
      %p784 = por %p782, %p783
      %p785 = scmp.le.s32.totalorder 1, %s90
      %p786 = scmp.lt.s32.totalorder %s90, 3
      %p787 = pnand %p785, %p786
      %p788 = pneg %p787
      // Predicated region
      $region9: #{generator_forward.1} parent=5 // pred_check
        _
      $region10: #{generator_forward.1} parent=5 // pred_check_branch
        %790 = sbr.rel (%p787) target = $region12
      $region11: #{generator_forward.1} parent=5 // pred_region
        %s791 = ssub.s32 %s90, 1
        // Predicated region
        $region13: #{generator_forward.1} parent=11 // pred_check
          %p792 = pneg %p137
        $region14: #{generator_forward.1} parent=11 // pred_check_branch
          %794 = sbr.rel (%p792) target = $region16
        $region15: #{generator_forward.1} parent=11 // pred_region
          %796 = vsyncadd [#allocation6], 0
          %s797 = sshll.u32 %s3, 4
          %s798 = int_to_ptr.hbm [resolvable:$true] %s797
          %s799 = sshll.u32 [#allocation5], 4
          %s800 = int_to_ptr.vmem [resolvable:$true] %s799
          %805 = dma.hbm_to_vmem [thread:$0]  %s798, 128, %s800, [#allocation6], 32, 32, 2
        $region16: #{generator_forward.1} parent=11 // pred_fallthru
          _
        // Predicated region
        $region17: #{generator_forward.1} parent=11 // pred_check
          %p806 = pneg %p158
        $region18: #{generator_forward.1} parent=11 // pred_check_branch
          %808 = sbr.rel (%p806) target = $region20
        $region19: #{generator_forward.1} parent=11 // pred_region
          %810 = vsyncadd [#allocation6], 0
          %s811 = sshll.u32 %s5, 4
          %s812 = int_to_ptr.hbm [resolvable:$true] %s811
          %s813 = sshll.u32 [#allocation7], 4
          %s814 = int_to_ptr.vmem [resolvable:$true] %s813
          %819 = dma.hbm_to_vmem [thread:$0]  %s812, 20480, %s814, [#allocation6], 128, 128, 8
        $region20: #{generator_forward.1} parent=11 // pred_fallthru
          _
        // Predicated region
        $region21: #{generator_forward.1} parent=11 // pred_check
          %p820 = pneg %p179
        $region22: #{generator_forward.1} parent=11 // pred_check_branch
          %822 = sbr.rel (%p820) target = $region24
        $region23: #{generator_forward.1} parent=11 // pred_region
          %824 = vsyncadd [#allocation9], 0
          %s825 = sshll.u32 %s7, 4
          %s826 = int_to_ptr.hbm [resolvable:$true] %s825
          %s827 = sshll.u32 [#allocation8], 4
          %s828 = int_to_ptr.vmem [resolvable:$true] %s827
          %833 = dma.hbm_to_vmem [thread:$0]  %s826, 256, %s828, [#allocation9], 64, 64, 4
        $region24: #{generator_forward.1} parent=11 // pred_fallthru
          _
        // Predicated region
        $region25: #{generator_forward.1} parent=11 // pred_check
          %p834 = pneg %p200
        $region26: #{generator_forward.1} parent=11 // pred_check_branch
          %836 = sbr.rel (%p834) target = $region28
        $region27: #{generator_forward.1} parent=11 // pred_region
          %838 = vsyncadd [#allocation9], 0
          %s839 = sshll.u32 %s9, 4
          %s840 = int_to_ptr.hbm [resolvable:$true] %s839
          %s841 = sshll.u32 [#allocation10], 4
          %s842 = int_to_ptr.vmem [resolvable:$true] %s841
          %847 = dma.hbm_to_vmem [thread:$0]  %s840, 5120, %s842, [#allocation9], 64, 64, 4
        $region28: #{generator_forward.1} parent=11 // pred_fallthru
          _
        // Predicated region
        $region29: #{generator_forward.1} parent=11 // pred_check
          %p848 = pneg %p221
        $region30: #{generator_forward.1} parent=11 // pred_check_branch
          %850 = sbr.rel (%p848) target = $region32
        $region31: #{generator_forward.1} parent=11 // pred_region
          %852 = vsyncadd [#allocation12], 0
          %s853 = sshll.u32 %s11, 4
          %s854 = int_to_ptr.hbm [resolvable:$true] %s853
          %s855 = sshll.u32 [#allocation11], 4
          %s856 = int_to_ptr.vmem [resolvable:$true] %s855
          %861 = dma.hbm_to_vmem [thread:$0]  %s854, 512, %s856, [#allocation12], 64, 64, 4
        $region32: #{generator_forward.1} parent=11 // pred_fallthru
          _
        // Predicated region
        $region33: #{generator_forward.1} parent=11 // pred_check
          %p862 = pneg %p242
        $region34: #{generator_forward.1} parent=11 // pred_check_branch
          %864 = sbr.rel (%p862) target = $region36
        $region35: #{generator_forward.1} parent=11 // pred_region
          %866 = vsyncadd [#allocation12], 0
          %s867 = sshll.u32 %s13, 4
          %s868 = int_to_ptr.hbm [resolvable:$true] %s867
          %s869 = sshll.u32 [#allocation13], 4
          %s870 = int_to_ptr.vmem [resolvable:$true] %s869
          %875 = dma.hbm_to_vmem [thread:$0]  %s868, 2560, %s870, [#allocation12], 64, 64, 4
        $region36: #{generator_forward.1} parent=11 // pred_fallthru
          _
        // Predicated region
        $region37: #{generator_forward.1} parent=11 // pred_check
          %p876 = pneg %p263
        $region38: #{generator_forward.1} parent=11 // pred_check_branch
          %878 = sbr.rel (%p876) target = $region40
        $region39: #{generator_forward.1} parent=11 // pred_region
          %880 = vsyncadd [#allocation15], 0
          %s881 = sshll.u32 %s15, 4
          %s882 = int_to_ptr.hbm [resolvable:$true] %s881
          %s883 = sshll.u32 [#allocation14], 4
          %s884 = int_to_ptr.vmem [resolvable:$true] %s883
          %889 = dma.hbm_to_vmem [thread:$0]  %s882, 1024, %s884, [#allocation15], 64, 64, 4
        $region40: #{generator_forward.1} parent=11 // pred_fallthru
          _
        // Predicated region
        $region41: #{generator_forward.1} parent=11 // pred_check
          %p890 = pneg %p284
        $region42: #{generator_forward.1} parent=11 // pred_check_branch
          %892 = sbr.rel (%p890) target = $region44
        $region43: #{generator_forward.1} parent=11 // pred_region
          %894 = vsyncadd [#allocation15], 0
          %s895 = sshll.u32 %s17, 4
          %s896 = int_to_ptr.hbm [resolvable:$true] %s895
          %s897 = sshll.u32 [#allocation16], 4
          %s898 = int_to_ptr.vmem [resolvable:$true] %s897
          %903 = dma.hbm_to_vmem [thread:$0]  %s896, 1280, %s898, [#allocation15], 64, 64, 4
        $region44: #{generator_forward.1} parent=11 // pred_fallthru
          _
        // Predicated region
        $region45: #{generator_forward.1} parent=11 // pred_check
          %p904 = pneg %p305
        $region46: #{generator_forward.1} parent=11 // pred_check_branch
          %906 = sbr.rel (%p904) target = $region48
        $region47: #{generator_forward.1} parent=11 // pred_region
          %908 = vsyncadd [#allocation18], 0
          %s909 = sshll.u32 %s19, 4
          %s910 = int_to_ptr.hbm [resolvable:$true] %s909
          %s911 = sshll.u32 [#allocation17], 4
          %s912 = int_to_ptr.vmem [resolvable:$true] %s911
          %917 = dma.hbm_to_vmem [thread:$0]  %s910, 2048, %s912, [#allocation18], 64, 64, 4
        $region48: #{generator_forward.1} parent=11 // pred_fallthru
          _
        // Predicated region
        $region49: #{generator_forward.1} parent=11 // pred_check
          %p918 = pneg %p326
        $region50: #{generator_forward.1} parent=11 // pred_check_branch
          %920 = sbr.rel (%p918) target = $region52
        $region51: #{generator_forward.1} parent=11 // pred_region
          %922 = vsyncadd [#allocation18], 0
          %s923 = sshll.u32 %s21, 4
          %s924 = int_to_ptr.hbm [resolvable:$true] %s923
          %s925 = sshll.u32 [#allocation19], 4
          %s926 = int_to_ptr.vmem [resolvable:$true] %s925
          %931 = dma.hbm_to_vmem [thread:$0]  %s924, 768, %s926, [#allocation18], 64, 64, 4
        $region52: #{generator_forward.1} parent=11 // pred_fallthru
          _
        // Predicated region
        $region53: #{generator_forward.1} parent=11 // pred_check
          %p932 = pneg %p347
        $region54: #{generator_forward.1} parent=11 // pred_check_branch
          %934 = sbr.rel (%p932) target = $region56
        $region55: #{generator_forward.1} parent=11 // pred_region
          %936 = vsyncadd [#allocation21], 0
          %s937 = sshll.u32 %s23, 4
          %s938 = int_to_ptr.hbm [resolvable:$true] %s937
          %s939 = sshll.u32 [#allocation20], 4
          %s940 = int_to_ptr.vmem [resolvable:$true] %s939
          %945 = dma.hbm_to_vmem [thread:$0]  %s938, 640, %s940, [#allocation21], 64, 64, 4
        $region56: #{generator_forward.1} parent=11 // pred_fallthru
          _
        // Predicated region
        $region57: #{generator_forward.1} parent=11 // pred_check
          %p946 = pneg %p368
        $region58: #{generator_forward.1} parent=11 // pred_check_branch
          %948 = sbr.rel (%p946) target = $region60
        $region59: #{generator_forward.1} parent=11 // pred_region
          %950 = vsyncadd [#allocation21], 0
          %s951 = sshll.u32 %s25, 4
          %s952 = int_to_ptr.hbm [resolvable:$true] %s951
          %s953 = sshll.u32 [#allocation22], 4
          %s954 = int_to_ptr.vmem [resolvable:$true] %s953
          %959 = dma.hbm_to_vmem [thread:$0]  %s952, 1280, %s954, [#allocation21], 64, 64, 4
        $region60: #{generator_forward.1} parent=11 // pred_fallthru
          _
        // Predicated region
        $region61: #{generator_forward.1} parent=11 // pred_check
          %p960 = pneg %p389
        $region62: #{generator_forward.1} parent=11 // pred_check_branch
          %962 = sbr.rel (%p960) target = $region64
        $region63: #{generator_forward.1} parent=11 // pred_region
          %964 = vsyncadd [#allocation24], 0
          %s965 = sshll.u32 %s27, 4
          %s966 = int_to_ptr.hbm [resolvable:$true] %s965
          %s967 = sshll.u32 [#allocation23], 4
          %s968 = int_to_ptr.vmem [resolvable:$true] %s967
          %973 = dma.hbm_to_vmem [thread:$0]  %s966, 5120, %s968, [#allocation24], 64, 64, 4
        $region64: #{generator_forward.1} parent=11 // pred_fallthru
          _
        // Predicated region
        $region65: #{generator_forward.1} parent=11 // pred_check
          %p974 = pneg %p410
        $region66: #{generator_forward.1} parent=11 // pred_check_branch
          %976 = sbr.rel (%p974) target = $region68
        $region67: #{generator_forward.1} parent=11 // pred_region
          %978 = vsyncadd [#allocation24], 0
          %s979 = sshll.u32 %s29, 4
          %s980 = int_to_ptr.hbm [resolvable:$true] %s979
          %s981 = sshll.u32 [#allocation25], 4
          %s982 = int_to_ptr.vmem [resolvable:$true] %s981
          %987 = dma.hbm_to_vmem [thread:$0]  %s980, 160, %s982, [#allocation24], 16, 16, 1
        $region68: #{generator_forward.1} parent=11 // pred_fallthru
          _
        // Predicated region
        $region69: #{generator_forward.1} parent=11 // pred_check
          %p988 = pneg %p431
        $region70: #{generator_forward.1} parent=11 // pred_check_branch
          %990 = sbr.rel (%p988) target = $region72
        $region71: #{generator_forward.1} parent=11 // pred_region
          %992 = vsyncadd [#allocation27], 0
          %s993 = sshll.u32 %s31, 4
          %s994 = int_to_ptr.hbm [resolvable:$true] %s993
          %s995 = sshll.u32 [#allocation26], 4
          %s996 = int_to_ptr.vmem [resolvable:$true] %s995
          %1001 = dma.hbm_to_vmem [thread:$0]  %s994, 1024, %s996, [#allocation27], 128, 128, 8
        $region72: #{generator_forward.1} parent=11 // pred_fallthru
          _
        // Predicated region
        $region73: #{generator_forward.1} parent=11 // pred_check
          %p1002 = pneg %p452
        $region74: #{generator_forward.1} parent=11 // pred_check_branch
          %1004 = sbr.rel (%p1002) target = $region76
        $region75: #{generator_forward.1} parent=11 // pred_region
          %1006 = vsyncadd [#allocation27], 0
          %s1007 = sshll.u32 %s33, 4
          %s1008 = int_to_ptr.hbm [resolvable:$true] %s1007
          %s1009 = sshll.u32 [#allocation28], 4
          %s1010 = int_to_ptr.vmem [resolvable:$true] %s1009
          %1015 = dma.hbm_to_vmem [thread:$0]  %s1008, 1024, %s1010, [#allocation27], 64, 64, 4
        $region76: #{generator_forward.1} parent=11 // pred_fallthru
          _
        // Predicated region
        $region77: #{generator_forward.1} parent=11 // pred_check
          %p1016 = pneg %p473
        $region78: #{generator_forward.1} parent=11 // pred_check_branch
          %1018 = sbr.rel (%p1016) target = $region80
        $region79: #{generator_forward.1} parent=11 // pred_region
          %1020 = vsyncadd [#allocation30], 0
          %s1021 = sshll.u32 %s35, 4
          %s1022 = int_to_ptr.hbm [resolvable:$true] %s1021
          %s1023 = sshll.u32 [#allocation29], 4
          %s1024 = int_to_ptr.vmem [resolvable:$true] %s1023
          %1029 = dma.hbm_to_vmem [thread:$0]  %s1022, 512, %s1024, [#allocation30], 64, 64, 4
        $region80: #{generator_forward.1} parent=11 // pred_fallthru
          _
        // Predicated region
        $region81: #{generator_forward.1} parent=11 // pred_check
          %p1030 = pneg %p494
        $region82: #{generator_forward.1} parent=11 // pred_check_branch
          %1032 = sbr.rel (%p1030) target = $region84
        $region83: #{generator_forward.1} parent=11 // pred_region
          %1034 = vsyncadd [#allocation30], 0
          %s1035 = sshll.u32 %s37, 4
          %s1036 = int_to_ptr.hbm [resolvable:$true] %s1035
          %s1037 = sshll.u32 [#allocation31], 4
          %s1038 = int_to_ptr.vmem [resolvable:$true] %s1037
          %1043 = dma.hbm_to_vmem [thread:$0]  %s1036, 512, %s1038, [#allocation30], 128, 128, 8
        $region84: #{generator_forward.1} parent=11 // pred_fallthru
          _
        // Predicated region
        $region85: #{generator_forward.1} parent=11 // pred_check
          %p1044 = pneg %p515
        $region86: #{generator_forward.1} parent=11 // pred_check_branch
          %1046 = sbr.rel (%p1044) target = $region88
        $region87: #{generator_forward.1} parent=11 // pred_region
          %1048 = vsyncadd [#allocation33], 0
          %s1049 = sshll.u32 %s39, 4
          %s1050 = int_to_ptr.hbm [resolvable:$true] %s1049
          %s1051 = sshll.u32 [#allocation32], 4
          %s1052 = int_to_ptr.vmem [resolvable:$true] %s1051
          %1057 = dma.hbm_to_vmem [thread:$0]  %s1050, 512, %s1052, [#allocation33], 64, 64, 4
        $region88: #{generator_forward.1} parent=11 // pred_fallthru
          _
        // Predicated region
        $region89: #{generator_forward.1} parent=11 // pred_check
          %p1058 = pneg %p536
        $region90: #{generator_forward.1} parent=11 // pred_check_branch
          %1060 = sbr.rel (%p1058) target = $region92
        $region91: #{generator_forward.1} parent=11 // pred_region
          %1062 = vsyncadd [#allocation33], 0
          %s1063 = sshll.u32 %s41, 4
          %s1064 = int_to_ptr.hbm [resolvable:$true] %s1063
          %s1065 = sshll.u32 [#allocation34], 4
          %s1066 = int_to_ptr.vmem [resolvable:$true] %s1065
          %1071 = dma.hbm_to_vmem [thread:$0]  %s1064, 768, %s1066, [#allocation33], 64, 64, 4
        $region92: #{generator_forward.1} parent=11 // pred_fallthru
          _
        // Predicated region
        $region93: #{generator_forward.1} parent=11 // pred_check
          %p1072 = pneg %p557
        $region94: #{generator_forward.1} parent=11 // pred_check_branch
          %1074 = sbr.rel (%p1072) target = $region96
        $region95: #{generator_forward.1} parent=11 // pred_region
          %1076 = vsyncadd [#allocation36], 0
          %s1077 = sshll.u32 %s43, 4
          %s1078 = int_to_ptr.hbm [resolvable:$true] %s1077
          %s1079 = sshll.u32 [#allocation35], 4
          %s1080 = int_to_ptr.vmem [resolvable:$true] %s1079
          %1085 = dma.hbm_to_vmem [thread:$0]  %s1078, 256, %s1080, [#allocation36], 128, 128, 8
        $region96: #{generator_forward.1} parent=11 // pred_fallthru
          _
        // Predicated region
        $region97: #{generator_forward.1} parent=11 // pred_check
          %p1086 = pneg %p578
        $region98: #{generator_forward.1} parent=11 // pred_check_branch
          %1088 = sbr.rel (%p1086) target = $region100
        $region99: #{generator_forward.1} parent=11 // pred_region
          _
        $region100: #{generator_forward.1} parent=11 // pred_fallthru
          _
        // Predicated region
        $region101: #{generator_forward.1} parent=11 // pred_check
          %p1089 = pneg %p599
        $region102: #{generator_forward.1} parent=11 // pred_check_branch
          %1091 = sbr.rel (%p1089) target = $region104
        $region103: #{generator_forward.1} parent=11 // pred_region
          %1093 = vsyncadd [#allocation36], 0
          %s1094 = sshll.u32 %s47, 4
          %s1095 = int_to_ptr.hbm [resolvable:$true] %s1094
          %s1096 = sshll.u32 [#allocation37], 4
          %s1097 = int_to_ptr.vmem [resolvable:$true] %s1096
          %1102 = dma.hbm_to_vmem [thread:$0]  %s1095, 1280, %s1097, [#allocation36], 64, 64, 4
        $region104: #{generator_forward.1} parent=11 // pred_fallthru
          _
        // Predicated region
        $region105: #{generator_forward.1} parent=11 // pred_check
          %p1103 = pneg %p620
        $region106: #{generator_forward.1} parent=11 // pred_check_branch
          %1105 = sbr.rel (%p1103) target = $region108
        $region107: #{generator_forward.1} parent=11 // pred_region
          %1107 = vsyncadd [#allocation39], 0
          %s1109 = sshll.u32 %s49, 4
          %s1110 = int_to_ptr.hbm [resolvable:$true] %s1109
          %s1111 = sshll.u32 [#allocation38], 4
          %s1112 = int_to_ptr.vmem [resolvable:$true] %s1111
          %1114 = dma.hbm_to_vmem [thread:$0]  %s1110, 128, %s1112, [#allocation39]
        $region108: #{generator_forward.1} parent=11 // pred_fallthru
          _
        // Predicated region
        $region109: #{generator_forward.1} parent=11 // pred_check
          %p1115 = pneg %p641
        $region110: #{generator_forward.1} parent=11 // pred_check_branch
          %1117 = sbr.rel (%p1115) target = $region112
        $region111: #{generator_forward.1} parent=11 // pred_region
          %1119 = vsyncadd [#allocation39], 0
          %s1120 = sshll.u32 %s51, 4
          %s1121 = int_to_ptr.hbm [resolvable:$true] %s1120
          %s1122 = sshll.u32 [#allocation40], 4
          %s1123 = int_to_ptr.vmem [resolvable:$true] %s1122
          %1128 = dma.hbm_to_vmem [thread:$0]  %s1121, 128, %s1123, [#allocation39], 32, 32, 2
        $region112: #{generator_forward.1} parent=11 // pred_fallthru
          _
        // Predicated region
        $region113: #{generator_forward.1} parent=11 // pred_check
          %p1129 = pneg %p662
        $region114: #{generator_forward.1} parent=11 // pred_check_branch
          %1131 = sbr.rel (%p1129) target = $region116
        $region115: #{generator_forward.1} parent=11 // pred_region
          %1133 = vsyncadd [#allocation42], 0
          %s1134 = sshll.u32 %s53, 4
          %s1135 = int_to_ptr.hbm [resolvable:$true] %s1134
          %s1136 = sshll.u32 [#allocation41], 4
          %s1137 = int_to_ptr.vmem [resolvable:$true] %s1136
          %1142 = dma.hbm_to_vmem [thread:$0]  %s1135, 5120, %s1137, [#allocation42], 128, 128, 8
        $region116: #{generator_forward.1} parent=11 // pred_fallthru
          _
        // Predicated region
        $region117: #{generator_forward.1} parent=11 // pred_check
          %p1143 = pneg %p683
        $region118: #{generator_forward.1} parent=11 // pred_check_branch
          %1145 = sbr.rel (%p1143) target = $region120
        $region119: #{generator_forward.1} parent=11 // pred_region
          %1147 = vsyncadd [#allocation42], 0
          %s1149 = sshll.u32 %s55, 4
          %s1150 = int_to_ptr.hbm [resolvable:$true] %s1149
          %s1151 = sshll.u32 [#allocation43], 4
          %s1152 = int_to_ptr.vmem [resolvable:$true] %s1151
          %1154 = dma.hbm_to_vmem [thread:$0]  %s1150, 64, %s1152, [#allocation42]
        $region120: #{generator_forward.1} parent=11 // pred_fallthru
          _
        // Predicated region
        $region121: #{generator_forward.1} parent=11 // pred_check
          %p1155 = pneg %p704
        $region122: #{generator_forward.1} parent=11 // pred_check_branch
          %1157 = sbr.rel (%p1155) target = $region124
        $region123: #{generator_forward.1} parent=11 // pred_region
          _
        $region124: #{generator_forward.1} parent=11 // pred_fallthru
          _
        // Predicated region
        $region125: #{generator_forward.1} parent=11 // pred_check
          %p1158 = pneg %p725
        $region126: #{generator_forward.1} parent=11 // pred_check_branch
          %1160 = sbr.rel (%p1158) target = $region128
        $region127: #{generator_forward.1} parent=11 // pred_region
          %1162 = vsyncadd [#allocation45], 0
          %s1163 = sshll.u32 %s59, 4
          %s1164 = int_to_ptr.hbm [resolvable:$true] %s1163
          %s1165 = sshll.u32 [#allocation44], 4
          %s1166 = int_to_ptr.vmem [resolvable:$true] %s1165
          %1171 = dma.hbm_to_vmem [thread:$0]  %s1164, 15360, %s1166, [#allocation45], 192, 192, 12
        $region128: #{generator_forward.1} parent=11 // pred_fallthru
          _
      $region12: #{generator_forward.1} parent=5 // pred_fallthru
        _
      %p1172 = scmp.lt.s32.totalorder %s90, 2
      // Predicated region
      $region129: #{generator_forward.1} parent=5 // pred_check
        %p1173 = pneg %p1172
      $region130: #{generator_forward.1} parent=5 // pred_check_branch
        %1175 = sbr.rel (%p1173) target = $region132
      $region131: #{generator_forward.1} parent=5 // pred_region
        // Predicated region
        $region133: #{generator_forward.1} parent=131 // pred_check
          %p1176 = pneg %p110
        $region134: #{generator_forward.1} parent=131 // pred_check_branch
          %1178 = sbr.rel (%p1176) target = $region136
        $region135: #{generator_forward.1} parent=131 // pred_region
          %s1179 = sand.u32 %s100, 1
          %s1180 = scalar_lea.sflag [#allocation3], %s1179
          %s1181 = sand.u32 %s100, 1
          %s1182 = smul.addr %s1181, 12
          %s1183 = scalar_lea.vmem [#allocation2], %s1182
          %1185 = vsyncadd %s1180, 0
          %s1186 = smul.addr %s90, 3
          %s1187 = smul.addr %s1186, 4
          %s1188 = scalar_lea.hbm %s1, %s1187
          %s1190 = sshll.u32 %s1188, 4
          %s1191 = int_to_ptr.hbm [resolvable:$true] %s1190
          %s1192 = sshll.u32 %s1183, 4
          %s1193 = int_to_ptr.vmem [resolvable:$true] %s1192
          %1195 = dma.hbm_to_vmem [thread:$0]  %s1191, 192, %s1193, %s1180
        $region136: #{generator_forward.1} parent=131 // pred_fallthru
          _
      $region132: #{generator_forward.1} parent=5 // pred_fallthru
        _
      %p1196 = scmp.le.s32.totalorder 1, %s90
      %p1197 = scmp.lt.s32.totalorder %s90, 3
      %p1198 = pnand %p1196, %p1197
      %p1199 = pneg %p1198
      // Predicated region
      $region137: #{generator_forward.1} parent=5 // pred_check
        _
      $region138: #{generator_forward.1} parent=5 // pred_check_branch
        %1201 = sbr.rel (%p1198) target = $region140
      $region139: #{generator_forward.1} parent=5 // pred_region
        %s1202 = ssub.s32 %s90, 1
        %s1203 = sand.u32 %s103, 1
        %s1204 = scalar_lea.sflag [#allocation3], %s1203
        %s1205 = sand.u32 %s103, 1
        %s1206 = smul.addr %s1205, 12
        %s1207 = scalar_lea.vmem [#allocation2], %s1206
        // Predicated region
        $region141: #{generator_forward.1} parent=139 // pred_check
          %p1208 = pneg %p116
        $region142: #{generator_forward.1} parent=139 // pred_check_branch
          %1210 = sbr.rel (%p1208) target = $region144
        $region143: #{generator_forward.1} parent=139 // pred_region
          %1212 = dma.done %s1204, 192
        $region144: #{generator_forward.1} parent=139 // pred_fallthru
          _
        // Predicated region
        $region145: #{generator_forward.1} parent=139 // pred_check
          %p1213 = pneg %p137
        $region146: #{generator_forward.1} parent=139 // pred_check_branch
          %1215 = sbr.rel (%p1213) target = $region148
        $region147: #{generator_forward.1} parent=139 // pred_region
          %1217 = dma.done [#allocation6], 128
        $region148: #{generator_forward.1} parent=139 // pred_fallthru
          _
        // Predicated region
        $region149: #{generator_forward.1} parent=139 // pred_check
          %p1218 = pneg %p158
        $region150: #{generator_forward.1} parent=139 // pred_check_branch
          %1220 = sbr.rel (%p1218) target = $region152
        $region151: #{generator_forward.1} parent=139 // pred_region
          %1222 = dma.done [#allocation6], 20480
        $region152: #{generator_forward.1} parent=139 // pred_fallthru
          _
        // Predicated region
        $region153: #{generator_forward.1} parent=139 // pred_check
          %p1223 = pneg %p179
        $region154: #{generator_forward.1} parent=139 // pred_check_branch
          %1225 = sbr.rel (%p1223) target = $region156
        $region155: #{generator_forward.1} parent=139 // pred_region
          %1227 = dma.done [#allocation9], 256
        $region156: #{generator_forward.1} parent=139 // pred_fallthru
          _
        // Predicated region
        $region157: #{generator_forward.1} parent=139 // pred_check
          %p1228 = pneg %p200
        $region158: #{generator_forward.1} parent=139 // pred_check_branch
          %1230 = sbr.rel (%p1228) target = $region160
        $region159: #{generator_forward.1} parent=139 // pred_region
          %1232 = dma.done [#allocation9], 5120
        $region160: #{generator_forward.1} parent=139 // pred_fallthru
          _
        // Predicated region
        $region161: #{generator_forward.1} parent=139 // pred_check
          %p1233 = pneg %p221
        $region162: #{generator_forward.1} parent=139 // pred_check_branch
          %1235 = sbr.rel (%p1233) target = $region164
        $region163: #{generator_forward.1} parent=139 // pred_region
          %1237 = dma.done [#allocation12], 512
        $region164: #{generator_forward.1} parent=139 // pred_fallthru
          _
        // Predicated region
        $region165: #{generator_forward.1} parent=139 // pred_check
          %p1238 = pneg %p242
        $region166: #{generator_forward.1} parent=139 // pred_check_branch
          %1240 = sbr.rel (%p1238) target = $region168
        $region167: #{generator_forward.1} parent=139 // pred_region
          %1242 = dma.done [#allocation12], 2560
        $region168: #{generator_forward.1} parent=139 // pred_fallthru
          _
        // Predicated region
        $region169: #{generator_forward.1} parent=139 // pred_check
          %p1243 = pneg %p263
        $region170: #{generator_forward.1} parent=139 // pred_check_branch
          %1245 = sbr.rel (%p1243) target = $region172
        $region171: #{generator_forward.1} parent=139 // pred_region
          %1247 = dma.done [#allocation15], 1024
        $region172: #{generator_forward.1} parent=139 // pred_fallthru
          _
        // Predicated region
        $region173: #{generator_forward.1} parent=139 // pred_check
          %p1248 = pneg %p284
        $region174: #{generator_forward.1} parent=139 // pred_check_branch
          %1250 = sbr.rel (%p1248) target = $region176
        $region175: #{generator_forward.1} parent=139 // pred_region
          %1252 = dma.done [#allocation15], 1280
        $region176: #{generator_forward.1} parent=139 // pred_fallthru
          _
        // Predicated region
        $region177: #{generator_forward.1} parent=139 // pred_check
          %p1253 = pneg %p305
        $region178: #{generator_forward.1} parent=139 // pred_check_branch
          %1255 = sbr.rel (%p1253) target = $region180
        $region179: #{generator_forward.1} parent=139 // pred_region
          %1257 = dma.done [#allocation18], 2048
        $region180: #{generator_forward.1} parent=139 // pred_fallthru
          _
        // Predicated region
        $region181: #{generator_forward.1} parent=139 // pred_check
          %p1258 = pneg %p326
        $region182: #{generator_forward.1} parent=139 // pred_check_branch
          %1260 = sbr.rel (%p1258) target = $region184
        $region183: #{generator_forward.1} parent=139 // pred_region
          %1262 = dma.done [#allocation18], 768
        $region184: #{generator_forward.1} parent=139 // pred_fallthru
          _
        // Predicated region
        $region185: #{generator_forward.1} parent=139 // pred_check
          %p1263 = pneg %p347
        $region186: #{generator_forward.1} parent=139 // pred_check_branch
          %1265 = sbr.rel (%p1263) target = $region188
        $region187: #{generator_forward.1} parent=139 // pred_region
          %1267 = dma.done [#allocation21], 640
        $region188: #{generator_forward.1} parent=139 // pred_fallthru
          _
        // Predicated region
        $region189: #{generator_forward.1} parent=139 // pred_check
          %p1268 = pneg %p368
        $region190: #{generator_forward.1} parent=139 // pred_check_branch
          %1270 = sbr.rel (%p1268) target = $region192
        $region191: #{generator_forward.1} parent=139 // pred_region
          %1272 = dma.done [#allocation21], 1280
        $region192: #{generator_forward.1} parent=139 // pred_fallthru
          _
        // Predicated region
        $region193: #{generator_forward.1} parent=139 // pred_check
          %p1273 = pneg %p389
        $region194: #{generator_forward.1} parent=139 // pred_check_branch
          %1275 = sbr.rel (%p1273) target = $region196
        $region195: #{generator_forward.1} parent=139 // pred_region
          %1277 = dma.done [#allocation24], 5120
        $region196: #{generator_forward.1} parent=139 // pred_fallthru
          _
        // Predicated region
        $region197: #{generator_forward.1} parent=139 // pred_check
          %p1278 = pneg %p410
        $region198: #{generator_forward.1} parent=139 // pred_check_branch
          %1280 = sbr.rel (%p1278) target = $region200
        $region199: #{generator_forward.1} parent=139 // pred_region
          %1282 = dma.done [#allocation24], 160
        $region200: #{generator_forward.1} parent=139 // pred_fallthru
          _
        // Predicated region
        $region201: #{generator_forward.1} parent=139 // pred_check
          %p1283 = pneg %p431
        $region202: #{generator_forward.1} parent=139 // pred_check_branch
          %1285 = sbr.rel (%p1283) target = $region204
        $region203: #{generator_forward.1} parent=139 // pred_region
          %1287 = dma.done [#allocation27], 1024
        $region204: #{generator_forward.1} parent=139 // pred_fallthru
          _
        // Predicated region
        $region205: #{generator_forward.1} parent=139 // pred_check
          %p1288 = pneg %p452
        $region206: #{generator_forward.1} parent=139 // pred_check_branch
          %1290 = sbr.rel (%p1288) target = $region208
        $region207: #{generator_forward.1} parent=139 // pred_region
          %1292 = dma.done [#allocation27], 1024
        $region208: #{generator_forward.1} parent=139 // pred_fallthru
          _
        // Predicated region
        $region209: #{generator_forward.1} parent=139 // pred_check
          %p1293 = pneg %p473
        $region210: #{generator_forward.1} parent=139 // pred_check_branch
          %1295 = sbr.rel (%p1293) target = $region212
        $region211: #{generator_forward.1} parent=139 // pred_region
          %1297 = dma.done [#allocation30], 512
        $region212: #{generator_forward.1} parent=139 // pred_fallthru
          _
        // Predicated region
        $region213: #{generator_forward.1} parent=139 // pred_check
          %p1298 = pneg %p494
        $region214: #{generator_forward.1} parent=139 // pred_check_branch
          %1300 = sbr.rel (%p1298) target = $region216
        $region215: #{generator_forward.1} parent=139 // pred_region
          %1302 = dma.done [#allocation30], 512
        $region216: #{generator_forward.1} parent=139 // pred_fallthru
          _
        // Predicated region
        $region217: #{generator_forward.1} parent=139 // pred_check
          %p1303 = pneg %p515
        $region218: #{generator_forward.1} parent=139 // pred_check_branch
          %1305 = sbr.rel (%p1303) target = $region220
        $region219: #{generator_forward.1} parent=139 // pred_region
          %1307 = dma.done [#allocation33], 512
        $region220: #{generator_forward.1} parent=139 // pred_fallthru
          _
        // Predicated region
        $region221: #{generator_forward.1} parent=139 // pred_check
          %p1308 = pneg %p536
        $region222: #{generator_forward.1} parent=139 // pred_check_branch
          %1310 = sbr.rel (%p1308) target = $region224
        $region223: #{generator_forward.1} parent=139 // pred_region
          %1312 = dma.done [#allocation33], 768
        $region224: #{generator_forward.1} parent=139 // pred_fallthru
          _
        // Predicated region
        $region225: #{generator_forward.1} parent=139 // pred_check
          %p1313 = pneg %p557
        $region226: #{generator_forward.1} parent=139 // pred_check_branch
          %1315 = sbr.rel (%p1313) target = $region228
        $region227: #{generator_forward.1} parent=139 // pred_region
          %1317 = dma.done [#allocation36], 256
        $region228: #{generator_forward.1} parent=139 // pred_fallthru
          _
        // Predicated region
        $region229: #{generator_forward.1} parent=139 // pred_check
          %p1318 = pneg %p599
        $region230: #{generator_forward.1} parent=139 // pred_check_branch
          %1320 = sbr.rel (%p1318) target = $region232
        $region231: #{generator_forward.1} parent=139 // pred_region
          %1322 = dma.done [#allocation36], 1280
        $region232: #{generator_forward.1} parent=139 // pred_fallthru
          _
        // Predicated region
        $region233: #{generator_forward.1} parent=139 // pred_check
          %p1323 = pneg %p620
        $region234: #{generator_forward.1} parent=139 // pred_check_branch
          %1325 = sbr.rel (%p1323) target = $region236
        $region235: #{generator_forward.1} parent=139 // pred_region
          %1327 = dma.done [#allocation39], 128
        $region236: #{generator_forward.1} parent=139 // pred_fallthru
          _
        // Predicated region
        $region237: #{generator_forward.1} parent=139 // pred_check
          %p1328 = pneg %p641
        $region238: #{generator_forward.1} parent=139 // pred_check_branch
          %1330 = sbr.rel (%p1328) target = $region240
        $region239: #{generator_forward.1} parent=139 // pred_region
          %1332 = dma.done [#allocation39], 128
        $region240: #{generator_forward.1} parent=139 // pred_fallthru
          _
        // Predicated region
        $region241: #{generator_forward.1} parent=139 // pred_check
          %p1333 = pneg %p662
        $region242: #{generator_forward.1} parent=139 // pred_check_branch
          %1335 = sbr.rel (%p1333) target = $region244
        $region243: #{generator_forward.1} parent=139 // pred_region
          %1337 = dma.done [#allocation42], 5120
        $region244: #{generator_forward.1} parent=139 // pred_fallthru
          _
        // Predicated region
        $region245: #{generator_forward.1} parent=139 // pred_check
          %p1338 = pneg %p683
        $region246: #{generator_forward.1} parent=139 // pred_check_branch
          %1340 = sbr.rel (%p1338) target = $region248
        $region247: #{generator_forward.1} parent=139 // pred_region
          %1342 = dma.done [#allocation42], 64
        $region248: #{generator_forward.1} parent=139 // pred_fallthru
          _
        // Predicated region
        $region249: #{generator_forward.1} parent=139 // pred_check
          %p1343 = pneg %p725
        $region250: #{generator_forward.1} parent=139 // pred_check_branch
          %1345 = sbr.rel (%p1343) target = $region252
        $region251: #{generator_forward.1} parent=139 // pred_region
          %1347 = dma.done [#allocation45], 15360
        $region252: #{generator_forward.1} parent=139 // pred_fallthru
          _
        %s1348 = sand.u32 %s103, 1
        %s1349 = scalar_lea.sflag [#allocation3], %s1348
        %s1350 = sand.u32 %s103, 1
        %s1351 = smul.addr %s1350, 12
        %s1352 = scalar_lea.vmem [#allocation2], %s1351
        %p1353 = pneg %p116
        %p1354 = pneg %p113
        %p1355 = pneg %p137
        %p1356 = pneg %p134
        %p1357 = pneg %p158
        %p1358 = pneg %p155
        %p1359 = pneg %p179
        %p1360 = pneg %p176
        %p1361 = pneg %p200
        %p1362 = pneg %p197
        %p1363 = pneg %p221
        %p1364 = pneg %p218
        %p1365 = pneg %p242
        %p1366 = pneg %p239
        %p1367 = pneg %p263
        %p1368 = pneg %p260
        %p1369 = pneg %p284
        %p1370 = pneg %p281
        %p1371 = pneg %p305
        %p1372 = pneg %p302
        %p1373 = pneg %p326
        %p1374 = pneg %p323
        %p1375 = pneg %p347
        %p1376 = pneg %p344
        %p1377 = pneg %p368
        %p1378 = pneg %p365
        %p1379 = pneg %p389
        %p1380 = pneg %p386
        %p1381 = pneg %p410
        %p1382 = pneg %p407
        %p1383 = pneg %p431
        %p1384 = pneg %p428
        %p1385 = pneg %p452
        %p1386 = pneg %p449
        %p1387 = pneg %p473
        %p1388 = pneg %p470
        %p1389 = pneg %p494
        %p1390 = pneg %p491
        %p1391 = pneg %p515
        %p1392 = pneg %p512
        %p1393 = pneg %p536
        %p1394 = pneg %p533
        %p1395 = pneg %p557
        %p1396 = pneg %p554
        %p1397 = pneg %p578
        %p1398 = pneg %p575
        %p1399 = pneg %p599
        %p1400 = pneg %p596
        %p1401 = pneg %p620
        %p1402 = pneg %p617
        %p1403 = pneg %p641
        %p1404 = pneg %p638
        %p1405 = pneg %p662
        %p1406 = pneg %p659
        %p1407 = pneg %p683
        %p1408 = pneg %p680
        %p1409 = pneg %p704
        %p1410 = pneg %p701
        %p1411 = pneg %p725
        %p1412 = pneg %p722
        %p1413 = pneg %p751
        %p1414 = pneg %p748
        %s1415 = sand.u32 %s738, 1
        %s1416 = scalar_lea.sflag [#allocation4], %s1415
        %s1417 = sand.u32 %s738, 1
        %s1418 = smul.addr %s1417, 12
        %s1419 = scalar_lea.vmem [#allocation46], %s1418
        %p1420 = pneg %p777
        %p1421 = pneg %p774
        %p1422 = scmp.lt.s32.totalorder %s95, 1
        %s1423 = scalar_select %p1422, %s95, 1
        %s1424 = smul.addr %s1423, 8
        %s1425 = scalar_lea.vmem %s63, %s1424
        %p1426 = scmp.lt.s32.totalorder %s95, 1
        %s1427 = scalar_select %p1426, %s95, 1
        %s1428 = smul.addr %s1427, 8
        %s1429 = scalar_lea.vmem %s63, %s1428
        %v1431 = vld [vmem:[%s1207] sm:$0xff]
        %v1432 = vld [vmem:[%s1207 + $0x8] sm:$0xf]
        %1435 = vst [vmem:[#allocation1] ss:$2 sm:$0xff] %v1431
        %s1436 = scalar_lea.vmem [#allocation1], 16
        %1437 = vst [vmem:[%s1436] ss:$2 sm:$0xff] %v1432
        %v1438 = vld.sshfl [vmem:[#allocation1] sm:$0xff pattern:$0x75316420]
        %v1439 = vld.sshfl [vmem:[#allocation1 + $0x8] sm:$0xff pattern:$0x75316420]
        %v1440 = vld.sshfl [vmem:[#allocation1 + $0x10] sm:$0xff pattern:$0x75316420]
        %v1444 = vpack.c.bf16 %v1438, %v1438
        %v1445 = vpack.c.bf16 %v1439, %v1439
        %v1446 = vpack.c.bf16 %v1440, %v1440
        %v1447 = vld [vmem:[#allocation7] sm:$0xff]
        %v1448 = vld [vmem:[#allocation7 + $0x8] sm:$0xff]
        %v1449 = vld [vmem:[#allocation7 + $0x10] sm:$0xff]
        %v1450 = vld [vmem:[#allocation7 + $0x18] sm:$0xff]
        %v1451 = vld [vmem:[#allocation7 + $0x20] sm:$0xff]
        %v1452 = vld [vmem:[#allocation7 + $0x28] sm:$0xff]
        %v1453 = vld [vmem:[#allocation7 + $0x30] sm:$0xff]
        %v1454 = vld [vmem:[#allocation7 + $0x38] sm:$0xff]
        %v1455 = vld [vmem:[#allocation7 + $0x40] sm:$0xff]
        %v1456 = vld [vmem:[#allocation7 + $0x48] sm:$0xff]
        %v1457 = vld [vmem:[#allocation7 + $0x50] sm:$0xff]
        %v1458 = vld [vmem:[#allocation7 + $0x58] sm:$0xff]
        %v1459 = vld [vmem:[#allocation7 + $0x60] sm:$0xff]
        %v1460 = vld [vmem:[#allocation7 + $0x68] sm:$0xff]
        %v1461 = vld [vmem:[#allocation7 + $0x70] sm:$0xff]
        %v1462 = vld [vmem:[#allocation7 + $0x78] sm:$0xff]
        %v1463 = vld [vmem:[#allocation7 + $0x80] sm:$0xff]
        %v1464 = vld [vmem:[#allocation7 + $0x88] sm:$0xff]
        %v1465 = vld [vmem:[#allocation7 + $0x90] sm:$0xff]
        %v1466 = vld [vmem:[#allocation7 + $0x98] sm:$0xff]
        %v1467 = vld [vmem:[#allocation7 + $0xa0] sm:$0xff]
        %v1468 = vld [vmem:[#allocation7 + $0xa8] sm:$0xff]
        %v1469 = vld [vmem:[#allocation7 + $0xb0] sm:$0xff]
        %v1470 = vld [vmem:[#allocation7 + $0xb8] sm:$0xff]
        %v1471 = vld [vmem:[#allocation7 + $0xc0] sm:$0xff]
        %v1472 = vld [vmem:[#allocation7 + $0xc8] sm:$0xff]
        %v1473 = vld [vmem:[#allocation7 + $0xd0] sm:$0xff]
        %v1474 = vld [vmem:[#allocation7 + $0xd8] sm:$0xff]
        %v1475 = vld [vmem:[#allocation7 + $0xe0] sm:$0xff]
        %v1476 = vld [vmem:[#allocation7 + $0xe8] sm:$0xff]
        %v1477 = vld [vmem:[#allocation7 + $0xf0] sm:$0xff]
        %v1478 = vld [vmem:[#allocation7 + $0xf8] sm:$0xff]
        %v1479 = vld [vmem:[#allocation7 + $0x100] sm:$0xff]
        %v1480 = vld [vmem:[#allocation7 + $0x108] sm:$0xff]
        %v1481 = vld [vmem:[#allocation7 + $0x110] sm:$0xff]
        %v1482 = vld [vmem:[#allocation7 + $0x118] sm:$0xff]
        %v1483 = vld [vmem:[#allocation7 + $0x120] sm:$0xff]
        %v1484 = vld [vmem:[#allocation7 + $0x128] sm:$0xff]
        %v1485 = vld [vmem:[#allocation7 + $0x130] sm:$0xff]
        %v1486 = vld [vmem:[#allocation7 + $0x138] sm:$0xff]
        %v1527 = vunpack.c.l.b16 %v1447
        %v1528 = vunpack.c.h.b16 %v1447
        %v1529 = vunpack.c.l.b16 %v1448
        %v1530 = vunpack.c.h.b16 %v1448
        %v1531 = vunpack.c.l.b16 %v1449
        %v1532 = vunpack.c.h.b16 %v1449
        %v1533 = vunpack.c.l.b16 %v1450
        %v1534 = vunpack.c.h.b16 %v1450
        %v1535 = vunpack.c.l.b16 %v1451
        %v1536 = vunpack.c.h.b16 %v1451
        %v1537 = vunpack.c.l.b16 %v1452
        %v1538 = vunpack.c.h.b16 %v1452
        %v1539 = vunpack.c.l.b16 %v1453
        %v1540 = vunpack.c.h.b16 %v1453
        %v1541 = vunpack.c.l.b16 %v1454
        %v1542 = vunpack.c.h.b16 %v1454
        %v1543 = vunpack.c.l.b16 %v1455
        %v1544 = vunpack.c.h.b16 %v1455
        %v1545 = vunpack.c.l.b16 %v1456
        %v1546 = vunpack.c.h.b16 %v1456
        %v1547 = vunpack.c.l.b16 %v1457
        %v1548 = vunpack.c.h.b16 %v1457
        %v1549 = vunpack.c.l.b16 %v1458
        %v1550 = vunpack.c.h.b16 %v1458
        %v1551 = vunpack.c.l.b16 %v1459
        %v1552 = vunpack.c.h.b16 %v1459
        %v1553 = vunpack.c.l.b16 %v1460
        %v1554 = vunpack.c.h.b16 %v1460
        %v1555 = vunpack.c.l.b16 %v1461
        %v1556 = vunpack.c.h.b16 %v1461
        %v1557 = vunpack.c.l.b16 %v1462
        %v1558 = vunpack.c.h.b16 %v1462
        %v1559 = vunpack.c.l.b16 %v1463
        %v1560 = vunpack.c.h.b16 %v1463
        %v1561 = vunpack.c.l.b16 %v1464
        %v1562 = vunpack.c.h.b16 %v1464
        %v1563 = vunpack.c.l.b16 %v1465
        %v1564 = vunpack.c.h.b16 %v1465
        %v1565 = vunpack.c.l.b16 %v1466
        %v1566 = vunpack.c.h.b16 %v1466
        %v1567 = vunpack.c.l.b16 %v1467
        %v1568 = vunpack.c.h.b16 %v1467
        %v1569 = vunpack.c.l.b16 %v1468
        %v1570 = vunpack.c.h.b16 %v1468
        %v1571 = vunpack.c.l.b16 %v1469
        %v1572 = vunpack.c.h.b16 %v1469
        %v1573 = vunpack.c.l.b16 %v1470
        %v1574 = vunpack.c.h.b16 %v1470
        %v1575 = vunpack.c.l.b16 %v1471
        %v1576 = vunpack.c.h.b16 %v1471
        %v1577 = vunpack.c.l.b16 %v1472
        %v1578 = vunpack.c.h.b16 %v1472
        %v1579 = vunpack.c.l.b16 %v1473
        %v1580 = vunpack.c.h.b16 %v1473
        %v1581 = vunpack.c.l.b16 %v1474
        %v1582 = vunpack.c.h.b16 %v1474
        %v1583 = vunpack.c.l.b16 %v1475
        %v1584 = vunpack.c.h.b16 %v1475
        %v1585 = vunpack.c.l.b16 %v1476
        %v1586 = vunpack.c.h.b16 %v1476
        %v1587 = vunpack.c.l.b16 %v1477
        %v1588 = vunpack.c.h.b16 %v1477
        %v1589 = vunpack.c.l.b16 %v1478
        %v1590 = vunpack.c.h.b16 %v1478
        %v1591 = vunpack.c.l.b16 %v1479
        %v1592 = vunpack.c.h.b16 %v1479
        %v1593 = vunpack.c.l.b16 %v1480
        %v1594 = vunpack.c.h.b16 %v1480
        %v1595 = vunpack.c.l.b16 %v1481
        %v1596 = vunpack.c.h.b16 %v1481
        %v1597 = vunpack.c.l.b16 %v1482
        %v1598 = vunpack.c.h.b16 %v1482
        %v1599 = vunpack.c.l.b16 %v1483
        %v1600 = vunpack.c.h.b16 %v1483
        %v1601 = vunpack.c.l.b16 %v1484
        %v1602 = vunpack.c.h.b16 %v1484
        %v1603 = vunpack.c.l.b16 %v1485
        %v1604 = vunpack.c.h.b16 %v1485
        %v1605 = vunpack.c.l.b16 %v1486
        %v1606 = vunpack.c.h.b16 %v1486
        %v1607 = vpack.c.b16 %v1529, %v1527
        %v1608 = vpack.c.b16 %v1530, %v1528
        %v1609 = vpack.c.b16 %v1533, %v1531
        %v1610 = vpack.c.b16 %v1534, %v1532
        %v1611 = vpack.c.b16 %v1537, %v1535
        %v1612 = vpack.c.b16 %v1538, %v1536
        %v1613 = vpack.c.b16 %v1541, %v1539
        %v1614 = vpack.c.b16 %v1542, %v1540
        %v1615 = vpack.c.b16 %v1545, %v1543
        %v1616 = vpack.c.b16 %v1546, %v1544
        %v1617 = vpack.c.b16 %v1549, %v1547
        %v1618 = vpack.c.b16 %v1550, %v1548
        %v1619 = vpack.c.b16 %v1553, %v1551
        %v1620 = vpack.c.b16 %v1554, %v1552
        %v1621 = vpack.c.b16 %v1557, %v1555
        %v1622 = vpack.c.b16 %v1558, %v1556
        %v1623 = vpack.c.b16 %v1561, %v1559
        %v1624 = vpack.c.b16 %v1562, %v1560
        %v1625 = vpack.c.b16 %v1565, %v1563
        %v1626 = vpack.c.b16 %v1566, %v1564
        %v1627 = vpack.c.b16 %v1569, %v1567
        %v1628 = vpack.c.b16 %v1570, %v1568
        %v1629 = vpack.c.b16 %v1573, %v1571
        %v1630 = vpack.c.b16 %v1574, %v1572
        %v1631 = vpack.c.b16 %v1577, %v1575
        %v1632 = vpack.c.b16 %v1578, %v1576
        %v1633 = vpack.c.b16 %v1581, %v1579
        %v1634 = vpack.c.b16 %v1582, %v1580
        %v1635 = vpack.c.b16 %v1585, %v1583
        %v1636 = vpack.c.b16 %v1586, %v1584
        %v1637 = vpack.c.b16 %v1589, %v1587
        %v1638 = vpack.c.b16 %v1590, %v1588
        %v1639 = vpack.c.b16 %v1593, %v1591
        %v1640 = vpack.c.b16 %v1594, %v1592
        %v1641 = vpack.c.b16 %v1597, %v1595
        %v1642 = vpack.c.b16 %v1598, %v1596
        %v1643 = vpack.c.b16 %v1601, %v1599
        %v1644 = vpack.c.b16 %v1602, %v1600
        %v1645 = vpack.c.b16 %v1605, %v1603
        %v1646 = vpack.c.b16 %v1606, %v1604
        %vm1687 = vcmask 523264
        %v1689 = vsel %vm1687, %v1446, 0
        %1691 = vmatpush.bf16.msra.mxu0 %v1621
        %1692 = vmatpush.bf16.msra.mxu0 %v1619
        %1693 = vmatpush.bf16.msra.mxu0 %v1617
        %1694 = vmatpush.bf16.msra.mxu0 %v1615
        %1695 = vmatpush.bf16.msra.mxu0 %v1613
        %1696 = vmatpush.bf16.msra.mxu0 %v1611
        %1697 = vmatpush.bf16.msra.mxu0 %v1609
        %1698 = vmatpush.bf16.msra.mxu0 %v1607
        %1699 = vmatmul.bf16.gmra.mxu0 %v1444
        %v1700 = vpop.f32.mrf.mxu0
        %v1701 = vadd.f32 0.0, %v1700
        %v1702 = vpop.f32.mrf.mxu0
        %1703 = vdwg.mxu0
        %1704 = vmatpush.bf16.msra.mxu0 %v1637
        %1705 = vmatpush.bf16.msra.mxu0 %v1635
        %1706 = vmatpush.bf16.msra.mxu0 %v1633
        %1707 = vmatpush.bf16.msra.mxu0 %v1631
        %1708 = vmatpush.bf16.msra.mxu0 %v1629
        %1709 = vmatpush.bf16.msra.mxu0 %v1627
        %1710 = vmatpush.bf16.msra.mxu0 %v1625
        %1711 = vmatpush.bf16.msra.mxu0 %v1623
        %1712 = vmatmul.bf16.gmra.mxu0 %v1445
        %v1713 = vpop.f32.mrf.mxu0
        %v1714 = vadd.f32 %v1701, %v1713
        %v1715 = vpop.f32.mrf.mxu0
        %1716 = vdwg.mxu0
        %1717 = vmatpush.bf16.msra.mxu0 0
        %1718 = vmatpush.bf16.msra.mxu0 0
        %1719 = vmatpush.bf16.msra.mxu0 0
        %1720 = vmatpush.bf16.msra.mxu0 0
        %1721 = vmatpush.bf16.msra.mxu0 %v1645
        %1722 = vmatpush.bf16.msra.mxu0 %v1643
        %1723 = vmatpush.bf16.msra.mxu0 %v1641
        %1724 = vmatpush.bf16.msra.mxu0 %v1639
        %1725 = vmatmul.bf16.gmra.mxu0 %v1689
        %v1726 = vpop.f32.mrf.mxu0
        %v1727 = vadd.f32 %v1714, %v1726
        %v1728 = vpop.f32.mrf.mxu0
        %1729 = vdwg.mxu0
        %1730 = vmatpush.bf16.msra.mxu0 %v1622
        %1731 = vmatpush.bf16.msra.mxu0 %v1620
        %1732 = vmatpush.bf16.msra.mxu0 %v1618
        %1733 = vmatpush.bf16.msra.mxu0 %v1616
        %1734 = vmatpush.bf16.msra.mxu0 %v1614
        %1735 = vmatpush.bf16.msra.mxu0 %v1612
        %1736 = vmatpush.bf16.msra.mxu0 %v1610
        %1737 = vmatpush.bf16.msra.mxu0 %v1608
        %1738 = vmatmul.bf16.gmra.mxu0 %v1444
        %v1739 = vpop.f32.mrf.mxu0
        %v1740 = vadd.f32 0.0, %v1739
        %v1741 = vpop.f32.mrf.mxu0
        %1742 = vdwg.mxu0
        %1743 = vmatpush.bf16.msra.mxu0 %v1638
        %1744 = vmatpush.bf16.msra.mxu0 %v1636
        %1745 = vmatpush.bf16.msra.mxu0 %v1634
        %1746 = vmatpush.bf16.msra.mxu0 %v1632
        %1747 = vmatpush.bf16.msra.mxu0 %v1630
        %1748 = vmatpush.bf16.msra.mxu0 %v1628
        %1749 = vmatpush.bf16.msra.mxu0 %v1626
        %1750 = vmatpush.bf16.msra.mxu0 %v1624
        %1751 = vmatmul.bf16.gmra.mxu0 %v1445
        %v1752 = vpop.f32.mrf.mxu0
        %v1753 = vadd.f32 %v1740, %v1752
        %v1754 = vpop.f32.mrf.mxu0
        %1755 = vdwg.mxu0
        %1756 = vmatpush.bf16.msra.mxu0 0
        %1757 = vmatpush.bf16.msra.mxu0 0
        %1758 = vmatpush.bf16.msra.mxu0 0
        %1759 = vmatpush.bf16.msra.mxu0 0
        %1760 = vmatpush.bf16.msra.mxu0 %v1646
        %1761 = vmatpush.bf16.msra.mxu0 %v1644
        %1762 = vmatpush.bf16.msra.mxu0 %v1642
        %1763 = vmatpush.bf16.msra.mxu0 %v1640
        %1764 = vmatmul.bf16.gmra.mxu0 %v1689
        %v1765 = vpop.f32.mrf.mxu0
        %v1766 = vadd.f32 %v1753, %v1765
        %v1767 = vpop.f32.mrf.mxu0
        %1768 = vdwg.mxu0
        %v1769 = vpack.c.bf16 %v1727, %v1727
        %v1770 = vpack.c.bf16 %v1766, %v1766
        %v1771 = vld [vmem:[#allocation5] sm:$0x3]
        %s1772 = scalar_lea.vmem [#allocation7], 320
        %v1773 = vld [vmem:[%s1772] sm:$0xff]
        %v1774 = vld [vmem:[%s1772 + $0x8] sm:$0xff]
        %v1775 = vld [vmem:[%s1772 + $0x10] sm:$0xff]
        %v1776 = vld [vmem:[%s1772 + $0x18] sm:$0xff]
        %v1777 = vld [vmem:[%s1772 + $0x20] sm:$0xff]
        %v1778 = vld [vmem:[%s1772 + $0x28] sm:$0xff]
        %v1779 = vld [vmem:[%s1772 + $0x30] sm:$0xff]
        %v1780 = vld [vmem:[%s1772 + $0x38] sm:$0xff]
        %v1781 = vld [vmem:[%s1772 + $0x40] sm:$0xff]
        %v1782 = vld [vmem:[%s1772 + $0x48] sm:$0xff]
        %v1783 = vld [vmem:[%s1772 + $0x50] sm:$0xff]
        %v1784 = vld [vmem:[%s1772 + $0x58] sm:$0xff]
        %v1785 = vld [vmem:[%s1772 + $0x60] sm:$0xff]
        %v1786 = vld [vmem:[%s1772 + $0x68] sm:$0xff]
        %v1787 = vld [vmem:[%s1772 + $0x70] sm:$0xff]
        %v1788 = vld [vmem:[%s1772 + $0x78] sm:$0xff]
        %v1789 = vld [vmem:[%s1772 + $0x80] sm:$0xff]
        %v1790 = vld [vmem:[%s1772 + $0x88] sm:$0xff]
        %v1791 = vld [vmem:[%s1772 + $0x90] sm:$0xff]
        %v1792 = vld [vmem:[%s1772 + $0x98] sm:$0xff]
        %v1793 = vld [vmem:[%s1772 + $0xa0] sm:$0xff]
        %v1794 = vld [vmem:[%s1772 + $0xa8] sm:$0xff]
        %v1795 = vld [vmem:[%s1772 + $0xb0] sm:$0xff]
        %v1796 = vld [vmem:[%s1772 + $0xb8] sm:$0xff]
        %v1797 = vld [vmem:[%s1772 + $0xc0] sm:$0xff]
        %v1798 = vld [vmem:[%s1772 + $0xc8] sm:$0xff]
        %v1799 = vld [vmem:[%s1772 + $0xd0] sm:$0xff]
        %v1800 = vld [vmem:[%s1772 + $0xd8] sm:$0xff]
        %v1801 = vld [vmem:[%s1772 + $0xe0] sm:$0xff]
        %v1802 = vld [vmem:[%s1772 + $0xe8] sm:$0xff]
        %v1803 = vld [vmem:[%s1772 + $0xf0] sm:$0xff]
        %v1804 = vld [vmem:[%s1772 + $0xf8] sm:$0xff]
        %v1805 = vld [vmem:[%s1772 + $0x100] sm:$0xff]
        %v1806 = vld [vmem:[%s1772 + $0x108] sm:$0xff]
        %v1807 = vld [vmem:[%s1772 + $0x110] sm:$0xff]
        %v1808 = vld [vmem:[%s1772 + $0x118] sm:$0xff]
        %v1809 = vld [vmem:[%s1772 + $0x120] sm:$0xff]
        %v1810 = vld [vmem:[%s1772 + $0x128] sm:$0xff]
        %v1811 = vld [vmem:[%s1772 + $0x130] sm:$0xff]
        %v1812 = vld [vmem:[%s1772 + $0x138] sm:$0xff]
        %v1853 = vunpack.c.l.b16 %v1773
        %v1854 = vunpack.c.h.b16 %v1773
        %v1855 = vunpack.c.l.b16 %v1774
        %v1856 = vunpack.c.h.b16 %v1774
        %v1857 = vunpack.c.l.b16 %v1775
        %v1858 = vunpack.c.h.b16 %v1775
        %v1859 = vunpack.c.l.b16 %v1776
        %v1860 = vunpack.c.h.b16 %v1776
        %v1861 = vunpack.c.l.b16 %v1777
        %v1862 = vunpack.c.h.b16 %v1777
        %v1863 = vunpack.c.l.b16 %v1778
        %v1864 = vunpack.c.h.b16 %v1778
        %v1865 = vunpack.c.l.b16 %v1779
        %v1866 = vunpack.c.h.b16 %v1779
        %v1867 = vunpack.c.l.b16 %v1780
        %v1868 = vunpack.c.h.b16 %v1780
        %v1869 = vunpack.c.l.b16 %v1781
        %v1870 = vunpack.c.h.b16 %v1781
        %v1871 = vunpack.c.l.b16 %v1782
        %v1872 = vunpack.c.h.b16 %v1782
        %v1873 = vunpack.c.l.b16 %v1783
        %v1874 = vunpack.c.h.b16 %v1783
        %v1875 = vunpack.c.l.b16 %v1784
        %v1876 = vunpack.c.h.b16 %v1784
        %v1877 = vunpack.c.l.b16 %v1785
        %v1878 = vunpack.c.h.b16 %v1785
        %v1879 = vunpack.c.l.b16 %v1786
        %v1880 = vunpack.c.h.b16 %v1786
        %v1881 = vunpack.c.l.b16 %v1787
        %v1882 = vunpack.c.h.b16 %v1787
        %v1883 = vunpack.c.l.b16 %v1788
        %v1884 = vunpack.c.h.b16 %v1788
        %v1885 = vunpack.c.l.b16 %v1789
        %v1886 = vunpack.c.h.b16 %v1789
        %v1887 = vunpack.c.l.b16 %v1790
        %v1888 = vunpack.c.h.b16 %v1790
        %v1889 = vunpack.c.l.b16 %v1791
        %v1890 = vunpack.c.h.b16 %v1791
        %v1891 = vunpack.c.l.b16 %v1792
        %v1892 = vunpack.c.h.b16 %v1792
        %v1893 = vunpack.c.l.b16 %v1793
        %v1894 = vunpack.c.h.b16 %v1793
        %v1895 = vunpack.c.l.b16 %v1794
        %v1896 = vunpack.c.h.b16 %v1794
        %v1897 = vunpack.c.l.b16 %v1795
        %v1898 = vunpack.c.h.b16 %v1795
        %v1899 = vunpack.c.l.b16 %v1796
        %v1900 = vunpack.c.h.b16 %v1796
        %v1901 = vunpack.c.l.b16 %v1797
        %v1902 = vunpack.c.h.b16 %v1797
        %v1903 = vunpack.c.l.b16 %v1798
        %v1904 = vunpack.c.h.b16 %v1798
        %v1905 = vunpack.c.l.b16 %v1799
        %v1906 = vunpack.c.h.b16 %v1799
        %v1907 = vunpack.c.l.b16 %v1800
        %v1908 = vunpack.c.h.b16 %v1800
        %v1909 = vunpack.c.l.b16 %v1801
        %v1910 = vunpack.c.h.b16 %v1801
        %v1911 = vunpack.c.l.b16 %v1802
        %v1912 = vunpack.c.h.b16 %v1802
        %v1913 = vunpack.c.l.b16 %v1803
        %v1914 = vunpack.c.h.b16 %v1803
        %v1915 = vunpack.c.l.b16 %v1804
        %v1916 = vunpack.c.h.b16 %v1804
        %v1917 = vunpack.c.l.b16 %v1805
        %v1918 = vunpack.c.h.b16 %v1805
        %v1919 = vunpack.c.l.b16 %v1806
        %v1920 = vunpack.c.h.b16 %v1806
        %v1921 = vunpack.c.l.b16 %v1807
        %v1922 = vunpack.c.h.b16 %v1807
        %v1923 = vunpack.c.l.b16 %v1808
        %v1924 = vunpack.c.h.b16 %v1808
        %v1925 = vunpack.c.l.b16 %v1809
        %v1926 = vunpack.c.h.b16 %v1809
        %v1927 = vunpack.c.l.b16 %v1810
        %v1928 = vunpack.c.h.b16 %v1810
        %v1929 = vunpack.c.l.b16 %v1811
        %v1930 = vunpack.c.h.b16 %v1811
        %v1931 = vunpack.c.l.b16 %v1812
        %v1932 = vunpack.c.h.b16 %v1812
        %v1933 = vpack.c.b16 %v1855, %v1853
        %v1934 = vpack.c.b16 %v1856, %v1854
        %v1935 = vpack.c.b16 %v1859, %v1857
        %v1936 = vpack.c.b16 %v1860, %v1858
        %v1937 = vpack.c.b16 %v1863, %v1861
        %v1938 = vpack.c.b16 %v1864, %v1862
        %v1939 = vpack.c.b16 %v1867, %v1865
        %v1940 = vpack.c.b16 %v1868, %v1866
        %v1941 = vpack.c.b16 %v1871, %v1869
        %v1942 = vpack.c.b16 %v1872, %v1870
        %v1943 = vpack.c.b16 %v1875, %v1873
        %v1944 = vpack.c.b16 %v1876, %v1874
        %v1945 = vpack.c.b16 %v1879, %v1877
        %v1946 = vpack.c.b16 %v1880, %v1878
        %v1947 = vpack.c.b16 %v1883, %v1881
        %v1948 = vpack.c.b16 %v1884, %v1882
        %v1949 = vpack.c.b16 %v1887, %v1885
        %v1950 = vpack.c.b16 %v1888, %v1886
        %v1951 = vpack.c.b16 %v1891, %v1889
        %v1952 = vpack.c.b16 %v1892, %v1890
        %v1953 = vpack.c.b16 %v1895, %v1893
        %v1954 = vpack.c.b16 %v1896, %v1894
        %v1955 = vpack.c.b16 %v1899, %v1897
        %v1956 = vpack.c.b16 %v1900, %v1898
        %v1957 = vpack.c.b16 %v1903, %v1901
        %v1958 = vpack.c.b16 %v1904, %v1902
        %v1959 = vpack.c.b16 %v1907, %v1905
        %v1960 = vpack.c.b16 %v1908, %v1906
        %v1961 = vpack.c.b16 %v1911, %v1909
        %v1962 = vpack.c.b16 %v1912, %v1910
        %v1963 = vpack.c.b16 %v1915, %v1913
        %v1964 = vpack.c.b16 %v1916, %v1914
        %v1965 = vpack.c.b16 %v1919, %v1917
        %v1966 = vpack.c.b16 %v1920, %v1918
        %v1967 = vpack.c.b16 %v1923, %v1921
        %v1968 = vpack.c.b16 %v1924, %v1922
        %v1969 = vpack.c.b16 %v1927, %v1925
        %v1970 = vpack.c.b16 %v1928, %v1926
        %v1971 = vpack.c.b16 %v1931, %v1929
        %v1972 = vpack.c.b16 %v1932, %v1930
        %2013 = vmatpush.bf16.msra.mxu0 %v1947
        %2014 = vmatpush.bf16.msra.mxu0 %v1945
        %2015 = vmatpush.bf16.msra.mxu0 %v1943
        %2016 = vmatpush.bf16.msra.mxu0 %v1941
        %2017 = vmatpush.bf16.msra.mxu0 %v1939
        %2018 = vmatpush.bf16.msra.mxu0 %v1937
        %2019 = vmatpush.bf16.msra.mxu0 %v1935
        %2020 = vmatpush.bf16.msra.mxu0 %v1933
        %2021 = vmatmul.bf16.gmra.mxu0 %v1444
        %v2022 = vpop.f32.mrf.mxu0
        %v2023 = vadd.f32 0.0, %v2022
        %v2024 = vpop.f32.mrf.mxu0
        %2025 = vdwg.mxu0
        %2026 = vmatpush.bf16.msra.mxu0 %v1963
        %2027 = vmatpush.bf16.msra.mxu0 %v1961
        %2028 = vmatpush.bf16.msra.mxu0 %v1959
        %2029 = vmatpush.bf16.msra.mxu0 %v1957
        %2030 = vmatpush.bf16.msra.mxu0 %v1955
        %2031 = vmatpush.bf16.msra.mxu0 %v1953
        %2032 = vmatpush.bf16.msra.mxu0 %v1951
        %2033 = vmatpush.bf16.msra.mxu0 %v1949
        %2034 = vmatmul.bf16.gmra.mxu0 %v1445
        %v2035 = vpop.f32.mrf.mxu0
        %v2036 = vadd.f32 %v2023, %v2035
        %v2037 = vpop.f32.mrf.mxu0
        %2038 = vdwg.mxu0
        %2039 = vmatpush.bf16.msra.mxu0 0
        %2040 = vmatpush.bf16.msra.mxu0 0
        %2041 = vmatpush.bf16.msra.mxu0 0
        %2042 = vmatpush.bf16.msra.mxu0 0
        %2043 = vmatpush.bf16.msra.mxu0 %v1971
        %2044 = vmatpush.bf16.msra.mxu0 %v1969
        %2045 = vmatpush.bf16.msra.mxu0 %v1967
        %2046 = vmatpush.bf16.msra.mxu0 %v1965
        %2047 = vmatmul.bf16.gmra.mxu0 %v1689
        %v2048 = vpop.f32.mrf.mxu0
        %v2049 = vadd.f32 %v2036, %v2048
        %v2050 = vpop.f32.mrf.mxu0
        %2051 = vdwg.mxu0
        %2052 = vmatpush.bf16.msra.mxu0 %v1948
        %2053 = vmatpush.bf16.msra.mxu0 %v1946
        %2054 = vmatpush.bf16.msra.mxu0 %v1944
        %2055 = vmatpush.bf16.msra.mxu0 %v1942
        %2056 = vmatpush.bf16.msra.mxu0 %v1940
        %2057 = vmatpush.bf16.msra.mxu0 %v1938
        %2058 = vmatpush.bf16.msra.mxu0 %v1936
        %2059 = vmatpush.bf16.msra.mxu0 %v1934
        %2060 = vmatmul.bf16.gmra.mxu0 %v1444
        %v2061 = vpop.f32.mrf.mxu0
        %v2062 = vadd.f32 0.0, %v2061
        %v2063 = vpop.f32.mrf.mxu0
        %2064 = vdwg.mxu0
        %2065 = vmatpush.bf16.msra.mxu0 %v1964
        %2066 = vmatpush.bf16.msra.mxu0 %v1962
        %2067 = vmatpush.bf16.msra.mxu0 %v1960
        %2068 = vmatpush.bf16.msra.mxu0 %v1958
        %2069 = vmatpush.bf16.msra.mxu0 %v1956
        %2070 = vmatpush.bf16.msra.mxu0 %v1954
        %2071 = vmatpush.bf16.msra.mxu0 %v1952
        %2072 = vmatpush.bf16.msra.mxu0 %v1950
        %2073 = vmatmul.bf16.gmra.mxu0 %v1445
        %v2074 = vpop.f32.mrf.mxu0
        %v2075 = vadd.f32 %v2062, %v2074
        %v2076 = vpop.f32.mrf.mxu0
        %2077 = vdwg.mxu0
        %2078 = vmatpush.bf16.msra.mxu0 0
        %2079 = vmatpush.bf16.msra.mxu0 0
        %2080 = vmatpush.bf16.msra.mxu0 0
        %2081 = vmatpush.bf16.msra.mxu0 0
        %2082 = vmatpush.bf16.msra.mxu0 %v1972
        %2083 = vmatpush.bf16.msra.mxu0 %v1970
        %2084 = vmatpush.bf16.msra.mxu0 %v1968
        %2085 = vmatpush.bf16.msra.mxu0 %v1966
        %2086 = vmatmul.bf16.gmra.mxu0 %v1689
        %v2087 = vpop.f32.mrf.mxu0
        %v2088 = vadd.f32 %v2075, %v2087
        %v2089 = vpop.f32.mrf.mxu0
        %2090 = vdwg.mxu0
        %v2091 = vpack.c.bf16 %v2049, %v2049
        %v2092 = vpack.c.bf16 %v2088, %v2088
        %s2093 = scalar_lea.vmem [#allocation5], 2
        %v2094 = vld [vmem:[%s2093] sm:$0x3]
        %vm2095 = vcmask 31744
        %v2097 = vsel %vm2095, %v2094, 0
        %vm2099 = vcmask 1041408
        %v2101 = vsel %vm2099, %v2091, 0
        %v2104 = vsel %vm2099, %v2092, 0
        %2106 = vmatpush.bf16.msra.mxu0 0
        %2107 = vmatpush.bf16.msra.mxu0 0
        %2108 = vmatpush.bf16.msra.mxu0 0
        %2109 = vmatpush.bf16.msra.mxu0 0
        %2110 = vmatpush.bf16.msra.mxu0 0
        %2111 = vmatpush.bf16.msra.mxu0 0
        %2112 = vmatpush.bf16.msra.mxu0 0
        %2113 = vmatpush.bf16.msra.mxu0 %v2101
        %2114 = vmatmul.bf16.gmra.mxu0 %v2097
        %v2115 = vpop.f32.mrf.mxu0
        %v2116 = vadd.f32 0.0, %v2115
        %v2117 = vpop.f32.mrf.mxu0
        %2118 = vdwg.mxu0
        %2119 = vmatpush.bf16.msra.mxu0 0
        %2120 = vmatpush.bf16.msra.mxu0 0
        %2121 = vmatpush.bf16.msra.mxu0 0
        %2122 = vmatpush.bf16.msra.mxu0 0
        %2123 = vmatpush.bf16.msra.mxu0 0
        %2124 = vmatpush.bf16.msra.mxu0 0
        %2125 = vmatpush.bf16.msra.mxu0 0
        %2126 = vmatpush.bf16.msra.mxu0 %v2104
        %2127 = vmatmul.bf16.gmra.mxu0 %v2097
        %v2128 = vpop.f32.mrf.mxu0
        %v2129 = vadd.f32 0.0, %v2128
        %v2130 = vpop.f32.mrf.mxu0
        %2131 = vdwg.mxu0
        %v2133 = vsel %vm2095, %v1771, 0
        %v2136 = vsel %vm2099, %v1769, 0
        %v2139 = vsel %vm2099, %v1770, 0
        %2141 = vmatpush.bf16.msra.mxu0 0
        %2142 = vmatpush.bf16.msra.mxu0 0
        %2143 = vmatpush.bf16.msra.mxu0 0
        %2144 = vmatpush.bf16.msra.mxu0 0
        %2145 = vmatpush.bf16.msra.mxu0 0
        %2146 = vmatpush.bf16.msra.mxu0 0
        %2147 = vmatpush.bf16.msra.mxu0 0
        %2148 = vmatpush.bf16.msra.mxu0 %v2136
        %2149 = vmatmul.bf16.gmra.mxu0 %v2133
        %v2150 = vpop.f32.mrf.mxu0
        %v2151 = vadd.f32 %v2116, %v2150
        %v2152 = vpop.f32.mrf.mxu0
        %2153 = vdwg.mxu0
        %2154 = vmatpush.bf16.msra.mxu0 0
        %2155 = vmatpush.bf16.msra.mxu0 0
        %2156 = vmatpush.bf16.msra.mxu0 0
        %2157 = vmatpush.bf16.msra.mxu0 0
        %2158 = vmatpush.bf16.msra.mxu0 0
        %2159 = vmatpush.bf16.msra.mxu0 0
        %2160 = vmatpush.bf16.msra.mxu0 0
        %2161 = vmatpush.bf16.msra.mxu0 %v2139
        %2162 = vmatmul.bf16.gmra.mxu0 %v2133
        %v2163 = vpop.f32.mrf.mxu0
        %v2164 = vadd.f32 %v2129, %v2163
        %v2165 = vpop.f32.mrf.mxu0
        %2166 = vdwg.mxu0
        %s2167 = scalar_lea.vmem [#allocation7], 640
        %v2168 = vld [vmem:[%s2167] sm:$0xff]
        %v2169 = vld [vmem:[%s2167 + $0x8] sm:$0xff]
        %v2170 = vld [vmem:[%s2167 + $0x10] sm:$0xff]
        %v2171 = vld [vmem:[%s2167 + $0x18] sm:$0xff]
        %v2172 = vld [vmem:[%s2167 + $0x20] sm:$0xff]
        %v2173 = vld [vmem:[%s2167 + $0x28] sm:$0xff]
        %v2174 = vld [vmem:[%s2167 + $0x30] sm:$0xff]
        %v2175 = vld [vmem:[%s2167 + $0x38] sm:$0xff]
        %v2176 = vld [vmem:[%s2167 + $0x40] sm:$0xff]
        %v2177 = vld [vmem:[%s2167 + $0x48] sm:$0xff]
        %v2178 = vld [vmem:[%s2167 + $0x50] sm:$0xff]
        %v2179 = vld [vmem:[%s2167 + $0x58] sm:$0xff]
        %v2180 = vld [vmem:[%s2167 + $0x60] sm:$0xff]
        %v2181 = vld [vmem:[%s2167 + $0x68] sm:$0xff]
        %v2182 = vld [vmem:[%s2167 + $0x70] sm:$0xff]
        %v2183 = vld [vmem:[%s2167 + $0x78] sm:$0xff]
        %v2184 = vld [vmem:[%s2167 + $0x80] sm:$0xff]
        %v2185 = vld [vmem:[%s2167 + $0x88] sm:$0xff]
        %v2186 = vld [vmem:[%s2167 + $0x90] sm:$0xff]
        %v2187 = vld [vmem:[%s2167 + $0x98] sm:$0xff]
        %v2188 = vld [vmem:[%s2167 + $0xa0] sm:$0xff]
        %v2189 = vld [vmem:[%s2167 + $0xa8] sm:$0xff]
        %v2190 = vld [vmem:[%s2167 + $0xb0] sm:$0xff]
        %v2191 = vld [vmem:[%s2167 + $0xb8] sm:$0xff]
        %v2192 = vld [vmem:[%s2167 + $0xc0] sm:$0xff]
        %v2193 = vld [vmem:[%s2167 + $0xc8] sm:$0xff]
        %v2194 = vld [vmem:[%s2167 + $0xd0] sm:$0xff]
        %v2195 = vld [vmem:[%s2167 + $0xd8] sm:$0xff]
        %v2196 = vld [vmem:[%s2167 + $0xe0] sm:$0xff]
        %v2197 = vld [vmem:[%s2167 + $0xe8] sm:$0xff]
        %v2198 = vld [vmem:[%s2167 + $0xf0] sm:$0xff]
        %v2199 = vld [vmem:[%s2167 + $0xf8] sm:$0xff]
        %v2200 = vld [vmem:[%s2167 + $0x100] sm:$0xff]
        %v2201 = vld [vmem:[%s2167 + $0x108] sm:$0xff]
        %v2202 = vld [vmem:[%s2167 + $0x110] sm:$0xff]
        %v2203 = vld [vmem:[%s2167 + $0x118] sm:$0xff]
        %v2204 = vld [vmem:[%s2167 + $0x120] sm:$0xff]
        %v2205 = vld [vmem:[%s2167 + $0x128] sm:$0xff]
        %v2206 = vld [vmem:[%s2167 + $0x130] sm:$0xff]
        %v2207 = vld [vmem:[%s2167 + $0x138] sm:$0xff]
        %v2248 = vunpack.c.l.b16 %v2168
        %v2249 = vunpack.c.h.b16 %v2168
        %v2250 = vunpack.c.l.b16 %v2169
        %v2251 = vunpack.c.h.b16 %v2169
        %v2252 = vunpack.c.l.b16 %v2170
        %v2253 = vunpack.c.h.b16 %v2170
        %v2254 = vunpack.c.l.b16 %v2171
        %v2255 = vunpack.c.h.b16 %v2171
        %v2256 = vunpack.c.l.b16 %v2172
        %v2257 = vunpack.c.h.b16 %v2172
        %v2258 = vunpack.c.l.b16 %v2173
        %v2259 = vunpack.c.h.b16 %v2173
        %v2260 = vunpack.c.l.b16 %v2174
        %v2261 = vunpack.c.h.b16 %v2174
        %v2262 = vunpack.c.l.b16 %v2175
        %v2263 = vunpack.c.h.b16 %v2175
        %v2264 = vunpack.c.l.b16 %v2176
        %v2265 = vunpack.c.h.b16 %v2176
        %v2266 = vunpack.c.l.b16 %v2177
        %v2267 = vunpack.c.h.b16 %v2177
        %v2268 = vunpack.c.l.b16 %v2178
        %v2269 = vunpack.c.h.b16 %v2178
        %v2270 = vunpack.c.l.b16 %v2179
        %v2271 = vunpack.c.h.b16 %v2179
        %v2272 = vunpack.c.l.b16 %v2180
        %v2273 = vunpack.c.h.b16 %v2180
        %v2274 = vunpack.c.l.b16 %v2181
        %v2275 = vunpack.c.h.b16 %v2181
        %v2276 = vunpack.c.l.b16 %v2182
        %v2277 = vunpack.c.h.b16 %v2182
        %v2278 = vunpack.c.l.b16 %v2183
        %v2279 = vunpack.c.h.b16 %v2183
        %v2280 = vunpack.c.l.b16 %v2184
        %v2281 = vunpack.c.h.b16 %v2184
        %v2282 = vunpack.c.l.b16 %v2185
        %v2283 = vunpack.c.h.b16 %v2185
        %v2284 = vunpack.c.l.b16 %v2186
        %v2285 = vunpack.c.h.b16 %v2186
        %v2286 = vunpack.c.l.b16 %v2187
        %v2287 = vunpack.c.h.b16 %v2187
        %v2288 = vunpack.c.l.b16 %v2188
        %v2289 = vunpack.c.h.b16 %v2188
        %v2290 = vunpack.c.l.b16 %v2189
        %v2291 = vunpack.c.h.b16 %v2189
        %v2292 = vunpack.c.l.b16 %v2190
        %v2293 = vunpack.c.h.b16 %v2190
        %v2294 = vunpack.c.l.b16 %v2191
        %v2295 = vunpack.c.h.b16 %v2191
        %v2296 = vunpack.c.l.b16 %v2192
        %v2297 = vunpack.c.h.b16 %v2192
        %v2298 = vunpack.c.l.b16 %v2193
        %v2299 = vunpack.c.h.b16 %v2193
        %v2300 = vunpack.c.l.b16 %v2194
        %v2301 = vunpack.c.h.b16 %v2194
        %v2302 = vunpack.c.l.b16 %v2195
        %v2303 = vunpack.c.h.b16 %v2195
        %v2304 = vunpack.c.l.b16 %v2196
        %v2305 = vunpack.c.h.b16 %v2196
        %v2306 = vunpack.c.l.b16 %v2197
        %v2307 = vunpack.c.h.b16 %v2197
        %v2308 = vunpack.c.l.b16 %v2198
        %v2309 = vunpack.c.h.b16 %v2198
        %v2310 = vunpack.c.l.b16 %v2199
        %v2311 = vunpack.c.h.b16 %v2199
        %v2312 = vunpack.c.l.b16 %v2200
        %v2313 = vunpack.c.h.b16 %v2200
        %v2314 = vunpack.c.l.b16 %v2201
        %v2315 = vunpack.c.h.b16 %v2201
        %v2316 = vunpack.c.l.b16 %v2202
        %v2317 = vunpack.c.h.b16 %v2202
        %v2318 = vunpack.c.l.b16 %v2203
        %v2319 = vunpack.c.h.b16 %v2203
        %v2320 = vunpack.c.l.b16 %v2204
        %v2321 = vunpack.c.h.b16 %v2204
        %v2322 = vunpack.c.l.b16 %v2205
        %v2323 = vunpack.c.h.b16 %v2205
        %v2324 = vunpack.c.l.b16 %v2206
        %v2325 = vunpack.c.h.b16 %v2206
        %v2326 = vunpack.c.l.b16 %v2207
        %v2327 = vunpack.c.h.b16 %v2207
        %v2328 = vpack.c.b16 %v2250, %v2248
        %v2329 = vpack.c.b16 %v2251, %v2249
        %v2330 = vpack.c.b16 %v2254, %v2252
        %v2331 = vpack.c.b16 %v2255, %v2253
        %v2332 = vpack.c.b16 %v2258, %v2256
        %v2333 = vpack.c.b16 %v2259, %v2257
        %v2334 = vpack.c.b16 %v2262, %v2260
        %v2335 = vpack.c.b16 %v2263, %v2261
        %v2336 = vpack.c.b16 %v2266, %v2264
        %v2337 = vpack.c.b16 %v2267, %v2265
        %v2338 = vpack.c.b16 %v2270, %v2268
        %v2339 = vpack.c.b16 %v2271, %v2269
        %v2340 = vpack.c.b16 %v2274, %v2272
        %v2341 = vpack.c.b16 %v2275, %v2273
        %v2342 = vpack.c.b16 %v2278, %v2276
        %v2343 = vpack.c.b16 %v2279, %v2277
        %v2344 = vpack.c.b16 %v2282, %v2280
        %v2345 = vpack.c.b16 %v2283, %v2281
        %v2346 = vpack.c.b16 %v2286, %v2284
        %v2347 = vpack.c.b16 %v2287, %v2285
        %v2348 = vpack.c.b16 %v2290, %v2288
        %v2349 = vpack.c.b16 %v2291, %v2289
        %v2350 = vpack.c.b16 %v2294, %v2292
        %v2351 = vpack.c.b16 %v2295, %v2293
        %v2352 = vpack.c.b16 %v2298, %v2296
        %v2353 = vpack.c.b16 %v2299, %v2297
        %v2354 = vpack.c.b16 %v2302, %v2300
        %v2355 = vpack.c.b16 %v2303, %v2301
        %v2356 = vpack.c.b16 %v2306, %v2304
        %v2357 = vpack.c.b16 %v2307, %v2305
        %v2358 = vpack.c.b16 %v2310, %v2308
        %v2359 = vpack.c.b16 %v2311, %v2309
        %v2360 = vpack.c.b16 %v2314, %v2312
        %v2361 = vpack.c.b16 %v2315, %v2313
        %v2362 = vpack.c.b16 %v2318, %v2316
        %v2363 = vpack.c.b16 %v2319, %v2317
        %v2364 = vpack.c.b16 %v2322, %v2320
        %v2365 = vpack.c.b16 %v2323, %v2321
        %v2366 = vpack.c.b16 %v2326, %v2324
        %v2367 = vpack.c.b16 %v2327, %v2325
        %2408 = vmatpush.bf16.msra.mxu0 %v2342
        %2409 = vmatpush.bf16.msra.mxu0 %v2340
        %2410 = vmatpush.bf16.msra.mxu0 %v2338
        %2411 = vmatpush.bf16.msra.mxu0 %v2336
        %2412 = vmatpush.bf16.msra.mxu0 %v2334
        %2413 = vmatpush.bf16.msra.mxu0 %v2332
        %2414 = vmatpush.bf16.msra.mxu0 %v2330
        %2415 = vmatpush.bf16.msra.mxu0 %v2328
        %2416 = vmatmul.bf16.gmra.mxu0 %v1444
        %v2417 = vpop.f32.mrf.mxu0
        %v2418 = vadd.f32 0.0, %v2417
        %v2419 = vpop.f32.mrf.mxu0
        %2420 = vdwg.mxu0
        %2421 = vmatpush.bf16.msra.mxu0 %v2358
        %2422 = vmatpush.bf16.msra.mxu0 %v2356
        %2423 = vmatpush.bf16.msra.mxu0 %v2354
        %2424 = vmatpush.bf16.msra.mxu0 %v2352
        %2425 = vmatpush.bf16.msra.mxu0 %v2350
        %2426 = vmatpush.bf16.msra.mxu0 %v2348
        %2427 = vmatpush.bf16.msra.mxu0 %v2346
        %2428 = vmatpush.bf16.msra.mxu0 %v2344
        %2429 = vmatmul.bf16.gmra.mxu0 %v1445
        %v2430 = vpop.f32.mrf.mxu0
        %v2431 = vadd.f32 %v2418, %v2430
        %v2432 = vpop.f32.mrf.mxu0
        %2433 = vdwg.mxu0
        %2434 = vmatpush.bf16.msra.mxu0 0
        %2435 = vmatpush.bf16.msra.mxu0 0
        %2436 = vmatpush.bf16.msra.mxu0 0
        %2437 = vmatpush.bf16.msra.mxu0 0
        %2438 = vmatpush.bf16.msra.mxu0 %v2366
        %2439 = vmatpush.bf16.msra.mxu0 %v2364
        %2440 = vmatpush.bf16.msra.mxu0 %v2362
        %2441 = vmatpush.bf16.msra.mxu0 %v2360
        %2442 = vmatmul.bf16.gmra.mxu0 %v1689
        %v2443 = vpop.f32.mrf.mxu0
        %v2444 = vadd.f32 %v2431, %v2443
        %v2445 = vpop.f32.mrf.mxu0
        %2446 = vdwg.mxu0
        %2447 = vmatpush.bf16.msra.mxu0 %v2343
        %2448 = vmatpush.bf16.msra.mxu0 %v2341
        %2449 = vmatpush.bf16.msra.mxu0 %v2339
        %2450 = vmatpush.bf16.msra.mxu0 %v2337
        %2451 = vmatpush.bf16.msra.mxu0 %v2335
        %2452 = vmatpush.bf16.msra.mxu0 %v2333
        %2453 = vmatpush.bf16.msra.mxu0 %v2331
        %2454 = vmatpush.bf16.msra.mxu0 %v2329
        %2455 = vmatmul.bf16.gmra.mxu0 %v1444
        %v2456 = vpop.f32.mrf.mxu0
        %v2457 = vadd.f32 0.0, %v2456
        %v2458 = vpop.f32.mrf.mxu0
        %2459 = vdwg.mxu0
        %2460 = vmatpush.bf16.msra.mxu0 %v2359
        %2461 = vmatpush.bf16.msra.mxu0 %v2357
        %2462 = vmatpush.bf16.msra.mxu0 %v2355
        %2463 = vmatpush.bf16.msra.mxu0 %v2353
        %2464 = vmatpush.bf16.msra.mxu0 %v2351
        %2465 = vmatpush.bf16.msra.mxu0 %v2349
        %2466 = vmatpush.bf16.msra.mxu0 %v2347
        %2467 = vmatpush.bf16.msra.mxu0 %v2345
        %2468 = vmatmul.bf16.gmra.mxu0 %v1445
        %v2469 = vpop.f32.mrf.mxu0
        %v2470 = vadd.f32 %v2457, %v2469
        %v2471 = vpop.f32.mrf.mxu0
        %2472 = vdwg.mxu0
        %2473 = vmatpush.bf16.msra.mxu0 0
        %2474 = vmatpush.bf16.msra.mxu0 0
        %2475 = vmatpush.bf16.msra.mxu0 0
        %2476 = vmatpush.bf16.msra.mxu0 0
        %2477 = vmatpush.bf16.msra.mxu0 %v2367
        %2478 = vmatpush.bf16.msra.mxu0 %v2365
        %2479 = vmatpush.bf16.msra.mxu0 %v2363
        %2480 = vmatpush.bf16.msra.mxu0 %v2361
        %2481 = vmatmul.bf16.gmra.mxu0 %v1689
        %v2482 = vpop.f32.mrf.mxu0
        %v2483 = vadd.f32 %v2470, %v2482
        %v2484 = vpop.f32.mrf.mxu0
        %2485 = vdwg.mxu0
        %v2486 = vpack.c.bf16 %v2444, %v2444
        %v2487 = vpack.c.bf16 %v2483, %v2483
        %s2488 = scalar_lea.vmem [#allocation5], 4
        %v2489 = vld [vmem:[%s2488] sm:$0x3]
        %v2491 = vsel %vm2095, %v2489, 0
        %v2494 = vsel %vm2099, %v2486, 0
        %v2497 = vsel %vm2099, %v2487, 0
        %2499 = vmatpush.bf16.msra.mxu0 0
        %2500 = vmatpush.bf16.msra.mxu0 0
        %2501 = vmatpush.bf16.msra.mxu0 0
        %2502 = vmatpush.bf16.msra.mxu0 0
        %2503 = vmatpush.bf16.msra.mxu0 0
        %2504 = vmatpush.bf16.msra.mxu0 0
        %2505 = vmatpush.bf16.msra.mxu0 0
        %2506 = vmatpush.bf16.msra.mxu0 %v2494
        %2507 = vmatmul.bf16.gmra.mxu0 %v2491
        %v2508 = vpop.f32.mrf.mxu0
        %v2509 = vadd.f32 0.0, %v2508
        %v2510 = vpop.f32.mrf.mxu0
        %2511 = vdwg.mxu0
        %2512 = vmatpush.bf16.msra.mxu0 0
        %2513 = vmatpush.bf16.msra.mxu0 0
        %2514 = vmatpush.bf16.msra.mxu0 0
        %2515 = vmatpush.bf16.msra.mxu0 0
        %2516 = vmatpush.bf16.msra.mxu0 0
        %2517 = vmatpush.bf16.msra.mxu0 0
        %2518 = vmatpush.bf16.msra.mxu0 0
        %2519 = vmatpush.bf16.msra.mxu0 %v2497
        %2520 = vmatmul.bf16.gmra.mxu0 %v2491
        %v2521 = vpop.f32.mrf.mxu0
        %v2522 = vadd.f32 0.0, %v2521
        %v2523 = vpop.f32.mrf.mxu0
        %2524 = vdwg.mxu0
        %v2525 = vadd.f32 %v2151, %v2509
        %v2526 = vadd.f32 %v2164, %v2522
        %s2527 = scalar_lea.vmem [#allocation7], 960
        %v2528 = vld [vmem:[%s2527] sm:$0xff]
        %v2529 = vld [vmem:[%s2527 + $0x8] sm:$0xff]
        %v2530 = vld [vmem:[%s2527 + $0x10] sm:$0xff]
        %v2531 = vld [vmem:[%s2527 + $0x18] sm:$0xff]
        %v2532 = vld [vmem:[%s2527 + $0x20] sm:$0xff]
        %v2533 = vld [vmem:[%s2527 + $0x28] sm:$0xff]
        %v2534 = vld [vmem:[%s2527 + $0x30] sm:$0xff]
        %v2535 = vld [vmem:[%s2527 + $0x38] sm:$0xff]
        %v2536 = vld [vmem:[%s2527 + $0x40] sm:$0xff]
        %v2537 = vld [vmem:[%s2527 + $0x48] sm:$0xff]
        %v2538 = vld [vmem:[%s2527 + $0x50] sm:$0xff]
        %v2539 = vld [vmem:[%s2527 + $0x58] sm:$0xff]
        %v2540 = vld [vmem:[%s2527 + $0x60] sm:$0xff]
        %v2541 = vld [vmem:[%s2527 + $0x68] sm:$0xff]
        %v2542 = vld [vmem:[%s2527 + $0x70] sm:$0xff]
        %v2543 = vld [vmem:[%s2527 + $0x78] sm:$0xff]
        %v2544 = vld [vmem:[%s2527 + $0x80] sm:$0xff]
        %v2545 = vld [vmem:[%s2527 + $0x88] sm:$0xff]
        %v2546 = vld [vmem:[%s2527 + $0x90] sm:$0xff]
        %v2547 = vld [vmem:[%s2527 + $0x98] sm:$0xff]
        %v2548 = vld [vmem:[%s2527 + $0xa0] sm:$0xff]
        %v2549 = vld [vmem:[%s2527 + $0xa8] sm:$0xff]
        %v2550 = vld [vmem:[%s2527 + $0xb0] sm:$0xff]
        %v2551 = vld [vmem:[%s2527 + $0xb8] sm:$0xff]
        %v2552 = vld [vmem:[%s2527 + $0xc0] sm:$0xff]
        %v2553 = vld [vmem:[%s2527 + $0xc8] sm:$0xff]
        %v2554 = vld [vmem:[%s2527 + $0xd0] sm:$0xff]
        %v2555 = vld [vmem:[%s2527 + $0xd8] sm:$0xff]
        %v2556 = vld [vmem:[%s2527 + $0xe0] sm:$0xff]
        %v2557 = vld [vmem:[%s2527 + $0xe8] sm:$0xff]
        %v2558 = vld [vmem:[%s2527 + $0xf0] sm:$0xff]
        %v2559 = vld [vmem:[%s2527 + $0xf8] sm:$0xff]
        %v2560 = vld [vmem:[%s2527 + $0x100] sm:$0xff]
        %v2561 = vld [vmem:[%s2527 + $0x108] sm:$0xff]
        %v2562 = vld [vmem:[%s2527 + $0x110] sm:$0xff]
        %v2563 = vld [vmem:[%s2527 + $0x118] sm:$0xff]
        %v2564 = vld [vmem:[%s2527 + $0x120] sm:$0xff]
        %v2565 = vld [vmem:[%s2527 + $0x128] sm:$0xff]
        %v2566 = vld [vmem:[%s2527 + $0x130] sm:$0xff]
        %v2567 = vld [vmem:[%s2527 + $0x138] sm:$0xff]
        %v2608 = vunpack.c.l.b16 %v2528
        %v2609 = vunpack.c.h.b16 %v2528
        %v2610 = vunpack.c.l.b16 %v2529
        %v2611 = vunpack.c.h.b16 %v2529
        %v2612 = vunpack.c.l.b16 %v2530
        %v2613 = vunpack.c.h.b16 %v2530
        %v2614 = vunpack.c.l.b16 %v2531
        %v2615 = vunpack.c.h.b16 %v2531
        %v2616 = vunpack.c.l.b16 %v2532
        %v2617 = vunpack.c.h.b16 %v2532
        %v2618 = vunpack.c.l.b16 %v2533
        %v2619 = vunpack.c.h.b16 %v2533
        %v2620 = vunpack.c.l.b16 %v2534
        %v2621 = vunpack.c.h.b16 %v2534
        %v2622 = vunpack.c.l.b16 %v2535
        %v2623 = vunpack.c.h.b16 %v2535
        %v2624 = vunpack.c.l.b16 %v2536
        %v2625 = vunpack.c.h.b16 %v2536
        %v2626 = vunpack.c.l.b16 %v2537
        %v2627 = vunpack.c.h.b16 %v2537
        %v2628 = vunpack.c.l.b16 %v2538
        %v2629 = vunpack.c.h.b16 %v2538
        %v2630 = vunpack.c.l.b16 %v2539
        %v2631 = vunpack.c.h.b16 %v2539
        %v2632 = vunpack.c.l.b16 %v2540
        %v2633 = vunpack.c.h.b16 %v2540
        %v2634 = vunpack.c.l.b16 %v2541
        %v2635 = vunpack.c.h.b16 %v2541
        %v2636 = vunpack.c.l.b16 %v2542
        %v2637 = vunpack.c.h.b16 %v2542
        %v2638 = vunpack.c.l.b16 %v2543
        %v2639 = vunpack.c.h.b16 %v2543
        %v2640 = vunpack.c.l.b16 %v2544
        %v2641 = vunpack.c.h.b16 %v2544
        %v2642 = vunpack.c.l.b16 %v2545
        %v2643 = vunpack.c.h.b16 %v2545
        %v2644 = vunpack.c.l.b16 %v2546
        %v2645 = vunpack.c.h.b16 %v2546
        %v2646 = vunpack.c.l.b16 %v2547
        %v2647 = vunpack.c.h.b16 %v2547
        %v2648 = vunpack.c.l.b16 %v2548
        %v2649 = vunpack.c.h.b16 %v2548
        %v2650 = vunpack.c.l.b16 %v2549
        %v2651 = vunpack.c.h.b16 %v2549
        %v2652 = vunpack.c.l.b16 %v2550
        %v2653 = vunpack.c.h.b16 %v2550
        %v2654 = vunpack.c.l.b16 %v2551
        %v2655 = vunpack.c.h.b16 %v2551
        %v2656 = vunpack.c.l.b16 %v2552
        %v2657 = vunpack.c.h.b16 %v2552
        %v2658 = vunpack.c.l.b16 %v2553
        %v2659 = vunpack.c.h.b16 %v2553
        %v2660 = vunpack.c.l.b16 %v2554
        %v2661 = vunpack.c.h.b16 %v2554
        %v2662 = vunpack.c.l.b16 %v2555
        %v2663 = vunpack.c.h.b16 %v2555
        %v2664 = vunpack.c.l.b16 %v2556
        %v2665 = vunpack.c.h.b16 %v2556
        %v2666 = vunpack.c.l.b16 %v2557
        %v2667 = vunpack.c.h.b16 %v2557
        %v2668 = vunpack.c.l.b16 %v2558
        %v2669 = vunpack.c.h.b16 %v2558
        %v2670 = vunpack.c.l.b16 %v2559
        %v2671 = vunpack.c.h.b16 %v2559
        %v2672 = vunpack.c.l.b16 %v2560
        %v2673 = vunpack.c.h.b16 %v2560
        %v2674 = vunpack.c.l.b16 %v2561
        %v2675 = vunpack.c.h.b16 %v2561
        %v2676 = vunpack.c.l.b16 %v2562
        %v2677 = vunpack.c.h.b16 %v2562
        %v2678 = vunpack.c.l.b16 %v2563
        %v2679 = vunpack.c.h.b16 %v2563
        %v2680 = vunpack.c.l.b16 %v2564
        %v2681 = vunpack.c.h.b16 %v2564
        %v2682 = vunpack.c.l.b16 %v2565
        %v2683 = vunpack.c.h.b16 %v2565
        %v2684 = vunpack.c.l.b16 %v2566
        %v2685 = vunpack.c.h.b16 %v2566
        %v2686 = vunpack.c.l.b16 %v2567
        %v2687 = vunpack.c.h.b16 %v2567
        %v2688 = vpack.c.b16 %v2610, %v2608
        %v2689 = vpack.c.b16 %v2611, %v2609
        %v2690 = vpack.c.b16 %v2614, %v2612
        %v2691 = vpack.c.b16 %v2615, %v2613
        %v2692 = vpack.c.b16 %v2618, %v2616
        %v2693 = vpack.c.b16 %v2619, %v2617
        %v2694 = vpack.c.b16 %v2622, %v2620
        %v2695 = vpack.c.b16 %v2623, %v2621
        %v2696 = vpack.c.b16 %v2626, %v2624
        %v2697 = vpack.c.b16 %v2627, %v2625
        %v2698 = vpack.c.b16 %v2630, %v2628
        %v2699 = vpack.c.b16 %v2631, %v2629
        %v2700 = vpack.c.b16 %v2634, %v2632
        %v2701 = vpack.c.b16 %v2635, %v2633
        %v2702 = vpack.c.b16 %v2638, %v2636
        %v2703 = vpack.c.b16 %v2639, %v2637
        %v2704 = vpack.c.b16 %v2642, %v2640
        %v2705 = vpack.c.b16 %v2643, %v2641
        %v2706 = vpack.c.b16 %v2646, %v2644
        %v2707 = vpack.c.b16 %v2647, %v2645
        %v2708 = vpack.c.b16 %v2650, %v2648
        %v2709 = vpack.c.b16 %v2651, %v2649
        %v2710 = vpack.c.b16 %v2654, %v2652
        %v2711 = vpack.c.b16 %v2655, %v2653
        %v2712 = vpack.c.b16 %v2658, %v2656
        %v2713 = vpack.c.b16 %v2659, %v2657
        %v2714 = vpack.c.b16 %v2662, %v2660
        %v2715 = vpack.c.b16 %v2663, %v2661
        %v2716 = vpack.c.b16 %v2666, %v2664
        %v2717 = vpack.c.b16 %v2667, %v2665
        %v2718 = vpack.c.b16 %v2670, %v2668
        %v2719 = vpack.c.b16 %v2671, %v2669
        %v2720 = vpack.c.b16 %v2674, %v2672
        %v2721 = vpack.c.b16 %v2675, %v2673
        %v2722 = vpack.c.b16 %v2678, %v2676
        %v2723 = vpack.c.b16 %v2679, %v2677
        %v2724 = vpack.c.b16 %v2682, %v2680
        %v2725 = vpack.c.b16 %v2683, %v2681
        %v2726 = vpack.c.b16 %v2686, %v2684
        %v2727 = vpack.c.b16 %v2687, %v2685
        %2768 = vmatpush.bf16.msra.mxu0 %v2702
        %2769 = vmatpush.bf16.msra.mxu0 %v2700
        %2770 = vmatpush.bf16.msra.mxu0 %v2698
        %2771 = vmatpush.bf16.msra.mxu0 %v2696
        %2772 = vmatpush.bf16.msra.mxu0 %v2694
        %2773 = vmatpush.bf16.msra.mxu0 %v2692
        %2774 = vmatpush.bf16.msra.mxu0 %v2690
        %2775 = vmatpush.bf16.msra.mxu0 %v2688
        %2776 = vmatmul.bf16.gmra.mxu0 %v1444
        %v2777 = vpop.f32.mrf.mxu0
        %v2778 = vadd.f32 0.0, %v2777
        %v2779 = vpop.f32.mrf.mxu0
        %2780 = vdwg.mxu0
        %2781 = vmatpush.bf16.msra.mxu0 %v2718
        %2782 = vmatpush.bf16.msra.mxu0 %v2716
        %2783 = vmatpush.bf16.msra.mxu0 %v2714
        %2784 = vmatpush.bf16.msra.mxu0 %v2712
        %2785 = vmatpush.bf16.msra.mxu0 %v2710
        %2786 = vmatpush.bf16.msra.mxu0 %v2708
        %2787 = vmatpush.bf16.msra.mxu0 %v2706
        %2788 = vmatpush.bf16.msra.mxu0 %v2704
        %2789 = vmatmul.bf16.gmra.mxu0 %v1445
        %v2790 = vpop.f32.mrf.mxu0
        %v2791 = vadd.f32 %v2778, %v2790
        %v2792 = vpop.f32.mrf.mxu0
        %2793 = vdwg.mxu0
        %2794 = vmatpush.bf16.msra.mxu0 0
        %2795 = vmatpush.bf16.msra.mxu0 0
        %2796 = vmatpush.bf16.msra.mxu0 0
        %2797 = vmatpush.bf16.msra.mxu0 0
        %2798 = vmatpush.bf16.msra.mxu0 %v2726
        %2799 = vmatpush.bf16.msra.mxu0 %v2724
        %2800 = vmatpush.bf16.msra.mxu0 %v2722
        %2801 = vmatpush.bf16.msra.mxu0 %v2720
        %2802 = vmatmul.bf16.gmra.mxu0 %v1689
        %v2803 = vpop.f32.mrf.mxu0
        %v2804 = vadd.f32 %v2791, %v2803
        %v2805 = vpop.f32.mrf.mxu0
        %2806 = vdwg.mxu0
        %2807 = vmatpush.bf16.msra.mxu0 %v2703
        %2808 = vmatpush.bf16.msra.mxu0 %v2701
        %2809 = vmatpush.bf16.msra.mxu0 %v2699
        %2810 = vmatpush.bf16.msra.mxu0 %v2697
        %2811 = vmatpush.bf16.msra.mxu0 %v2695
        %2812 = vmatpush.bf16.msra.mxu0 %v2693
        %2813 = vmatpush.bf16.msra.mxu0 %v2691
        %2814 = vmatpush.bf16.msra.mxu0 %v2689
        %2815 = vmatmul.bf16.gmra.mxu0 %v1444
        %v2816 = vpop.f32.mrf.mxu0
        %v2817 = vadd.f32 0.0, %v2816
        %v2818 = vpop.f32.mrf.mxu0
        %2819 = vdwg.mxu0
        %2820 = vmatpush.bf16.msra.mxu0 %v2719
        %2821 = vmatpush.bf16.msra.mxu0 %v2717
        %2822 = vmatpush.bf16.msra.mxu0 %v2715
        %2823 = vmatpush.bf16.msra.mxu0 %v2713
        %2824 = vmatpush.bf16.msra.mxu0 %v2711
        %2825 = vmatpush.bf16.msra.mxu0 %v2709
        %2826 = vmatpush.bf16.msra.mxu0 %v2707
        %2827 = vmatpush.bf16.msra.mxu0 %v2705
        %2828 = vmatmul.bf16.gmra.mxu0 %v1445
        %v2829 = vpop.f32.mrf.mxu0
        %v2830 = vadd.f32 %v2817, %v2829
        %v2831 = vpop.f32.mrf.mxu0
        %2832 = vdwg.mxu0
        %2833 = vmatpush.bf16.msra.mxu0 0
        %2834 = vmatpush.bf16.msra.mxu0 0
        %2835 = vmatpush.bf16.msra.mxu0 0
        %2836 = vmatpush.bf16.msra.mxu0 0
        %2837 = vmatpush.bf16.msra.mxu0 %v2727
        %2838 = vmatpush.bf16.msra.mxu0 %v2725
        %2839 = vmatpush.bf16.msra.mxu0 %v2723
        %2840 = vmatpush.bf16.msra.mxu0 %v2721
        %2841 = vmatmul.bf16.gmra.mxu0 %v1689
        %v2842 = vpop.f32.mrf.mxu0
        %v2843 = vadd.f32 %v2830, %v2842
        %v2844 = vpop.f32.mrf.mxu0
        %2845 = vdwg.mxu0
        %v2846 = vpack.c.bf16 %v2804, %v2804
        %v2847 = vpack.c.bf16 %v2843, %v2843
        %s2848 = scalar_lea.vmem [#allocation5], 6
        %v2849 = vld [vmem:[%s2848] sm:$0x3]
        %v2851 = vsel %vm2095, %v2849, 0
        %v2854 = vsel %vm2099, %v2846, 0
        %v2857 = vsel %vm2099, %v2847, 0
        %2859 = vmatpush.bf16.msra.mxu0 0
        %2860 = vmatpush.bf16.msra.mxu0 0
        %2861 = vmatpush.bf16.msra.mxu0 0
        %2862 = vmatpush.bf16.msra.mxu0 0
        %2863 = vmatpush.bf16.msra.mxu0 0
        %2864 = vmatpush.bf16.msra.mxu0 0
        %2865 = vmatpush.bf16.msra.mxu0 0
        %2866 = vmatpush.bf16.msra.mxu0 %v2854
        %2867 = vmatmul.bf16.gmra.mxu0 %v2851
        %v2868 = vpop.f32.mrf.mxu0
        %v2869 = vadd.f32 0.0, %v2868
        %v2870 = vpop.f32.mrf.mxu0
        %2871 = vdwg.mxu0
        %2872 = vmatpush.bf16.msra.mxu0 0
        %2873 = vmatpush.bf16.msra.mxu0 0
        %2874 = vmatpush.bf16.msra.mxu0 0
        %2875 = vmatpush.bf16.msra.mxu0 0
        %2876 = vmatpush.bf16.msra.mxu0 0
        %2877 = vmatpush.bf16.msra.mxu0 0
        %2878 = vmatpush.bf16.msra.mxu0 0
        %2879 = vmatpush.bf16.msra.mxu0 %v2857
        %2880 = vmatmul.bf16.gmra.mxu0 %v2851
        %v2881 = vpop.f32.mrf.mxu0
        %v2882 = vadd.f32 0.0, %v2881
        %v2883 = vpop.f32.mrf.mxu0
        %2884 = vdwg.mxu0
        %v2885 = vadd.f32 %v2525, %v2869
        %v2886 = vadd.f32 %v2526, %v2882
        %vm2887 = vcmp.gt.f32.partialorder %v2885, 0.0
        %vm2888 = vcmp.gt.f32.partialorder %v2886, 0.0
        %v2889 = vmul.f32 %v2885, 0.2
        %v2890 = vmul.f32 %v2886, 0.2
        %v2891 = vsel %vm2887, %v2885, %v2889
        %v2892 = vsel %vm2888, %v2886, %v2890
        %v2893 = vpack.c.bf16 %v2891, %v2891
        %v2894 = vpack.c.bf16 %v2892, %v2892
        %v2895 = vld [vmem:[#allocation10] sm:$0xf]
        %v2896 = vld [vmem:[#allocation10 + $0x4] sm:$0xf]
        %v2897 = vld [vmem:[#allocation10 + $0x8] sm:$0xf]
        %v2898 = vld [vmem:[#allocation10 + $0xc] sm:$0xf]
        %v2899 = vld [vmem:[#allocation10 + $0x10] sm:$0xf]
        %v2900 = vld [vmem:[#allocation10 + $0x14] sm:$0xf]
        %v2901 = vld [vmem:[#allocation10 + $0x18] sm:$0xf]
        %v2902 = vld [vmem:[#allocation10 + $0x1c] sm:$0xf]
        %v2903 = vld [vmem:[#allocation10 + $0x20] sm:$0xf]
        %v2904 = vld [vmem:[#allocation10 + $0x24] sm:$0xf]
        %v2905 = vld [vmem:[#allocation10 + $0x28] sm:$0xf]
        %v2906 = vld [vmem:[#allocation10 + $0x2c] sm:$0xf]
        %v2907 = vld [vmem:[#allocation10 + $0x30] sm:$0xf]
        %v2908 = vld [vmem:[#allocation10 + $0x34] sm:$0xf]
        %v2909 = vld [vmem:[#allocation10 + $0x38] sm:$0xf]
        %v2910 = vld [vmem:[#allocation10 + $0x3c] sm:$0xf]
        %v2911 = vld [vmem:[#allocation10 + $0x40] sm:$0xf]
        %v2912 = vld [vmem:[#allocation10 + $0x44] sm:$0xf]
        %v2913 = vld [vmem:[#allocation10 + $0x48] sm:$0xf]
        %v2914 = vld [vmem:[#allocation10 + $0x4c] sm:$0xf]
        %v2935 = vunpack.c.l.b16 %v2895
        %v2936 = vunpack.c.l.b16 %v2896
        %v2937 = vunpack.c.l.b16 %v2897
        %v2938 = vunpack.c.l.b16 %v2898
        %v2939 = vunpack.c.l.b16 %v2899
        %v2940 = vunpack.c.l.b16 %v2900
        %v2941 = vunpack.c.l.b16 %v2901
        %v2942 = vunpack.c.l.b16 %v2902
        %v2943 = vunpack.c.l.b16 %v2903
        %v2944 = vunpack.c.l.b16 %v2904
        %v2945 = vunpack.c.l.b16 %v2905
        %v2946 = vunpack.c.l.b16 %v2906
        %v2947 = vunpack.c.l.b16 %v2907
        %v2948 = vunpack.c.l.b16 %v2908
        %v2949 = vunpack.c.l.b16 %v2909
        %v2950 = vunpack.c.l.b16 %v2910
        %v2951 = vunpack.c.l.b16 %v2911
        %v2952 = vunpack.c.l.b16 %v2912
        %v2953 = vunpack.c.l.b16 %v2913
        %v2954 = vunpack.c.l.b16 %v2914
        %v2955 = vpack.c.b16 %v2936, %v2935
        %v2956 = vpack.c.b16 %v2938, %v2937
        %v2957 = vpack.c.b16 %v2940, %v2939
        %v2958 = vpack.c.b16 %v2942, %v2941
        %v2959 = vpack.c.b16 %v2944, %v2943
        %v2960 = vpack.c.b16 %v2946, %v2945
        %v2961 = vpack.c.b16 %v2948, %v2947
        %v2962 = vpack.c.b16 %v2950, %v2949
        %v2963 = vpack.c.b16 %v2952, %v2951
        %v2964 = vpack.c.b16 %v2954, %v2953
        %vm2975 = vcmask 261120
        %v2977 = vsel %vm2975, %v2894, 0
        %2979 = vmatpush.bf16.msra.mxu0 %v2962
        %2980 = vmatpush.bf16.msra.mxu0 %v2961
        %2981 = vmatpush.bf16.msra.mxu0 %v2960
        %2982 = vmatpush.bf16.msra.mxu0 %v2959
        %2983 = vmatpush.bf16.msra.mxu0 %v2958
        %2984 = vmatpush.bf16.msra.mxu0 %v2957
        %2985 = vmatpush.bf16.msra.mxu0 %v2956
        %2986 = vmatpush.bf16.msra.mxu0 %v2955
        %2987 = vmatmul.bf16.gmra.mxu0 %v2893
        %v2988 = vpop.f32.mrf.mxu0
        %v2989 = vadd.f32 0.0, %v2988
        %v2990 = vpop.f32.mrf.mxu0
        %2991 = vdwg.mxu0
        %2992 = vmatpush.bf16.msra.mxu0 0
        %2993 = vmatpush.bf16.msra.mxu0 0
        %2994 = vmatpush.bf16.msra.mxu0 0
        %2995 = vmatpush.bf16.msra.mxu0 0
        %2996 = vmatpush.bf16.msra.mxu0 0
        %2997 = vmatpush.bf16.msra.mxu0 0
        %2998 = vmatpush.bf16.msra.mxu0 %v2964
        %2999 = vmatpush.bf16.msra.mxu0 %v2963
        %3000 = vmatmul.bf16.gmra.mxu0 %v2977
        %v3001 = vpop.f32.mrf.mxu0
        %v3002 = vadd.f32 %v2989, %v3001
        %v3003 = vpop.f32.mrf.mxu0
        %3004 = vdwg.mxu0
        %v3005 = vpack.c.bf16 %v3002, %v3002
        %v3006 = vld [vmem:[#allocation8] sm:$0xf]
        %s3007 = scalar_lea.vmem [#allocation10], 80
        %v3008 = vld [vmem:[%s3007] sm:$0xf]
        %v3009 = vld [vmem:[%s3007 + $0x4] sm:$0xf]
        %v3010 = vld [vmem:[%s3007 + $0x8] sm:$0xf]
        %v3011 = vld [vmem:[%s3007 + $0xc] sm:$0xf]
        %v3012 = vld [vmem:[%s3007 + $0x10] sm:$0xf]
        %v3013 = vld [vmem:[%s3007 + $0x14] sm:$0xf]
        %v3014 = vld [vmem:[%s3007 + $0x18] sm:$0xf]
        %v3015 = vld [vmem:[%s3007 + $0x1c] sm:$0xf]
        %v3016 = vld [vmem:[%s3007 + $0x20] sm:$0xf]
        %v3017 = vld [vmem:[%s3007 + $0x24] sm:$0xf]
        %v3018 = vld [vmem:[%s3007 + $0x28] sm:$0xf]
        %v3019 = vld [vmem:[%s3007 + $0x2c] sm:$0xf]
        %v3020 = vld [vmem:[%s3007 + $0x30] sm:$0xf]
        %v3021 = vld [vmem:[%s3007 + $0x34] sm:$0xf]
        %v3022 = vld [vmem:[%s3007 + $0x38] sm:$0xf]
        %v3023 = vld [vmem:[%s3007 + $0x3c] sm:$0xf]
        %v3024 = vld [vmem:[%s3007 + $0x40] sm:$0xf]
        %v3025 = vld [vmem:[%s3007 + $0x44] sm:$0xf]
        %v3026 = vld [vmem:[%s3007 + $0x48] sm:$0xf]
        %v3027 = vld [vmem:[%s3007 + $0x4c] sm:$0xf]
        %v3048 = vunpack.c.l.b16 %v3008
        %v3049 = vunpack.c.l.b16 %v3009
        %v3050 = vunpack.c.l.b16 %v3010
        %v3051 = vunpack.c.l.b16 %v3011
        %v3052 = vunpack.c.l.b16 %v3012
        %v3053 = vunpack.c.l.b16 %v3013
        %v3054 = vunpack.c.l.b16 %v3014
        %v3055 = vunpack.c.l.b16 %v3015
        %v3056 = vunpack.c.l.b16 %v3016
        %v3057 = vunpack.c.l.b16 %v3017
        %v3058 = vunpack.c.l.b16 %v3018
        %v3059 = vunpack.c.l.b16 %v3019
        %v3060 = vunpack.c.l.b16 %v3020
        %v3061 = vunpack.c.l.b16 %v3021
        %v3062 = vunpack.c.l.b16 %v3022
        %v3063 = vunpack.c.l.b16 %v3023
        %v3064 = vunpack.c.l.b16 %v3024
        %v3065 = vunpack.c.l.b16 %v3025
        %v3066 = vunpack.c.l.b16 %v3026
        %v3067 = vunpack.c.l.b16 %v3027
        %v3068 = vpack.c.b16 %v3049, %v3048
        %v3069 = vpack.c.b16 %v3051, %v3050
        %v3070 = vpack.c.b16 %v3053, %v3052
        %v3071 = vpack.c.b16 %v3055, %v3054
        %v3072 = vpack.c.b16 %v3057, %v3056
        %v3073 = vpack.c.b16 %v3059, %v3058
        %v3074 = vpack.c.b16 %v3061, %v3060
        %v3075 = vpack.c.b16 %v3063, %v3062
        %v3076 = vpack.c.b16 %v3065, %v3064
        %v3077 = vpack.c.b16 %v3067, %v3066
        %3088 = vmatpush.bf16.msra.mxu0 %v3075
        %3089 = vmatpush.bf16.msra.mxu0 %v3074
        %3090 = vmatpush.bf16.msra.mxu0 %v3073
        %3091 = vmatpush.bf16.msra.mxu0 %v3072
        %3092 = vmatpush.bf16.msra.mxu0 %v3071
        %3093 = vmatpush.bf16.msra.mxu0 %v3070
        %3094 = vmatpush.bf16.msra.mxu0 %v3069
        %3095 = vmatpush.bf16.msra.mxu0 %v3068
        %3096 = vmatmul.bf16.gmra.mxu0 %v2893
        %v3097 = vpop.f32.mrf.mxu0
        %v3098 = vadd.f32 0.0, %v3097
        %v3099 = vpop.f32.mrf.mxu0
        %3100 = vdwg.mxu0
        %3101 = vmatpush.bf16.msra.mxu0 0
        %3102 = vmatpush.bf16.msra.mxu0 0
        %3103 = vmatpush.bf16.msra.mxu0 0
        %3104 = vmatpush.bf16.msra.mxu0 0
        %3105 = vmatpush.bf16.msra.mxu0 0
        %3106 = vmatpush.bf16.msra.mxu0 0
        %3107 = vmatpush.bf16.msra.mxu0 %v3077
        %3108 = vmatpush.bf16.msra.mxu0 %v3076
        %3109 = vmatmul.bf16.gmra.mxu0 %v2977
        %v3110 = vpop.f32.mrf.mxu0
        %v3111 = vadd.f32 %v3098, %v3110
        %v3112 = vpop.f32.mrf.mxu0
        %3113 = vdwg.mxu0
        %v3114 = vpack.c.bf16 %v3111, %v3111
        %s3115 = scalar_lea.vmem [#allocation8], 4
        %v3116 = vld [vmem:[%s3115] sm:$0xf]
        %v3118 = vsel %vm2095, %v3116, 0
        %v3121 = vsel %vm2099, %v3114, 0
        %3123 = vmatpush.bf16.msra.mxu0 0
        %3124 = vmatpush.bf16.msra.mxu0 0
        %3125 = vmatpush.bf16.msra.mxu0 0
        %3126 = vmatpush.bf16.msra.mxu0 0
        %3127 = vmatpush.bf16.msra.mxu0 0
        %3128 = vmatpush.bf16.msra.mxu0 0
        %3129 = vmatpush.bf16.msra.mxu0 0
        %3130 = vmatpush.bf16.msra.mxu0 %v3121
        %3131 = vmatmul.bf16.gmra.mxu0 %v3118
        %v3132 = vpop.f32.mrf.mxu0
        %v3133 = vadd.f32 0.0, %v3132
        %v3134 = vpop.f32.mrf.mxu0
        %3135 = vdwg.mxu0
        %v3137 = vsel %vm2095, %v3006, 0
        %v3140 = vsel %vm2099, %v3005, 0
        %3142 = vmatpush.bf16.msra.mxu0 0
        %3143 = vmatpush.bf16.msra.mxu0 0
        %3144 = vmatpush.bf16.msra.mxu0 0
        %3145 = vmatpush.bf16.msra.mxu0 0
        %3146 = vmatpush.bf16.msra.mxu0 0
        %3147 = vmatpush.bf16.msra.mxu0 0
        %3148 = vmatpush.bf16.msra.mxu0 0
        %3149 = vmatpush.bf16.msra.mxu0 %v3140
        %3150 = vmatmul.bf16.gmra.mxu0 %v3137
        %v3151 = vpop.f32.mrf.mxu0
        %v3152 = vadd.f32 %v3133, %v3151
        %v3153 = vpop.f32.mrf.mxu0
        %3154 = vdwg.mxu0
        %s3155 = scalar_lea.vmem [#allocation10], 160
        %v3156 = vld [vmem:[%s3155] sm:$0xf]
        %v3157 = vld [vmem:[%s3155 + $0x4] sm:$0xf]
        %v3158 = vld [vmem:[%s3155 + $0x8] sm:$0xf]
        %v3159 = vld [vmem:[%s3155 + $0xc] sm:$0xf]
        %v3160 = vld [vmem:[%s3155 + $0x10] sm:$0xf]
        %v3161 = vld [vmem:[%s3155 + $0x14] sm:$0xf]
        %v3162 = vld [vmem:[%s3155 + $0x18] sm:$0xf]
        %v3163 = vld [vmem:[%s3155 + $0x1c] sm:$0xf]
        %v3164 = vld [vmem:[%s3155 + $0x20] sm:$0xf]
        %v3165 = vld [vmem:[%s3155 + $0x24] sm:$0xf]
        %v3166 = vld [vmem:[%s3155 + $0x28] sm:$0xf]
        %v3167 = vld [vmem:[%s3155 + $0x2c] sm:$0xf]
        %v3168 = vld [vmem:[%s3155 + $0x30] sm:$0xf]
        %v3169 = vld [vmem:[%s3155 + $0x34] sm:$0xf]
        %v3170 = vld [vmem:[%s3155 + $0x38] sm:$0xf]
        %v3171 = vld [vmem:[%s3155 + $0x3c] sm:$0xf]
        %v3172 = vld [vmem:[%s3155 + $0x40] sm:$0xf]
        %v3173 = vld [vmem:[%s3155 + $0x44] sm:$0xf]
        %v3174 = vld [vmem:[%s3155 + $0x48] sm:$0xf]
        %v3175 = vld [vmem:[%s3155 + $0x4c] sm:$0xf]
        %v3196 = vunpack.c.l.b16 %v3156
        %v3197 = vunpack.c.l.b16 %v3157
        %v3198 = vunpack.c.l.b16 %v3158
        %v3199 = vunpack.c.l.b16 %v3159
        %v3200 = vunpack.c.l.b16 %v3160
        %v3201 = vunpack.c.l.b16 %v3161
        %v3202 = vunpack.c.l.b16 %v3162
        %v3203 = vunpack.c.l.b16 %v3163
        %v3204 = vunpack.c.l.b16 %v3164
        %v3205 = vunpack.c.l.b16 %v3165
        %v3206 = vunpack.c.l.b16 %v3166
        %v3207 = vunpack.c.l.b16 %v3167
        %v3208 = vunpack.c.l.b16 %v3168
        %v3209 = vunpack.c.l.b16 %v3169
        %v3210 = vunpack.c.l.b16 %v3170
        %v3211 = vunpack.c.l.b16 %v3171
        %v3212 = vunpack.c.l.b16 %v3172
        %v3213 = vunpack.c.l.b16 %v3173
        %v3214 = vunpack.c.l.b16 %v3174
        %v3215 = vunpack.c.l.b16 %v3175
        %v3216 = vpack.c.b16 %v3197, %v3196
        %v3217 = vpack.c.b16 %v3199, %v3198
        %v3218 = vpack.c.b16 %v3201, %v3200
        %v3219 = vpack.c.b16 %v3203, %v3202
        %v3220 = vpack.c.b16 %v3205, %v3204
        %v3221 = vpack.c.b16 %v3207, %v3206
        %v3222 = vpack.c.b16 %v3209, %v3208
        %v3223 = vpack.c.b16 %v3211, %v3210
        %v3224 = vpack.c.b16 %v3213, %v3212
        %v3225 = vpack.c.b16 %v3215, %v3214
        %3236 = vmatpush.bf16.msra.mxu0 %v3223
        %3237 = vmatpush.bf16.msra.mxu0 %v3222
        %3238 = vmatpush.bf16.msra.mxu0 %v3221
        %3239 = vmatpush.bf16.msra.mxu0 %v3220
        %3240 = vmatpush.bf16.msra.mxu0 %v3219
        %3241 = vmatpush.bf16.msra.mxu0 %v3218
        %3242 = vmatpush.bf16.msra.mxu0 %v3217
        %3243 = vmatpush.bf16.msra.mxu0 %v3216
        %3244 = vmatmul.bf16.gmra.mxu0 %v2893
        %v3245 = vpop.f32.mrf.mxu0
        %v3246 = vadd.f32 0.0, %v3245
        %v3247 = vpop.f32.mrf.mxu0
        %3248 = vdwg.mxu0
        %3249 = vmatpush.bf16.msra.mxu0 0
        %3250 = vmatpush.bf16.msra.mxu0 0
        %3251 = vmatpush.bf16.msra.mxu0 0
        %3252 = vmatpush.bf16.msra.mxu0 0
        %3253 = vmatpush.bf16.msra.mxu0 0
        %3254 = vmatpush.bf16.msra.mxu0 0
        %3255 = vmatpush.bf16.msra.mxu0 %v3225
        %3256 = vmatpush.bf16.msra.mxu0 %v3224
        %3257 = vmatmul.bf16.gmra.mxu0 %v2977
        %v3258 = vpop.f32.mrf.mxu0
        %v3259 = vadd.f32 %v3246, %v3258
        %v3260 = vpop.f32.mrf.mxu0
        %3261 = vdwg.mxu0
        %v3262 = vpack.c.bf16 %v3259, %v3259
        %s3263 = scalar_lea.vmem [#allocation8], 8
        %v3264 = vld [vmem:[%s3263] sm:$0xf]
        %v3266 = vsel %vm2095, %v3264, 0
        %v3269 = vsel %vm2099, %v3262, 0
        %3271 = vmatpush.bf16.msra.mxu0 0
        %3272 = vmatpush.bf16.msra.mxu0 0
        %3273 = vmatpush.bf16.msra.mxu0 0
        %3274 = vmatpush.bf16.msra.mxu0 0
        %3275 = vmatpush.bf16.msra.mxu0 0
        %3276 = vmatpush.bf16.msra.mxu0 0
        %3277 = vmatpush.bf16.msra.mxu0 0
        %3278 = vmatpush.bf16.msra.mxu0 %v3269
        %3279 = vmatmul.bf16.gmra.mxu0 %v3266
        %v3280 = vpop.f32.mrf.mxu0
        %v3281 = vadd.f32 0.0, %v3280
        %v3282 = vpop.f32.mrf.mxu0
        %3283 = vdwg.mxu0
        %v3284 = vadd.f32 %v3152, %v3281
        %s3285 = scalar_lea.vmem [#allocation10], 240
        %v3286 = vld [vmem:[%s3285] sm:$0xf]
        %v3287 = vld [vmem:[%s3285 + $0x4] sm:$0xf]
        %v3288 = vld [vmem:[%s3285 + $0x8] sm:$0xf]
        %v3289 = vld [vmem:[%s3285 + $0xc] sm:$0xf]
        %v3290 = vld [vmem:[%s3285 + $0x10] sm:$0xf]
        %v3291 = vld [vmem:[%s3285 + $0x14] sm:$0xf]
        %v3292 = vld [vmem:[%s3285 + $0x18] sm:$0xf]
        %v3293 = vld [vmem:[%s3285 + $0x1c] sm:$0xf]
        %v3294 = vld [vmem:[%s3285 + $0x20] sm:$0xf]
        %v3295 = vld [vmem:[%s3285 + $0x24] sm:$0xf]
        %v3296 = vld [vmem:[%s3285 + $0x28] sm:$0xf]
        %v3297 = vld [vmem:[%s3285 + $0x2c] sm:$0xf]
        %v3298 = vld [vmem:[%s3285 + $0x30] sm:$0xf]
        %v3299 = vld [vmem:[%s3285 + $0x34] sm:$0xf]
        %v3300 = vld [vmem:[%s3285 + $0x38] sm:$0xf]
        %v3301 = vld [vmem:[%s3285 + $0x3c] sm:$0xf]
        %v3302 = vld [vmem:[%s3285 + $0x40] sm:$0xf]
        %v3303 = vld [vmem:[%s3285 + $0x44] sm:$0xf]
        %v3304 = vld [vmem:[%s3285 + $0x48] sm:$0xf]
        %v3305 = vld [vmem:[%s3285 + $0x4c] sm:$0xf]
        %v3326 = vunpack.c.l.b16 %v3286
        %v3327 = vunpack.c.l.b16 %v3287
        %v3328 = vunpack.c.l.b16 %v3288
        %v3329 = vunpack.c.l.b16 %v3289
        %v3330 = vunpack.c.l.b16 %v3290
        %v3331 = vunpack.c.l.b16 %v3291
        %v3332 = vunpack.c.l.b16 %v3292
        %v3333 = vunpack.c.l.b16 %v3293
        %v3334 = vunpack.c.l.b16 %v3294
        %v3335 = vunpack.c.l.b16 %v3295
        %v3336 = vunpack.c.l.b16 %v3296
        %v3337 = vunpack.c.l.b16 %v3297
        %v3338 = vunpack.c.l.b16 %v3298
        %v3339 = vunpack.c.l.b16 %v3299
        %v3340 = vunpack.c.l.b16 %v3300
        %v3341 = vunpack.c.l.b16 %v3301
        %v3342 = vunpack.c.l.b16 %v3302
        %v3343 = vunpack.c.l.b16 %v3303
        %v3344 = vunpack.c.l.b16 %v3304
        %v3345 = vunpack.c.l.b16 %v3305
        %v3346 = vpack.c.b16 %v3327, %v3326
        %v3347 = vpack.c.b16 %v3329, %v3328
        %v3348 = vpack.c.b16 %v3331, %v3330
        %v3349 = vpack.c.b16 %v3333, %v3332
        %v3350 = vpack.c.b16 %v3335, %v3334
        %v3351 = vpack.c.b16 %v3337, %v3336
        %v3352 = vpack.c.b16 %v3339, %v3338
        %v3353 = vpack.c.b16 %v3341, %v3340
        %v3354 = vpack.c.b16 %v3343, %v3342
        %v3355 = vpack.c.b16 %v3345, %v3344
        %3366 = vmatpush.bf16.msra.mxu0 %v3353
        %3367 = vmatpush.bf16.msra.mxu0 %v3352
        %3368 = vmatpush.bf16.msra.mxu0 %v3351
        %3369 = vmatpush.bf16.msra.mxu0 %v3350
        %3370 = vmatpush.bf16.msra.mxu0 %v3349
        %3371 = vmatpush.bf16.msra.mxu0 %v3348
        %3372 = vmatpush.bf16.msra.mxu0 %v3347
        %3373 = vmatpush.bf16.msra.mxu0 %v3346
        %3374 = vmatmul.bf16.gmra.mxu0 %v2893
        %v3375 = vpop.f32.mrf.mxu0
        %v3376 = vadd.f32 0.0, %v3375
        %v3377 = vpop.f32.mrf.mxu0
        %3378 = vdwg.mxu0
        %3379 = vmatpush.bf16.msra.mxu0 0
        %3380 = vmatpush.bf16.msra.mxu0 0
        %3381 = vmatpush.bf16.msra.mxu0 0
        %3382 = vmatpush.bf16.msra.mxu0 0
        %3383 = vmatpush.bf16.msra.mxu0 0
        %3384 = vmatpush.bf16.msra.mxu0 0
        %3385 = vmatpush.bf16.msra.mxu0 %v3355
        %3386 = vmatpush.bf16.msra.mxu0 %v3354
        %3387 = vmatmul.bf16.gmra.mxu0 %v2977
        %v3388 = vpop.f32.mrf.mxu0
        %v3389 = vadd.f32 %v3376, %v3388
        %v3390 = vpop.f32.mrf.mxu0
        %3391 = vdwg.mxu0
        %v3392 = vpack.c.bf16 %v3389, %v3389
        %s3393 = scalar_lea.vmem [#allocation8], 12
        %v3394 = vld [vmem:[%s3393] sm:$0xf]
        %v3396 = vsel %vm2095, %v3394, 0
        %v3399 = vsel %vm2099, %v3392, 0
        %3401 = vmatpush.bf16.msra.mxu0 0
        %3402 = vmatpush.bf16.msra.mxu0 0
        %3403 = vmatpush.bf16.msra.mxu0 0
        %3404 = vmatpush.bf16.msra.mxu0 0
        %3405 = vmatpush.bf16.msra.mxu0 0
        %3406 = vmatpush.bf16.msra.mxu0 0
        %3407 = vmatpush.bf16.msra.mxu0 0
        %3408 = vmatpush.bf16.msra.mxu0 %v3399
        %3409 = vmatmul.bf16.gmra.mxu0 %v3396
        %v3410 = vpop.f32.mrf.mxu0
        %v3411 = vadd.f32 0.0, %v3410
        %v3412 = vpop.f32.mrf.mxu0
        %3413 = vdwg.mxu0
        %v3414 = vadd.f32 %v3284, %v3411
        %vm3415 = vcmp.gt.f32.partialorder %v3414, 0.0
        %v3416 = vmul.f32 %v3414, 0.2
        %v3417 = vsel %vm3415, %v3414, %v3416
        %v3418 = vpack.c.bf16 %v3417, %v3417
        %v3419 = vld [vmem:[#allocation13] sm:$0xf]
        %v3420 = vld [vmem:[#allocation13 + $0x4] sm:$0xf]
        %v3421 = vld [vmem:[#allocation13 + $0x8] sm:$0xf]
        %v3422 = vld [vmem:[#allocation13 + $0xc] sm:$0xf]
        %v3423 = vld [vmem:[#allocation13 + $0x10] sm:$0xf]
        %v3424 = vld [vmem:[#allocation13 + $0x14] sm:$0xf]
        %v3425 = vld [vmem:[#allocation13 + $0x18] sm:$0xf]
        %v3426 = vld [vmem:[#allocation13 + $0x1c] sm:$0xf]
        %v3427 = vld [vmem:[#allocation13 + $0x20] sm:$0xf]
        %v3428 = vld [vmem:[#allocation13 + $0x24] sm:$0xf]
        %v3439 = vunpack.c.l.b16 %v3419
        %v3440 = vunpack.c.l.b16 %v3420
        %v3441 = vunpack.c.l.b16 %v3421
        %v3442 = vunpack.c.l.b16 %v3422
        %v3443 = vunpack.c.l.b16 %v3423
        %v3444 = vunpack.c.l.b16 %v3424
        %v3445 = vunpack.c.l.b16 %v3425
        %v3446 = vunpack.c.l.b16 %v3426
        %v3447 = vunpack.c.l.b16 %v3427
        %v3448 = vunpack.c.l.b16 %v3428
        %v3449 = vpack.c.b16 %v3440, %v3439
        %v3450 = vpack.c.b16 %v3442, %v3441
        %v3451 = vpack.c.b16 %v3444, %v3443
        %v3452 = vpack.c.b16 %v3446, %v3445
        %v3453 = vpack.c.b16 %v3448, %v3447
        %vm3459 = vcmask 654336
        %v3461 = vsel %vm3459, %v3418, 0
        %3463 = vmatpush.bf16.msra.mxu0 0
        %3464 = vmatpush.bf16.msra.mxu0 0
        %3465 = vmatpush.bf16.msra.mxu0 0
        %3466 = vmatpush.bf16.msra.mxu0 %v3453
        %3467 = vmatpush.bf16.msra.mxu0 %v3452
        %3468 = vmatpush.bf16.msra.mxu0 %v3451
        %3469 = vmatpush.bf16.msra.mxu0 %v3450
        %3470 = vmatpush.bf16.msra.mxu0 %v3449
        %3471 = vmatmul.bf16.gmra.mxu0 %v3461
        %v3472 = vpop.f32.mrf.mxu0
        %v3473 = vadd.f32 0.0, %v3472
        %v3474 = vpop.f32.mrf.mxu0
        %3475 = vdwg.mxu0
        %v3476 = vpack.c.bf16 %v3473, %v3473
        %v3477 = vld [vmem:[#allocation11] sm:$0xf]
        %v3478 = vld [vmem:[#allocation11 + $0x4] sm:$0xf]
        %s3479 = scalar_lea.vmem [#allocation13], 40
        %v3480 = vld [vmem:[%s3479] sm:$0xf]
        %v3481 = vld [vmem:[%s3479 + $0x4] sm:$0xf]
        %v3482 = vld [vmem:[%s3479 + $0x8] sm:$0xf]
        %v3483 = vld [vmem:[%s3479 + $0xc] sm:$0xf]
        %v3484 = vld [vmem:[%s3479 + $0x10] sm:$0xf]
        %v3485 = vld [vmem:[%s3479 + $0x14] sm:$0xf]
        %v3486 = vld [vmem:[%s3479 + $0x18] sm:$0xf]
        %v3487 = vld [vmem:[%s3479 + $0x1c] sm:$0xf]
        %v3488 = vld [vmem:[%s3479 + $0x20] sm:$0xf]
        %v3489 = vld [vmem:[%s3479 + $0x24] sm:$0xf]
        %v3500 = vunpack.c.l.b16 %v3480
        %v3501 = vunpack.c.l.b16 %v3481
        %v3502 = vunpack.c.l.b16 %v3482
        %v3503 = vunpack.c.l.b16 %v3483
        %v3504 = vunpack.c.l.b16 %v3484
        %v3505 = vunpack.c.l.b16 %v3485
        %v3506 = vunpack.c.l.b16 %v3486
        %v3507 = vunpack.c.l.b16 %v3487
        %v3508 = vunpack.c.l.b16 %v3488
        %v3509 = vunpack.c.l.b16 %v3489
        %v3510 = vpack.c.b16 %v3501, %v3500
        %v3511 = vpack.c.b16 %v3503, %v3502
        %v3512 = vpack.c.b16 %v3505, %v3504
        %v3513 = vpack.c.b16 %v3507, %v3506
        %v3514 = vpack.c.b16 %v3509, %v3508
        %3520 = vmatpush.bf16.msra.mxu0 0
        %3521 = vmatpush.bf16.msra.mxu0 0
        %3522 = vmatpush.bf16.msra.mxu0 0
        %3523 = vmatpush.bf16.msra.mxu0 %v3514
        %3524 = vmatpush.bf16.msra.mxu0 %v3513
        %3525 = vmatpush.bf16.msra.mxu0 %v3512
        %3526 = vmatpush.bf16.msra.mxu0 %v3511
        %3527 = vmatpush.bf16.msra.mxu0 %v3510
        %3528 = vmatmul.bf16.gmra.mxu0 %v3461
        %v3529 = vpop.f32.mrf.mxu0
        %v3530 = vadd.f32 0.0, %v3529
        %v3531 = vpop.f32.mrf.mxu0
        %3532 = vdwg.mxu0
        %v3533 = vpack.c.bf16 %v3530, %v3530
        %s3534 = scalar_lea.vmem [#allocation11], 8
        %v3535 = vld [vmem:[%s3534] sm:$0xf]
        %v3536 = vld [vmem:[%s3534 + $0x4] sm:$0xf]
        %v3539 = vunpack.c.l.b16 %v3535
        %v3540 = vunpack.c.l.b16 %v3536
        %v3541 = vpack.c.b16 %v3540, %v3539
        %vm3542 = vcmask 64512
        %v3544 = vsel %vm3542, %v3541, 0
        %vm3546 = vcmask 1043456
        %v3548 = vsel %vm3546, %v3533, 0
        %3550 = vmatpush.bf16.msra.mxu0 0
        %3551 = vmatpush.bf16.msra.mxu0 0
        %3552 = vmatpush.bf16.msra.mxu0 0
        %3553 = vmatpush.bf16.msra.mxu0 0
        %3554 = vmatpush.bf16.msra.mxu0 0
        %3555 = vmatpush.bf16.msra.mxu0 0
        %3556 = vmatpush.bf16.msra.mxu0 0
        %3557 = vmatpush.bf16.msra.mxu0 %v3548
        %3558 = vmatmul.bf16.gmra.mxu0 %v3544
        %v3559 = vpop.f32.mrf.mxu0
        %v3560 = vadd.f32 0.0, %v3559
        %v3561 = vpop.f32.mrf.mxu0
        %v3562 = vadd.f32 0.0, %v3561
        %3563 = vdwg.mxu0
        %v3566 = vunpack.c.l.b16 %v3477
        %v3567 = vunpack.c.l.b16 %v3478
        %v3568 = vpack.c.b16 %v3567, %v3566
        %v3570 = vsel %vm3542, %v3568, 0
        %v3573 = vsel %vm3546, %v3476, 0
        %3575 = vmatpush.bf16.msra.mxu0 0
        %3576 = vmatpush.bf16.msra.mxu0 0
        %3577 = vmatpush.bf16.msra.mxu0 0
        %3578 = vmatpush.bf16.msra.mxu0 0
        %3579 = vmatpush.bf16.msra.mxu0 0
        %3580 = vmatpush.bf16.msra.mxu0 0
        %3581 = vmatpush.bf16.msra.mxu0 0
        %3582 = vmatpush.bf16.msra.mxu0 %v3573
        %3583 = vmatmul.bf16.gmra.mxu0 %v3570
        %v3584 = vpop.f32.mrf.mxu0
        %v3585 = vadd.f32 %v3560, %v3584
        %v3586 = vpop.f32.mrf.mxu0
        %v3587 = vadd.f32 %v3562, %v3586
        %3588 = vdwg.mxu0
        %s3589 = scalar_lea.vmem [#allocation13], 80
        %v3590 = vld [vmem:[%s3589] sm:$0xf]
        %v3591 = vld [vmem:[%s3589 + $0x4] sm:$0xf]
        %v3592 = vld [vmem:[%s3589 + $0x8] sm:$0xf]
        %v3593 = vld [vmem:[%s3589 + $0xc] sm:$0xf]
        %v3594 = vld [vmem:[%s3589 + $0x10] sm:$0xf]
        %v3595 = vld [vmem:[%s3589 + $0x14] sm:$0xf]
        %v3596 = vld [vmem:[%s3589 + $0x18] sm:$0xf]
        %v3597 = vld [vmem:[%s3589 + $0x1c] sm:$0xf]
        %v3598 = vld [vmem:[%s3589 + $0x20] sm:$0xf]
        %v3599 = vld [vmem:[%s3589 + $0x24] sm:$0xf]
        %v3610 = vunpack.c.l.b16 %v3590
        %v3611 = vunpack.c.l.b16 %v3591
        %v3612 = vunpack.c.l.b16 %v3592
        %v3613 = vunpack.c.l.b16 %v3593
        %v3614 = vunpack.c.l.b16 %v3594
        %v3615 = vunpack.c.l.b16 %v3595
        %v3616 = vunpack.c.l.b16 %v3596
        %v3617 = vunpack.c.l.b16 %v3597
        %v3618 = vunpack.c.l.b16 %v3598
        %v3619 = vunpack.c.l.b16 %v3599
        %v3620 = vpack.c.b16 %v3611, %v3610
        %v3621 = vpack.c.b16 %v3613, %v3612
        %v3622 = vpack.c.b16 %v3615, %v3614
        %v3623 = vpack.c.b16 %v3617, %v3616
        %v3624 = vpack.c.b16 %v3619, %v3618
        %3630 = vmatpush.bf16.msra.mxu0 0
        %3631 = vmatpush.bf16.msra.mxu0 0
        %3632 = vmatpush.bf16.msra.mxu0 0
        %3633 = vmatpush.bf16.msra.mxu0 %v3624
        %3634 = vmatpush.bf16.msra.mxu0 %v3623
        %3635 = vmatpush.bf16.msra.mxu0 %v3622
        %3636 = vmatpush.bf16.msra.mxu0 %v3621
        %3637 = vmatpush.bf16.msra.mxu0 %v3620
        %3638 = vmatmul.bf16.gmra.mxu0 %v3461
        %v3639 = vpop.f32.mrf.mxu0
        %v3640 = vadd.f32 0.0, %v3639
        %v3641 = vpop.f32.mrf.mxu0
        %3642 = vdwg.mxu0
        %v3643 = vpack.c.bf16 %v3640, %v3640
        %s3644 = scalar_lea.vmem [#allocation11], 16
        %v3645 = vld [vmem:[%s3644] sm:$0xf]
        %v3646 = vld [vmem:[%s3644 + $0x4] sm:$0xf]
        %v3649 = vunpack.c.l.b16 %v3645
        %v3650 = vunpack.c.l.b16 %v3646
        %v3651 = vpack.c.b16 %v3650, %v3649
        %v3653 = vsel %vm3542, %v3651, 0
        %v3656 = vsel %vm3546, %v3643, 0
        %3658 = vmatpush.bf16.msra.mxu0 0
        %3659 = vmatpush.bf16.msra.mxu0 0
        %3660 = vmatpush.bf16.msra.mxu0 0
        %3661 = vmatpush.bf16.msra.mxu0 0
        %3662 = vmatpush.bf16.msra.mxu0 0
        %3663 = vmatpush.bf16.msra.mxu0 0
        %3664 = vmatpush.bf16.msra.mxu0 0
        %3665 = vmatpush.bf16.msra.mxu0 %v3656
        %3666 = vmatmul.bf16.gmra.mxu0 %v3653
        %v3667 = vpop.f32.mrf.mxu0
        %v3668 = vadd.f32 0.0, %v3667
        %v3669 = vpop.f32.mrf.mxu0
        %v3670 = vadd.f32 0.0, %v3669
        %3671 = vdwg.mxu0
        %v3672 = vadd.f32 %v3585, %v3668
        %v3673 = vadd.f32 %v3587, %v3670
        %s3674 = scalar_lea.vmem [#allocation13], 120
        %v3675 = vld [vmem:[%s3674] sm:$0xf]
        %v3676 = vld [vmem:[%s3674 + $0x4] sm:$0xf]
        %v3677 = vld [vmem:[%s3674 + $0x8] sm:$0xf]
        %v3678 = vld [vmem:[%s3674 + $0xc] sm:$0xf]
        %v3679 = vld [vmem:[%s3674 + $0x10] sm:$0xf]
        %v3680 = vld [vmem:[%s3674 + $0x14] sm:$0xf]
        %v3681 = vld [vmem:[%s3674 + $0x18] sm:$0xf]
        %v3682 = vld [vmem:[%s3674 + $0x1c] sm:$0xf]
        %v3683 = vld [vmem:[%s3674 + $0x20] sm:$0xf]
        %v3684 = vld [vmem:[%s3674 + $0x24] sm:$0xf]
        %v3695 = vunpack.c.l.b16 %v3675
        %v3696 = vunpack.c.l.b16 %v3676
        %v3697 = vunpack.c.l.b16 %v3677
        %v3698 = vunpack.c.l.b16 %v3678
        %v3699 = vunpack.c.l.b16 %v3679
        %v3700 = vunpack.c.l.b16 %v3680
        %v3701 = vunpack.c.l.b16 %v3681
        %v3702 = vunpack.c.l.b16 %v3682
        %v3703 = vunpack.c.l.b16 %v3683
        %v3704 = vunpack.c.l.b16 %v3684
        %v3705 = vpack.c.b16 %v3696, %v3695
        %v3706 = vpack.c.b16 %v3698, %v3697
        %v3707 = vpack.c.b16 %v3700, %v3699
        %v3708 = vpack.c.b16 %v3702, %v3701
        %v3709 = vpack.c.b16 %v3704, %v3703
        %3715 = vmatpush.bf16.msra.mxu0 0
        %3716 = vmatpush.bf16.msra.mxu0 0
        %3717 = vmatpush.bf16.msra.mxu0 0
        %3718 = vmatpush.bf16.msra.mxu0 %v3709
        %3719 = vmatpush.bf16.msra.mxu0 %v3708
        %3720 = vmatpush.bf16.msra.mxu0 %v3707
        %3721 = vmatpush.bf16.msra.mxu0 %v3706
        %3722 = vmatpush.bf16.msra.mxu0 %v3705
        %3723 = vmatmul.bf16.gmra.mxu0 %v3461
        %v3724 = vpop.f32.mrf.mxu0
        %v3725 = vadd.f32 0.0, %v3724
        %v3726 = vpop.f32.mrf.mxu0
        %3727 = vdwg.mxu0
        %v3728 = vpack.c.bf16 %v3725, %v3725
        %s3729 = scalar_lea.vmem [#allocation11], 24
        %v3730 = vld [vmem:[%s3729] sm:$0xf]
        %v3731 = vld [vmem:[%s3729 + $0x4] sm:$0xf]
        %v3734 = vunpack.c.l.b16 %v3730
        %v3735 = vunpack.c.l.b16 %v3731
        %v3736 = vpack.c.b16 %v3735, %v3734
        %v3738 = vsel %vm3542, %v3736, 0
        %v3741 = vsel %vm3546, %v3728, 0
        %3743 = vmatpush.bf16.msra.mxu0 0
        %3744 = vmatpush.bf16.msra.mxu0 0
        %3745 = vmatpush.bf16.msra.mxu0 0
        %3746 = vmatpush.bf16.msra.mxu0 0
        %3747 = vmatpush.bf16.msra.mxu0 0
        %3748 = vmatpush.bf16.msra.mxu0 0
        %3749 = vmatpush.bf16.msra.mxu0 0
        %3750 = vmatpush.bf16.msra.mxu0 %v3741
        %3751 = vmatmul.bf16.gmra.mxu0 %v3738
        %v3752 = vpop.f32.mrf.mxu0
        %v3753 = vadd.f32 0.0, %v3752
        %v3754 = vpop.f32.mrf.mxu0
        %v3755 = vadd.f32 0.0, %v3754
        %3756 = vdwg.mxu0
        %v3757 = vadd.f32 %v3672, %v3753
        %v3758 = vadd.f32 %v3673, %v3755
        %vm3759 = vcmp.gt.f32.partialorder %v3757, 0.0
        %vm3760 = vcmp.gt.f32.partialorder %v3758, 0.0
        %v3761 = vmul.f32 %v3757, 0.2
        %v3762 = vmul.f32 %v3758, 0.2
        %v3763 = vsel %vm3759, %v3757, %v3761
        %v3764 = vsel %vm3760, %v3758, %v3762
        %v3765 = vpack.c.bf16 %v3764, %v3763
        %v3766 = vld [vmem:[#allocation16] sm:$0xf]
        %v3767 = vld [vmem:[#allocation16 + $0x4] sm:$0xf]
        %v3768 = vld [vmem:[#allocation16 + $0x8] sm:$0xf]
        %v3769 = vld [vmem:[#allocation16 + $0xc] sm:$0xf]
        %v3770 = vld [vmem:[#allocation16 + $0x10] sm:$0xf]
        %v3776 = vunpack.c.l.b16 %v3766
        %v3777 = vunpack.c.l.b16 %v3767
        %v3778 = vunpack.c.l.b16 %v3768
        %v3779 = vunpack.c.l.b16 %v3769
        %v3780 = vunpack.c.l.b16 %v3770
        %v3781 = vpack.c.b16 %v3777, %v3776
        %v3782 = vpack.c.b16 %v3779, %v3778
        %v3783 = vpack.c.b16 %v3780, %v3780
        %vm3786 = vcmask 326656
        %v3788 = vsel %vm3786, %v3765, 0
        %v3791 = vsel %vm3546, %v3783, 0
        %3793 = vmatpush.bf16.msra.mxu0 0
        %3794 = vmatpush.bf16.msra.mxu0 0
        %3795 = vmatpush.bf16.msra.mxu0 0
        %3796 = vmatpush.bf16.msra.mxu0 0
        %3797 = vmatpush.bf16.msra.mxu0 0
        %3798 = vmatpush.bf16.msra.mxu0 %v3791
        %3799 = vmatpush.bf16.msra.mxu0 %v3782
        %3800 = vmatpush.bf16.msra.mxu0 %v3781
        %3801 = vmatmul.bf16.gmra.mxu0 %v3788
        %v3802 = vpop.f32.mrf.mxu0
        %v3803 = vadd.f32 0.0, %v3802
        %v3804 = vpop.f32.mrf.mxu0
        %v3805 = vadd.f32 0.0, %v3804
        %3806 = vdwg.mxu0
        %v3807 = vpack.c.bf16 %v3805, %v3803
        %v3808 = vld [vmem:[#allocation14] sm:$0xf]
        %v3809 = vld [vmem:[#allocation14 + $0x4] sm:$0xf]
        %v3810 = vld [vmem:[#allocation14 + $0x8] sm:$0xf]
        %v3811 = vld [vmem:[#allocation14 + $0xc] sm:$0xf]
        %s3812 = scalar_lea.vmem [#allocation16], 20
        %v3813 = vld [vmem:[%s3812] sm:$0xf]
        %v3814 = vld [vmem:[%s3812 + $0x4] sm:$0xf]
        %v3815 = vld [vmem:[%s3812 + $0x8] sm:$0xf]
        %v3816 = vld [vmem:[%s3812 + $0xc] sm:$0xf]
        %v3817 = vld [vmem:[%s3812 + $0x10] sm:$0xf]
        %v3823 = vunpack.c.l.b16 %v3813
        %v3824 = vunpack.c.l.b16 %v3814
        %v3825 = vunpack.c.l.b16 %v3815
        %v3826 = vunpack.c.l.b16 %v3816
        %v3827 = vunpack.c.l.b16 %v3817
        %v3828 = vpack.c.b16 %v3824, %v3823
        %v3829 = vpack.c.b16 %v3826, %v3825
        %v3830 = vpack.c.b16 %v3827, %v3827
        %v3834 = vsel %vm3546, %v3830, 0
        %3836 = vmatpush.bf16.msra.mxu0 0
        %3837 = vmatpush.bf16.msra.mxu0 0
        %3838 = vmatpush.bf16.msra.mxu0 0
        %3839 = vmatpush.bf16.msra.mxu0 0
        %3840 = vmatpush.bf16.msra.mxu0 0
        %3841 = vmatpush.bf16.msra.mxu0 %v3834
        %3842 = vmatpush.bf16.msra.mxu0 %v3829
        %3843 = vmatpush.bf16.msra.mxu0 %v3828
        %3844 = vmatmul.bf16.gmra.mxu0 %v3788
        %v3845 = vpop.f32.mrf.mxu0
        %v3846 = vadd.f32 0.0, %v3845
        %v3847 = vpop.f32.mrf.mxu0
        %v3848 = vadd.f32 0.0, %v3847
        %3849 = vdwg.mxu0
        %v3850 = vpack.c.bf16 %v3848, %v3846
        %s3851 = scalar_lea.vmem [#allocation14], 16
        %v3852 = vld [vmem:[%s3851] sm:$0xf]
        %v3853 = vld [vmem:[%s3851 + $0x4] sm:$0xf]
        %v3854 = vld [vmem:[%s3851 + $0x8] sm:$0xf]
        %v3855 = vld [vmem:[%s3851 + $0xc] sm:$0xf]
        %v3860 = vunpack.c.l.b16 %v3852
        %v3861 = vunpack.c.l.b16 %v3853
        %v3862 = vunpack.c.l.b16 %v3854
        %v3863 = vunpack.c.l.b16 %v3855
        %v3864 = vpack.c.b16 %v3861, %v3860
        %v3865 = vpack.c.b16 %v3863, %v3862
        %vm3866 = vcmask 130048
        %v3868 = vsel %vm3866, %v3864, 0
        %v3871 = vsel %vm3866, %v3865, 0
        %3873 = vmatpush.bf16.msra.mxu0 0
        %3874 = vmatpush.bf16.msra.mxu0 0
        %3875 = vmatpush.bf16.msra.mxu0 0
        %3876 = vmatpush.bf16.msra.mxu0 0
        %3877 = vmatpush.bf16.msra.mxu0 0
        %3878 = vmatpush.bf16.msra.mxu0 0
        %3879 = vmatpush.bf16.msra.mxu0 0
        %3880 = vmatpush.bf16.msra.mxu0 %v3850
        %3881 = vmatmul.bf16.gmra.mxu0 %v3868
        %v3882 = vpop.f32.mrf.mxu0
        %v3883 = vadd.f32 0.0, %v3882
        %v3884 = vpop.f32.mrf.mxu0
        %v3885 = vadd.f32 0.0, %v3884
        %3886 = vmatmul.bf16.gmra.mxu0 %v3871
        %v3887 = vpop.f32.mrf.mxu0
        %v3888 = vadd.f32 0.0, %v3887
        %v3889 = vpop.f32.mrf.mxu0
        %v3890 = vadd.f32 0.0, %v3889
        %3891 = vdwg.mxu0
        %v3896 = vunpack.c.l.b16 %v3808
        %v3897 = vunpack.c.l.b16 %v3809
        %v3898 = vunpack.c.l.b16 %v3810
        %v3899 = vunpack.c.l.b16 %v3811
        %v3900 = vpack.c.b16 %v3897, %v3896
        %v3901 = vpack.c.b16 %v3899, %v3898
        %v3903 = vsel %vm3866, %v3900, 0
        %v3906 = vsel %vm3866, %v3901, 0
        %3908 = vmatpush.bf16.msra.mxu0 0
        %3909 = vmatpush.bf16.msra.mxu0 0
        %3910 = vmatpush.bf16.msra.mxu0 0
        %3911 = vmatpush.bf16.msra.mxu0 0
        %3912 = vmatpush.bf16.msra.mxu0 0
        %3913 = vmatpush.bf16.msra.mxu0 0
        %3914 = vmatpush.bf16.msra.mxu0 0
        %3915 = vmatpush.bf16.msra.mxu0 %v3807
        %3916 = vmatmul.bf16.gmra.mxu0 %v3903
        %v3917 = vpop.f32.mrf.mxu0
        %v3918 = vadd.f32 %v3883, %v3917
        %v3919 = vpop.f32.mrf.mxu0
        %v3920 = vadd.f32 %v3885, %v3919
        %3921 = vmatmul.bf16.gmra.mxu0 %v3906
        %v3922 = vpop.f32.mrf.mxu0
        %v3923 = vadd.f32 %v3888, %v3922
        %v3924 = vpop.f32.mrf.mxu0
        %v3925 = vadd.f32 %v3890, %v3924
        %3926 = vdwg.mxu0
        %s3927 = scalar_lea.vmem [#allocation16], 40
        %v3928 = vld [vmem:[%s3927] sm:$0xf]
        %v3929 = vld [vmem:[%s3927 + $0x4] sm:$0xf]
        %v3930 = vld [vmem:[%s3927 + $0x8] sm:$0xf]
        %v3931 = vld [vmem:[%s3927 + $0xc] sm:$0xf]
        %v3932 = vld [vmem:[%s3927 + $0x10] sm:$0xf]
        %v3938 = vunpack.c.l.b16 %v3928
        %v3939 = vunpack.c.l.b16 %v3929
        %v3940 = vunpack.c.l.b16 %v3930
        %v3941 = vunpack.c.l.b16 %v3931
        %v3942 = vunpack.c.l.b16 %v3932
        %v3943 = vpack.c.b16 %v3939, %v3938
        %v3944 = vpack.c.b16 %v3941, %v3940
        %v3945 = vpack.c.b16 %v3942, %v3942
        %v3949 = vsel %vm3546, %v3945, 0
        %3951 = vmatpush.bf16.msra.mxu0 0
        %3952 = vmatpush.bf16.msra.mxu0 0
        %3953 = vmatpush.bf16.msra.mxu0 0
        %3954 = vmatpush.bf16.msra.mxu0 0
        %3955 = vmatpush.bf16.msra.mxu0 0
        %3956 = vmatpush.bf16.msra.mxu0 %v3949
        %3957 = vmatpush.bf16.msra.mxu0 %v3944
        %3958 = vmatpush.bf16.msra.mxu0 %v3943
        %3959 = vmatmul.bf16.gmra.mxu0 %v3788
        %v3960 = vpop.f32.mrf.mxu0
        %v3961 = vadd.f32 0.0, %v3960
        %v3962 = vpop.f32.mrf.mxu0
        %v3963 = vadd.f32 0.0, %v3962
        %3964 = vdwg.mxu0
        %v3965 = vpack.c.bf16 %v3963, %v3961
        %s3966 = scalar_lea.vmem [#allocation14], 32
        %v3967 = vld [vmem:[%s3966] sm:$0xf]
        %v3968 = vld [vmem:[%s3966 + $0x4] sm:$0xf]
        %v3969 = vld [vmem:[%s3966 + $0x8] sm:$0xf]
        %v3970 = vld [vmem:[%s3966 + $0xc] sm:$0xf]
        %v3975 = vunpack.c.l.b16 %v3967
        %v3976 = vunpack.c.l.b16 %v3968
        %v3977 = vunpack.c.l.b16 %v3969
        %v3978 = vunpack.c.l.b16 %v3970
        %v3979 = vpack.c.b16 %v3976, %v3975
        %v3980 = vpack.c.b16 %v3978, %v3977
        %v3982 = vsel %vm3866, %v3979, 0
        %v3985 = vsel %vm3866, %v3980, 0
        %3987 = vmatpush.bf16.msra.mxu0 0
        %3988 = vmatpush.bf16.msra.mxu0 0
        %3989 = vmatpush.bf16.msra.mxu0 0
        %3990 = vmatpush.bf16.msra.mxu0 0
        %3991 = vmatpush.bf16.msra.mxu0 0
        %3992 = vmatpush.bf16.msra.mxu0 0
        %3993 = vmatpush.bf16.msra.mxu0 0
        %3994 = vmatpush.bf16.msra.mxu0 %v3965
        %3995 = vmatmul.bf16.gmra.mxu0 %v3982
        %v3996 = vpop.f32.mrf.mxu0
        %v3997 = vadd.f32 0.0, %v3996
        %v3998 = vpop.f32.mrf.mxu0
        %v3999 = vadd.f32 0.0, %v3998
        %4000 = vmatmul.bf16.gmra.mxu0 %v3985
        %v4001 = vpop.f32.mrf.mxu0
        %v4002 = vadd.f32 0.0, %v4001
        %v4003 = vpop.f32.mrf.mxu0
        %v4004 = vadd.f32 0.0, %v4003
        %4005 = vdwg.mxu0
        %v4006 = vadd.f32 %v3918, %v3997
        %v4007 = vadd.f32 %v3920, %v3999
        %v4008 = vadd.f32 %v3923, %v4002
        %v4009 = vadd.f32 %v3925, %v4004
        %s4010 = scalar_lea.vmem [#allocation16], 60
        %v4011 = vld [vmem:[%s4010] sm:$0xf]
        %v4012 = vld [vmem:[%s4010 + $0x4] sm:$0xf]
        %v4013 = vld [vmem:[%s4010 + $0x8] sm:$0xf]
        %v4014 = vld [vmem:[%s4010 + $0xc] sm:$0xf]
        %v4015 = vld [vmem:[%s4010 + $0x10] sm:$0xf]
        %v4021 = vunpack.c.l.b16 %v4011
        %v4022 = vunpack.c.l.b16 %v4012
        %v4023 = vunpack.c.l.b16 %v4013
        %v4024 = vunpack.c.l.b16 %v4014
        %v4025 = vunpack.c.l.b16 %v4015
        %v4026 = vpack.c.b16 %v4022, %v4021
        %v4027 = vpack.c.b16 %v4024, %v4023
        %v4028 = vpack.c.b16 %v4025, %v4025
        %v4032 = vsel %vm3546, %v4028, 0
        %4034 = vmatpush.bf16.msra.mxu0 0
        %4035 = vmatpush.bf16.msra.mxu0 0
        %4036 = vmatpush.bf16.msra.mxu0 0
        %4037 = vmatpush.bf16.msra.mxu0 0
        %4038 = vmatpush.bf16.msra.mxu0 0
        %4039 = vmatpush.bf16.msra.mxu0 %v4032
        %4040 = vmatpush.bf16.msra.mxu0 %v4027
        %4041 = vmatpush.bf16.msra.mxu0 %v4026
        %4042 = vmatmul.bf16.gmra.mxu0 %v3788
        %v4043 = vpop.f32.mrf.mxu0
        %v4044 = vadd.f32 0.0, %v4043
        %v4045 = vpop.f32.mrf.mxu0
        %v4046 = vadd.f32 0.0, %v4045
        %4047 = vdwg.mxu0
        %v4048 = vpack.c.bf16 %v4046, %v4044
        %s4049 = scalar_lea.vmem [#allocation14], 48
        %v4050 = vld [vmem:[%s4049] sm:$0xf]
        %v4051 = vld [vmem:[%s4049 + $0x4] sm:$0xf]
        %v4052 = vld [vmem:[%s4049 + $0x8] sm:$0xf]
        %v4053 = vld [vmem:[%s4049 + $0xc] sm:$0xf]
        %v4058 = vunpack.c.l.b16 %v4050
        %v4059 = vunpack.c.l.b16 %v4051
        %v4060 = vunpack.c.l.b16 %v4052
        %v4061 = vunpack.c.l.b16 %v4053
        %v4062 = vpack.c.b16 %v4059, %v4058
        %v4063 = vpack.c.b16 %v4061, %v4060
        %v4065 = vsel %vm3866, %v4062, 0
        %v4068 = vsel %vm3866, %v4063, 0
        %4070 = vmatpush.bf16.msra.mxu0 0
        %4071 = vmatpush.bf16.msra.mxu0 0
        %4072 = vmatpush.bf16.msra.mxu0 0
        %4073 = vmatpush.bf16.msra.mxu0 0
        %4074 = vmatpush.bf16.msra.mxu0 0
        %4075 = vmatpush.bf16.msra.mxu0 0
        %4076 = vmatpush.bf16.msra.mxu0 0
        %4077 = vmatpush.bf16.msra.mxu0 %v4048
        %4078 = vmatmul.bf16.gmra.mxu0 %v4065
        %v4079 = vpop.f32.mrf.mxu0
        %v4080 = vadd.f32 0.0, %v4079
        %v4081 = vpop.f32.mrf.mxu0
        %v4082 = vadd.f32 0.0, %v4081
        %4083 = vmatmul.bf16.gmra.mxu0 %v4068
        %v4084 = vpop.f32.mrf.mxu0
        %v4085 = vadd.f32 0.0, %v4084
        %v4086 = vpop.f32.mrf.mxu0
        %v4087 = vadd.f32 0.0, %v4086
        %4088 = vdwg.mxu0
        %v4089 = vadd.f32 %v4006, %v4080
        %v4090 = vadd.f32 %v4007, %v4082
        %v4091 = vadd.f32 %v4008, %v4085
        %v4092 = vadd.f32 %v4009, %v4087
        %vm4093 = vcmp.gt.f32.partialorder %v4089, 0.0
        %vm4094 = vcmp.gt.f32.partialorder %v4090, 0.0
        %vm4095 = vcmp.gt.f32.partialorder %v4091, 0.0
        %vm4096 = vcmp.gt.f32.partialorder %v4092, 0.0
        %v4097 = vmul.f32 %v4089, 0.2
        %v4098 = vmul.f32 %v4090, 0.2
        %v4099 = vmul.f32 %v4091, 0.2
        %v4100 = vmul.f32 %v4092, 0.2
        %v4101 = vsel %vm4093, %v4089, %v4097
        %v4102 = vsel %vm4094, %v4090, %v4098
        %v4103 = vsel %vm4095, %v4091, %v4099
        %v4104 = vsel %vm4096, %v4092, %v4100
        %v4105 = vpack.c.bf16 %v4102, %v4101
        %v4106 = vpack.c.bf16 %v4104, %v4103
        %v4107 = vld [vmem:[#allocation19] sm:$0xf]
        %v4108 = vld [vmem:[#allocation19 + $0x4] sm:$0xf]
        %v4109 = vld [vmem:[#allocation19 + $0x8] sm:$0x3]
        %v4113 = vunpack.c.l.b16 %v4107
        %v4114 = vunpack.c.l.b16 %v4108
        %v4115 = vunpack.c.l.b16 %v4109
        %v4116 = vpack.c.b16 %v4114, %v4113
        %v4117 = vpack.c.b16 %v4115, %v4115
        %vm4119 = vcmask 162816
        %v4121 = vsel %vm4119, %v4105, 0
        %v4124 = vsel %vm4119, %v4106, 0
        %v4127 = vsel %vm2099, %v4117, 0
        %4129 = vmatpush.bf16.msra.mxu0 0
        %4130 = vmatpush.bf16.msra.mxu0 0
        %4131 = vmatpush.bf16.msra.mxu0 0
        %4132 = vmatpush.bf16.msra.mxu0 0
        %4133 = vmatpush.bf16.msra.mxu0 0
        %4134 = vmatpush.bf16.msra.mxu0 0
        %4135 = vmatpush.bf16.msra.mxu0 %v4127
        %4136 = vmatpush.bf16.msra.mxu0 %v4116
        %4137 = vmatmul.bf16.gmra.mxu0 %v4121
        %v4138 = vpop.f32.mrf.mxu0
        %v4139 = vadd.f32 0.0, %v4138
        %v4140 = vpop.f32.mrf.mxu0
        %v4141 = vadd.f32 0.0, %v4140
        %4142 = vmatmul.bf16.gmra.mxu0 %v4124
        %v4143 = vpop.f32.mrf.mxu0
        %v4144 = vadd.f32 0.0, %v4143
        %v4145 = vpop.f32.mrf.mxu0
        %v4146 = vadd.f32 0.0, %v4145
        %4147 = vdwg.mxu0
        %v4148 = vpack.c.bf16 %v4141, %v4139
        %v4149 = vpack.c.bf16 %v4146, %v4144
        %v4150 = vld [vmem:[#allocation17] sm:$0xf]
        %v4151 = vld [vmem:[#allocation17 + $0x4] sm:$0xf]
        %v4152 = vld [vmem:[#allocation17 + $0x8] sm:$0xf]
        %v4153 = vld [vmem:[#allocation17 + $0xc] sm:$0xf]
        %v4154 = vld [vmem:[#allocation17 + $0x10] sm:$0xf]
        %v4155 = vld [vmem:[#allocation17 + $0x14] sm:$0xf]
        %v4156 = vld [vmem:[#allocation17 + $0x18] sm:$0xf]
        %v4157 = vld [vmem:[#allocation17 + $0x1c] sm:$0xf]
        %s4158 = scalar_lea.vmem [#allocation19], 12
        %v4159 = vld [vmem:[%s4158] sm:$0xf]
        %v4160 = vld [vmem:[%s4158 + $0x4] sm:$0xf]
        %v4161 = vld [vmem:[%s4158 + $0x8] sm:$0x3]
        %v4165 = vunpack.c.l.b16 %v4159
        %v4166 = vunpack.c.l.b16 %v4160
        %v4167 = vunpack.c.l.b16 %v4161
        %v4168 = vpack.c.b16 %v4166, %v4165
        %v4169 = vpack.c.b16 %v4167, %v4167
        %v4172 = vsel %vm2099, %v4169, 0
        %4174 = vmatpush.bf16.msra.mxu0 0
        %4175 = vmatpush.bf16.msra.mxu0 0
        %4176 = vmatpush.bf16.msra.mxu0 0
        %4177 = vmatpush.bf16.msra.mxu0 0
        %4178 = vmatpush.bf16.msra.mxu0 0
        %4179 = vmatpush.bf16.msra.mxu0 0
        %4180 = vmatpush.bf16.msra.mxu0 %v4172
        %4181 = vmatpush.bf16.msra.mxu0 %v4168
        %4182 = vmatmul.bf16.gmra.mxu0 %v4121
        %v4183 = vpop.f32.mrf.mxu0
        %v4184 = vadd.f32 0.0, %v4183
        %v4185 = vpop.f32.mrf.mxu0
        %v4186 = vadd.f32 0.0, %v4185
        %4187 = vmatmul.bf16.gmra.mxu0 %v4124
        %v4188 = vpop.f32.mrf.mxu0
        %v4189 = vadd.f32 0.0, %v4188
        %v4190 = vpop.f32.mrf.mxu0
        %v4191 = vadd.f32 0.0, %v4190
        %4192 = vdwg.mxu0
        %v4193 = vpack.c.bf16 %v4186, %v4184
        %v4194 = vpack.c.bf16 %v4191, %v4189
        %s4195 = scalar_lea.vmem [#allocation17], 32
        %v4196 = vld [vmem:[%s4195] sm:$0xf]
        %v4197 = vld [vmem:[%s4195 + $0x4] sm:$0xf]
        %v4198 = vld [vmem:[%s4195 + $0x8] sm:$0xf]
        %v4199 = vld [vmem:[%s4195 + $0xc] sm:$0xf]
        %v4200 = vld [vmem:[%s4195 + $0x10] sm:$0xf]
        %v4201 = vld [vmem:[%s4195 + $0x14] sm:$0xf]
        %v4202 = vld [vmem:[%s4195 + $0x18] sm:$0xf]
        %v4203 = vld [vmem:[%s4195 + $0x1c] sm:$0xf]
        %v4212 = vunpack.c.l.b16 %v4196
        %v4213 = vunpack.c.l.b16 %v4197
        %v4214 = vunpack.c.l.b16 %v4198
        %v4215 = vunpack.c.l.b16 %v4199
        %v4216 = vunpack.c.l.b16 %v4200
        %v4217 = vunpack.c.l.b16 %v4201
        %v4218 = vunpack.c.l.b16 %v4202
        %v4219 = vunpack.c.l.b16 %v4203
        %v4220 = vpack.c.b16 %v4213, %v4212
        %v4221 = vpack.c.b16 %v4215, %v4214
        %v4222 = vpack.c.b16 %v4217, %v4216
        %v4223 = vpack.c.b16 %v4219, %v4218
        %v4225 = vsel %vm2975, %v4220, 0
        %v4228 = vsel %vm2975, %v4221, 0
        %v4231 = vsel %vm2975, %v4222, 0
        %v4234 = vsel %vm2975, %v4223, 0
        %4236 = vmatpush.bf16.msra.mxu0 0
        %4237 = vmatpush.bf16.msra.mxu0 0
        %4238 = vmatpush.bf16.msra.mxu0 0
        %4239 = vmatpush.bf16.msra.mxu0 0
        %4240 = vmatpush.bf16.msra.mxu0 0
        %4241 = vmatpush.bf16.msra.mxu0 0
        %4242 = vmatpush.bf16.msra.mxu0 %v4194
        %4243 = vmatpush.bf16.msra.mxu0 %v4193
        %4244 = vmatmul.bf16.gmra.mxu0 %v4225
        %v4245 = vpop.f32.mrf.mxu0
        %v4246 = vadd.f32 0.0, %v4245
        %v4247 = vpop.f32.mrf.mxu0
        %v4248 = vadd.f32 0.0, %v4247
        %4249 = vmatmul.bf16.gmra.mxu0 %v4228
        %v4250 = vpop.f32.mrf.mxu0
        %v4251 = vadd.f32 0.0, %v4250
        %v4252 = vpop.f32.mrf.mxu0
        %v4253 = vadd.f32 0.0, %v4252
        %4254 = vmatmul.bf16.gmra.mxu0 %v4231
        %v4255 = vpop.f32.mrf.mxu0
        %v4256 = vadd.f32 0.0, %v4255
        %v4257 = vpop.f32.mrf.mxu0
        %v4258 = vadd.f32 0.0, %v4257
        %4259 = vmatmul.bf16.gmra.mxu0 %v4234
        %v4260 = vpop.f32.mrf.mxu0
        %v4261 = vadd.f32 0.0, %v4260
        %v4262 = vpop.f32.mrf.mxu0
        %v4263 = vadd.f32 0.0, %v4262
        %4264 = vdwg.mxu0
        %v4273 = vunpack.c.l.b16 %v4150
        %v4274 = vunpack.c.l.b16 %v4151
        %v4275 = vunpack.c.l.b16 %v4152
        %v4276 = vunpack.c.l.b16 %v4153
        %v4277 = vunpack.c.l.b16 %v4154
        %v4278 = vunpack.c.l.b16 %v4155
        %v4279 = vunpack.c.l.b16 %v4156
        %v4280 = vunpack.c.l.b16 %v4157
        %v4281 = vpack.c.b16 %v4274, %v4273
        %v4282 = vpack.c.b16 %v4276, %v4275
        %v4283 = vpack.c.b16 %v4278, %v4277
        %v4284 = vpack.c.b16 %v4280, %v4279
        %v4286 = vsel %vm2975, %v4281, 0
        %v4289 = vsel %vm2975, %v4282, 0
        %v4292 = vsel %vm2975, %v4283, 0
        %v4295 = vsel %vm2975, %v4284, 0
        %4297 = vmatpush.bf16.msra.mxu0 0
        %4298 = vmatpush.bf16.msra.mxu0 0
        %4299 = vmatpush.bf16.msra.mxu0 0
        %4300 = vmatpush.bf16.msra.mxu0 0
        %4301 = vmatpush.bf16.msra.mxu0 0
        %4302 = vmatpush.bf16.msra.mxu0 0
        %4303 = vmatpush.bf16.msra.mxu0 %v4149
        %4304 = vmatpush.bf16.msra.mxu0 %v4148
        %4305 = vmatmul.bf16.gmra.mxu0 %v4286
        %v4306 = vpop.f32.mrf.mxu0
        %v4307 = vadd.f32 %v4246, %v4306
        %v4308 = vpop.f32.mrf.mxu0
        %v4309 = vadd.f32 %v4248, %v4308
        %4310 = vmatmul.bf16.gmra.mxu0 %v4289
        %v4311 = vpop.f32.mrf.mxu0
        %v4312 = vadd.f32 %v4251, %v4311
        %v4313 = vpop.f32.mrf.mxu0
        %v4314 = vadd.f32 %v4253, %v4313
        %4315 = vmatmul.bf16.gmra.mxu0 %v4292
        %v4316 = vpop.f32.mrf.mxu0
        %v4317 = vadd.f32 %v4256, %v4316
        %v4318 = vpop.f32.mrf.mxu0
        %v4319 = vadd.f32 %v4258, %v4318
        %4320 = vmatmul.bf16.gmra.mxu0 %v4295
        %v4321 = vpop.f32.mrf.mxu0
        %v4322 = vadd.f32 %v4261, %v4321
        %v4323 = vpop.f32.mrf.mxu0
        %v4324 = vadd.f32 %v4263, %v4323
        %4325 = vdwg.mxu0
        %s4326 = scalar_lea.vmem [#allocation19], 24
        %v4327 = vld [vmem:[%s4326] sm:$0xf]
        %v4328 = vld [vmem:[%s4326 + $0x4] sm:$0xf]
        %v4329 = vld [vmem:[%s4326 + $0x8] sm:$0x3]
        %v4333 = vunpack.c.l.b16 %v4327
        %v4334 = vunpack.c.l.b16 %v4328
        %v4335 = vunpack.c.l.b16 %v4329
        %v4336 = vpack.c.b16 %v4334, %v4333
        %v4337 = vpack.c.b16 %v4335, %v4335
        %v4340 = vsel %vm2099, %v4337, 0
        %4342 = vmatpush.bf16.msra.mxu0 0
        %4343 = vmatpush.bf16.msra.mxu0 0
        %4344 = vmatpush.bf16.msra.mxu0 0
        %4345 = vmatpush.bf16.msra.mxu0 0
        %4346 = vmatpush.bf16.msra.mxu0 0
        %4347 = vmatpush.bf16.msra.mxu0 0
        %4348 = vmatpush.bf16.msra.mxu0 %v4340
        %4349 = vmatpush.bf16.msra.mxu0 %v4336
        %4350 = vmatmul.bf16.gmra.mxu0 %v4121
        %v4351 = vpop.f32.mrf.mxu0
        %v4352 = vadd.f32 0.0, %v4351
        %v4353 = vpop.f32.mrf.mxu0
        %v4354 = vadd.f32 0.0, %v4353
        %4355 = vmatmul.bf16.gmra.mxu0 %v4124
        %v4356 = vpop.f32.mrf.mxu0
        %v4357 = vadd.f32 0.0, %v4356
        %v4358 = vpop.f32.mrf.mxu0
        %v4359 = vadd.f32 0.0, %v4358
        %4360 = vdwg.mxu0
        %v4361 = vpack.c.bf16 %v4354, %v4352
        %v4362 = vpack.c.bf16 %v4359, %v4357
        %s4363 = scalar_lea.vmem [#allocation17], 64
        %v4364 = vld [vmem:[%s4363] sm:$0xf]
        %v4365 = vld [vmem:[%s4363 + $0x4] sm:$0xf]
        %v4366 = vld [vmem:[%s4363 + $0x8] sm:$0xf]
        %v4367 = vld [vmem:[%s4363 + $0xc] sm:$0xf]
        %v4368 = vld [vmem:[%s4363 + $0x10] sm:$0xf]
        %v4369 = vld [vmem:[%s4363 + $0x14] sm:$0xf]
        %v4370 = vld [vmem:[%s4363 + $0x18] sm:$0xf]
        %v4371 = vld [vmem:[%s4363 + $0x1c] sm:$0xf]
        %v4380 = vunpack.c.l.b16 %v4364
        %v4381 = vunpack.c.l.b16 %v4365
        %v4382 = vunpack.c.l.b16 %v4366
        %v4383 = vunpack.c.l.b16 %v4367
        %v4384 = vunpack.c.l.b16 %v4368
        %v4385 = vunpack.c.l.b16 %v4369
        %v4386 = vunpack.c.l.b16 %v4370
        %v4387 = vunpack.c.l.b16 %v4371
        %v4388 = vpack.c.b16 %v4381, %v4380
        %v4389 = vpack.c.b16 %v4383, %v4382
        %v4390 = vpack.c.b16 %v4385, %v4384
        %v4391 = vpack.c.b16 %v4387, %v4386
        %v4393 = vsel %vm2975, %v4388, 0
        %v4396 = vsel %vm2975, %v4389, 0
        %v4399 = vsel %vm2975, %v4390, 0
        %v4402 = vsel %vm2975, %v4391, 0
        %4404 = vmatpush.bf16.msra.mxu0 0
        %4405 = vmatpush.bf16.msra.mxu0 0
        %4406 = vmatpush.bf16.msra.mxu0 0
        %4407 = vmatpush.bf16.msra.mxu0 0
        %4408 = vmatpush.bf16.msra.mxu0 0
        %4409 = vmatpush.bf16.msra.mxu0 0
        %4410 = vmatpush.bf16.msra.mxu0 %v4362
        %4411 = vmatpush.bf16.msra.mxu0 %v4361
        %4412 = vmatmul.bf16.gmra.mxu0 %v4393
        %v4413 = vpop.f32.mrf.mxu0
        %v4414 = vadd.f32 0.0, %v4413
        %v4415 = vpop.f32.mrf.mxu0
        %v4416 = vadd.f32 0.0, %v4415
        %4417 = vmatmul.bf16.gmra.mxu0 %v4396
        %v4418 = vpop.f32.mrf.mxu0
        %v4419 = vadd.f32 0.0, %v4418
        %v4420 = vpop.f32.mrf.mxu0
        %v4421 = vadd.f32 0.0, %v4420
        %4422 = vmatmul.bf16.gmra.mxu0 %v4399
        %v4423 = vpop.f32.mrf.mxu0
        %v4424 = vadd.f32 0.0, %v4423
        %v4425 = vpop.f32.mrf.mxu0
        %v4426 = vadd.f32 0.0, %v4425
        %4427 = vmatmul.bf16.gmra.mxu0 %v4402
        %v4428 = vpop.f32.mrf.mxu0
        %v4429 = vadd.f32 0.0, %v4428
        %v4430 = vpop.f32.mrf.mxu0
        %v4431 = vadd.f32 0.0, %v4430
        %4432 = vdwg.mxu0
        %v4433 = vadd.f32 %v4307, %v4414
        %v4434 = vadd.f32 %v4309, %v4416
        %v4435 = vadd.f32 %v4312, %v4419
        %v4436 = vadd.f32 %v4314, %v4421
        %v4437 = vadd.f32 %v4317, %v4424
        %v4438 = vadd.f32 %v4319, %v4426
        %v4439 = vadd.f32 %v4322, %v4429
        %v4440 = vadd.f32 %v4324, %v4431
        %s4441 = scalar_lea.vmem [#allocation19], 36
        %v4442 = vld [vmem:[%s4441] sm:$0xf]
        %v4443 = vld [vmem:[%s4441 + $0x4] sm:$0xf]
        %v4444 = vld [vmem:[%s4441 + $0x8] sm:$0x3]
        %v4448 = vunpack.c.l.b16 %v4442
        %v4449 = vunpack.c.l.b16 %v4443
        %v4450 = vunpack.c.l.b16 %v4444
        %v4451 = vpack.c.b16 %v4449, %v4448
        %v4452 = vpack.c.b16 %v4450, %v4450
        %v4455 = vsel %vm2099, %v4452, 0
        %4457 = vmatpush.bf16.msra.mxu0 0
        %4458 = vmatpush.bf16.msra.mxu0 0
        %4459 = vmatpush.bf16.msra.mxu0 0
        %4460 = vmatpush.bf16.msra.mxu0 0
        %4461 = vmatpush.bf16.msra.mxu0 0
        %4462 = vmatpush.bf16.msra.mxu0 0
        %4463 = vmatpush.bf16.msra.mxu0 %v4455
        %4464 = vmatpush.bf16.msra.mxu0 %v4451
        %4465 = vmatmul.bf16.gmra.mxu0 %v4121
        %v4466 = vpop.f32.mrf.mxu0
        %v4467 = vadd.f32 0.0, %v4466
        %v4468 = vpop.f32.mrf.mxu0
        %v4469 = vadd.f32 0.0, %v4468
        %4470 = vmatmul.bf16.gmra.mxu0 %v4124
        %v4471 = vpop.f32.mrf.mxu0
        %v4472 = vadd.f32 0.0, %v4471
        %v4473 = vpop.f32.mrf.mxu0
        %v4474 = vadd.f32 0.0, %v4473
        %4475 = vdwg.mxu0
        %v4476 = vpack.c.bf16 %v4469, %v4467
        %v4477 = vpack.c.bf16 %v4474, %v4472
        %s4478 = scalar_lea.vmem [#allocation17], 96
        %v4479 = vld [vmem:[%s4478] sm:$0xf]
        %v4480 = vld [vmem:[%s4478 + $0x4] sm:$0xf]
        %v4481 = vld [vmem:[%s4478 + $0x8] sm:$0xf]
        %v4482 = vld [vmem:[%s4478 + $0xc] sm:$0xf]
        %v4483 = vld [vmem:[%s4478 + $0x10] sm:$0xf]
        %v4484 = vld [vmem:[%s4478 + $0x14] sm:$0xf]
        %v4485 = vld [vmem:[%s4478 + $0x18] sm:$0xf]
        %v4486 = vld [vmem:[%s4478 + $0x1c] sm:$0xf]
        %v4495 = vunpack.c.l.b16 %v4479
        %v4496 = vunpack.c.l.b16 %v4480
        %v4497 = vunpack.c.l.b16 %v4481
        %v4498 = vunpack.c.l.b16 %v4482
        %v4499 = vunpack.c.l.b16 %v4483
        %v4500 = vunpack.c.l.b16 %v4484
        %v4501 = vunpack.c.l.b16 %v4485
        %v4502 = vunpack.c.l.b16 %v4486
        %v4503 = vpack.c.b16 %v4496, %v4495
        %v4504 = vpack.c.b16 %v4498, %v4497
        %v4505 = vpack.c.b16 %v4500, %v4499
        %v4506 = vpack.c.b16 %v4502, %v4501
        %v4508 = vsel %vm2975, %v4503, 0
        %v4511 = vsel %vm2975, %v4504, 0
        %v4514 = vsel %vm2975, %v4505, 0
        %v4517 = vsel %vm2975, %v4506, 0
        %4519 = vmatpush.bf16.msra.mxu0 0
        %4520 = vmatpush.bf16.msra.mxu0 0
        %4521 = vmatpush.bf16.msra.mxu0 0
        %4522 = vmatpush.bf16.msra.mxu0 0
        %4523 = vmatpush.bf16.msra.mxu0 0
        %4524 = vmatpush.bf16.msra.mxu0 0
        %4525 = vmatpush.bf16.msra.mxu0 %v4477
        %4526 = vmatpush.bf16.msra.mxu0 %v4476
        %4527 = vmatmul.bf16.gmra.mxu0 %v4508
        %v4528 = vpop.f32.mrf.mxu0
        %v4529 = vadd.f32 0.0, %v4528
        %v4530 = vpop.f32.mrf.mxu0
        %v4531 = vadd.f32 0.0, %v4530
        %4532 = vmatmul.bf16.gmra.mxu0 %v4511
        %v4533 = vpop.f32.mrf.mxu0
        %v4534 = vadd.f32 0.0, %v4533
        %v4535 = vpop.f32.mrf.mxu0
        %v4536 = vadd.f32 0.0, %v4535
        %4537 = vmatmul.bf16.gmra.mxu0 %v4514
        %v4538 = vpop.f32.mrf.mxu0
        %v4539 = vadd.f32 0.0, %v4538
        %v4540 = vpop.f32.mrf.mxu0
        %v4541 = vadd.f32 0.0, %v4540
        %4542 = vmatmul.bf16.gmra.mxu0 %v4517
        %v4543 = vpop.f32.mrf.mxu0
        %v4544 = vadd.f32 0.0, %v4543
        %v4545 = vpop.f32.mrf.mxu0
        %v4546 = vadd.f32 0.0, %v4545
        %4547 = vdwg.mxu0
        %v4548 = vadd.f32 %v4433, %v4529
        %v4549 = vadd.f32 %v4434, %v4531
        %v4550 = vadd.f32 %v4435, %v4534
        %v4551 = vadd.f32 %v4436, %v4536
        %v4552 = vadd.f32 %v4437, %v4539
        %v4553 = vadd.f32 %v4438, %v4541
        %v4554 = vadd.f32 %v4439, %v4544
        %v4555 = vadd.f32 %v4440, %v4546
        %vm4556 = vcmp.gt.f32.partialorder %v4548, 0.0
        %vm4557 = vcmp.gt.f32.partialorder %v4549, 0.0
        %vm4558 = vcmp.gt.f32.partialorder %v4550, 0.0
        %vm4559 = vcmp.gt.f32.partialorder %v4551, 0.0
        %vm4560 = vcmp.gt.f32.partialorder %v4552, 0.0
        %vm4561 = vcmp.gt.f32.partialorder %v4553, 0.0
        %vm4562 = vcmp.gt.f32.partialorder %v4554, 0.0
        %vm4563 = vcmp.gt.f32.partialorder %v4555, 0.0
        %v4564 = vmul.f32 %v4548, 0.2
        %v4565 = vmul.f32 %v4549, 0.2
        %v4566 = vmul.f32 %v4550, 0.2
        %v4567 = vmul.f32 %v4551, 0.2
        %v4568 = vmul.f32 %v4552, 0.2
        %v4569 = vmul.f32 %v4553, 0.2
        %v4570 = vmul.f32 %v4554, 0.2
        %v4571 = vmul.f32 %v4555, 0.2
        %v4572 = vsel %vm4556, %v4548, %v4564
        %v4573 = vsel %vm4557, %v4549, %v4565
        %v4574 = vsel %vm4558, %v4550, %v4566
        %v4575 = vsel %vm4559, %v4551, %v4567
        %v4576 = vsel %vm4560, %v4552, %v4568
        %v4577 = vsel %vm4561, %v4553, %v4569
        %v4578 = vsel %vm4562, %v4554, %v4570
        %v4579 = vsel %vm4563, %v4555, %v4571
        %v4580 = vpack.c.bf16 %v4573, %v4572
        %v4581 = vpack.c.bf16 %v4575, %v4574
        %v4582 = vpack.c.bf16 %v4577, %v4576
        %v4583 = vpack.c.bf16 %v4579, %v4578
        %v4584 = vld [vmem:[#allocation22] sm:$0xf]
        %v4585 = vld [vmem:[#allocation22 + $0x4] sm:$0x1]
        %v4588 = vunpack.c.l.b16 %v4584
        %v4589 = vunpack.c.l.b16 %v4585
        %v4590 = vpack.c.b16 %v4589, %v4588
        %vm4591 = vcmask 80896
        %v4593 = vsel %vm4591, %v4580, 0
        %v4596 = vsel %vm4591, %v4581, 0
        %v4599 = vsel %vm4591, %v4582, 0
        %v4602 = vsel %vm4591, %v4583, 0
        %vm4604 = vcmask 1044480
        %v4606 = vsel %vm4604, %v4590, 0
        %4608 = vmatpush.bf16.msra.mxu0 0
        %4609 = vmatpush.bf16.msra.mxu0 0
        %4610 = vmatpush.bf16.msra.mxu0 0
        %4611 = vmatpush.bf16.msra.mxu0 0
        %4612 = vmatpush.bf16.msra.mxu0 0
        %4613 = vmatpush.bf16.msra.mxu0 0
        %4614 = vmatpush.bf16.msra.mxu0 0
        %4615 = vmatpush.bf16.msra.mxu0 %v4606
        %4616 = vmatmul.bf16.gmra.mxu0 %v4593
        %v4617 = vpop.f32.mrf.mxu0
        %v4618 = vadd.f32 0.0, %v4617
        %v4619 = vpop.f32.mrf.mxu0
        %v4620 = vadd.f32 0.0, %v4619
        %4621 = vmatmul.bf16.gmra.mxu0 %v4596
        %v4622 = vpop.f32.mrf.mxu0
        %v4623 = vadd.f32 0.0, %v4622
        %v4624 = vpop.f32.mrf.mxu0
        %v4625 = vadd.f32 0.0, %v4624
        %4626 = vmatmul.bf16.gmra.mxu0 %v4599
        %v4627 = vpop.f32.mrf.mxu0
        %v4628 = vadd.f32 0.0, %v4627
        %v4629 = vpop.f32.mrf.mxu0
        %v4630 = vadd.f32 0.0, %v4629
        %4631 = vmatmul.bf16.gmra.mxu0 %v4602
        %v4632 = vpop.f32.mrf.mxu0
        %v4633 = vadd.f32 0.0, %v4632
        %v4634 = vpop.f32.mrf.mxu0
        %v4635 = vadd.f32 0.0, %v4634
        %4636 = vdwg.mxu0
        %v4637 = vpack.c.bf16 %v4620, %v4618
        %v4638 = vpack.c.bf16 %v4625, %v4623
        %v4639 = vpack.c.bf16 %v4630, %v4628
        %v4640 = vpack.c.bf16 %v4635, %v4633
        %v4641 = vld [vmem:[#allocation20] sm:$0xf]
        %s4642 = scalar_lea.vmem [#allocation22], 8
        %v4643 = vld [vmem:[%s4642] sm:$0xf]
        %v4644 = vld [vmem:[%s4642 + $0x4] sm:$0x1]
        %v4647 = vunpack.c.l.b16 %v4643
        %v4648 = vunpack.c.l.b16 %v4644
        %v4649 = vpack.c.b16 %v4648, %v4647
        %v4651 = vsel %vm4604, %v4649, 0
        %4653 = vmatpush.bf16.msra.mxu0 0
        %4654 = vmatpush.bf16.msra.mxu0 0
        %4655 = vmatpush.bf16.msra.mxu0 0
        %4656 = vmatpush.bf16.msra.mxu0 0
        %4657 = vmatpush.bf16.msra.mxu0 0
        %4658 = vmatpush.bf16.msra.mxu0 0
        %4659 = vmatpush.bf16.msra.mxu0 0
        %4660 = vmatpush.bf16.msra.mxu0 %v4651
        %4661 = vmatmul.bf16.gmra.mxu0 %v4593
        %v4662 = vpop.f32.mrf.mxu0
        %v4663 = vadd.f32 0.0, %v4662
        %v4664 = vpop.f32.mrf.mxu0
        %v4665 = vadd.f32 0.0, %v4664
        %4666 = vmatmul.bf16.gmra.mxu0 %v4596
        %v4667 = vpop.f32.mrf.mxu0
        %v4668 = vadd.f32 0.0, %v4667
        %v4669 = vpop.f32.mrf.mxu0
        %v4670 = vadd.f32 0.0, %v4669
        %4671 = vmatmul.bf16.gmra.mxu0 %v4599
        %v4672 = vpop.f32.mrf.mxu0
        %v4673 = vadd.f32 0.0, %v4672
        %v4674 = vpop.f32.mrf.mxu0
        %v4675 = vadd.f32 0.0, %v4674
        %4676 = vmatmul.bf16.gmra.mxu0 %v4602
        %v4677 = vpop.f32.mrf.mxu0
        %v4678 = vadd.f32 0.0, %v4677
        %v4679 = vpop.f32.mrf.mxu0
        %v4680 = vadd.f32 0.0, %v4679
        %4681 = vdwg.mxu0
        %v4682 = vpack.c.bf16 %v4665, %v4663
        %v4683 = vpack.c.bf16 %v4670, %v4668
        %v4684 = vpack.c.bf16 %v4675, %v4673
        %v4685 = vpack.c.bf16 %v4680, %v4678
        %s4686 = scalar_lea.vmem [#allocation20], 4
        %v4687 = vld [vmem:[%s4686] sm:$0xf]
        %v4689 = vsel %vm1687, %v4687, 0
        %4691 = vmatpush.bf16.msra.mxu0 0
        %4692 = vmatpush.bf16.msra.mxu0 0
        %4693 = vmatpush.bf16.msra.mxu0 0
        %4694 = vmatpush.bf16.msra.mxu0 0
        %4695 = vmatpush.bf16.msra.mxu0 %v4685
        %4696 = vmatpush.bf16.msra.mxu0 %v4684
        %4697 = vmatpush.bf16.msra.mxu0 %v4683
        %4698 = vmatpush.bf16.msra.mxu0 %v4682
        %4699 = vmatmul.bf16.gmra.mxu0 %v4689
        %v4700 = vpop.f32.mrf.mxu0
        %v4701 = vadd.f32 0.0, %v4700
        %v4702 = vpop.f32.mrf.mxu0
        %4703 = vdwg.mxu0
        %v4705 = vsel %vm1687, %v4641, 0
        %4707 = vmatpush.bf16.msra.mxu0 0
        %4708 = vmatpush.bf16.msra.mxu0 0
        %4709 = vmatpush.bf16.msra.mxu0 0
        %4710 = vmatpush.bf16.msra.mxu0 0
        %4711 = vmatpush.bf16.msra.mxu0 %v4640
        %4712 = vmatpush.bf16.msra.mxu0 %v4639
        %4713 = vmatpush.bf16.msra.mxu0 %v4638
        %4714 = vmatpush.bf16.msra.mxu0 %v4637
        %4715 = vmatmul.bf16.gmra.mxu0 %v4705
        %v4716 = vpop.f32.mrf.mxu0
        %v4717 = vadd.f32 %v4701, %v4716
        %v4718 = vpop.f32.mrf.mxu0
        %4719 = vdwg.mxu0
        %s4720 = scalar_lea.vmem [#allocation22], 16
        %v4721 = vld [vmem:[%s4720] sm:$0xf]
        %v4722 = vld [vmem:[%s4720 + $0x4] sm:$0x1]
        %v4725 = vunpack.c.l.b16 %v4721
        %v4726 = vunpack.c.l.b16 %v4722
        %v4727 = vpack.c.b16 %v4726, %v4725
        %v4729 = vsel %vm4604, %v4727, 0
        %4731 = vmatpush.bf16.msra.mxu0 0
        %4732 = vmatpush.bf16.msra.mxu0 0
        %4733 = vmatpush.bf16.msra.mxu0 0
        %4734 = vmatpush.bf16.msra.mxu0 0
        %4735 = vmatpush.bf16.msra.mxu0 0
        %4736 = vmatpush.bf16.msra.mxu0 0
        %4737 = vmatpush.bf16.msra.mxu0 0
        %4738 = vmatpush.bf16.msra.mxu0 %v4729
        %4739 = vmatmul.bf16.gmra.mxu0 %v4593
        %v4740 = vpop.f32.mrf.mxu0
        %v4741 = vadd.f32 0.0, %v4740
        %v4742 = vpop.f32.mrf.mxu0
        %v4743 = vadd.f32 0.0, %v4742
        %4744 = vmatmul.bf16.gmra.mxu0 %v4596
        %v4745 = vpop.f32.mrf.mxu0
        %v4746 = vadd.f32 0.0, %v4745
        %v4747 = vpop.f32.mrf.mxu0
        %v4748 = vadd.f32 0.0, %v4747
        %4749 = vmatmul.bf16.gmra.mxu0 %v4599
        %v4750 = vpop.f32.mrf.mxu0
        %v4751 = vadd.f32 0.0, %v4750
        %v4752 = vpop.f32.mrf.mxu0
        %v4753 = vadd.f32 0.0, %v4752
        %4754 = vmatmul.bf16.gmra.mxu0 %v4602
        %v4755 = vpop.f32.mrf.mxu0
        %v4756 = vadd.f32 0.0, %v4755
        %v4757 = vpop.f32.mrf.mxu0
        %v4758 = vadd.f32 0.0, %v4757
        %4759 = vdwg.mxu0
        %v4760 = vpack.c.bf16 %v4743, %v4741
        %v4761 = vpack.c.bf16 %v4748, %v4746
        %v4762 = vpack.c.bf16 %v4753, %v4751
        %v4763 = vpack.c.bf16 %v4758, %v4756
        %s4764 = scalar_lea.vmem [#allocation20], 8
        %v4765 = vld [vmem:[%s4764] sm:$0xf]
        %v4767 = vsel %vm1687, %v4765, 0
        %4769 = vmatpush.bf16.msra.mxu0 0
        %4770 = vmatpush.bf16.msra.mxu0 0
        %4771 = vmatpush.bf16.msra.mxu0 0
        %4772 = vmatpush.bf16.msra.mxu0 0
        %4773 = vmatpush.bf16.msra.mxu0 %v4763
        %4774 = vmatpush.bf16.msra.mxu0 %v4762
        %4775 = vmatpush.bf16.msra.mxu0 %v4761
        %4776 = vmatpush.bf16.msra.mxu0 %v4760
        %4777 = vmatmul.bf16.gmra.mxu0 %v4767
        %v4778 = vpop.f32.mrf.mxu0
        %v4779 = vadd.f32 0.0, %v4778
        %v4780 = vpop.f32.mrf.mxu0
        %4781 = vdwg.mxu0
        %v4782 = vadd.f32 %v4717, %v4779
        %s4783 = scalar_lea.vmem [#allocation22], 24
        %v4784 = vld [vmem:[%s4783] sm:$0xf]
        %v4785 = vld [vmem:[%s4783 + $0x4] sm:$0x1]
        %v4788 = vunpack.c.l.b16 %v4784
        %v4789 = vunpack.c.l.b16 %v4785
        %v4790 = vpack.c.b16 %v4789, %v4788
        %v4792 = vsel %vm4604, %v4790, 0
        %4794 = vmatpush.bf16.msra.mxu0 0
        %4795 = vmatpush.bf16.msra.mxu0 0
        %4796 = vmatpush.bf16.msra.mxu0 0
        %4797 = vmatpush.bf16.msra.mxu0 0
        %4798 = vmatpush.bf16.msra.mxu0 0
        %4799 = vmatpush.bf16.msra.mxu0 0
        %4800 = vmatpush.bf16.msra.mxu0 0
        %4801 = vmatpush.bf16.msra.mxu0 %v4792
        %4802 = vmatmul.bf16.gmra.mxu0 %v4593
        %v4803 = vpop.f32.mrf.mxu0
        %v4804 = vadd.f32 0.0, %v4803
        %v4805 = vpop.f32.mrf.mxu0
        %v4806 = vadd.f32 0.0, %v4805
        %4807 = vmatmul.bf16.gmra.mxu0 %v4596
        %v4808 = vpop.f32.mrf.mxu0
        %v4809 = vadd.f32 0.0, %v4808
        %v4810 = vpop.f32.mrf.mxu0
        %v4811 = vadd.f32 0.0, %v4810
        %4812 = vmatmul.bf16.gmra.mxu0 %v4599
        %v4813 = vpop.f32.mrf.mxu0
        %v4814 = vadd.f32 0.0, %v4813
        %v4815 = vpop.f32.mrf.mxu0
        %v4816 = vadd.f32 0.0, %v4815
        %4817 = vmatmul.bf16.gmra.mxu0 %v4602
        %v4818 = vpop.f32.mrf.mxu0
        %v4819 = vadd.f32 0.0, %v4818
        %v4820 = vpop.f32.mrf.mxu0
        %v4821 = vadd.f32 0.0, %v4820
        %4822 = vdwg.mxu0
        %v4823 = vpack.c.bf16 %v4806, %v4804
        %v4824 = vpack.c.bf16 %v4811, %v4809
        %v4825 = vpack.c.bf16 %v4816, %v4814
        %v4826 = vpack.c.bf16 %v4821, %v4819
        %s4827 = scalar_lea.vmem [#allocation20], 12
        %v4828 = vld [vmem:[%s4827] sm:$0xf]
        %v4830 = vsel %vm1687, %v4828, 0
        %4832 = vmatpush.bf16.msra.mxu0 0
        %4833 = vmatpush.bf16.msra.mxu0 0
        %4834 = vmatpush.bf16.msra.mxu0 0
        %4835 = vmatpush.bf16.msra.mxu0 0
        %4836 = vmatpush.bf16.msra.mxu0 %v4826
        %4837 = vmatpush.bf16.msra.mxu0 %v4825
        %4838 = vmatpush.bf16.msra.mxu0 %v4824
        %4839 = vmatpush.bf16.msra.mxu0 %v4823
        %4840 = vmatmul.bf16.gmra.mxu0 %v4830
        %v4841 = vpop.f32.mrf.mxu0
        %v4842 = vadd.f32 0.0, %v4841
        %v4843 = vpop.f32.mrf.mxu0
        %4844 = vdwg.mxu0
        %v4845 = vadd.f32 %v4782, %v4842
        %s4846 = scalar_lea.vmem [#allocation22], 32
        %v4847 = vld [vmem:[%s4846] sm:$0xf]
        %v4848 = vld [vmem:[%s4846 + $0x4] sm:$0x1]
        %v4851 = vunpack.c.l.b16 %v4847
        %v4852 = vunpack.c.l.b16 %v4848
        %v4853 = vpack.c.b16 %v4852, %v4851
        %v4855 = vsel %vm4604, %v4853, 0
        %4857 = vmatpush.bf16.msra.mxu0 0
        %4858 = vmatpush.bf16.msra.mxu0 0
        %4859 = vmatpush.bf16.msra.mxu0 0
        %4860 = vmatpush.bf16.msra.mxu0 0
        %4861 = vmatpush.bf16.msra.mxu0 0
        %4862 = vmatpush.bf16.msra.mxu0 0
        %4863 = vmatpush.bf16.msra.mxu0 0
        %4864 = vmatpush.bf16.msra.mxu0 %v4855
        %4865 = vmatmul.bf16.gmra.mxu0 %v4593
        %v4866 = vpop.f32.mrf.mxu0
        %v4867 = vadd.f32 0.0, %v4866
        %v4868 = vpop.f32.mrf.mxu0
        %v4869 = vadd.f32 0.0, %v4868
        %4870 = vmatmul.bf16.gmra.mxu0 %v4596
        %v4871 = vpop.f32.mrf.mxu0
        %v4872 = vadd.f32 0.0, %v4871
        %v4873 = vpop.f32.mrf.mxu0
        %v4874 = vadd.f32 0.0, %v4873
        %4875 = vmatmul.bf16.gmra.mxu0 %v4599
        %v4876 = vpop.f32.mrf.mxu0
        %v4877 = vadd.f32 0.0, %v4876
        %v4878 = vpop.f32.mrf.mxu0
        %v4879 = vadd.f32 0.0, %v4878
        %4880 = vmatmul.bf16.gmra.mxu0 %v4602
        %v4881 = vpop.f32.mrf.mxu0
        %v4882 = vadd.f32 0.0, %v4881
        %v4883 = vpop.f32.mrf.mxu0
        %v4884 = vadd.f32 0.0, %v4883
        %4885 = vdwg.mxu0
        %v4886 = vpack.c.bf16 %v4869, %v4867
        %v4887 = vpack.c.bf16 %v4874, %v4872
        %v4888 = vpack.c.bf16 %v4879, %v4877
        %v4889 = vpack.c.bf16 %v4884, %v4882
        %s4890 = scalar_lea.vmem [#allocation20], 16
        %v4891 = vld [vmem:[%s4890] sm:$0xf]
        %v4893 = vsel %vm1687, %v4891, 0
        %4895 = vmatpush.bf16.msra.mxu0 0
        %4896 = vmatpush.bf16.msra.mxu0 0
        %4897 = vmatpush.bf16.msra.mxu0 0
        %4898 = vmatpush.bf16.msra.mxu0 0
        %4899 = vmatpush.bf16.msra.mxu0 %v4889
        %4900 = vmatpush.bf16.msra.mxu0 %v4888
        %4901 = vmatpush.bf16.msra.mxu0 %v4887
        %4902 = vmatpush.bf16.msra.mxu0 %v4886
        %4903 = vmatmul.bf16.gmra.mxu0 %v4893
        %v4904 = vpop.f32.mrf.mxu0
        %v4905 = vadd.f32 0.0, %v4904
        %v4906 = vpop.f32.mrf.mxu0
        %4907 = vdwg.mxu0
        %v4908 = vadd.f32 %v4845, %v4905
        %s4909 = scalar_lea.vmem [#allocation22], 40
        %v4910 = vld [vmem:[%s4909] sm:$0xf]
        %v4911 = vld [vmem:[%s4909 + $0x4] sm:$0x1]
        %v4914 = vunpack.c.l.b16 %v4910
        %v4915 = vunpack.c.l.b16 %v4911
        %v4916 = vpack.c.b16 %v4915, %v4914
        %v4918 = vsel %vm4604, %v4916, 0
        %4920 = vmatpush.bf16.msra.mxu0 0
        %4921 = vmatpush.bf16.msra.mxu0 0
        %4922 = vmatpush.bf16.msra.mxu0 0
        %4923 = vmatpush.bf16.msra.mxu0 0
        %4924 = vmatpush.bf16.msra.mxu0 0
        %4925 = vmatpush.bf16.msra.mxu0 0
        %4926 = vmatpush.bf16.msra.mxu0 0
        %4927 = vmatpush.bf16.msra.mxu0 %v4918
        %4928 = vmatmul.bf16.gmra.mxu0 %v4593
        %v4929 = vpop.f32.mrf.mxu0
        %v4930 = vadd.f32 0.0, %v4929
        %v4931 = vpop.f32.mrf.mxu0
        %v4932 = vadd.f32 0.0, %v4931
        %4933 = vmatmul.bf16.gmra.mxu0 %v4596
        %v4934 = vpop.f32.mrf.mxu0
        %v4935 = vadd.f32 0.0, %v4934
        %v4936 = vpop.f32.mrf.mxu0
        %v4937 = vadd.f32 0.0, %v4936
        %4938 = vmatmul.bf16.gmra.mxu0 %v4599
        %v4939 = vpop.f32.mrf.mxu0
        %v4940 = vadd.f32 0.0, %v4939
        %v4941 = vpop.f32.mrf.mxu0
        %v4942 = vadd.f32 0.0, %v4941
        %4943 = vmatmul.bf16.gmra.mxu0 %v4602
        %v4944 = vpop.f32.mrf.mxu0
        %v4945 = vadd.f32 0.0, %v4944
        %v4946 = vpop.f32.mrf.mxu0
        %v4947 = vadd.f32 0.0, %v4946
        %4948 = vdwg.mxu0
        %v4949 = vpack.c.bf16 %v4932, %v4930
        %v4950 = vpack.c.bf16 %v4937, %v4935
        %v4951 = vpack.c.bf16 %v4942, %v4940
        %v4952 = vpack.c.bf16 %v4947, %v4945
        %s4953 = scalar_lea.vmem [#allocation20], 20
        %v4954 = vld [vmem:[%s4953] sm:$0xf]
        %v4956 = vsel %vm1687, %v4954, 0
        %4958 = vmatpush.bf16.msra.mxu0 0
        %4959 = vmatpush.bf16.msra.mxu0 0
        %4960 = vmatpush.bf16.msra.mxu0 0
        %4961 = vmatpush.bf16.msra.mxu0 0
        %4962 = vmatpush.bf16.msra.mxu0 %v4952
        %4963 = vmatpush.bf16.msra.mxu0 %v4951
        %4964 = vmatpush.bf16.msra.mxu0 %v4950
        %4965 = vmatpush.bf16.msra.mxu0 %v4949
        %4966 = vmatmul.bf16.gmra.mxu0 %v4956
        %v4967 = vpop.f32.mrf.mxu0
        %v4968 = vadd.f32 0.0, %v4967
        %v4969 = vpop.f32.mrf.mxu0
        %4970 = vdwg.mxu0
        %v4971 = vadd.f32 %v4908, %v4968
        %s4972 = scalar_lea.vmem [#allocation22], 48
        %v4973 = vld [vmem:[%s4972] sm:$0xf]
        %v4974 = vld [vmem:[%s4972 + $0x4] sm:$0x1]
        %v4977 = vunpack.c.l.b16 %v4973
        %v4978 = vunpack.c.l.b16 %v4974
        %v4979 = vpack.c.b16 %v4978, %v4977
        %v4981 = vsel %vm4604, %v4979, 0
        %4983 = vmatpush.bf16.msra.mxu0 0
        %4984 = vmatpush.bf16.msra.mxu0 0
        %4985 = vmatpush.bf16.msra.mxu0 0
        %4986 = vmatpush.bf16.msra.mxu0 0
        %4987 = vmatpush.bf16.msra.mxu0 0
        %4988 = vmatpush.bf16.msra.mxu0 0
        %4989 = vmatpush.bf16.msra.mxu0 0
        %4990 = vmatpush.bf16.msra.mxu0 %v4981
        %4991 = vmatmul.bf16.gmra.mxu0 %v4593
        %v4992 = vpop.f32.mrf.mxu0
        %v4993 = vadd.f32 0.0, %v4992
        %v4994 = vpop.f32.mrf.mxu0
        %v4995 = vadd.f32 0.0, %v4994
        %4996 = vmatmul.bf16.gmra.mxu0 %v4596
        %v4997 = vpop.f32.mrf.mxu0
        %v4998 = vadd.f32 0.0, %v4997
        %v4999 = vpop.f32.mrf.mxu0
        %v5000 = vadd.f32 0.0, %v4999
        %5001 = vmatmul.bf16.gmra.mxu0 %v4599
        %v5002 = vpop.f32.mrf.mxu0
        %v5003 = vadd.f32 0.0, %v5002
        %v5004 = vpop.f32.mrf.mxu0
        %v5005 = vadd.f32 0.0, %v5004
        %5006 = vmatmul.bf16.gmra.mxu0 %v4602
        %v5007 = vpop.f32.mrf.mxu0
        %v5008 = vadd.f32 0.0, %v5007
        %v5009 = vpop.f32.mrf.mxu0
        %v5010 = vadd.f32 0.0, %v5009
        %5011 = vdwg.mxu0
        %v5012 = vpack.c.bf16 %v4995, %v4993
        %v5013 = vpack.c.bf16 %v5000, %v4998
        %v5014 = vpack.c.bf16 %v5005, %v5003
        %v5015 = vpack.c.bf16 %v5010, %v5008
        %s5016 = scalar_lea.vmem [#allocation20], 24
        %v5017 = vld [vmem:[%s5016] sm:$0xf]
        %v5019 = vsel %vm1687, %v5017, 0
        %5021 = vmatpush.bf16.msra.mxu0 0
        %5022 = vmatpush.bf16.msra.mxu0 0
        %5023 = vmatpush.bf16.msra.mxu0 0
        %5024 = vmatpush.bf16.msra.mxu0 0
        %5025 = vmatpush.bf16.msra.mxu0 %v5015
        %5026 = vmatpush.bf16.msra.mxu0 %v5014
        %5027 = vmatpush.bf16.msra.mxu0 %v5013
        %5028 = vmatpush.bf16.msra.mxu0 %v5012
        %5029 = vmatmul.bf16.gmra.mxu0 %v5019
        %v5030 = vpop.f32.mrf.mxu0
        %v5031 = vadd.f32 0.0, %v5030
        %v5032 = vpop.f32.mrf.mxu0
        %5033 = vdwg.mxu0
        %v5034 = vadd.f32 %v4971, %v5031
        %s5035 = scalar_lea.vmem [#allocation22], 56
        %v5036 = vld [vmem:[%s5035] sm:$0xf]
        %v5037 = vld [vmem:[%s5035 + $0x4] sm:$0x1]
        %v5040 = vunpack.c.l.b16 %v5036
        %v5041 = vunpack.c.l.b16 %v5037
        %v5042 = vpack.c.b16 %v5041, %v5040
        %v5044 = vsel %vm4604, %v5042, 0
        %5046 = vmatpush.bf16.msra.mxu0 0
        %5047 = vmatpush.bf16.msra.mxu0 0
        %5048 = vmatpush.bf16.msra.mxu0 0
        %5049 = vmatpush.bf16.msra.mxu0 0
        %5050 = vmatpush.bf16.msra.mxu0 0
        %5051 = vmatpush.bf16.msra.mxu0 0
        %5052 = vmatpush.bf16.msra.mxu0 0
        %5053 = vmatpush.bf16.msra.mxu0 %v5044
        %5054 = vmatmul.bf16.gmra.mxu0 %v4593
        %v5055 = vpop.f32.mrf.mxu0
        %v5056 = vadd.f32 0.0, %v5055
        %v5057 = vpop.f32.mrf.mxu0
        %v5058 = vadd.f32 0.0, %v5057
        %5059 = vmatmul.bf16.gmra.mxu0 %v4596
        %v5060 = vpop.f32.mrf.mxu0
        %v5061 = vadd.f32 0.0, %v5060
        %v5062 = vpop.f32.mrf.mxu0
        %v5063 = vadd.f32 0.0, %v5062
        %5064 = vmatmul.bf16.gmra.mxu0 %v4599
        %v5065 = vpop.f32.mrf.mxu0
        %v5066 = vadd.f32 0.0, %v5065
        %v5067 = vpop.f32.mrf.mxu0
        %v5068 = vadd.f32 0.0, %v5067
        %5069 = vmatmul.bf16.gmra.mxu0 %v4602
        %v5070 = vpop.f32.mrf.mxu0
        %v5071 = vadd.f32 0.0, %v5070
        %v5072 = vpop.f32.mrf.mxu0
        %v5073 = vadd.f32 0.0, %v5072
        %5074 = vdwg.mxu0
        %v5075 = vpack.c.bf16 %v5058, %v5056
        %v5076 = vpack.c.bf16 %v5063, %v5061
        %v5077 = vpack.c.bf16 %v5068, %v5066
        %v5078 = vpack.c.bf16 %v5073, %v5071
        %s5079 = scalar_lea.vmem [#allocation20], 28
        %v5080 = vld [vmem:[%s5079] sm:$0xf]
        %v5082 = vsel %vm1687, %v5080, 0
        %5084 = vmatpush.bf16.msra.mxu0 0
        %5085 = vmatpush.bf16.msra.mxu0 0
        %5086 = vmatpush.bf16.msra.mxu0 0
        %5087 = vmatpush.bf16.msra.mxu0 0
        %5088 = vmatpush.bf16.msra.mxu0 %v5078
        %5089 = vmatpush.bf16.msra.mxu0 %v5077
        %5090 = vmatpush.bf16.msra.mxu0 %v5076
        %5091 = vmatpush.bf16.msra.mxu0 %v5075
        %5092 = vmatmul.bf16.gmra.mxu0 %v5082
        %v5093 = vpop.f32.mrf.mxu0
        %v5094 = vadd.f32 0.0, %v5093
        %v5095 = vpop.f32.mrf.mxu0
        %5096 = vdwg.mxu0
        %v5097 = vadd.f32 %v5034, %v5094
        %s5098 = scalar_lea.vmem [#allocation22], 64
        %v5099 = vld [vmem:[%s5098] sm:$0xf]
        %v5100 = vld [vmem:[%s5098 + $0x4] sm:$0x1]
        %v5103 = vunpack.c.l.b16 %v5099
        %v5104 = vunpack.c.l.b16 %v5100
        %v5105 = vpack.c.b16 %v5104, %v5103
        %v5107 = vsel %vm4604, %v5105, 0
        %5109 = vmatpush.bf16.msra.mxu0 0
        %5110 = vmatpush.bf16.msra.mxu0 0
        %5111 = vmatpush.bf16.msra.mxu0 0
        %5112 = vmatpush.bf16.msra.mxu0 0
        %5113 = vmatpush.bf16.msra.mxu0 0
        %5114 = vmatpush.bf16.msra.mxu0 0
        %5115 = vmatpush.bf16.msra.mxu0 0
        %5116 = vmatpush.bf16.msra.mxu0 %v5107
        %5117 = vmatmul.bf16.gmra.mxu0 %v4593
        %v5118 = vpop.f32.mrf.mxu0
        %v5119 = vadd.f32 0.0, %v5118
        %v5120 = vpop.f32.mrf.mxu0
        %v5121 = vadd.f32 0.0, %v5120
        %5122 = vmatmul.bf16.gmra.mxu0 %v4596
        %v5123 = vpop.f32.mrf.mxu0
        %v5124 = vadd.f32 0.0, %v5123
        %v5125 = vpop.f32.mrf.mxu0
        %v5126 = vadd.f32 0.0, %v5125
        %5127 = vmatmul.bf16.gmra.mxu0 %v4599
        %v5128 = vpop.f32.mrf.mxu0
        %v5129 = vadd.f32 0.0, %v5128
        %v5130 = vpop.f32.mrf.mxu0
        %v5131 = vadd.f32 0.0, %v5130
        %5132 = vmatmul.bf16.gmra.mxu0 %v4602
        %v5133 = vpop.f32.mrf.mxu0
        %v5134 = vadd.f32 0.0, %v5133
        %v5135 = vpop.f32.mrf.mxu0
        %v5136 = vadd.f32 0.0, %v5135
        %5137 = vdwg.mxu0
        %v5138 = vpack.c.bf16 %v5121, %v5119
        %v5139 = vpack.c.bf16 %v5126, %v5124
        %v5140 = vpack.c.bf16 %v5131, %v5129
        %v5141 = vpack.c.bf16 %v5136, %v5134
        %s5142 = scalar_lea.vmem [#allocation20], 32
        %v5143 = vld [vmem:[%s5142] sm:$0xf]
        %v5145 = vsel %vm1687, %v5143, 0
        %5147 = vmatpush.bf16.msra.mxu0 0
        %5148 = vmatpush.bf16.msra.mxu0 0
        %5149 = vmatpush.bf16.msra.mxu0 0
        %5150 = vmatpush.bf16.msra.mxu0 0
        %5151 = vmatpush.bf16.msra.mxu0 %v5141
        %5152 = vmatpush.bf16.msra.mxu0 %v5140
        %5153 = vmatpush.bf16.msra.mxu0 %v5139
        %5154 = vmatpush.bf16.msra.mxu0 %v5138
        %5155 = vmatmul.bf16.gmra.mxu0 %v5145
        %v5156 = vpop.f32.mrf.mxu0
        %v5157 = vadd.f32 0.0, %v5156
        %v5158 = vpop.f32.mrf.mxu0
        %5159 = vdwg.mxu0
        %v5160 = vadd.f32 %v5097, %v5157
        %s5161 = scalar_lea.vmem [#allocation22], 72
        %v5162 = vld [vmem:[%s5161] sm:$0xf]
        %v5163 = vld [vmem:[%s5161 + $0x4] sm:$0x1]
        %v5166 = vunpack.c.l.b16 %v5162
        %v5167 = vunpack.c.l.b16 %v5163
        %v5168 = vpack.c.b16 %v5167, %v5166
        %v5170 = vsel %vm4604, %v5168, 0
        %5172 = vmatpush.bf16.msra.mxu0 0
        %5173 = vmatpush.bf16.msra.mxu0 0
        %5174 = vmatpush.bf16.msra.mxu0 0
        %5175 = vmatpush.bf16.msra.mxu0 0
        %5176 = vmatpush.bf16.msra.mxu0 0
        %5177 = vmatpush.bf16.msra.mxu0 0
        %5178 = vmatpush.bf16.msra.mxu0 0
        %5179 = vmatpush.bf16.msra.mxu0 %v5170
        %5180 = vmatmul.bf16.gmra.mxu0 %v4593
        %v5181 = vpop.f32.mrf.mxu0
        %v5182 = vadd.f32 0.0, %v5181
        %v5183 = vpop.f32.mrf.mxu0
        %v5184 = vadd.f32 0.0, %v5183
        %5185 = vmatmul.bf16.gmra.mxu0 %v4596
        %v5186 = vpop.f32.mrf.mxu0
        %v5187 = vadd.f32 0.0, %v5186
        %v5188 = vpop.f32.mrf.mxu0
        %v5189 = vadd.f32 0.0, %v5188
        %5190 = vmatmul.bf16.gmra.mxu0 %v4599
        %v5191 = vpop.f32.mrf.mxu0
        %v5192 = vadd.f32 0.0, %v5191
        %v5193 = vpop.f32.mrf.mxu0
        %v5194 = vadd.f32 0.0, %v5193
        %5195 = vmatmul.bf16.gmra.mxu0 %v4602
        %v5196 = vpop.f32.mrf.mxu0
        %v5197 = vadd.f32 0.0, %v5196
        %v5198 = vpop.f32.mrf.mxu0
        %v5199 = vadd.f32 0.0, %v5198
        %5200 = vdwg.mxu0
        %v5201 = vpack.c.bf16 %v5184, %v5182
        %v5202 = vpack.c.bf16 %v5189, %v5187
        %v5203 = vpack.c.bf16 %v5194, %v5192
        %v5204 = vpack.c.bf16 %v5199, %v5197
        %s5205 = scalar_lea.vmem [#allocation20], 36
        %v5206 = vld [vmem:[%s5205] sm:$0xf]
        %v5208 = vsel %vm1687, %v5206, 0
        %5210 = vmatpush.bf16.msra.mxu0 0
        %5211 = vmatpush.bf16.msra.mxu0 0
        %5212 = vmatpush.bf16.msra.mxu0 0
        %5213 = vmatpush.bf16.msra.mxu0 0
        %5214 = vmatpush.bf16.msra.mxu0 %v5204
        %5215 = vmatpush.bf16.msra.mxu0 %v5203
        %5216 = vmatpush.bf16.msra.mxu0 %v5202
        %5217 = vmatpush.bf16.msra.mxu0 %v5201
        %5218 = vmatmul.bf16.gmra.mxu0 %v5208
        %v5219 = vpop.f32.mrf.mxu0
        %v5220 = vadd.f32 0.0, %v5219
        %v5221 = vpop.f32.mrf.mxu0
        %5222 = vdwg.mxu0
        %v5223 = vadd.f32 %v5160, %v5220
        %vm5224 = vcmask 7168
        %5225 = vst.msk [vmem:[%s1429] sm:$0xff] %vm5224, %v5223
        %v5226 = vpack.c.bf16 %v5223, %v5223
        %v5227 = vld [vmem:[#allocation25] sm:$0x1]
        %v5229 = vsel %vm5224, %v5226, 0
        %vm5231 = vcmask 1040384
        %v5232 = vsel 0, 4294967295, 65535
        %v5233 = vsel %vm5231, %v5232, 0
        %v5235 = vand.u32 %v5227, %v5233
        %5237 = vmatpush.bf16.msra.mxu0 0
        %5238 = vmatpush.bf16.msra.mxu0 0
        %5239 = vmatpush.bf16.msra.mxu0 0
        %5240 = vmatpush.bf16.msra.mxu0 0
        %5241 = vmatpush.bf16.msra.mxu0 0
        %5242 = vmatpush.bf16.msra.mxu0 0
        %5243 = vmatpush.bf16.msra.mxu0 0
        %5244 = vmatpush.bf16.msra.mxu0 %v5235
        %5245 = vmatmul.bf16.gmra.mxu0 %v5229
        %v5246 = vpop.f32.mrf.mxu0
        %v5247 = vadd.f32 0.0, %v5246
        %v5248 = vpop.f32.mrf.mxu0
        %5249 = vdwg.mxu0
        %v5250 = vpack.c.bf16 %v5247, %v5247
        %v5251 = vld [vmem:[#allocation23] sm:$0xf]
        %v5252 = vld [vmem:[#allocation23 + $0x4] sm:$0xf]
        %v5253 = vld [vmem:[#allocation23 + $0x8] sm:$0xf]
        %v5254 = vld [vmem:[#allocation23 + $0xc] sm:$0xf]
        %v5255 = vld [vmem:[#allocation23 + $0x10] sm:$0xf]
        %v5256 = vld [vmem:[#allocation23 + $0x14] sm:$0xf]
        %v5257 = vld [vmem:[#allocation23 + $0x18] sm:$0xf]
        %v5258 = vld [vmem:[#allocation23 + $0x1c] sm:$0xf]
        %s5259 = scalar_lea.vmem [#allocation25], 1
        %v5260 = vld [vmem:[%s5259] sm:$0x1]
        %v5262 = vand.u32 %v5260, %v5233
        %5264 = vmatpush.bf16.msra.mxu0 0
        %5265 = vmatpush.bf16.msra.mxu0 0
        %5266 = vmatpush.bf16.msra.mxu0 0
        %5267 = vmatpush.bf16.msra.mxu0 0
        %5268 = vmatpush.bf16.msra.mxu0 0
        %5269 = vmatpush.bf16.msra.mxu0 0
        %5270 = vmatpush.bf16.msra.mxu0 0
        %5271 = vmatpush.bf16.msra.mxu0 %v5262
        %5272 = vmatmul.bf16.gmra.mxu0 %v5229
        %v5273 = vpop.f32.mrf.mxu0
        %v5274 = vadd.f32 0.0, %v5273
        %v5275 = vpop.f32.mrf.mxu0
        %5276 = vdwg.mxu0
        %v5277 = vpack.c.bf16 %v5274, %v5274
        %s5278 = scalar_lea.vmem [#allocation23], 32
        %v5279 = vld [vmem:[%s5278] sm:$0xf]
        %v5280 = vld [vmem:[%s5278 + $0x4] sm:$0xf]
        %v5281 = vld [vmem:[%s5278 + $0x8] sm:$0xf]
        %v5282 = vld [vmem:[%s5278 + $0xc] sm:$0xf]
        %v5283 = vld [vmem:[%s5278 + $0x10] sm:$0xf]
        %v5284 = vld [vmem:[%s5278 + $0x14] sm:$0xf]
        %v5285 = vld [vmem:[%s5278 + $0x18] sm:$0xf]
        %v5286 = vld [vmem:[%s5278 + $0x1c] sm:$0xf]
        %v5295 = vunpack.c.l.b16 %v5279
        %v5296 = vunpack.c.l.b16 %v5280
        %v5297 = vunpack.c.l.b16 %v5281
        %v5298 = vunpack.c.l.b16 %v5282
        %v5299 = vunpack.c.l.b16 %v5283
        %v5300 = vunpack.c.l.b16 %v5284
        %v5301 = vunpack.c.l.b16 %v5285
        %v5302 = vunpack.c.l.b16 %v5286
        %v5303 = vpack.c.b16 %v5296, %v5295
        %v5304 = vpack.c.b16 %v5298, %v5297
        %v5305 = vpack.c.b16 %v5300, %v5299
        %v5306 = vpack.c.b16 %v5302, %v5301
        %v5308 = vsel %vm3542, %v5303, 0
        %v5311 = vsel %vm3542, %v5304, 0
        %v5314 = vsel %vm3542, %v5305, 0
        %v5317 = vsel %vm3542, %v5306, 0
        %v5320 = vsel %vm3546, %v5277, 0
        %5322 = vmatpush.bf16.msra.mxu0 0
        %5323 = vmatpush.bf16.msra.mxu0 0
        %5324 = vmatpush.bf16.msra.mxu0 0
        %5325 = vmatpush.bf16.msra.mxu0 0
        %5326 = vmatpush.bf16.msra.mxu0 0
        %5327 = vmatpush.bf16.msra.mxu0 0
        %5328 = vmatpush.bf16.msra.mxu0 0
        %5329 = vmatpush.bf16.msra.mxu0 %v5320
        %5330 = vmatmul.bf16.gmra.mxu0 %v5308
        %v5331 = vpop.f32.mrf.mxu0
        %v5332 = vadd.f32 0.0, %v5331
        %v5333 = vpop.f32.mrf.mxu0
        %v5334 = vadd.f32 0.0, %v5333
        %5335 = vmatmul.bf16.gmra.mxu0 %v5311
        %v5336 = vpop.f32.mrf.mxu0
        %v5337 = vadd.f32 0.0, %v5336
        %v5338 = vpop.f32.mrf.mxu0
        %v5339 = vadd.f32 0.0, %v5338
        %5340 = vmatmul.bf16.gmra.mxu0 %v5314
        %v5341 = vpop.f32.mrf.mxu0
        %v5342 = vadd.f32 0.0, %v5341
        %v5343 = vpop.f32.mrf.mxu0
        %v5344 = vadd.f32 0.0, %v5343
        %5345 = vmatmul.bf16.gmra.mxu0 %v5317
        %v5346 = vpop.f32.mrf.mxu0
        %v5347 = vadd.f32 0.0, %v5346
        %v5348 = vpop.f32.mrf.mxu0
        %v5349 = vadd.f32 0.0, %v5348
        %5350 = vdwg.mxu0
        %v5359 = vunpack.c.l.b16 %v5251
        %v5360 = vunpack.c.l.b16 %v5252
        %v5361 = vunpack.c.l.b16 %v5253
        %v5362 = vunpack.c.l.b16 %v5254
        %v5363 = vunpack.c.l.b16 %v5255
        %v5364 = vunpack.c.l.b16 %v5256
        %v5365 = vunpack.c.l.b16 %v5257
        %v5366 = vunpack.c.l.b16 %v5258
        %v5367 = vpack.c.b16 %v5360, %v5359
        %v5368 = vpack.c.b16 %v5362, %v5361
        %v5369 = vpack.c.b16 %v5364, %v5363
        %v5370 = vpack.c.b16 %v5366, %v5365
        %v5372 = vsel %vm3542, %v5367, 0
        %v5375 = vsel %vm3542, %v5368, 0
        %v5378 = vsel %vm3542, %v5369, 0
        %v5381 = vsel %vm3542, %v5370, 0
        %v5384 = vsel %vm3546, %v5250, 0
        %5386 = vmatpush.bf16.msra.mxu0 0
        %5387 = vmatpush.bf16.msra.mxu0 0
        %5388 = vmatpush.bf16.msra.mxu0 0
        %5389 = vmatpush.bf16.msra.mxu0 0
        %5390 = vmatpush.bf16.msra.mxu0 0
        %5391 = vmatpush.bf16.msra.mxu0 0
        %5392 = vmatpush.bf16.msra.mxu0 0
        %5393 = vmatpush.bf16.msra.mxu0 %v5384
        %5394 = vmatmul.bf16.gmra.mxu0 %v5372
        %v5395 = vpop.f32.mrf.mxu0
        %v5396 = vadd.f32 %v5332, %v5395
        %v5397 = vpop.f32.mrf.mxu0
        %v5398 = vadd.f32 %v5334, %v5397
        %5399 = vmatmul.bf16.gmra.mxu0 %v5375
        %v5400 = vpop.f32.mrf.mxu0
        %v5401 = vadd.f32 %v5337, %v5400
        %v5402 = vpop.f32.mrf.mxu0
        %v5403 = vadd.f32 %v5339, %v5402
        %5404 = vmatmul.bf16.gmra.mxu0 %v5378
        %v5405 = vpop.f32.mrf.mxu0
        %v5406 = vadd.f32 %v5342, %v5405
        %v5407 = vpop.f32.mrf.mxu0
        %v5408 = vadd.f32 %v5344, %v5407
        %5409 = vmatmul.bf16.gmra.mxu0 %v5381
        %v5410 = vpop.f32.mrf.mxu0
        %v5411 = vadd.f32 %v5347, %v5410
        %v5412 = vpop.f32.mrf.mxu0
        %v5413 = vadd.f32 %v5349, %v5412
        %5414 = vdwg.mxu0
        %s5415 = scalar_lea.vmem [#allocation25], 2
        %v5416 = vld [vmem:[%s5415] sm:$0x1]
        %v5418 = vand.u32 %v5416, %v5233
        %5420 = vmatpush.bf16.msra.mxu0 0
        %5421 = vmatpush.bf16.msra.mxu0 0
        %5422 = vmatpush.bf16.msra.mxu0 0
        %5423 = vmatpush.bf16.msra.mxu0 0
        %5424 = vmatpush.bf16.msra.mxu0 0
        %5425 = vmatpush.bf16.msra.mxu0 0
        %5426 = vmatpush.bf16.msra.mxu0 0
        %5427 = vmatpush.bf16.msra.mxu0 %v5418
        %5428 = vmatmul.bf16.gmra.mxu0 %v5229
        %v5429 = vpop.f32.mrf.mxu0
        %v5430 = vadd.f32 0.0, %v5429
        %v5431 = vpop.f32.mrf.mxu0
        %5432 = vdwg.mxu0
        %v5433 = vpack.c.bf16 %v5430, %v5430
        %s5434 = scalar_lea.vmem [#allocation23], 64
        %v5435 = vld [vmem:[%s5434] sm:$0xf]
        %v5436 = vld [vmem:[%s5434 + $0x4] sm:$0xf]
        %v5437 = vld [vmem:[%s5434 + $0x8] sm:$0xf]
        %v5438 = vld [vmem:[%s5434 + $0xc] sm:$0xf]
        %v5439 = vld [vmem:[%s5434 + $0x10] sm:$0xf]
        %v5440 = vld [vmem:[%s5434 + $0x14] sm:$0xf]
        %v5441 = vld [vmem:[%s5434 + $0x18] sm:$0xf]
        %v5442 = vld [vmem:[%s5434 + $0x1c] sm:$0xf]
        %v5451 = vunpack.c.l.b16 %v5435
        %v5452 = vunpack.c.l.b16 %v5436
        %v5453 = vunpack.c.l.b16 %v5437
        %v5454 = vunpack.c.l.b16 %v5438
        %v5455 = vunpack.c.l.b16 %v5439
        %v5456 = vunpack.c.l.b16 %v5440
        %v5457 = vunpack.c.l.b16 %v5441
        %v5458 = vunpack.c.l.b16 %v5442
        %v5459 = vpack.c.b16 %v5452, %v5451
        %v5460 = vpack.c.b16 %v5454, %v5453
        %v5461 = vpack.c.b16 %v5456, %v5455
        %v5462 = vpack.c.b16 %v5458, %v5457
        %v5464 = vsel %vm3542, %v5459, 0
        %v5467 = vsel %vm3542, %v5460, 0
        %v5470 = vsel %vm3542, %v5461, 0
        %v5473 = vsel %vm3542, %v5462, 0
        %v5476 = vsel %vm3546, %v5433, 0
        %5478 = vmatpush.bf16.msra.mxu0 0
        %5479 = vmatpush.bf16.msra.mxu0 0
        %5480 = vmatpush.bf16.msra.mxu0 0
        %5481 = vmatpush.bf16.msra.mxu0 0
        %5482 = vmatpush.bf16.msra.mxu0 0
        %5483 = vmatpush.bf16.msra.mxu0 0
        %5484 = vmatpush.bf16.msra.mxu0 0
        %5485 = vmatpush.bf16.msra.mxu0 %v5476
        %5486 = vmatmul.bf16.gmra.mxu0 %v5464
        %v5487 = vpop.f32.mrf.mxu0
        %v5488 = vadd.f32 0.0, %v5487
        %v5489 = vpop.f32.mrf.mxu0
        %v5490 = vadd.f32 0.0, %v5489
        %5491 = vmatmul.bf16.gmra.mxu0 %v5467
        %v5492 = vpop.f32.mrf.mxu0
        %v5493 = vadd.f32 0.0, %v5492
        %v5494 = vpop.f32.mrf.mxu0
        %v5495 = vadd.f32 0.0, %v5494
        %5496 = vmatmul.bf16.gmra.mxu0 %v5470
        %v5497 = vpop.f32.mrf.mxu0
        %v5498 = vadd.f32 0.0, %v5497
        %v5499 = vpop.f32.mrf.mxu0
        %v5500 = vadd.f32 0.0, %v5499
        %5501 = vmatmul.bf16.gmra.mxu0 %v5473
        %v5502 = vpop.f32.mrf.mxu0
        %v5503 = vadd.f32 0.0, %v5502
        %v5504 = vpop.f32.mrf.mxu0
        %v5505 = vadd.f32 0.0, %v5504
        %5506 = vdwg.mxu0
        %v5507 = vadd.f32 %v5396, %v5488
        %v5508 = vadd.f32 %v5398, %v5490
        %v5509 = vadd.f32 %v5401, %v5493
        %v5510 = vadd.f32 %v5403, %v5495
        %v5511 = vadd.f32 %v5406, %v5498
        %v5512 = vadd.f32 %v5408, %v5500
        %v5513 = vadd.f32 %v5411, %v5503
        %v5514 = vadd.f32 %v5413, %v5505
        %s5515 = scalar_lea.vmem [#allocation25], 3
        %v5516 = vld [vmem:[%s5515] sm:$0x1]
        %v5518 = vand.u32 %v5516, %v5233
        %5520 = vmatpush.bf16.msra.mxu0 0
        %5521 = vmatpush.bf16.msra.mxu0 0
        %5522 = vmatpush.bf16.msra.mxu0 0
        %5523 = vmatpush.bf16.msra.mxu0 0
        %5524 = vmatpush.bf16.msra.mxu0 0
        %5525 = vmatpush.bf16.msra.mxu0 0
        %5526 = vmatpush.bf16.msra.mxu0 0
        %5527 = vmatpush.bf16.msra.mxu0 %v5518
        %5528 = vmatmul.bf16.gmra.mxu0 %v5229
        %v5529 = vpop.f32.mrf.mxu0
        %v5530 = vadd.f32 0.0, %v5529
        %v5531 = vpop.f32.mrf.mxu0
        %5532 = vdwg.mxu0
        %v5533 = vpack.c.bf16 %v5530, %v5530
        %s5534 = scalar_lea.vmem [#allocation23], 96
        %v5535 = vld [vmem:[%s5534] sm:$0xf]
        %v5536 = vld [vmem:[%s5534 + $0x4] sm:$0xf]
        %v5537 = vld [vmem:[%s5534 + $0x8] sm:$0xf]
        %v5538 = vld [vmem:[%s5534 + $0xc] sm:$0xf]
        %v5539 = vld [vmem:[%s5534 + $0x10] sm:$0xf]
        %v5540 = vld [vmem:[%s5534 + $0x14] sm:$0xf]
        %v5541 = vld [vmem:[%s5534 + $0x18] sm:$0xf]
        %v5542 = vld [vmem:[%s5534 + $0x1c] sm:$0xf]
        %v5551 = vunpack.c.l.b16 %v5535
        %v5552 = vunpack.c.l.b16 %v5536
        %v5553 = vunpack.c.l.b16 %v5537
        %v5554 = vunpack.c.l.b16 %v5538
        %v5555 = vunpack.c.l.b16 %v5539
        %v5556 = vunpack.c.l.b16 %v5540
        %v5557 = vunpack.c.l.b16 %v5541
        %v5558 = vunpack.c.l.b16 %v5542
        %v5559 = vpack.c.b16 %v5552, %v5551
        %v5560 = vpack.c.b16 %v5554, %v5553
        %v5561 = vpack.c.b16 %v5556, %v5555
        %v5562 = vpack.c.b16 %v5558, %v5557
        %v5564 = vsel %vm3542, %v5559, 0
        %v5567 = vsel %vm3542, %v5560, 0
        %v5570 = vsel %vm3542, %v5561, 0
        %v5573 = vsel %vm3542, %v5562, 0
        %v5576 = vsel %vm3546, %v5533, 0
        %5578 = vmatpush.bf16.msra.mxu0 0
        %5579 = vmatpush.bf16.msra.mxu0 0
        %5580 = vmatpush.bf16.msra.mxu0 0
        %5581 = vmatpush.bf16.msra.mxu0 0
        %5582 = vmatpush.bf16.msra.mxu0 0
        %5583 = vmatpush.bf16.msra.mxu0 0
        %5584 = vmatpush.bf16.msra.mxu0 0
        %5585 = vmatpush.bf16.msra.mxu0 %v5576
        %5586 = vmatmul.bf16.gmra.mxu0 %v5564
        %v5587 = vpop.f32.mrf.mxu0
        %v5588 = vadd.f32 0.0, %v5587
        %v5589 = vpop.f32.mrf.mxu0
        %v5590 = vadd.f32 0.0, %v5589
        %5591 = vmatmul.bf16.gmra.mxu0 %v5567
        %v5592 = vpop.f32.mrf.mxu0
        %v5593 = vadd.f32 0.0, %v5592
        %v5594 = vpop.f32.mrf.mxu0
        %v5595 = vadd.f32 0.0, %v5594
        %5596 = vmatmul.bf16.gmra.mxu0 %v5570
        %v5597 = vpop.f32.mrf.mxu0
        %v5598 = vadd.f32 0.0, %v5597
        %v5599 = vpop.f32.mrf.mxu0
        %v5600 = vadd.f32 0.0, %v5599
        %5601 = vmatmul.bf16.gmra.mxu0 %v5573
        %v5602 = vpop.f32.mrf.mxu0
        %v5603 = vadd.f32 0.0, %v5602
        %v5604 = vpop.f32.mrf.mxu0
        %v5605 = vadd.f32 0.0, %v5604
        %5606 = vdwg.mxu0
        %v5607 = vadd.f32 %v5507, %v5588
        %v5608 = vadd.f32 %v5508, %v5590
        %v5609 = vadd.f32 %v5509, %v5593
        %v5610 = vadd.f32 %v5510, %v5595
        %v5611 = vadd.f32 %v5511, %v5598
        %v5612 = vadd.f32 %v5512, %v5600
        %v5613 = vadd.f32 %v5513, %v5603
        %v5614 = vadd.f32 %v5514, %v5605
        %s5615 = scalar_lea.vmem [#allocation25], 4
        %v5616 = vld [vmem:[%s5615] sm:$0x1]
        %v5618 = vand.u32 %v5616, %v5233
        %5620 = vmatpush.bf16.msra.mxu0 0
        %5621 = vmatpush.bf16.msra.mxu0 0
        %5622 = vmatpush.bf16.msra.mxu0 0
        %5623 = vmatpush.bf16.msra.mxu0 0
        %5624 = vmatpush.bf16.msra.mxu0 0
        %5625 = vmatpush.bf16.msra.mxu0 0
        %5626 = vmatpush.bf16.msra.mxu0 0
        %5627 = vmatpush.bf16.msra.mxu0 %v5618
        %5628 = vmatmul.bf16.gmra.mxu0 %v5229
        %v5629 = vpop.f32.mrf.mxu0
        %v5630 = vadd.f32 0.0, %v5629
        %v5631 = vpop.f32.mrf.mxu0
        %5632 = vdwg.mxu0
        %v5633 = vpack.c.bf16 %v5630, %v5630
        %s5634 = scalar_lea.vmem [#allocation23], 128
        %v5635 = vld [vmem:[%s5634] sm:$0xf]
        %v5636 = vld [vmem:[%s5634 + $0x4] sm:$0xf]
        %v5637 = vld [vmem:[%s5634 + $0x8] sm:$0xf]
        %v5638 = vld [vmem:[%s5634 + $0xc] sm:$0xf]
        %v5639 = vld [vmem:[%s5634 + $0x10] sm:$0xf]
        %v5640 = vld [vmem:[%s5634 + $0x14] sm:$0xf]
        %v5641 = vld [vmem:[%s5634 + $0x18] sm:$0xf]
        %v5642 = vld [vmem:[%s5634 + $0x1c] sm:$0xf]
        %v5651 = vunpack.c.l.b16 %v5635
        %v5652 = vunpack.c.l.b16 %v5636
        %v5653 = vunpack.c.l.b16 %v5637
        %v5654 = vunpack.c.l.b16 %v5638
        %v5655 = vunpack.c.l.b16 %v5639
        %v5656 = vunpack.c.l.b16 %v5640
        %v5657 = vunpack.c.l.b16 %v5641
        %v5658 = vunpack.c.l.b16 %v5642
        %v5659 = vpack.c.b16 %v5652, %v5651
        %v5660 = vpack.c.b16 %v5654, %v5653
        %v5661 = vpack.c.b16 %v5656, %v5655
        %v5662 = vpack.c.b16 %v5658, %v5657
        %v5664 = vsel %vm3542, %v5659, 0
        %v5667 = vsel %vm3542, %v5660, 0
        %v5670 = vsel %vm3542, %v5661, 0
        %v5673 = vsel %vm3542, %v5662, 0
        %v5676 = vsel %vm3546, %v5633, 0
        %5678 = vmatpush.bf16.msra.mxu0 0
        %5679 = vmatpush.bf16.msra.mxu0 0
        %5680 = vmatpush.bf16.msra.mxu0 0
        %5681 = vmatpush.bf16.msra.mxu0 0
        %5682 = vmatpush.bf16.msra.mxu0 0
        %5683 = vmatpush.bf16.msra.mxu0 0
        %5684 = vmatpush.bf16.msra.mxu0 0
        %5685 = vmatpush.bf16.msra.mxu0 %v5676
        %5686 = vmatmul.bf16.gmra.mxu0 %v5664
        %v5687 = vpop.f32.mrf.mxu0
        %v5688 = vadd.f32 0.0, %v5687
        %v5689 = vpop.f32.mrf.mxu0
        %v5690 = vadd.f32 0.0, %v5689
        %5691 = vmatmul.bf16.gmra.mxu0 %v5667
        %v5692 = vpop.f32.mrf.mxu0
        %v5693 = vadd.f32 0.0, %v5692
        %v5694 = vpop.f32.mrf.mxu0
        %v5695 = vadd.f32 0.0, %v5694
        %5696 = vmatmul.bf16.gmra.mxu0 %v5670
        %v5697 = vpop.f32.mrf.mxu0
        %v5698 = vadd.f32 0.0, %v5697
        %v5699 = vpop.f32.mrf.mxu0
        %v5700 = vadd.f32 0.0, %v5699
        %5701 = vmatmul.bf16.gmra.mxu0 %v5673
        %v5702 = vpop.f32.mrf.mxu0
        %v5703 = vadd.f32 0.0, %v5702
        %v5704 = vpop.f32.mrf.mxu0
        %v5705 = vadd.f32 0.0, %v5704
        %5706 = vdwg.mxu0
        %v5707 = vadd.f32 %v5607, %v5688
        %v5708 = vadd.f32 %v5608, %v5690
        %v5709 = vadd.f32 %v5609, %v5693
        %v5710 = vadd.f32 %v5610, %v5695
        %v5711 = vadd.f32 %v5611, %v5698
        %v5712 = vadd.f32 %v5612, %v5700
        %v5713 = vadd.f32 %v5613, %v5703
        %v5714 = vadd.f32 %v5614, %v5705
        %s5715 = scalar_lea.vmem [#allocation25], 5
        %v5716 = vld [vmem:[%s5715] sm:$0x1]
        %v5718 = vand.u32 %v5716, %v5233
        %5720 = vmatpush.bf16.msra.mxu0 0
        %5721 = vmatpush.bf16.msra.mxu0 0
        %5722 = vmatpush.bf16.msra.mxu0 0
        %5723 = vmatpush.bf16.msra.mxu0 0
        %5724 = vmatpush.bf16.msra.mxu0 0
        %5725 = vmatpush.bf16.msra.mxu0 0
        %5726 = vmatpush.bf16.msra.mxu0 0
        %5727 = vmatpush.bf16.msra.mxu0 %v5718
        %5728 = vmatmul.bf16.gmra.mxu0 %v5229
        %v5729 = vpop.f32.mrf.mxu0
        %v5730 = vadd.f32 0.0, %v5729
        %v5731 = vpop.f32.mrf.mxu0
        %5732 = vdwg.mxu0
        %v5733 = vpack.c.bf16 %v5730, %v5730
        %s5734 = scalar_lea.vmem [#allocation23], 160
        %v5735 = vld [vmem:[%s5734] sm:$0xf]
        %v5736 = vld [vmem:[%s5734 + $0x4] sm:$0xf]
        %v5737 = vld [vmem:[%s5734 + $0x8] sm:$0xf]
        %v5738 = vld [vmem:[%s5734 + $0xc] sm:$0xf]
        %v5739 = vld [vmem:[%s5734 + $0x10] sm:$0xf]
        %v5740 = vld [vmem:[%s5734 + $0x14] sm:$0xf]
        %v5741 = vld [vmem:[%s5734 + $0x18] sm:$0xf]
        %v5742 = vld [vmem:[%s5734 + $0x1c] sm:$0xf]
        %v5751 = vunpack.c.l.b16 %v5735
        %v5752 = vunpack.c.l.b16 %v5736
        %v5753 = vunpack.c.l.b16 %v5737
        %v5754 = vunpack.c.l.b16 %v5738
        %v5755 = vunpack.c.l.b16 %v5739
        %v5756 = vunpack.c.l.b16 %v5740
        %v5757 = vunpack.c.l.b16 %v5741
        %v5758 = vunpack.c.l.b16 %v5742
        %v5759 = vpack.c.b16 %v5752, %v5751
        %v5760 = vpack.c.b16 %v5754, %v5753
        %v5761 = vpack.c.b16 %v5756, %v5755
        %v5762 = vpack.c.b16 %v5758, %v5757
        %v5764 = vsel %vm3542, %v5759, 0
        %v5767 = vsel %vm3542, %v5760, 0
        %v5770 = vsel %vm3542, %v5761, 0
        %v5773 = vsel %vm3542, %v5762, 0
        %v5776 = vsel %vm3546, %v5733, 0
        %5778 = vmatpush.bf16.msra.mxu0 0
        %5779 = vmatpush.bf16.msra.mxu0 0
        %5780 = vmatpush.bf16.msra.mxu0 0
        %5781 = vmatpush.bf16.msra.mxu0 0
        %5782 = vmatpush.bf16.msra.mxu0 0
        %5783 = vmatpush.bf16.msra.mxu0 0
        %5784 = vmatpush.bf16.msra.mxu0 0
        %5785 = vmatpush.bf16.msra.mxu0 %v5776
        %5786 = vmatmul.bf16.gmra.mxu0 %v5764
        %v5787 = vpop.f32.mrf.mxu0
        %v5788 = vadd.f32 0.0, %v5787
        %v5789 = vpop.f32.mrf.mxu0
        %v5790 = vadd.f32 0.0, %v5789
        %5791 = vmatmul.bf16.gmra.mxu0 %v5767
        %v5792 = vpop.f32.mrf.mxu0
        %v5793 = vadd.f32 0.0, %v5792
        %v5794 = vpop.f32.mrf.mxu0
        %v5795 = vadd.f32 0.0, %v5794
        %5796 = vmatmul.bf16.gmra.mxu0 %v5770
        %v5797 = vpop.f32.mrf.mxu0
        %v5798 = vadd.f32 0.0, %v5797
        %v5799 = vpop.f32.mrf.mxu0
        %v5800 = vadd.f32 0.0, %v5799
        %5801 = vmatmul.bf16.gmra.mxu0 %v5773
        %v5802 = vpop.f32.mrf.mxu0
        %v5803 = vadd.f32 0.0, %v5802
        %v5804 = vpop.f32.mrf.mxu0
        %v5805 = vadd.f32 0.0, %v5804
        %5806 = vdwg.mxu0
        %v5807 = vadd.f32 %v5707, %v5788
        %v5808 = vadd.f32 %v5708, %v5790
        %v5809 = vadd.f32 %v5709, %v5793
        %v5810 = vadd.f32 %v5710, %v5795
        %v5811 = vadd.f32 %v5711, %v5798
        %v5812 = vadd.f32 %v5712, %v5800
        %v5813 = vadd.f32 %v5713, %v5803
        %v5814 = vadd.f32 %v5714, %v5805
        %s5815 = scalar_lea.vmem [#allocation25], 6
        %v5816 = vld [vmem:[%s5815] sm:$0x1]
        %v5818 = vand.u32 %v5816, %v5233
        %5820 = vmatpush.bf16.msra.mxu0 0
        %5821 = vmatpush.bf16.msra.mxu0 0
        %5822 = vmatpush.bf16.msra.mxu0 0
        %5823 = vmatpush.bf16.msra.mxu0 0
        %5824 = vmatpush.bf16.msra.mxu0 0
        %5825 = vmatpush.bf16.msra.mxu0 0
        %5826 = vmatpush.bf16.msra.mxu0 0
        %5827 = vmatpush.bf16.msra.mxu0 %v5818
        %5828 = vmatmul.bf16.gmra.mxu0 %v5229
        %v5829 = vpop.f32.mrf.mxu0
        %v5830 = vadd.f32 0.0, %v5829
        %v5831 = vpop.f32.mrf.mxu0
        %5832 = vdwg.mxu0
        %v5833 = vpack.c.bf16 %v5830, %v5830
        %s5834 = scalar_lea.vmem [#allocation23], 192
        %v5835 = vld [vmem:[%s5834] sm:$0xf]
        %v5836 = vld [vmem:[%s5834 + $0x4] sm:$0xf]
        %v5837 = vld [vmem:[%s5834 + $0x8] sm:$0xf]
        %v5838 = vld [vmem:[%s5834 + $0xc] sm:$0xf]
        %v5839 = vld [vmem:[%s5834 + $0x10] sm:$0xf]
        %v5840 = vld [vmem:[%s5834 + $0x14] sm:$0xf]
        %v5841 = vld [vmem:[%s5834 + $0x18] sm:$0xf]
        %v5842 = vld [vmem:[%s5834 + $0x1c] sm:$0xf]
        %v5851 = vunpack.c.l.b16 %v5835
        %v5852 = vunpack.c.l.b16 %v5836
        %v5853 = vunpack.c.l.b16 %v5837
        %v5854 = vunpack.c.l.b16 %v5838
        %v5855 = vunpack.c.l.b16 %v5839
        %v5856 = vunpack.c.l.b16 %v5840
        %v5857 = vunpack.c.l.b16 %v5841
        %v5858 = vunpack.c.l.b16 %v5842
        %v5859 = vpack.c.b16 %v5852, %v5851
        %v5860 = vpack.c.b16 %v5854, %v5853
        %v5861 = vpack.c.b16 %v5856, %v5855
        %v5862 = vpack.c.b16 %v5858, %v5857
        %v5864 = vsel %vm3542, %v5859, 0
        %v5867 = vsel %vm3542, %v5860, 0
        %v5870 = vsel %vm3542, %v5861, 0
        %v5873 = vsel %vm3542, %v5862, 0
        %v5876 = vsel %vm3546, %v5833, 0
        %5878 = vmatpush.bf16.msra.mxu0 0
        %5879 = vmatpush.bf16.msra.mxu0 0
        %5880 = vmatpush.bf16.msra.mxu0 0
        %5881 = vmatpush.bf16.msra.mxu0 0
        %5882 = vmatpush.bf16.msra.mxu0 0
        %5883 = vmatpush.bf16.msra.mxu0 0
        %5884 = vmatpush.bf16.msra.mxu0 0
        %5885 = vmatpush.bf16.msra.mxu0 %v5876
        %5886 = vmatmul.bf16.gmra.mxu0 %v5864
        %v5887 = vpop.f32.mrf.mxu0
        %v5888 = vadd.f32 0.0, %v5887
        %v5889 = vpop.f32.mrf.mxu0
        %v5890 = vadd.f32 0.0, %v5889
        %5891 = vmatmul.bf16.gmra.mxu0 %v5867
        %v5892 = vpop.f32.mrf.mxu0
        %v5893 = vadd.f32 0.0, %v5892
        %v5894 = vpop.f32.mrf.mxu0
        %v5895 = vadd.f32 0.0, %v5894
        %5896 = vmatmul.bf16.gmra.mxu0 %v5870
        %v5897 = vpop.f32.mrf.mxu0
        %v5898 = vadd.f32 0.0, %v5897
        %v5899 = vpop.f32.mrf.mxu0
        %v5900 = vadd.f32 0.0, %v5899
        %5901 = vmatmul.bf16.gmra.mxu0 %v5873
        %v5902 = vpop.f32.mrf.mxu0
        %v5903 = vadd.f32 0.0, %v5902
        %v5904 = vpop.f32.mrf.mxu0
        %v5905 = vadd.f32 0.0, %v5904
        %5906 = vdwg.mxu0
        %v5907 = vadd.f32 %v5807, %v5888
        %v5908 = vadd.f32 %v5808, %v5890
        %v5909 = vadd.f32 %v5809, %v5893
        %v5910 = vadd.f32 %v5810, %v5895
        %v5911 = vadd.f32 %v5811, %v5898
        %v5912 = vadd.f32 %v5812, %v5900
        %v5913 = vadd.f32 %v5813, %v5903
        %v5914 = vadd.f32 %v5814, %v5905
        %s5915 = scalar_lea.vmem [#allocation25], 7
        %v5916 = vld [vmem:[%s5915] sm:$0x1]
        %v5918 = vand.u32 %v5916, %v5233
        %5920 = vmatpush.bf16.msra.mxu0 0
        %5921 = vmatpush.bf16.msra.mxu0 0
        %5922 = vmatpush.bf16.msra.mxu0 0
        %5923 = vmatpush.bf16.msra.mxu0 0
        %5924 = vmatpush.bf16.msra.mxu0 0
        %5925 = vmatpush.bf16.msra.mxu0 0
        %5926 = vmatpush.bf16.msra.mxu0 0
        %5927 = vmatpush.bf16.msra.mxu0 %v5918
        %5928 = vmatmul.bf16.gmra.mxu0 %v5229
        %v5929 = vpop.f32.mrf.mxu0
        %v5930 = vadd.f32 0.0, %v5929
        %v5931 = vpop.f32.mrf.mxu0
        %5932 = vdwg.mxu0
        %v5933 = vpack.c.bf16 %v5930, %v5930
        %s5934 = scalar_lea.vmem [#allocation23], 224
        %v5935 = vld [vmem:[%s5934] sm:$0xf]
        %v5936 = vld [vmem:[%s5934 + $0x4] sm:$0xf]
        %v5937 = vld [vmem:[%s5934 + $0x8] sm:$0xf]
        %v5938 = vld [vmem:[%s5934 + $0xc] sm:$0xf]
        %v5939 = vld [vmem:[%s5934 + $0x10] sm:$0xf]
        %v5940 = vld [vmem:[%s5934 + $0x14] sm:$0xf]
        %v5941 = vld [vmem:[%s5934 + $0x18] sm:$0xf]
        %v5942 = vld [vmem:[%s5934 + $0x1c] sm:$0xf]
        %v5951 = vunpack.c.l.b16 %v5935
        %v5952 = vunpack.c.l.b16 %v5936
        %v5953 = vunpack.c.l.b16 %v5937
        %v5954 = vunpack.c.l.b16 %v5938
        %v5955 = vunpack.c.l.b16 %v5939
        %v5956 = vunpack.c.l.b16 %v5940
        %v5957 = vunpack.c.l.b16 %v5941
        %v5958 = vunpack.c.l.b16 %v5942
        %v5959 = vpack.c.b16 %v5952, %v5951
        %v5960 = vpack.c.b16 %v5954, %v5953
        %v5961 = vpack.c.b16 %v5956, %v5955
        %v5962 = vpack.c.b16 %v5958, %v5957
        %v5964 = vsel %vm3542, %v5959, 0
        %v5967 = vsel %vm3542, %v5960, 0
        %v5970 = vsel %vm3542, %v5961, 0
        %v5973 = vsel %vm3542, %v5962, 0
        %v5976 = vsel %vm3546, %v5933, 0
        %5978 = vmatpush.bf16.msra.mxu0 0
        %5979 = vmatpush.bf16.msra.mxu0 0
        %5980 = vmatpush.bf16.msra.mxu0 0
        %5981 = vmatpush.bf16.msra.mxu0 0
        %5982 = vmatpush.bf16.msra.mxu0 0
        %5983 = vmatpush.bf16.msra.mxu0 0
        %5984 = vmatpush.bf16.msra.mxu0 0
        %5985 = vmatpush.bf16.msra.mxu0 %v5976
        %5986 = vmatmul.bf16.gmra.mxu0 %v5964
        %v5987 = vpop.f32.mrf.mxu0
        %v5988 = vadd.f32 0.0, %v5987
        %v5989 = vpop.f32.mrf.mxu0
        %v5990 = vadd.f32 0.0, %v5989
        %5991 = vmatmul.bf16.gmra.mxu0 %v5967
        %v5992 = vpop.f32.mrf.mxu0
        %v5993 = vadd.f32 0.0, %v5992
        %v5994 = vpop.f32.mrf.mxu0
        %v5995 = vadd.f32 0.0, %v5994
        %5996 = vmatmul.bf16.gmra.mxu0 %v5970
        %v5997 = vpop.f32.mrf.mxu0
        %v5998 = vadd.f32 0.0, %v5997
        %v5999 = vpop.f32.mrf.mxu0
        %v6000 = vadd.f32 0.0, %v5999
        %6001 = vmatmul.bf16.gmra.mxu0 %v5973
        %v6002 = vpop.f32.mrf.mxu0
        %v6003 = vadd.f32 0.0, %v6002
        %v6004 = vpop.f32.mrf.mxu0
        %v6005 = vadd.f32 0.0, %v6004
        %6006 = vdwg.mxu0
        %v6007 = vadd.f32 %v5907, %v5988
        %v6008 = vadd.f32 %v5908, %v5990
        %v6009 = vadd.f32 %v5909, %v5993
        %v6010 = vadd.f32 %v5910, %v5995
        %v6011 = vadd.f32 %v5911, %v5998
        %v6012 = vadd.f32 %v5912, %v6000
        %v6013 = vadd.f32 %v5913, %v6003
        %v6014 = vadd.f32 %v5914, %v6005
        %s6015 = scalar_lea.vmem [#allocation25], 8
        %v6016 = vld [vmem:[%s6015] sm:$0x1]
        %v6018 = vand.u32 %v6016, %v5233
        %6020 = vmatpush.bf16.msra.mxu0 0
        %6021 = vmatpush.bf16.msra.mxu0 0
        %6022 = vmatpush.bf16.msra.mxu0 0
        %6023 = vmatpush.bf16.msra.mxu0 0
        %6024 = vmatpush.bf16.msra.mxu0 0
        %6025 = vmatpush.bf16.msra.mxu0 0
        %6026 = vmatpush.bf16.msra.mxu0 0
        %6027 = vmatpush.bf16.msra.mxu0 %v6018
        %6028 = vmatmul.bf16.gmra.mxu0 %v5229
        %v6029 = vpop.f32.mrf.mxu0
        %v6030 = vadd.f32 0.0, %v6029
        %v6031 = vpop.f32.mrf.mxu0
        %6032 = vdwg.mxu0
        %v6033 = vpack.c.bf16 %v6030, %v6030
        %s6034 = scalar_lea.vmem [#allocation23], 256
        %v6035 = vld [vmem:[%s6034] sm:$0xf]
        %v6036 = vld [vmem:[%s6034 + $0x4] sm:$0xf]
        %v6037 = vld [vmem:[%s6034 + $0x8] sm:$0xf]
        %v6038 = vld [vmem:[%s6034 + $0xc] sm:$0xf]
        %v6039 = vld [vmem:[%s6034 + $0x10] sm:$0xf]
        %v6040 = vld [vmem:[%s6034 + $0x14] sm:$0xf]
        %v6041 = vld [vmem:[%s6034 + $0x18] sm:$0xf]
        %v6042 = vld [vmem:[%s6034 + $0x1c] sm:$0xf]
        %v6051 = vunpack.c.l.b16 %v6035
        %v6052 = vunpack.c.l.b16 %v6036
        %v6053 = vunpack.c.l.b16 %v6037
        %v6054 = vunpack.c.l.b16 %v6038
        %v6055 = vunpack.c.l.b16 %v6039
        %v6056 = vunpack.c.l.b16 %v6040
        %v6057 = vunpack.c.l.b16 %v6041
        %v6058 = vunpack.c.l.b16 %v6042
        %v6059 = vpack.c.b16 %v6052, %v6051
        %v6060 = vpack.c.b16 %v6054, %v6053
        %v6061 = vpack.c.b16 %v6056, %v6055
        %v6062 = vpack.c.b16 %v6058, %v6057
        %v6064 = vsel %vm3542, %v6059, 0
        %v6067 = vsel %vm3542, %v6060, 0
        %v6070 = vsel %vm3542, %v6061, 0
        %v6073 = vsel %vm3542, %v6062, 0
        %v6076 = vsel %vm3546, %v6033, 0
        %6078 = vmatpush.bf16.msra.mxu0 0
        %6079 = vmatpush.bf16.msra.mxu0 0
        %6080 = vmatpush.bf16.msra.mxu0 0
        %6081 = vmatpush.bf16.msra.mxu0 0
        %6082 = vmatpush.bf16.msra.mxu0 0
        %6083 = vmatpush.bf16.msra.mxu0 0
        %6084 = vmatpush.bf16.msra.mxu0 0
        %6085 = vmatpush.bf16.msra.mxu0 %v6076
        %6086 = vmatmul.bf16.gmra.mxu0 %v6064
        %v6087 = vpop.f32.mrf.mxu0
        %v6088 = vadd.f32 0.0, %v6087
        %v6089 = vpop.f32.mrf.mxu0
        %v6090 = vadd.f32 0.0, %v6089
        %6091 = vmatmul.bf16.gmra.mxu0 %v6067
        %v6092 = vpop.f32.mrf.mxu0
        %v6093 = vadd.f32 0.0, %v6092
        %v6094 = vpop.f32.mrf.mxu0
        %v6095 = vadd.f32 0.0, %v6094
        %6096 = vmatmul.bf16.gmra.mxu0 %v6070
        %v6097 = vpop.f32.mrf.mxu0
        %v6098 = vadd.f32 0.0, %v6097
        %v6099 = vpop.f32.mrf.mxu0
        %v6100 = vadd.f32 0.0, %v6099
        %6101 = vmatmul.bf16.gmra.mxu0 %v6073
        %v6102 = vpop.f32.mrf.mxu0
        %v6103 = vadd.f32 0.0, %v6102
        %v6104 = vpop.f32.mrf.mxu0
        %v6105 = vadd.f32 0.0, %v6104
        %6106 = vdwg.mxu0
        %v6107 = vadd.f32 %v6007, %v6088
        %v6108 = vadd.f32 %v6008, %v6090
        %v6109 = vadd.f32 %v6009, %v6093
        %v6110 = vadd.f32 %v6010, %v6095
        %v6111 = vadd.f32 %v6011, %v6098
        %v6112 = vadd.f32 %v6012, %v6100
        %v6113 = vadd.f32 %v6013, %v6103
        %v6114 = vadd.f32 %v6014, %v6105
        %s6115 = scalar_lea.vmem [#allocation25], 9
        %v6116 = vld [vmem:[%s6115] sm:$0x1]
        %v6118 = vand.u32 %v6116, %v5233
        %6120 = vmatpush.bf16.msra.mxu0 0
        %6121 = vmatpush.bf16.msra.mxu0 0
        %6122 = vmatpush.bf16.msra.mxu0 0
        %6123 = vmatpush.bf16.msra.mxu0 0
        %6124 = vmatpush.bf16.msra.mxu0 0
        %6125 = vmatpush.bf16.msra.mxu0 0
        %6126 = vmatpush.bf16.msra.mxu0 0
        %6127 = vmatpush.bf16.msra.mxu0 %v6118
        %6128 = vmatmul.bf16.gmra.mxu0 %v5229
        %v6129 = vpop.f32.mrf.mxu0
        %v6130 = vadd.f32 0.0, %v6129
        %v6131 = vpop.f32.mrf.mxu0
        %6132 = vdwg.mxu0
        %v6133 = vpack.c.bf16 %v6130, %v6130
        %s6134 = scalar_lea.vmem [#allocation23], 288
        %v6135 = vld [vmem:[%s6134] sm:$0xf]
        %v6136 = vld [vmem:[%s6134 + $0x4] sm:$0xf]
        %v6137 = vld [vmem:[%s6134 + $0x8] sm:$0xf]
        %v6138 = vld [vmem:[%s6134 + $0xc] sm:$0xf]
        %v6139 = vld [vmem:[%s6134 + $0x10] sm:$0xf]
        %v6140 = vld [vmem:[%s6134 + $0x14] sm:$0xf]
        %v6141 = vld [vmem:[%s6134 + $0x18] sm:$0xf]
        %v6142 = vld [vmem:[%s6134 + $0x1c] sm:$0xf]
        %v6151 = vunpack.c.l.b16 %v6135
        %v6152 = vunpack.c.l.b16 %v6136
        %v6153 = vunpack.c.l.b16 %v6137
        %v6154 = vunpack.c.l.b16 %v6138
        %v6155 = vunpack.c.l.b16 %v6139
        %v6156 = vunpack.c.l.b16 %v6140
        %v6157 = vunpack.c.l.b16 %v6141
        %v6158 = vunpack.c.l.b16 %v6142
        %v6159 = vpack.c.b16 %v6152, %v6151
        %v6160 = vpack.c.b16 %v6154, %v6153
        %v6161 = vpack.c.b16 %v6156, %v6155
        %v6162 = vpack.c.b16 %v6158, %v6157
        %v6164 = vsel %vm3542, %v6159, 0
        %v6167 = vsel %vm3542, %v6160, 0
        %v6170 = vsel %vm3542, %v6161, 0
        %v6173 = vsel %vm3542, %v6162, 0
        %v6176 = vsel %vm3546, %v6133, 0
        %6178 = vmatpush.bf16.msra.mxu0 0
        %6179 = vmatpush.bf16.msra.mxu0 0
        %6180 = vmatpush.bf16.msra.mxu0 0
        %6181 = vmatpush.bf16.msra.mxu0 0
        %6182 = vmatpush.bf16.msra.mxu0 0
        %6183 = vmatpush.bf16.msra.mxu0 0
        %6184 = vmatpush.bf16.msra.mxu0 0
        %6185 = vmatpush.bf16.msra.mxu0 %v6176
        %6186 = vmatmul.bf16.gmra.mxu0 %v6164
        %v6187 = vpop.f32.mrf.mxu0
        %v6188 = vadd.f32 0.0, %v6187
        %v6189 = vpop.f32.mrf.mxu0
        %v6190 = vadd.f32 0.0, %v6189
        %6191 = vmatmul.bf16.gmra.mxu0 %v6167
        %v6192 = vpop.f32.mrf.mxu0
        %v6193 = vadd.f32 0.0, %v6192
        %v6194 = vpop.f32.mrf.mxu0
        %v6195 = vadd.f32 0.0, %v6194
        %6196 = vmatmul.bf16.gmra.mxu0 %v6170
        %v6197 = vpop.f32.mrf.mxu0
        %v6198 = vadd.f32 0.0, %v6197
        %v6199 = vpop.f32.mrf.mxu0
        %v6200 = vadd.f32 0.0, %v6199
        %6201 = vmatmul.bf16.gmra.mxu0 %v6173
        %v6202 = vpop.f32.mrf.mxu0
        %v6203 = vadd.f32 0.0, %v6202
        %v6204 = vpop.f32.mrf.mxu0
        %v6205 = vadd.f32 0.0, %v6204
        %6206 = vdwg.mxu0
        %v6207 = vadd.f32 %v6107, %v6188
        %v6208 = vadd.f32 %v6108, %v6190
        %v6209 = vadd.f32 %v6109, %v6193
        %v6210 = vadd.f32 %v6110, %v6195
        %v6211 = vadd.f32 %v6111, %v6198
        %v6212 = vadd.f32 %v6112, %v6200
        %v6213 = vadd.f32 %v6113, %v6203
        %v6214 = vadd.f32 %v6114, %v6205
        %v6215 = vld [vmem:[#allocation26] sm:$0xff]
        %v6216 = vld [vmem:[#allocation26 + $0x8] sm:$0xff]
        %v6217 = vld [vmem:[#allocation26 + $0x10] sm:$0xff]
        %v6218 = vld [vmem:[#allocation26 + $0x18] sm:$0xff]
        %v6219 = vld [vmem:[#allocation26 + $0x20] sm:$0xff]
        %v6220 = vld [vmem:[#allocation26 + $0x28] sm:$0xff]
        %v6221 = vld [vmem:[#allocation26 + $0x30] sm:$0xff]
        %v6222 = vld [vmem:[#allocation26 + $0x38] sm:$0xff]
        %6224 = vset.pattern.permute.xlu0 0
        %6225 = vperm.xlu0 %6224, %v6215
        %v6226 = vpop.permute.xlu0 %6225
        %6229 = vset.pattern.permute.xlu0 0
        %6230 = vperm.xlu0 %6229, %v6216
        %v6231 = vpop.permute.xlu0 %6230
        %6234 = vset.pattern.permute.xlu0 0
        %6235 = vperm.xlu0 %6234, %v6217
        %v6236 = vpop.permute.xlu0 %6235
        %6239 = vset.pattern.permute.xlu0 0
        %6240 = vperm.xlu0 %6239, %v6218
        %v6241 = vpop.permute.xlu0 %6240
        %6244 = vset.pattern.permute.xlu0 0
        %6245 = vperm.xlu0 %6244, %v6219
        %v6246 = vpop.permute.xlu0 %6245
        %6249 = vset.pattern.permute.xlu0 0
        %6250 = vperm.xlu0 %6249, %v6220
        %v6251 = vpop.permute.xlu0 %6250
        %6254 = vset.pattern.permute.xlu0 0
        %6255 = vperm.xlu0 %6254, %v6221
        %v6256 = vpop.permute.xlu0 %6255
        %6259 = vset.pattern.permute.xlu0 0
        %6260 = vperm.xlu0 %6259, %v6222
        %v6261 = vpop.permute.xlu0 %6260
        %v6263 = vadd.f32 %v6207, %v6226
        %v6264 = vadd.f32 %v6208, %v6231
        %v6265 = vadd.f32 %v6209, %v6236
        %v6266 = vadd.f32 %v6210, %v6241
        %v6267 = vadd.f32 %v6211, %v6246
        %v6268 = vadd.f32 %v6212, %v6251
        %v6269 = vadd.f32 %v6213, %v6256
        %v6270 = vadd.f32 %v6214, %v6261
        %v6271 = vmax.f32 %v6263, 0.0
        %v6272 = vmax.f32 %v6264, 0.0
        %v6273 = vmax.f32 %v6265, 0.0
        %v6274 = vmax.f32 %v6266, 0.0
        %v6275 = vmax.f32 %v6267, 0.0
        %v6276 = vmax.f32 %v6268, 0.0
        %v6277 = vmax.f32 %v6269, 0.0
        %v6278 = vmax.f32 %v6270, 0.0
        %v6279 = vpack.c.bf16 %v6272, %v6271
        %v6280 = vpack.c.bf16 %v6274, %v6273
        %v6281 = vpack.c.bf16 %v6276, %v6275
        %v6282 = vpack.c.bf16 %v6278, %v6277
        %v6283 = vld [vmem:[#allocation29] sm:$0xf]
        %v6284 = vld [vmem:[#allocation29 + $0x4] sm:$0x1]
        %v6287 = vunpack.c.l.b16 %v6283
        %v6288 = vunpack.c.l.b16 %v6284
        %v6289 = vpack.c.b16 %v6288, %v6287
        %v6291 = vsel %vm4591, %v6279, 0
        %v6294 = vsel %vm4591, %v6280, 0
        %v6297 = vsel %vm4591, %v6281, 0
        %v6300 = vsel %vm4591, %v6282, 0
        %v6303 = vsel %vm4604, %v6289, 0
        %6305 = vmatpush.bf16.msra.mxu0 0
        %6306 = vmatpush.bf16.msra.mxu0 0
        %6307 = vmatpush.bf16.msra.mxu0 0
        %6308 = vmatpush.bf16.msra.mxu0 0
        %6309 = vmatpush.bf16.msra.mxu0 0
        %6310 = vmatpush.bf16.msra.mxu0 0
        %6311 = vmatpush.bf16.msra.mxu0 0
        %6312 = vmatpush.bf16.msra.mxu0 %v6303
        %6313 = vmatmul.bf16.gmra.mxu0 %v6291
        %v6314 = vpop.f32.mrf.mxu0
        %v6315 = vadd.f32 0.0, %v6314
        %v6316 = vpop.f32.mrf.mxu0
        %v6317 = vadd.f32 0.0, %v6316
        %6318 = vmatmul.bf16.gmra.mxu0 %v6294
        %v6319 = vpop.f32.mrf.mxu0
        %v6320 = vadd.f32 0.0, %v6319
        %v6321 = vpop.f32.mrf.mxu0
        %v6322 = vadd.f32 0.0, %v6321
        %6323 = vmatmul.bf16.gmra.mxu0 %v6297
        %v6324 = vpop.f32.mrf.mxu0
        %v6325 = vadd.f32 0.0, %v6324
        %v6326 = vpop.f32.mrf.mxu0
        %v6327 = vadd.f32 0.0, %v6326
        %6328 = vmatmul.bf16.gmra.mxu0 %v6300
        %v6329 = vpop.f32.mrf.mxu0
        %v6330 = vadd.f32 0.0, %v6329
        %v6331 = vpop.f32.mrf.mxu0
        %v6332 = vadd.f32 0.0, %v6331
        %6333 = vdwg.mxu0
        %v6334 = vpack.c.bf16 %v6317, %v6315
        %v6335 = vpack.c.bf16 %v6322, %v6320
        %v6336 = vpack.c.bf16 %v6327, %v6325
        %v6337 = vpack.c.bf16 %v6332, %v6330
        %v6338 = vld [vmem:[#allocation28] sm:$0xf]
        %v6339 = vld [vmem:[#allocation28 + $0x4] sm:$0xf]
        %v6340 = vld [vmem:[#allocation28 + $0x8] sm:$0xf]
        %v6341 = vld [vmem:[#allocation28 + $0xc] sm:$0xf]
        %s6342 = scalar_lea.vmem [#allocation29], 8
        %v6343 = vld [vmem:[%s6342] sm:$0xf]
        %v6344 = vld [vmem:[%s6342 + $0x4] sm:$0x1]
        %v6347 = vunpack.c.l.b16 %v6343
        %v6348 = vunpack.c.l.b16 %v6344
        %v6349 = vpack.c.b16 %v6348, %v6347
        %v6351 = vsel %vm4604, %v6349, 0
        %6353 = vmatpush.bf16.msra.mxu0 0
        %6354 = vmatpush.bf16.msra.mxu0 0
        %6355 = vmatpush.bf16.msra.mxu0 0
        %6356 = vmatpush.bf16.msra.mxu0 0
        %6357 = vmatpush.bf16.msra.mxu0 0
        %6358 = vmatpush.bf16.msra.mxu0 0
        %6359 = vmatpush.bf16.msra.mxu0 0
        %6360 = vmatpush.bf16.msra.mxu0 %v6351
        %6361 = vmatmul.bf16.gmra.mxu0 %v6291
        %v6362 = vpop.f32.mrf.mxu0
        %v6363 = vadd.f32 0.0, %v6362
        %v6364 = vpop.f32.mrf.mxu0
        %v6365 = vadd.f32 0.0, %v6364
        %6366 = vmatmul.bf16.gmra.mxu0 %v6294
        %v6367 = vpop.f32.mrf.mxu0
        %v6368 = vadd.f32 0.0, %v6367
        %v6369 = vpop.f32.mrf.mxu0
        %v6370 = vadd.f32 0.0, %v6369
        %6371 = vmatmul.bf16.gmra.mxu0 %v6297
        %v6372 = vpop.f32.mrf.mxu0
        %v6373 = vadd.f32 0.0, %v6372
        %v6374 = vpop.f32.mrf.mxu0
        %v6375 = vadd.f32 0.0, %v6374
        %6376 = vmatmul.bf16.gmra.mxu0 %v6300
        %v6377 = vpop.f32.mrf.mxu0
        %v6378 = vadd.f32 0.0, %v6377
        %v6379 = vpop.f32.mrf.mxu0
        %v6380 = vadd.f32 0.0, %v6379
        %6381 = vdwg.mxu0
        %v6382 = vpack.c.bf16 %v6365, %v6363
        %v6383 = vpack.c.bf16 %v6370, %v6368
        %v6384 = vpack.c.bf16 %v6375, %v6373
        %v6385 = vpack.c.bf16 %v6380, %v6378
        %s6386 = scalar_lea.vmem [#allocation28], 16
        %v6387 = vld [vmem:[%s6386] sm:$0xf]
        %v6388 = vld [vmem:[%s6386 + $0x4] sm:$0xf]
        %v6389 = vld [vmem:[%s6386 + $0x8] sm:$0xf]
        %v6390 = vld [vmem:[%s6386 + $0xc] sm:$0xf]
        %v6395 = vunpack.c.l.b16 %v6387
        %v6396 = vunpack.c.l.b16 %v6388
        %v6397 = vunpack.c.l.b16 %v6389
        %v6398 = vunpack.c.l.b16 %v6390
        %v6399 = vpack.c.b16 %v6396, %v6395
        %v6400 = vpack.c.b16 %v6398, %v6397
        %v6402 = vsel %vm1687, %v6399, 0
        %v6405 = vsel %vm1687, %v6400, 0
        %6407 = vmatpush.bf16.msra.mxu0 0
        %6408 = vmatpush.bf16.msra.mxu0 0
        %6409 = vmatpush.bf16.msra.mxu0 0
        %6410 = vmatpush.bf16.msra.mxu0 0
        %6411 = vmatpush.bf16.msra.mxu0 %v6385
        %6412 = vmatpush.bf16.msra.mxu0 %v6384
        %6413 = vmatpush.bf16.msra.mxu0 %v6383
        %6414 = vmatpush.bf16.msra.mxu0 %v6382
        %6415 = vmatmul.bf16.gmra.mxu0 %v6402
        %v6416 = vpop.f32.mrf.mxu0
        %v6417 = vadd.f32 0.0, %v6416
        %v6418 = vpop.f32.mrf.mxu0
        %v6419 = vadd.f32 0.0, %v6418
        %6420 = vmatmul.bf16.gmra.mxu0 %v6405
        %v6421 = vpop.f32.mrf.mxu0
        %v6422 = vadd.f32 0.0, %v6421
        %v6423 = vpop.f32.mrf.mxu0
        %v6424 = vadd.f32 0.0, %v6423
        %6425 = vdwg.mxu0
        %v6430 = vunpack.c.l.b16 %v6338
        %v6431 = vunpack.c.l.b16 %v6339
        %v6432 = vunpack.c.l.b16 %v6340
        %v6433 = vunpack.c.l.b16 %v6341
        %v6434 = vpack.c.b16 %v6431, %v6430
        %v6435 = vpack.c.b16 %v6433, %v6432
        %v6437 = vsel %vm1687, %v6434, 0
        %v6440 = vsel %vm1687, %v6435, 0
        %6442 = vmatpush.bf16.msra.mxu0 0
        %6443 = vmatpush.bf16.msra.mxu0 0
        %6444 = vmatpush.bf16.msra.mxu0 0
        %6445 = vmatpush.bf16.msra.mxu0 0
        %6446 = vmatpush.bf16.msra.mxu0 %v6337
        %6447 = vmatpush.bf16.msra.mxu0 %v6336
        %6448 = vmatpush.bf16.msra.mxu0 %v6335
        %6449 = vmatpush.bf16.msra.mxu0 %v6334
        %6450 = vmatmul.bf16.gmra.mxu0 %v6437
        %v6451 = vpop.f32.mrf.mxu0
        %v6452 = vadd.f32 %v6417, %v6451
        %v6453 = vpop.f32.mrf.mxu0
        %v6454 = vadd.f32 %v6419, %v6453
        %6455 = vmatmul.bf16.gmra.mxu0 %v6440
        %v6456 = vpop.f32.mrf.mxu0
        %v6457 = vadd.f32 %v6422, %v6456
        %v6458 = vpop.f32.mrf.mxu0
        %v6459 = vadd.f32 %v6424, %v6458
        %6460 = vdwg.mxu0
        %s6461 = scalar_lea.vmem [#allocation29], 16
        %v6462 = vld [vmem:[%s6461] sm:$0xf]
        %v6463 = vld [vmem:[%s6461 + $0x4] sm:$0x1]
        %v6466 = vunpack.c.l.b16 %v6462
        %v6467 = vunpack.c.l.b16 %v6463
        %v6468 = vpack.c.b16 %v6467, %v6466
        %v6470 = vsel %vm4604, %v6468, 0
        %6472 = vmatpush.bf16.msra.mxu0 0
        %6473 = vmatpush.bf16.msra.mxu0 0
        %6474 = vmatpush.bf16.msra.mxu0 0
        %6475 = vmatpush.bf16.msra.mxu0 0
        %6476 = vmatpush.bf16.msra.mxu0 0
        %6477 = vmatpush.bf16.msra.mxu0 0
        %6478 = vmatpush.bf16.msra.mxu0 0
        %6479 = vmatpush.bf16.msra.mxu0 %v6470
        %6480 = vmatmul.bf16.gmra.mxu0 %v6291
        %v6481 = vpop.f32.mrf.mxu0
        %v6482 = vadd.f32 0.0, %v6481
        %v6483 = vpop.f32.mrf.mxu0
        %v6484 = vadd.f32 0.0, %v6483
        %6485 = vmatmul.bf16.gmra.mxu0 %v6294
        %v6486 = vpop.f32.mrf.mxu0
        %v6487 = vadd.f32 0.0, %v6486
        %v6488 = vpop.f32.mrf.mxu0
        %v6489 = vadd.f32 0.0, %v6488
        %6490 = vmatmul.bf16.gmra.mxu0 %v6297
        %v6491 = vpop.f32.mrf.mxu0
        %v6492 = vadd.f32 0.0, %v6491
        %v6493 = vpop.f32.mrf.mxu0
        %v6494 = vadd.f32 0.0, %v6493
        %6495 = vmatmul.bf16.gmra.mxu0 %v6300
        %v6496 = vpop.f32.mrf.mxu0
        %v6497 = vadd.f32 0.0, %v6496
        %v6498 = vpop.f32.mrf.mxu0
        %v6499 = vadd.f32 0.0, %v6498
        %6500 = vdwg.mxu0
        %v6501 = vpack.c.bf16 %v6484, %v6482
        %v6502 = vpack.c.bf16 %v6489, %v6487
        %v6503 = vpack.c.bf16 %v6494, %v6492
        %v6504 = vpack.c.bf16 %v6499, %v6497
        %s6505 = scalar_lea.vmem [#allocation28], 32
        %v6506 = vld [vmem:[%s6505] sm:$0xf]
        %v6507 = vld [vmem:[%s6505 + $0x4] sm:$0xf]
        %v6508 = vld [vmem:[%s6505 + $0x8] sm:$0xf]
        %v6509 = vld [vmem:[%s6505 + $0xc] sm:$0xf]
        %v6514 = vunpack.c.l.b16 %v6506
        %v6515 = vunpack.c.l.b16 %v6507
        %v6516 = vunpack.c.l.b16 %v6508
        %v6517 = vunpack.c.l.b16 %v6509
        %v6518 = vpack.c.b16 %v6515, %v6514
        %v6519 = vpack.c.b16 %v6517, %v6516
        %v6521 = vsel %vm1687, %v6518, 0
        %v6524 = vsel %vm1687, %v6519, 0
        %6526 = vmatpush.bf16.msra.mxu0 0
        %6527 = vmatpush.bf16.msra.mxu0 0
        %6528 = vmatpush.bf16.msra.mxu0 0
        %6529 = vmatpush.bf16.msra.mxu0 0
        %6530 = vmatpush.bf16.msra.mxu0 %v6504
        %6531 = vmatpush.bf16.msra.mxu0 %v6503
        %6532 = vmatpush.bf16.msra.mxu0 %v6502
        %6533 = vmatpush.bf16.msra.mxu0 %v6501
        %6534 = vmatmul.bf16.gmra.mxu0 %v6521
        %v6535 = vpop.f32.mrf.mxu0
        %v6536 = vadd.f32 0.0, %v6535
        %v6537 = vpop.f32.mrf.mxu0
        %v6538 = vadd.f32 0.0, %v6537
        %6539 = vmatmul.bf16.gmra.mxu0 %v6524
        %v6540 = vpop.f32.mrf.mxu0
        %v6541 = vadd.f32 0.0, %v6540
        %v6542 = vpop.f32.mrf.mxu0
        %v6543 = vadd.f32 0.0, %v6542
        %6544 = vdwg.mxu0
        %v6545 = vadd.f32 %v6452, %v6536
        %v6546 = vadd.f32 %v6454, %v6538
        %v6547 = vadd.f32 %v6457, %v6541
        %v6548 = vadd.f32 %v6459, %v6543
        %s6549 = scalar_lea.vmem [#allocation29], 24
        %v6550 = vld [vmem:[%s6549] sm:$0xf]
        %v6551 = vld [vmem:[%s6549 + $0x4] sm:$0x1]
        %v6554 = vunpack.c.l.b16 %v6550
        %v6555 = vunpack.c.l.b16 %v6551
        %v6556 = vpack.c.b16 %v6555, %v6554
        %v6558 = vsel %vm4604, %v6556, 0
        %6560 = vmatpush.bf16.msra.mxu0 0
        %6561 = vmatpush.bf16.msra.mxu0 0
        %6562 = vmatpush.bf16.msra.mxu0 0
        %6563 = vmatpush.bf16.msra.mxu0 0
        %6564 = vmatpush.bf16.msra.mxu0 0
        %6565 = vmatpush.bf16.msra.mxu0 0
        %6566 = vmatpush.bf16.msra.mxu0 0
        %6567 = vmatpush.bf16.msra.mxu0 %v6558
        %6568 = vmatmul.bf16.gmra.mxu0 %v6291
        %v6569 = vpop.f32.mrf.mxu0
        %v6570 = vadd.f32 0.0, %v6569
        %v6571 = vpop.f32.mrf.mxu0
        %v6572 = vadd.f32 0.0, %v6571
        %6573 = vmatmul.bf16.gmra.mxu0 %v6294
        %v6574 = vpop.f32.mrf.mxu0
        %v6575 = vadd.f32 0.0, %v6574
        %v6576 = vpop.f32.mrf.mxu0
        %v6577 = vadd.f32 0.0, %v6576
        %6578 = vmatmul.bf16.gmra.mxu0 %v6297
        %v6579 = vpop.f32.mrf.mxu0
        %v6580 = vadd.f32 0.0, %v6579
        %v6581 = vpop.f32.mrf.mxu0
        %v6582 = vadd.f32 0.0, %v6581
        %6583 = vmatmul.bf16.gmra.mxu0 %v6300
        %v6584 = vpop.f32.mrf.mxu0
        %v6585 = vadd.f32 0.0, %v6584
        %v6586 = vpop.f32.mrf.mxu0
        %v6587 = vadd.f32 0.0, %v6586
        %6588 = vdwg.mxu0
        %v6589 = vpack.c.bf16 %v6572, %v6570
        %v6590 = vpack.c.bf16 %v6577, %v6575
        %v6591 = vpack.c.bf16 %v6582, %v6580
        %v6592 = vpack.c.bf16 %v6587, %v6585
        %s6593 = scalar_lea.vmem [#allocation28], 48
        %v6594 = vld [vmem:[%s6593] sm:$0xf]
        %v6595 = vld [vmem:[%s6593 + $0x4] sm:$0xf]
        %v6596 = vld [vmem:[%s6593 + $0x8] sm:$0xf]
        %v6597 = vld [vmem:[%s6593 + $0xc] sm:$0xf]
        %v6602 = vunpack.c.l.b16 %v6594
        %v6603 = vunpack.c.l.b16 %v6595
        %v6604 = vunpack.c.l.b16 %v6596
        %v6605 = vunpack.c.l.b16 %v6597
        %v6606 = vpack.c.b16 %v6603, %v6602
        %v6607 = vpack.c.b16 %v6605, %v6604
        %v6609 = vsel %vm1687, %v6606, 0
        %v6612 = vsel %vm1687, %v6607, 0
        %6614 = vmatpush.bf16.msra.mxu0 0
        %6615 = vmatpush.bf16.msra.mxu0 0
        %6616 = vmatpush.bf16.msra.mxu0 0
        %6617 = vmatpush.bf16.msra.mxu0 0
        %6618 = vmatpush.bf16.msra.mxu0 %v6592
        %6619 = vmatpush.bf16.msra.mxu0 %v6591
        %6620 = vmatpush.bf16.msra.mxu0 %v6590
        %6621 = vmatpush.bf16.msra.mxu0 %v6589
        %6622 = vmatmul.bf16.gmra.mxu0 %v6609
        %v6623 = vpop.f32.mrf.mxu0
        %v6624 = vadd.f32 0.0, %v6623
        %v6625 = vpop.f32.mrf.mxu0
        %v6626 = vadd.f32 0.0, %v6625
        %6627 = vmatmul.bf16.gmra.mxu0 %v6612
        %v6628 = vpop.f32.mrf.mxu0
        %v6629 = vadd.f32 0.0, %v6628
        %v6630 = vpop.f32.mrf.mxu0
        %v6631 = vadd.f32 0.0, %v6630
        %6632 = vdwg.mxu0
        %v6633 = vadd.f32 %v6545, %v6624
        %v6634 = vadd.f32 %v6546, %v6626
        %v6635 = vadd.f32 %v6547, %v6629
        %v6636 = vadd.f32 %v6548, %v6631
        %v6637 = vld [vmem:[#allocation31] sm:$0xff]
        %v6638 = vld [vmem:[#allocation31 + $0x8] sm:$0xff]
        %v6639 = vld [vmem:[#allocation31 + $0x10] sm:$0xff]
        %v6640 = vld [vmem:[#allocation31 + $0x18] sm:$0xff]
        %6642 = vset.pattern.permute.xlu0 0
        %6643 = vperm.xlu0 %6642, %v6637
        %v6644 = vpop.permute.xlu0 %6643
        %6647 = vset.pattern.permute.xlu0 0
        %6648 = vperm.xlu0 %6647, %v6638
        %v6649 = vpop.permute.xlu0 %6648
        %6652 = vset.pattern.permute.xlu0 0
        %6653 = vperm.xlu0 %6652, %v6639
        %v6654 = vpop.permute.xlu0 %6653
        %6657 = vset.pattern.permute.xlu0 0
        %6658 = vperm.xlu0 %6657, %v6640
        %v6659 = vpop.permute.xlu0 %6658
        %v6661 = vadd.f32 %v6633, %v6644
        %v6662 = vadd.f32 %v6634, %v6649
        %v6663 = vadd.f32 %v6635, %v6654
        %v6664 = vadd.f32 %v6636, %v6659
        %v6665 = vmax.f32 %v6661, 0.0
        %v6666 = vmax.f32 %v6662, 0.0
        %v6667 = vmax.f32 %v6663, 0.0
        %v6668 = vmax.f32 %v6664, 0.0
        %v6669 = vpack.c.bf16 %v6666, %v6665
        %v6670 = vpack.c.bf16 %v6668, %v6667
        %v6671 = vld [vmem:[#allocation34] sm:$0xf]
        %v6672 = vld [vmem:[#allocation34 + $0x4] sm:$0xf]
        %v6673 = vld [vmem:[#allocation34 + $0x8] sm:$0x3]
        %v6677 = vunpack.c.l.b16 %v6671
        %v6678 = vunpack.c.l.b16 %v6672
        %v6679 = vunpack.c.l.b16 %v6673
        %v6680 = vpack.c.b16 %v6678, %v6677
        %v6681 = vpack.c.b16 %v6679, %v6679
        %v6684 = vsel %vm4119, %v6669, 0
        %v6687 = vsel %vm4119, %v6670, 0
        %v6690 = vsel %vm2099, %v6681, 0
        %6692 = vmatpush.bf16.msra.mxu0 0
        %6693 = vmatpush.bf16.msra.mxu0 0
        %6694 = vmatpush.bf16.msra.mxu0 0
        %6695 = vmatpush.bf16.msra.mxu0 0
        %6696 = vmatpush.bf16.msra.mxu0 0
        %6697 = vmatpush.bf16.msra.mxu0 0
        %6698 = vmatpush.bf16.msra.mxu0 %v6690
        %6699 = vmatpush.bf16.msra.mxu0 %v6680
        %6700 = vmatmul.bf16.gmra.mxu0 %v6684
        %v6701 = vpop.f32.mrf.mxu0
        %v6702 = vadd.f32 0.0, %v6701
        %v6703 = vpop.f32.mrf.mxu0
        %v6704 = vadd.f32 0.0, %v6703
        %6705 = vmatmul.bf16.gmra.mxu0 %v6687
        %v6706 = vpop.f32.mrf.mxu0
        %v6707 = vadd.f32 0.0, %v6706
        %v6708 = vpop.f32.mrf.mxu0
        %v6709 = vadd.f32 0.0, %v6708
        %6710 = vdwg.mxu0
        %v6711 = vpack.c.bf16 %v6704, %v6702
        %v6712 = vpack.c.bf16 %v6709, %v6707
        %v6713 = vld [vmem:[#allocation32] sm:$0xf]
        %v6714 = vld [vmem:[#allocation32 + $0x4] sm:$0xf]
        %s6715 = scalar_lea.vmem [#allocation34], 12
        %v6716 = vld [vmem:[%s6715] sm:$0xf]
        %v6717 = vld [vmem:[%s6715 + $0x4] sm:$0xf]
        %v6718 = vld [vmem:[%s6715 + $0x8] sm:$0x3]
        %v6722 = vunpack.c.l.b16 %v6716
        %v6723 = vunpack.c.l.b16 %v6717
        %v6724 = vunpack.c.l.b16 %v6718
        %v6725 = vpack.c.b16 %v6723, %v6722
        %v6726 = vpack.c.b16 %v6724, %v6724
        %v6729 = vsel %vm2099, %v6726, 0
        %6731 = vmatpush.bf16.msra.mxu0 0
        %6732 = vmatpush.bf16.msra.mxu0 0
        %6733 = vmatpush.bf16.msra.mxu0 0
        %6734 = vmatpush.bf16.msra.mxu0 0
        %6735 = vmatpush.bf16.msra.mxu0 0
        %6736 = vmatpush.bf16.msra.mxu0 0
        %6737 = vmatpush.bf16.msra.mxu0 %v6729
        %6738 = vmatpush.bf16.msra.mxu0 %v6725
        %6739 = vmatmul.bf16.gmra.mxu0 %v6684
        %v6740 = vpop.f32.mrf.mxu0
        %v6741 = vadd.f32 0.0, %v6740
        %v6742 = vpop.f32.mrf.mxu0
        %v6743 = vadd.f32 0.0, %v6742
        %6744 = vmatmul.bf16.gmra.mxu0 %v6687
        %v6745 = vpop.f32.mrf.mxu0
        %v6746 = vadd.f32 0.0, %v6745
        %v6747 = vpop.f32.mrf.mxu0
        %v6748 = vadd.f32 0.0, %v6747
        %6749 = vdwg.mxu0
        %v6750 = vpack.c.bf16 %v6743, %v6741
        %v6751 = vpack.c.bf16 %v6748, %v6746
        %s6752 = scalar_lea.vmem [#allocation32], 8
        %v6753 = vld [vmem:[%s6752] sm:$0xf]
        %v6754 = vld [vmem:[%s6752 + $0x4] sm:$0xf]
        %v6757 = vunpack.c.l.b16 %v6753
        %v6758 = vunpack.c.l.b16 %v6754
        %v6759 = vpack.c.b16 %v6758, %v6757
        %v6761 = vsel %vm2975, %v6759, 0
        %6763 = vmatpush.bf16.msra.mxu0 0
        %6764 = vmatpush.bf16.msra.mxu0 0
        %6765 = vmatpush.bf16.msra.mxu0 0
        %6766 = vmatpush.bf16.msra.mxu0 0
        %6767 = vmatpush.bf16.msra.mxu0 0
        %6768 = vmatpush.bf16.msra.mxu0 0
        %6769 = vmatpush.bf16.msra.mxu0 %v6751
        %6770 = vmatpush.bf16.msra.mxu0 %v6750
        %6771 = vmatmul.bf16.gmra.mxu0 %v6761
        %v6772 = vpop.f32.mrf.mxu0
        %v6773 = vadd.f32 0.0, %v6772
        %v6774 = vpop.f32.mrf.mxu0
        %v6775 = vadd.f32 0.0, %v6774
        %6776 = vdwg.mxu0
        %v6779 = vunpack.c.l.b16 %v6713
        %v6780 = vunpack.c.l.b16 %v6714
        %v6781 = vpack.c.b16 %v6780, %v6779
        %v6783 = vsel %vm2975, %v6781, 0
        %6785 = vmatpush.bf16.msra.mxu0 0
        %6786 = vmatpush.bf16.msra.mxu0 0
        %6787 = vmatpush.bf16.msra.mxu0 0
        %6788 = vmatpush.bf16.msra.mxu0 0
        %6789 = vmatpush.bf16.msra.mxu0 0
        %6790 = vmatpush.bf16.msra.mxu0 0
        %6791 = vmatpush.bf16.msra.mxu0 %v6712
        %6792 = vmatpush.bf16.msra.mxu0 %v6711
        %6793 = vmatmul.bf16.gmra.mxu0 %v6783
        %v6794 = vpop.f32.mrf.mxu0
        %v6795 = vadd.f32 %v6773, %v6794
        %v6796 = vpop.f32.mrf.mxu0
        %v6797 = vadd.f32 %v6775, %v6796
        %6798 = vdwg.mxu0
        %s6799 = scalar_lea.vmem [#allocation34], 24
        %v6800 = vld [vmem:[%s6799] sm:$0xf]
        %v6801 = vld [vmem:[%s6799 + $0x4] sm:$0xf]
        %v6802 = vld [vmem:[%s6799 + $0x8] sm:$0x3]
        %v6806 = vunpack.c.l.b16 %v6800
        %v6807 = vunpack.c.l.b16 %v6801
        %v6808 = vunpack.c.l.b16 %v6802
        %v6809 = vpack.c.b16 %v6807, %v6806
        %v6810 = vpack.c.b16 %v6808, %v6808
        %v6813 = vsel %vm2099, %v6810, 0
        %6815 = vmatpush.bf16.msra.mxu0 0
        %6816 = vmatpush.bf16.msra.mxu0 0
        %6817 = vmatpush.bf16.msra.mxu0 0
        %6818 = vmatpush.bf16.msra.mxu0 0
        %6819 = vmatpush.bf16.msra.mxu0 0
        %6820 = vmatpush.bf16.msra.mxu0 0
        %6821 = vmatpush.bf16.msra.mxu0 %v6813
        %6822 = vmatpush.bf16.msra.mxu0 %v6809
        %6823 = vmatmul.bf16.gmra.mxu0 %v6684
        %v6824 = vpop.f32.mrf.mxu0
        %v6825 = vadd.f32 0.0, %v6824
        %v6826 = vpop.f32.mrf.mxu0
        %v6827 = vadd.f32 0.0, %v6826
        %6828 = vmatmul.bf16.gmra.mxu0 %v6687
        %v6829 = vpop.f32.mrf.mxu0
        %v6830 = vadd.f32 0.0, %v6829
        %v6831 = vpop.f32.mrf.mxu0
        %v6832 = vadd.f32 0.0, %v6831
        %6833 = vdwg.mxu0
        %v6834 = vpack.c.bf16 %v6827, %v6825
        %v6835 = vpack.c.bf16 %v6832, %v6830
        %s6836 = scalar_lea.vmem [#allocation32], 16
        %v6837 = vld [vmem:[%s6836] sm:$0xf]
        %v6838 = vld [vmem:[%s6836 + $0x4] sm:$0xf]
        %v6841 = vunpack.c.l.b16 %v6837
        %v6842 = vunpack.c.l.b16 %v6838
        %v6843 = vpack.c.b16 %v6842, %v6841
        %v6845 = vsel %vm2975, %v6843, 0
        %6847 = vmatpush.bf16.msra.mxu0 0
        %6848 = vmatpush.bf16.msra.mxu0 0
        %6849 = vmatpush.bf16.msra.mxu0 0
        %6850 = vmatpush.bf16.msra.mxu0 0
        %6851 = vmatpush.bf16.msra.mxu0 0
        %6852 = vmatpush.bf16.msra.mxu0 0
        %6853 = vmatpush.bf16.msra.mxu0 %v6835
        %6854 = vmatpush.bf16.msra.mxu0 %v6834
        %6855 = vmatmul.bf16.gmra.mxu0 %v6845
        %v6856 = vpop.f32.mrf.mxu0
        %v6857 = vadd.f32 0.0, %v6856
        %v6858 = vpop.f32.mrf.mxu0
        %v6859 = vadd.f32 0.0, %v6858
        %6860 = vdwg.mxu0
        %v6861 = vadd.f32 %v6795, %v6857
        %v6862 = vadd.f32 %v6797, %v6859
        %s6863 = scalar_lea.vmem [#allocation34], 36
        %v6864 = vld [vmem:[%s6863] sm:$0xf]
        %v6865 = vld [vmem:[%s6863 + $0x4] sm:$0xf]
        %v6866 = vld [vmem:[%s6863 + $0x8] sm:$0x3]
        %v6870 = vunpack.c.l.b16 %v6864
        %v6871 = vunpack.c.l.b16 %v6865
        %v6872 = vunpack.c.l.b16 %v6866
        %v6873 = vpack.c.b16 %v6871, %v6870
        %v6874 = vpack.c.b16 %v6872, %v6872
        %v6877 = vsel %vm2099, %v6874, 0
        %6879 = vmatpush.bf16.msra.mxu0 0
        %6880 = vmatpush.bf16.msra.mxu0 0
        %6881 = vmatpush.bf16.msra.mxu0 0
        %6882 = vmatpush.bf16.msra.mxu0 0
        %6883 = vmatpush.bf16.msra.mxu0 0
        %6884 = vmatpush.bf16.msra.mxu0 0
        %6885 = vmatpush.bf16.msra.mxu0 %v6877
        %6886 = vmatpush.bf16.msra.mxu0 %v6873
        %6887 = vmatmul.bf16.gmra.mxu0 %v6684
        %v6888 = vpop.f32.mrf.mxu0
        %v6889 = vadd.f32 0.0, %v6888
        %v6890 = vpop.f32.mrf.mxu0
        %v6891 = vadd.f32 0.0, %v6890
        %6892 = vmatmul.bf16.gmra.mxu0 %v6687
        %v6893 = vpop.f32.mrf.mxu0
        %v6894 = vadd.f32 0.0, %v6893
        %v6895 = vpop.f32.mrf.mxu0
        %v6896 = vadd.f32 0.0, %v6895
        %6897 = vdwg.mxu0
        %v6898 = vpack.c.bf16 %v6891, %v6889
        %v6899 = vpack.c.bf16 %v6896, %v6894
        %s6900 = scalar_lea.vmem [#allocation32], 24
        %v6901 = vld [vmem:[%s6900] sm:$0xf]
        %v6902 = vld [vmem:[%s6900 + $0x4] sm:$0xf]
        %v6905 = vunpack.c.l.b16 %v6901
        %v6906 = vunpack.c.l.b16 %v6902
        %v6907 = vpack.c.b16 %v6906, %v6905
        %v6909 = vsel %vm2975, %v6907, 0
        %6911 = vmatpush.bf16.msra.mxu0 0
        %6912 = vmatpush.bf16.msra.mxu0 0
        %6913 = vmatpush.bf16.msra.mxu0 0
        %6914 = vmatpush.bf16.msra.mxu0 0
        %6915 = vmatpush.bf16.msra.mxu0 0
        %6916 = vmatpush.bf16.msra.mxu0 0
        %6917 = vmatpush.bf16.msra.mxu0 %v6899
        %6918 = vmatpush.bf16.msra.mxu0 %v6898
        %6919 = vmatmul.bf16.gmra.mxu0 %v6909
        %v6920 = vpop.f32.mrf.mxu0
        %v6921 = vadd.f32 0.0, %v6920
        %v6922 = vpop.f32.mrf.mxu0
        %v6923 = vadd.f32 0.0, %v6922
        %6924 = vdwg.mxu0
        %v6925 = vadd.f32 %v6861, %v6921
        %v6926 = vadd.f32 %v6862, %v6923
        %v6927 = vld [vmem:[#allocation35] sm:$0xff]
        %v6928 = vld [vmem:[#allocation35 + $0x8] sm:$0xff]
        %6930 = vset.pattern.permute.xlu0 0
        %6931 = vperm.xlu0 %6930, %v6927
        %v6932 = vpop.permute.xlu0 %6931
        %6935 = vset.pattern.permute.xlu0 0
        %6936 = vperm.xlu0 %6935, %v6928
        %v6937 = vpop.permute.xlu0 %6936
        %v6939 = vadd.f32 %v6925, %v6932
        %v6940 = vadd.f32 %v6926, %v6937
        %v6941 = vmax.f32 %v6939, 0.0
        %v6942 = vmax.f32 %v6940, 0.0
        %v6943 = vpack.c.bf16 %v6942, %v6941
        %v6944 = vld [vmem:[#allocation37] sm:$0xf]
        %v6945 = vld [vmem:[#allocation37 + $0x4] sm:$0xf]
        %v6946 = vld [vmem:[#allocation37 + $0x8] sm:$0xf]
        %v6947 = vld [vmem:[#allocation37 + $0xc] sm:$0xf]
        %v6948 = vld [vmem:[#allocation37 + $0x10] sm:$0xf]
        %v6954 = vunpack.c.l.b16 %v6944
        %v6955 = vunpack.c.l.b16 %v6945
        %v6956 = vunpack.c.l.b16 %v6946
        %v6957 = vunpack.c.l.b16 %v6947
        %v6958 = vunpack.c.l.b16 %v6948
        %v6959 = vpack.c.b16 %v6955, %v6954
        %v6960 = vpack.c.b16 %v6957, %v6956
        %v6961 = vpack.c.b16 %v6958, %v6958
        %v6965 = vsel %vm3786, %v6943, 0
        %v6968 = vsel %vm3546, %v6961, 0
        %6970 = vmatpush.bf16.msra.mxu0 0
        %6971 = vmatpush.bf16.msra.mxu0 0
        %6972 = vmatpush.bf16.msra.mxu0 0
        %6973 = vmatpush.bf16.msra.mxu0 0
        %6974 = vmatpush.bf16.msra.mxu0 0
        %6975 = vmatpush.bf16.msra.mxu0 %v6968
        %6976 = vmatpush.bf16.msra.mxu0 %v6960
        %6977 = vmatpush.bf16.msra.mxu0 %v6959
        %6978 = vmatmul.bf16.gmra.mxu0 %v6965
        %v6979 = vpop.f32.mrf.mxu0
        %v6980 = vadd.f32 0.0, %v6979
        %v6981 = vpop.f32.mrf.mxu0
        %v6982 = vadd.f32 0.0, %v6981
        %6983 = vdwg.mxu0
        %v6984 = vpack.c.bf16 %v6982, %v6980
        %v6985 = vld [vmem:[%s45] sm:$0xf]
        %s6986 = scalar_lea.vmem [#allocation37], 20
        %v6987 = vld [vmem:[%s6986] sm:$0xf]
        %v6988 = vld [vmem:[%s6986 + $0x4] sm:$0xf]
        %v6989 = vld [vmem:[%s6986 + $0x8] sm:$0xf]
        %v6990 = vld [vmem:[%s6986 + $0xc] sm:$0xf]
        %v6991 = vld [vmem:[%s6986 + $0x10] sm:$0xf]
        %v6997 = vunpack.c.l.b16 %v6987
        %v6998 = vunpack.c.l.b16 %v6988
        %v6999 = vunpack.c.l.b16 %v6989
        %v7000 = vunpack.c.l.b16 %v6990
        %v7001 = vunpack.c.l.b16 %v6991
        %v7002 = vpack.c.b16 %v6998, %v6997
        %v7003 = vpack.c.b16 %v7000, %v6999
        %v7004 = vpack.c.b16 %v7001, %v7001
        %v7008 = vsel %vm3546, %v7004, 0
        %7010 = vmatpush.bf16.msra.mxu0 0
        %7011 = vmatpush.bf16.msra.mxu0 0
        %7012 = vmatpush.bf16.msra.mxu0 0
        %7013 = vmatpush.bf16.msra.mxu0 0
        %7014 = vmatpush.bf16.msra.mxu0 0
        %7015 = vmatpush.bf16.msra.mxu0 %v7008
        %7016 = vmatpush.bf16.msra.mxu0 %v7003
        %7017 = vmatpush.bf16.msra.mxu0 %v7002
        %7018 = vmatmul.bf16.gmra.mxu0 %v6965
        %v7019 = vpop.f32.mrf.mxu0
        %v7020 = vadd.f32 0.0, %v7019
        %v7021 = vpop.f32.mrf.mxu0
        %v7022 = vadd.f32 0.0, %v7021
        %7023 = vdwg.mxu0
        %v7024 = vpack.c.bf16 %v7022, %v7020
        %s7025 = scalar_lea.vmem %s45, 4
        %v7026 = vld [vmem:[%s7025] sm:$0xf]
        %v7028 = vsel %vm3866, %v7026, 0
        %7030 = vmatpush.bf16.msra.mxu0 0
        %7031 = vmatpush.bf16.msra.mxu0 0
        %7032 = vmatpush.bf16.msra.mxu0 0
        %7033 = vmatpush.bf16.msra.mxu0 0
        %7034 = vmatpush.bf16.msra.mxu0 0
        %7035 = vmatpush.bf16.msra.mxu0 0
        %7036 = vmatpush.bf16.msra.mxu0 0
        %7037 = vmatpush.bf16.msra.mxu0 %v7024
        %7038 = vmatmul.bf16.gmra.mxu0 %v7028
        %v7039 = vpop.f32.mrf.mxu0
        %v7040 = vadd.f32 0.0, %v7039
        %v7041 = vpop.f32.mrf.mxu0
        %7042 = vdwg.mxu0
        %v7044 = vsel %vm3866, %v6985, 0
        %7046 = vmatpush.bf16.msra.mxu0 0
        %7047 = vmatpush.bf16.msra.mxu0 0
        %7048 = vmatpush.bf16.msra.mxu0 0
        %7049 = vmatpush.bf16.msra.mxu0 0
        %7050 = vmatpush.bf16.msra.mxu0 0
        %7051 = vmatpush.bf16.msra.mxu0 0
        %7052 = vmatpush.bf16.msra.mxu0 0
        %7053 = vmatpush.bf16.msra.mxu0 %v6984
        %7054 = vmatmul.bf16.gmra.mxu0 %v7044
        %v7055 = vpop.f32.mrf.mxu0
        %v7056 = vadd.f32 %v7040, %v7055
        %v7057 = vpop.f32.mrf.mxu0
        %7058 = vdwg.mxu0
        %s7059 = scalar_lea.vmem [#allocation37], 40
        %v7060 = vld [vmem:[%s7059] sm:$0xf]
        %v7061 = vld [vmem:[%s7059 + $0x4] sm:$0xf]
        %v7062 = vld [vmem:[%s7059 + $0x8] sm:$0xf]
        %v7063 = vld [vmem:[%s7059 + $0xc] sm:$0xf]
        %v7064 = vld [vmem:[%s7059 + $0x10] sm:$0xf]
        %v7070 = vunpack.c.l.b16 %v7060
        %v7071 = vunpack.c.l.b16 %v7061
        %v7072 = vunpack.c.l.b16 %v7062
        %v7073 = vunpack.c.l.b16 %v7063
        %v7074 = vunpack.c.l.b16 %v7064
        %v7075 = vpack.c.b16 %v7071, %v7070
        %v7076 = vpack.c.b16 %v7073, %v7072
        %v7077 = vpack.c.b16 %v7074, %v7074
        %v7081 = vsel %vm3546, %v7077, 0
        %7083 = vmatpush.bf16.msra.mxu0 0
        %7084 = vmatpush.bf16.msra.mxu0 0
        %7085 = vmatpush.bf16.msra.mxu0 0
        %7086 = vmatpush.bf16.msra.mxu0 0
        %7087 = vmatpush.bf16.msra.mxu0 0
        %7088 = vmatpush.bf16.msra.mxu0 %v7081
        %7089 = vmatpush.bf16.msra.mxu0 %v7076
        %7090 = vmatpush.bf16.msra.mxu0 %v7075
        %7091 = vmatmul.bf16.gmra.mxu0 %v6965
        %v7092 = vpop.f32.mrf.mxu0
        %v7093 = vadd.f32 0.0, %v7092
        %v7094 = vpop.f32.mrf.mxu0
        %v7095 = vadd.f32 0.0, %v7094
        %7096 = vdwg.mxu0
        %v7097 = vpack.c.bf16 %v7095, %v7093
        %s7098 = scalar_lea.vmem %s45, 8
        %v7099 = vld [vmem:[%s7098] sm:$0xf]
        %v7101 = vsel %vm3866, %v7099, 0
        %7103 = vmatpush.bf16.msra.mxu0 0
        %7104 = vmatpush.bf16.msra.mxu0 0
        %7105 = vmatpush.bf16.msra.mxu0 0
        %7106 = vmatpush.bf16.msra.mxu0 0
        %7107 = vmatpush.bf16.msra.mxu0 0
        %7108 = vmatpush.bf16.msra.mxu0 0
        %7109 = vmatpush.bf16.msra.mxu0 0
        %7110 = vmatpush.bf16.msra.mxu0 %v7097
        %7111 = vmatmul.bf16.gmra.mxu0 %v7101
        %v7112 = vpop.f32.mrf.mxu0
        %v7113 = vadd.f32 0.0, %v7112
        %v7114 = vpop.f32.mrf.mxu0
        %7115 = vdwg.mxu0
        %v7116 = vadd.f32 %v7056, %v7113
        %s7117 = scalar_lea.vmem [#allocation37], 60
        %v7118 = vld [vmem:[%s7117] sm:$0xf]
        %v7119 = vld [vmem:[%s7117 + $0x4] sm:$0xf]
        %v7120 = vld [vmem:[%s7117 + $0x8] sm:$0xf]
        %v7121 = vld [vmem:[%s7117 + $0xc] sm:$0xf]
        %v7122 = vld [vmem:[%s7117 + $0x10] sm:$0xf]
        %v7128 = vunpack.c.l.b16 %v7118
        %v7129 = vunpack.c.l.b16 %v7119
        %v7130 = vunpack.c.l.b16 %v7120
        %v7131 = vunpack.c.l.b16 %v7121
        %v7132 = vunpack.c.l.b16 %v7122
        %v7133 = vpack.c.b16 %v7129, %v7128
        %v7134 = vpack.c.b16 %v7131, %v7130
        %v7135 = vpack.c.b16 %v7132, %v7132
        %v7139 = vsel %vm3546, %v7135, 0
        %7141 = vmatpush.bf16.msra.mxu0 0
        %7142 = vmatpush.bf16.msra.mxu0 0
        %7143 = vmatpush.bf16.msra.mxu0 0
        %7144 = vmatpush.bf16.msra.mxu0 0
        %7145 = vmatpush.bf16.msra.mxu0 0
        %7146 = vmatpush.bf16.msra.mxu0 %v7139
        %7147 = vmatpush.bf16.msra.mxu0 %v7134
        %7148 = vmatpush.bf16.msra.mxu0 %v7133
        %7149 = vmatmul.bf16.gmra.mxu0 %v6965
        %v7150 = vpop.f32.mrf.mxu0
        %v7151 = vadd.f32 0.0, %v7150
        %v7152 = vpop.f32.mrf.mxu0
        %v7153 = vadd.f32 0.0, %v7152
        %7154 = vdwg.mxu0
        %v7155 = vpack.c.bf16 %v7153, %v7151
        %s7156 = scalar_lea.vmem %s45, 12
        %v7157 = vld [vmem:[%s7156] sm:$0xf]
        %v7159 = vsel %vm3866, %v7157, 0
        %7161 = vmatpush.bf16.msra.mxu0 0
        %7162 = vmatpush.bf16.msra.mxu0 0
        %7163 = vmatpush.bf16.msra.mxu0 0
        %7164 = vmatpush.bf16.msra.mxu0 0
        %7165 = vmatpush.bf16.msra.mxu0 0
        %7166 = vmatpush.bf16.msra.mxu0 0
        %7167 = vmatpush.bf16.msra.mxu0 0
        %7168 = vmatpush.bf16.msra.mxu0 %v7155
        %7169 = vmatmul.bf16.gmra.mxu0 %v7159
        %v7170 = vpop.f32.mrf.mxu0
        %v7171 = vadd.f32 0.0, %v7170
        %v7172 = vpop.f32.mrf.mxu0
        %7173 = vdwg.mxu0
        %v7174 = vadd.f32 %v7116, %v7171
        %v7175 = vld [vmem:[#allocation38] sm:$0xff]
        %7177 = vset.pattern.permute.xlu0 0
        %7178 = vperm.xlu0 %7177, %v7175
        %v7179 = vpop.permute.xlu0 %7178
        %v7181 = vadd.f32 %v7174, %v7179
        %v7182 = vmax.f32 %v7181, 0.0
        %v7183 = vpack.c.bf16 %v7182, %v7182
        %v7184 = vld [vmem:[#allocation41] sm:$0xff]
        %v7185 = vld [vmem:[#allocation41 + $0x8] sm:$0xff]
        %v7186 = vld [vmem:[#allocation41 + $0x10] sm:$0xff]
        %v7187 = vld [vmem:[#allocation41 + $0x18] sm:$0xff]
        %v7188 = vld [vmem:[#allocation41 + $0x20] sm:$0xff]
        %v7189 = vld [vmem:[#allocation41 + $0x28] sm:$0xff]
        %v7190 = vld [vmem:[#allocation41 + $0x30] sm:$0xff]
        %v7191 = vld [vmem:[#allocation41 + $0x38] sm:$0xff]
        %v7192 = vld [vmem:[#allocation41 + $0x40] sm:$0xff]
        %v7193 = vld [vmem:[#allocation41 + $0x48] sm:$0xff]
        %v7204 = vunpack.c.l.b16 %v7184
        %v7205 = vunpack.c.h.b16 %v7184
        %v7206 = vunpack.c.l.b16 %v7185
        %v7207 = vunpack.c.h.b16 %v7185
        %v7208 = vunpack.c.l.b16 %v7186
        %v7209 = vunpack.c.h.b16 %v7186
        %v7210 = vunpack.c.l.b16 %v7187
        %v7211 = vunpack.c.h.b16 %v7187
        %v7212 = vunpack.c.l.b16 %v7188
        %v7213 = vunpack.c.h.b16 %v7188
        %v7214 = vunpack.c.l.b16 %v7189
        %v7215 = vunpack.c.h.b16 %v7189
        %v7216 = vunpack.c.l.b16 %v7190
        %v7217 = vunpack.c.h.b16 %v7190
        %v7218 = vunpack.c.l.b16 %v7191
        %v7219 = vunpack.c.h.b16 %v7191
        %v7220 = vunpack.c.l.b16 %v7192
        %v7221 = vunpack.c.h.b16 %v7192
        %v7222 = vunpack.c.l.b16 %v7193
        %v7223 = vunpack.c.h.b16 %v7193
        %v7224 = vpack.c.b16 %v7206, %v7204
        %v7225 = vpack.c.b16 %v7207, %v7205
        %v7226 = vpack.c.b16 %v7210, %v7208
        %v7227 = vpack.c.b16 %v7211, %v7209
        %v7228 = vpack.c.b16 %v7214, %v7212
        %v7229 = vpack.c.b16 %v7215, %v7213
        %v7230 = vpack.c.b16 %v7218, %v7216
        %v7231 = vpack.c.b16 %v7219, %v7217
        %v7232 = vpack.c.b16 %v7222, %v7220
        %v7233 = vpack.c.b16 %v7223, %v7221
        %v7245 = vsel %vm3459, %v7183, 0
        %7247 = vmatpush.bf16.msra.mxu0 0
        %7248 = vmatpush.bf16.msra.mxu0 0
        %7249 = vmatpush.bf16.msra.mxu0 0
        %7250 = vmatpush.bf16.msra.mxu0 %v7232
        %7251 = vmatpush.bf16.msra.mxu0 %v7230
        %7252 = vmatpush.bf16.msra.mxu0 %v7228
        %7253 = vmatpush.bf16.msra.mxu0 %v7226
        %7254 = vmatpush.bf16.msra.mxu0 %v7224
        %7255 = vmatmul.bf16.gmra.mxu0 %v7245
        %v7256 = vpop.f32.mrf.mxu0
        %v7257 = vadd.f32 0.0, %v7256
        %v7258 = vpop.f32.mrf.mxu0
        %7259 = vdwg.mxu0
        %7260 = vmatpush.bf16.msra.mxu0 0
        %7261 = vmatpush.bf16.msra.mxu0 0
        %7262 = vmatpush.bf16.msra.mxu0 0
        %7263 = vmatpush.bf16.msra.mxu0 %v7233
        %7264 = vmatpush.bf16.msra.mxu0 %v7231
        %7265 = vmatpush.bf16.msra.mxu0 %v7229
        %7266 = vmatpush.bf16.msra.mxu0 %v7227
        %7267 = vmatpush.bf16.msra.mxu0 %v7225
        %7268 = vmatmul.bf16.gmra.mxu0 %v7245
        %v7269 = vpop.f32.mrf.mxu0
        %v7270 = vadd.f32 0.0, %v7269
        %v7271 = vpop.f32.mrf.mxu0
        %7272 = vdwg.mxu0
        %v7273 = vpack.c.bf16 %v7257, %v7257
        %v7274 = vpack.c.bf16 %v7270, %v7270
        %v7275 = vld [vmem:[#allocation40] sm:$0x3]
        %s7276 = scalar_lea.vmem [#allocation41], 80
        %v7277 = vld [vmem:[%s7276] sm:$0xff]
        %v7278 = vld [vmem:[%s7276 + $0x8] sm:$0xff]
        %v7279 = vld [vmem:[%s7276 + $0x10] sm:$0xff]
        %v7280 = vld [vmem:[%s7276 + $0x18] sm:$0xff]
        %v7281 = vld [vmem:[%s7276 + $0x20] sm:$0xff]
        %v7282 = vld [vmem:[%s7276 + $0x28] sm:$0xff]
        %v7283 = vld [vmem:[%s7276 + $0x30] sm:$0xff]
        %v7284 = vld [vmem:[%s7276 + $0x38] sm:$0xff]
        %v7285 = vld [vmem:[%s7276 + $0x40] sm:$0xff]
        %v7286 = vld [vmem:[%s7276 + $0x48] sm:$0xff]
        %v7297 = vunpack.c.l.b16 %v7277
        %v7298 = vunpack.c.h.b16 %v7277
        %v7299 = vunpack.c.l.b16 %v7278
        %v7300 = vunpack.c.h.b16 %v7278
        %v7301 = vunpack.c.l.b16 %v7279
        %v7302 = vunpack.c.h.b16 %v7279
        %v7303 = vunpack.c.l.b16 %v7280
        %v7304 = vunpack.c.h.b16 %v7280
        %v7305 = vunpack.c.l.b16 %v7281
        %v7306 = vunpack.c.h.b16 %v7281
        %v7307 = vunpack.c.l.b16 %v7282
        %v7308 = vunpack.c.h.b16 %v7282
        %v7309 = vunpack.c.l.b16 %v7283
        %v7310 = vunpack.c.h.b16 %v7283
        %v7311 = vunpack.c.l.b16 %v7284
        %v7312 = vunpack.c.h.b16 %v7284
        %v7313 = vunpack.c.l.b16 %v7285
        %v7314 = vunpack.c.h.b16 %v7285
        %v7315 = vunpack.c.l.b16 %v7286
        %v7316 = vunpack.c.h.b16 %v7286
        %v7317 = vpack.c.b16 %v7299, %v7297
        %v7318 = vpack.c.b16 %v7300, %v7298
        %v7319 = vpack.c.b16 %v7303, %v7301
        %v7320 = vpack.c.b16 %v7304, %v7302
        %v7321 = vpack.c.b16 %v7307, %v7305
        %v7322 = vpack.c.b16 %v7308, %v7306
        %v7323 = vpack.c.b16 %v7311, %v7309
        %v7324 = vpack.c.b16 %v7312, %v7310
        %v7325 = vpack.c.b16 %v7315, %v7313
        %v7326 = vpack.c.b16 %v7316, %v7314
        %7337 = vmatpush.bf16.msra.mxu0 0
        %7338 = vmatpush.bf16.msra.mxu0 0
        %7339 = vmatpush.bf16.msra.mxu0 0
        %7340 = vmatpush.bf16.msra.mxu0 %v7325
        %7341 = vmatpush.bf16.msra.mxu0 %v7323
        %7342 = vmatpush.bf16.msra.mxu0 %v7321
        %7343 = vmatpush.bf16.msra.mxu0 %v7319
        %7344 = vmatpush.bf16.msra.mxu0 %v7317
        %7345 = vmatmul.bf16.gmra.mxu0 %v7245
        %v7346 = vpop.f32.mrf.mxu0
        %v7347 = vadd.f32 0.0, %v7346
        %v7348 = vpop.f32.mrf.mxu0
        %7349 = vdwg.mxu0
        %7350 = vmatpush.bf16.msra.mxu0 0
        %7351 = vmatpush.bf16.msra.mxu0 0
        %7352 = vmatpush.bf16.msra.mxu0 0
        %7353 = vmatpush.bf16.msra.mxu0 %v7326
        %7354 = vmatpush.bf16.msra.mxu0 %v7324
        %7355 = vmatpush.bf16.msra.mxu0 %v7322
        %7356 = vmatpush.bf16.msra.mxu0 %v7320
        %7357 = vmatpush.bf16.msra.mxu0 %v7318
        %7358 = vmatmul.bf16.gmra.mxu0 %v7245
        %v7359 = vpop.f32.mrf.mxu0
        %v7360 = vadd.f32 0.0, %v7359
        %v7361 = vpop.f32.mrf.mxu0
        %7362 = vdwg.mxu0
        %v7363 = vpack.c.bf16 %v7347, %v7347
        %v7364 = vpack.c.bf16 %v7360, %v7360
        %s7365 = scalar_lea.vmem [#allocation40], 2
        %v7366 = vld [vmem:[%s7365] sm:$0x3]
        %v7368 = vsel %vm3542, %v7366, 0
        %v7371 = vsel %vm3546, %v7363, 0
        %v7374 = vsel %vm3546, %v7364, 0
        %7376 = vmatpush.bf16.msra.mxu0 0
        %7377 = vmatpush.bf16.msra.mxu0 0
        %7378 = vmatpush.bf16.msra.mxu0 0
        %7379 = vmatpush.bf16.msra.mxu0 0
        %7380 = vmatpush.bf16.msra.mxu0 0
        %7381 = vmatpush.bf16.msra.mxu0 0
        %7382 = vmatpush.bf16.msra.mxu0 0
        %7383 = vmatpush.bf16.msra.mxu0 %v7371
        %7384 = vmatmul.bf16.gmra.mxu0 %v7368
        %v7385 = vpop.f32.mrf.mxu0
        %v7386 = vadd.f32 0.0, %v7385
        %v7387 = vpop.f32.mrf.mxu0
        %7388 = vdwg.mxu0
        %7389 = vmatpush.bf16.msra.mxu0 0
        %7390 = vmatpush.bf16.msra.mxu0 0
        %7391 = vmatpush.bf16.msra.mxu0 0
        %7392 = vmatpush.bf16.msra.mxu0 0
        %7393 = vmatpush.bf16.msra.mxu0 0
        %7394 = vmatpush.bf16.msra.mxu0 0
        %7395 = vmatpush.bf16.msra.mxu0 0
        %7396 = vmatpush.bf16.msra.mxu0 %v7374
        %7397 = vmatmul.bf16.gmra.mxu0 %v7368
        %v7398 = vpop.f32.mrf.mxu0
        %v7399 = vadd.f32 0.0, %v7398
        %v7400 = vpop.f32.mrf.mxu0
        %7401 = vdwg.mxu0
        %v7403 = vsel %vm3542, %v7275, 0
        %v7406 = vsel %vm3546, %v7273, 0
        %v7409 = vsel %vm3546, %v7274, 0
        %7411 = vmatpush.bf16.msra.mxu0 0
        %7412 = vmatpush.bf16.msra.mxu0 0
        %7413 = vmatpush.bf16.msra.mxu0 0
        %7414 = vmatpush.bf16.msra.mxu0 0
        %7415 = vmatpush.bf16.msra.mxu0 0
        %7416 = vmatpush.bf16.msra.mxu0 0
        %7417 = vmatpush.bf16.msra.mxu0 0
        %7418 = vmatpush.bf16.msra.mxu0 %v7406
        %7419 = vmatmul.bf16.gmra.mxu0 %v7403
        %v7420 = vpop.f32.mrf.mxu0
        %v7421 = vadd.f32 %v7386, %v7420
        %v7422 = vpop.f32.mrf.mxu0
        %7423 = vdwg.mxu0
        %7424 = vmatpush.bf16.msra.mxu0 0
        %7425 = vmatpush.bf16.msra.mxu0 0
        %7426 = vmatpush.bf16.msra.mxu0 0
        %7427 = vmatpush.bf16.msra.mxu0 0
        %7428 = vmatpush.bf16.msra.mxu0 0
        %7429 = vmatpush.bf16.msra.mxu0 0
        %7430 = vmatpush.bf16.msra.mxu0 0
        %7431 = vmatpush.bf16.msra.mxu0 %v7409
        %7432 = vmatmul.bf16.gmra.mxu0 %v7403
        %v7433 = vpop.f32.mrf.mxu0
        %v7434 = vadd.f32 %v7399, %v7433
        %v7435 = vpop.f32.mrf.mxu0
        %7436 = vdwg.mxu0
        %s7437 = scalar_lea.vmem [#allocation41], 160
        %v7438 = vld [vmem:[%s7437] sm:$0xff]
        %v7439 = vld [vmem:[%s7437 + $0x8] sm:$0xff]
        %v7440 = vld [vmem:[%s7437 + $0x10] sm:$0xff]
        %v7441 = vld [vmem:[%s7437 + $0x18] sm:$0xff]
        %v7442 = vld [vmem:[%s7437 + $0x20] sm:$0xff]
        %v7443 = vld [vmem:[%s7437 + $0x28] sm:$0xff]
        %v7444 = vld [vmem:[%s7437 + $0x30] sm:$0xff]
        %v7445 = vld [vmem:[%s7437 + $0x38] sm:$0xff]
        %v7446 = vld [vmem:[%s7437 + $0x40] sm:$0xff]
        %v7447 = vld [vmem:[%s7437 + $0x48] sm:$0xff]
        %v7458 = vunpack.c.l.b16 %v7438
        %v7459 = vunpack.c.h.b16 %v7438
        %v7460 = vunpack.c.l.b16 %v7439
        %v7461 = vunpack.c.h.b16 %v7439
        %v7462 = vunpack.c.l.b16 %v7440
        %v7463 = vunpack.c.h.b16 %v7440
        %v7464 = vunpack.c.l.b16 %v7441
        %v7465 = vunpack.c.h.b16 %v7441
        %v7466 = vunpack.c.l.b16 %v7442
        %v7467 = vunpack.c.h.b16 %v7442
        %v7468 = vunpack.c.l.b16 %v7443
        %v7469 = vunpack.c.h.b16 %v7443
        %v7470 = vunpack.c.l.b16 %v7444
        %v7471 = vunpack.c.h.b16 %v7444
        %v7472 = vunpack.c.l.b16 %v7445
        %v7473 = vunpack.c.h.b16 %v7445
        %v7474 = vunpack.c.l.b16 %v7446
        %v7475 = vunpack.c.h.b16 %v7446
        %v7476 = vunpack.c.l.b16 %v7447
        %v7477 = vunpack.c.h.b16 %v7447
        %v7478 = vpack.c.b16 %v7460, %v7458
        %v7479 = vpack.c.b16 %v7461, %v7459
        %v7480 = vpack.c.b16 %v7464, %v7462
        %v7481 = vpack.c.b16 %v7465, %v7463
        %v7482 = vpack.c.b16 %v7468, %v7466
        %v7483 = vpack.c.b16 %v7469, %v7467
        %v7484 = vpack.c.b16 %v7472, %v7470
        %v7485 = vpack.c.b16 %v7473, %v7471
        %v7486 = vpack.c.b16 %v7476, %v7474
        %v7487 = vpack.c.b16 %v7477, %v7475
        %7498 = vmatpush.bf16.msra.mxu0 0
        %7499 = vmatpush.bf16.msra.mxu0 0
        %7500 = vmatpush.bf16.msra.mxu0 0
        %7501 = vmatpush.bf16.msra.mxu0 %v7486
        %7502 = vmatpush.bf16.msra.mxu0 %v7484
        %7503 = vmatpush.bf16.msra.mxu0 %v7482
        %7504 = vmatpush.bf16.msra.mxu0 %v7480
        %7505 = vmatpush.bf16.msra.mxu0 %v7478
        %7506 = vmatmul.bf16.gmra.mxu0 %v7245
        %v7507 = vpop.f32.mrf.mxu0
        %v7508 = vadd.f32 0.0, %v7507
        %v7509 = vpop.f32.mrf.mxu0
        %7510 = vdwg.mxu0
        %7511 = vmatpush.bf16.msra.mxu0 0
        %7512 = vmatpush.bf16.msra.mxu0 0
        %7513 = vmatpush.bf16.msra.mxu0 0
        %7514 = vmatpush.bf16.msra.mxu0 %v7487
        %7515 = vmatpush.bf16.msra.mxu0 %v7485
        %7516 = vmatpush.bf16.msra.mxu0 %v7483
        %7517 = vmatpush.bf16.msra.mxu0 %v7481
        %7518 = vmatpush.bf16.msra.mxu0 %v7479
        %7519 = vmatmul.bf16.gmra.mxu0 %v7245
        %v7520 = vpop.f32.mrf.mxu0
        %v7521 = vadd.f32 0.0, %v7520
        %v7522 = vpop.f32.mrf.mxu0
        %7523 = vdwg.mxu0
        %v7524 = vpack.c.bf16 %v7508, %v7508
        %v7525 = vpack.c.bf16 %v7521, %v7521
        %s7526 = scalar_lea.vmem [#allocation40], 4
        %v7527 = vld [vmem:[%s7526] sm:$0x3]
        %v7529 = vsel %vm3542, %v7527, 0
        %v7532 = vsel %vm3546, %v7524, 0
        %v7535 = vsel %vm3546, %v7525, 0
        %7537 = vmatpush.bf16.msra.mxu0 0
        %7538 = vmatpush.bf16.msra.mxu0 0
        %7539 = vmatpush.bf16.msra.mxu0 0
        %7540 = vmatpush.bf16.msra.mxu0 0
        %7541 = vmatpush.bf16.msra.mxu0 0
        %7542 = vmatpush.bf16.msra.mxu0 0
        %7543 = vmatpush.bf16.msra.mxu0 0
        %7544 = vmatpush.bf16.msra.mxu0 %v7532
        %7545 = vmatmul.bf16.gmra.mxu0 %v7529
        %v7546 = vpop.f32.mrf.mxu0
        %v7547 = vadd.f32 0.0, %v7546
        %v7548 = vpop.f32.mrf.mxu0
        %7549 = vdwg.mxu0
        %7550 = vmatpush.bf16.msra.mxu0 0
        %7551 = vmatpush.bf16.msra.mxu0 0
        %7552 = vmatpush.bf16.msra.mxu0 0
        %7553 = vmatpush.bf16.msra.mxu0 0
        %7554 = vmatpush.bf16.msra.mxu0 0
        %7555 = vmatpush.bf16.msra.mxu0 0
        %7556 = vmatpush.bf16.msra.mxu0 0
        %7557 = vmatpush.bf16.msra.mxu0 %v7535
        %7558 = vmatmul.bf16.gmra.mxu0 %v7529
        %v7559 = vpop.f32.mrf.mxu0
        %v7560 = vadd.f32 0.0, %v7559
        %v7561 = vpop.f32.mrf.mxu0
        %7562 = vdwg.mxu0
        %v7563 = vadd.f32 %v7421, %v7547
        %v7564 = vadd.f32 %v7434, %v7560
        %s7565 = scalar_lea.vmem [#allocation41], 240
        %v7566 = vld [vmem:[%s7565] sm:$0xff]
        %v7567 = vld [vmem:[%s7565 + $0x8] sm:$0xff]
        %v7568 = vld [vmem:[%s7565 + $0x10] sm:$0xff]
        %v7569 = vld [vmem:[%s7565 + $0x18] sm:$0xff]
        %v7570 = vld [vmem:[%s7565 + $0x20] sm:$0xff]
        %v7571 = vld [vmem:[%s7565 + $0x28] sm:$0xff]
        %v7572 = vld [vmem:[%s7565 + $0x30] sm:$0xff]
        %v7573 = vld [vmem:[%s7565 + $0x38] sm:$0xff]
        %v7574 = vld [vmem:[%s7565 + $0x40] sm:$0xff]
        %v7575 = vld [vmem:[%s7565 + $0x48] sm:$0xff]
        %v7586 = vunpack.c.l.b16 %v7566
        %v7587 = vunpack.c.h.b16 %v7566
        %v7588 = vunpack.c.l.b16 %v7567
        %v7589 = vunpack.c.h.b16 %v7567
        %v7590 = vunpack.c.l.b16 %v7568
        %v7591 = vunpack.c.h.b16 %v7568
        %v7592 = vunpack.c.l.b16 %v7569
        %v7593 = vunpack.c.h.b16 %v7569
        %v7594 = vunpack.c.l.b16 %v7570
        %v7595 = vunpack.c.h.b16 %v7570
        %v7596 = vunpack.c.l.b16 %v7571
        %v7597 = vunpack.c.h.b16 %v7571
        %v7598 = vunpack.c.l.b16 %v7572
        %v7599 = vunpack.c.h.b16 %v7572
        %v7600 = vunpack.c.l.b16 %v7573
        %v7601 = vunpack.c.h.b16 %v7573
        %v7602 = vunpack.c.l.b16 %v7574
        %v7603 = vunpack.c.h.b16 %v7574
        %v7604 = vunpack.c.l.b16 %v7575
        %v7605 = vunpack.c.h.b16 %v7575
        %v7606 = vpack.c.b16 %v7588, %v7586
        %v7607 = vpack.c.b16 %v7589, %v7587
        %v7608 = vpack.c.b16 %v7592, %v7590
        %v7609 = vpack.c.b16 %v7593, %v7591
        %v7610 = vpack.c.b16 %v7596, %v7594
        %v7611 = vpack.c.b16 %v7597, %v7595
        %v7612 = vpack.c.b16 %v7600, %v7598
        %v7613 = vpack.c.b16 %v7601, %v7599
        %v7614 = vpack.c.b16 %v7604, %v7602
        %v7615 = vpack.c.b16 %v7605, %v7603
        %7626 = vmatpush.bf16.msra.mxu0 0
        %7627 = vmatpush.bf16.msra.mxu0 0
        %7628 = vmatpush.bf16.msra.mxu0 0
        %7629 = vmatpush.bf16.msra.mxu0 %v7614
        %7630 = vmatpush.bf16.msra.mxu0 %v7612
        %7631 = vmatpush.bf16.msra.mxu0 %v7610
        %7632 = vmatpush.bf16.msra.mxu0 %v7608
        %7633 = vmatpush.bf16.msra.mxu0 %v7606
        %7634 = vmatmul.bf16.gmra.mxu0 %v7245
        %v7635 = vpop.f32.mrf.mxu0
        %v7636 = vadd.f32 0.0, %v7635
        %v7637 = vpop.f32.mrf.mxu0
        %7638 = vdwg.mxu0
        %7639 = vmatpush.bf16.msra.mxu0 0
        %7640 = vmatpush.bf16.msra.mxu0 0
        %7641 = vmatpush.bf16.msra.mxu0 0
        %7642 = vmatpush.bf16.msra.mxu0 %v7615
        %7643 = vmatpush.bf16.msra.mxu0 %v7613
        %7644 = vmatpush.bf16.msra.mxu0 %v7611
        %7645 = vmatpush.bf16.msra.mxu0 %v7609
        %7646 = vmatpush.bf16.msra.mxu0 %v7607
        %7647 = vmatmul.bf16.gmra.mxu0 %v7245
        %v7648 = vpop.f32.mrf.mxu0
        %v7649 = vadd.f32 0.0, %v7648
        %v7650 = vpop.f32.mrf.mxu0
        %7651 = vdwg.mxu0
        %v7652 = vpack.c.bf16 %v7636, %v7636
        %v7653 = vpack.c.bf16 %v7649, %v7649
        %s7654 = scalar_lea.vmem [#allocation40], 6
        %v7655 = vld [vmem:[%s7654] sm:$0x3]
        %v7657 = vsel %vm3542, %v7655, 0
        %v7660 = vsel %vm3546, %v7652, 0
        %v7663 = vsel %vm3546, %v7653, 0
        %7665 = vmatpush.bf16.msra.mxu0 0
        %7666 = vmatpush.bf16.msra.mxu0 0
        %7667 = vmatpush.bf16.msra.mxu0 0
        %7668 = vmatpush.bf16.msra.mxu0 0
        %7669 = vmatpush.bf16.msra.mxu0 0
        %7670 = vmatpush.bf16.msra.mxu0 0
        %7671 = vmatpush.bf16.msra.mxu0 0
        %7672 = vmatpush.bf16.msra.mxu0 %v7660
        %7673 = vmatmul.bf16.gmra.mxu0 %v7657
        %v7674 = vpop.f32.mrf.mxu0
        %v7675 = vadd.f32 0.0, %v7674
        %v7676 = vpop.f32.mrf.mxu0
        %7677 = vdwg.mxu0
        %7678 = vmatpush.bf16.msra.mxu0 0
        %7679 = vmatpush.bf16.msra.mxu0 0
        %7680 = vmatpush.bf16.msra.mxu0 0
        %7681 = vmatpush.bf16.msra.mxu0 0
        %7682 = vmatpush.bf16.msra.mxu0 0
        %7683 = vmatpush.bf16.msra.mxu0 0
        %7684 = vmatpush.bf16.msra.mxu0 0
        %7685 = vmatpush.bf16.msra.mxu0 %v7663
        %7686 = vmatmul.bf16.gmra.mxu0 %v7657
        %v7687 = vpop.f32.mrf.mxu0
        %v7688 = vadd.f32 0.0, %v7687
        %v7689 = vpop.f32.mrf.mxu0
        %7690 = vdwg.mxu0
        %v7691 = vadd.f32 %v7563, %v7675
        %v7692 = vadd.f32 %v7564, %v7688
        %v7693 = vld [vmem:[#allocation43] sm:$0xf]
        %7695 = vset.pattern.permute.xlu0 0
        %7696 = vperm.xlu0 %7695, %v7693
        %v7697 = vpop.permute.xlu0 %7696
        %v7699 = vadd.f32 %v7691, %v7697
        %v7700 = vadd.f32 %v7692, %v7697
        %v7701 = vmax.f32 %v7699, 0.0
        %v7702 = vmax.f32 %v7700, 0.0
        %v7703 = vpack.c.bf16 %v7701, %v7701
        %v7704 = vpack.c.bf16 %v7702, %v7702
        %v7705 = vld [vmem:[#allocation44] sm:$0xff]
        %v7706 = vld [vmem:[#allocation44 + $0x8] sm:$0xf]
        %v7707 = vld [vmem:[#allocation44 + $0xc] sm:$0xff]
        %v7708 = vld [vmem:[#allocation44 + $0x14] sm:$0xf]
        %v7709 = vld [vmem:[#allocation44 + $0x18] sm:$0xff]
        %v7710 = vld [vmem:[#allocation44 + $0x20] sm:$0xf]
        %v7711 = vld [vmem:[#allocation44 + $0x24] sm:$0xff]
        %v7712 = vld [vmem:[#allocation44 + $0x2c] sm:$0xf]
        %v7713 = vld [vmem:[#allocation44 + $0x30] sm:$0xff]
        %v7714 = vld [vmem:[#allocation44 + $0x38] sm:$0xf]
        %v7715 = vld [vmem:[#allocation44 + $0x3c] sm:$0xff]
        %v7716 = vld [vmem:[#allocation44 + $0x44] sm:$0xf]
        %v7717 = vld [vmem:[#allocation44 + $0x48] sm:$0xff]
        %v7718 = vld [vmem:[#allocation44 + $0x50] sm:$0xf]
        %v7719 = vld [vmem:[#allocation44 + $0x54] sm:$0xff]
        %v7720 = vld [vmem:[#allocation44 + $0x5c] sm:$0xf]
        %v7721 = vld [vmem:[#allocation44 + $0x60] sm:$0xff]
        %v7722 = vld [vmem:[#allocation44 + $0x68] sm:$0xf]
        %v7723 = vld [vmem:[#allocation44 + $0x6c] sm:$0xff]
        %v7724 = vld [vmem:[#allocation44 + $0x74] sm:$0xf]
        %v7725 = vld [vmem:[#allocation44 + $0x78] sm:$0xff]
        %v7726 = vld [vmem:[#allocation44 + $0x80] sm:$0xf]
        %v7727 = vld [vmem:[#allocation44 + $0x84] sm:$0xff]
        %v7728 = vld [vmem:[#allocation44 + $0x8c] sm:$0xf]
        %v7729 = vld [vmem:[#allocation44 + $0x90] sm:$0xff]
        %v7730 = vld [vmem:[#allocation44 + $0x98] sm:$0xf]
        %v7731 = vld [vmem:[#allocation44 + $0x9c] sm:$0xff]
        %v7732 = vld [vmem:[#allocation44 + $0xa4] sm:$0xf]
        %v7733 = vld [vmem:[#allocation44 + $0xa8] sm:$0xff]
        %v7734 = vld [vmem:[#allocation44 + $0xb0] sm:$0xf]
        %v7735 = vld [vmem:[#allocation44 + $0xb4] sm:$0xff]
        %v7736 = vld [vmem:[#allocation44 + $0xbc] sm:$0xf]
        %v7737 = vld [vmem:[#allocation44 + $0xc0] sm:$0xff]
        %v7738 = vld [vmem:[#allocation44 + $0xc8] sm:$0xf]
        %v7739 = vld [vmem:[#allocation44 + $0xcc] sm:$0xff]
        %v7740 = vld [vmem:[#allocation44 + $0xd4] sm:$0xf]
        %v7741 = vld [vmem:[#allocation44 + $0xd8] sm:$0xff]
        %v7742 = vld [vmem:[#allocation44 + $0xe0] sm:$0xf]
        %v7743 = vld [vmem:[#allocation44 + $0xe4] sm:$0xff]
        %v7744 = vld [vmem:[#allocation44 + $0xec] sm:$0xf]
        %v7785 = vunpack.c.l.b16 %v7705
        %v7786 = vunpack.c.h.b16 %v7705
        %v7787 = vunpack.c.l.b16 %v7706
        %v7788 = vunpack.c.l.b16 %v7707
        %v7789 = vunpack.c.h.b16 %v7707
        %v7790 = vunpack.c.l.b16 %v7708
        %v7791 = vunpack.c.l.b16 %v7709
        %v7792 = vunpack.c.h.b16 %v7709
        %v7793 = vunpack.c.l.b16 %v7710
        %v7794 = vunpack.c.l.b16 %v7711
        %v7795 = vunpack.c.h.b16 %v7711
        %v7796 = vunpack.c.l.b16 %v7712
        %v7797 = vunpack.c.l.b16 %v7713
        %v7798 = vunpack.c.h.b16 %v7713
        %v7799 = vunpack.c.l.b16 %v7714
        %v7800 = vunpack.c.l.b16 %v7715
        %v7801 = vunpack.c.h.b16 %v7715
        %v7802 = vunpack.c.l.b16 %v7716
        %v7803 = vunpack.c.l.b16 %v7717
        %v7804 = vunpack.c.h.b16 %v7717
        %v7805 = vunpack.c.l.b16 %v7718
        %v7806 = vunpack.c.l.b16 %v7719
        %v7807 = vunpack.c.h.b16 %v7719
        %v7808 = vunpack.c.l.b16 %v7720
        %v7809 = vunpack.c.l.b16 %v7721
        %v7810 = vunpack.c.h.b16 %v7721
        %v7811 = vunpack.c.l.b16 %v7722
        %v7812 = vunpack.c.l.b16 %v7723
        %v7813 = vunpack.c.h.b16 %v7723
        %v7814 = vunpack.c.l.b16 %v7724
        %v7815 = vunpack.c.l.b16 %v7725
        %v7816 = vunpack.c.h.b16 %v7725
        %v7817 = vunpack.c.l.b16 %v7726
        %v7818 = vunpack.c.l.b16 %v7727
        %v7819 = vunpack.c.h.b16 %v7727
        %v7820 = vunpack.c.l.b16 %v7728
        %v7821 = vunpack.c.l.b16 %v7729
        %v7822 = vunpack.c.h.b16 %v7729
        %v7823 = vunpack.c.l.b16 %v7730
        %v7824 = vunpack.c.l.b16 %v7731
        %v7825 = vunpack.c.h.b16 %v7731
        %v7826 = vunpack.c.l.b16 %v7732
        %v7827 = vunpack.c.l.b16 %v7733
        %v7828 = vunpack.c.h.b16 %v7733
        %v7829 = vunpack.c.l.b16 %v7734
        %v7830 = vunpack.c.l.b16 %v7735
        %v7831 = vunpack.c.h.b16 %v7735
        %v7832 = vunpack.c.l.b16 %v7736
        %v7833 = vunpack.c.l.b16 %v7737
        %v7834 = vunpack.c.h.b16 %v7737
        %v7835 = vunpack.c.l.b16 %v7738
        %v7836 = vunpack.c.l.b16 %v7739
        %v7837 = vunpack.c.h.b16 %v7739
        %v7838 = vunpack.c.l.b16 %v7740
        %v7839 = vunpack.c.l.b16 %v7741
        %v7840 = vunpack.c.h.b16 %v7741
        %v7841 = vunpack.c.l.b16 %v7742
        %v7842 = vunpack.c.l.b16 %v7743
        %v7843 = vunpack.c.h.b16 %v7743
        %v7844 = vunpack.c.l.b16 %v7744
        %v7845 = vpack.c.b16 %v7788, %v7785
        %v7846 = vpack.c.b16 %v7789, %v7786
        %v7847 = vpack.c.b16 %v7790, %v7787
        %v7848 = vpack.c.b16 %v7794, %v7791
        %v7849 = vpack.c.b16 %v7795, %v7792
        %v7850 = vpack.c.b16 %v7796, %v7793
        %v7851 = vpack.c.b16 %v7800, %v7797
        %v7852 = vpack.c.b16 %v7801, %v7798
        %v7853 = vpack.c.b16 %v7802, %v7799
        %v7854 = vpack.c.b16 %v7806, %v7803
        %v7855 = vpack.c.b16 %v7807, %v7804
        %v7856 = vpack.c.b16 %v7808, %v7805
        %v7857 = vpack.c.b16 %v7812, %v7809
        %v7858 = vpack.c.b16 %v7813, %v7810
        %v7859 = vpack.c.b16 %v7814, %v7811
        %v7860 = vpack.c.b16 %v7818, %v7815
        %v7861 = vpack.c.b16 %v7819, %v7816
        %v7862 = vpack.c.b16 %v7820, %v7817
        %v7863 = vpack.c.b16 %v7824, %v7821
        %v7864 = vpack.c.b16 %v7825, %v7822
        %v7865 = vpack.c.b16 %v7826, %v7823
        %v7866 = vpack.c.b16 %v7830, %v7827
        %v7867 = vpack.c.b16 %v7831, %v7828
        %v7868 = vpack.c.b16 %v7832, %v7829
        %v7869 = vpack.c.b16 %v7836, %v7833
        %v7870 = vpack.c.b16 %v7837, %v7834
        %v7871 = vpack.c.b16 %v7838, %v7835
        %v7872 = vpack.c.b16 %v7842, %v7839
        %v7873 = vpack.c.b16 %v7843, %v7840
        %v7874 = vpack.c.b16 %v7844, %v7841
        %v7906 = vsel %vm2975, %v7704, 0
        %7908 = vmatpush.bf16.msra.mxu0 %v7866
        %7909 = vmatpush.bf16.msra.mxu0 %v7863
        %7910 = vmatpush.bf16.msra.mxu0 %v7860
        %7911 = vmatpush.bf16.msra.mxu0 %v7857
        %7912 = vmatpush.bf16.msra.mxu0 %v7854
        %7913 = vmatpush.bf16.msra.mxu0 %v7851
        %7914 = vmatpush.bf16.msra.mxu0 %v7848
        %7915 = vmatpush.bf16.msra.mxu0 %v7845
        %7916 = vmatmul.bf16.gmra.mxu0 %v7703
        %v7917 = vpop.f32.mrf.mxu0
        %v7918 = vadd.f32 0.0, %v7917
        %v7919 = vpop.f32.mrf.mxu0
        %7920 = vdwg.mxu0
        %7921 = vmatpush.bf16.msra.mxu0 0
        %7922 = vmatpush.bf16.msra.mxu0 0
        %7923 = vmatpush.bf16.msra.mxu0 0
        %7924 = vmatpush.bf16.msra.mxu0 0
        %7925 = vmatpush.bf16.msra.mxu0 0
        %7926 = vmatpush.bf16.msra.mxu0 0
        %7927 = vmatpush.bf16.msra.mxu0 %v7872
        %7928 = vmatpush.bf16.msra.mxu0 %v7869
        %7929 = vmatmul.bf16.gmra.mxu0 %v7906
        %v7930 = vpop.f32.mrf.mxu0
        %v7931 = vadd.f32 %v7918, %v7930
        %v7932 = vpop.f32.mrf.mxu0
        %7933 = vdwg.mxu0
        %7934 = vmatpush.bf16.msra.mxu0 %v7867
        %7935 = vmatpush.bf16.msra.mxu0 %v7864
        %7936 = vmatpush.bf16.msra.mxu0 %v7861
        %7937 = vmatpush.bf16.msra.mxu0 %v7858
        %7938 = vmatpush.bf16.msra.mxu0 %v7855
        %7939 = vmatpush.bf16.msra.mxu0 %v7852
        %7940 = vmatpush.bf16.msra.mxu0 %v7849
        %7941 = vmatpush.bf16.msra.mxu0 %v7846
        %7942 = vmatmul.bf16.gmra.mxu0 %v7703
        %v7943 = vpop.f32.mrf.mxu0
        %v7944 = vadd.f32 0.0, %v7943
        %v7945 = vpop.f32.mrf.mxu0
        %7946 = vdwg.mxu0
        %7947 = vmatpush.bf16.msra.mxu0 0
        %7948 = vmatpush.bf16.msra.mxu0 0
        %7949 = vmatpush.bf16.msra.mxu0 0
        %7950 = vmatpush.bf16.msra.mxu0 0
        %7951 = vmatpush.bf16.msra.mxu0 0
        %7952 = vmatpush.bf16.msra.mxu0 0
        %7953 = vmatpush.bf16.msra.mxu0 %v7873
        %7954 = vmatpush.bf16.msra.mxu0 %v7870
        %7955 = vmatmul.bf16.gmra.mxu0 %v7906
        %v7956 = vpop.f32.mrf.mxu0
        %v7957 = vadd.f32 %v7944, %v7956
        %v7958 = vpop.f32.mrf.mxu0
        %7959 = vdwg.mxu0
        %7960 = vmatpush.bf16.msra.mxu0 %v7868
        %7961 = vmatpush.bf16.msra.mxu0 %v7865
        %7962 = vmatpush.bf16.msra.mxu0 %v7862
        %7963 = vmatpush.bf16.msra.mxu0 %v7859
        %7964 = vmatpush.bf16.msra.mxu0 %v7856
        %7965 = vmatpush.bf16.msra.mxu0 %v7853
        %7966 = vmatpush.bf16.msra.mxu0 %v7850
        %7967 = vmatpush.bf16.msra.mxu0 %v7847
        %7968 = vmatmul.bf16.gmra.mxu0 %v7703
        %v7969 = vpop.f32.mrf.mxu0
        %v7970 = vadd.f32 0.0, %v7969
        %v7971 = vpop.f32.mrf.mxu0
        %7972 = vdwg.mxu0
        %7973 = vmatpush.bf16.msra.mxu0 0
        %7974 = vmatpush.bf16.msra.mxu0 0
        %7975 = vmatpush.bf16.msra.mxu0 0
        %7976 = vmatpush.bf16.msra.mxu0 0
        %7977 = vmatpush.bf16.msra.mxu0 0
        %7978 = vmatpush.bf16.msra.mxu0 0
        %7979 = vmatpush.bf16.msra.mxu0 %v7874
        %7980 = vmatpush.bf16.msra.mxu0 %v7871
        %7981 = vmatmul.bf16.gmra.mxu0 %v7906
        %v7982 = vpop.f32.mrf.mxu0
        %v7983 = vadd.f32 %v7970, %v7982
        %v7984 = vpop.f32.mrf.mxu0
        %7985 = vdwg.mxu0
        %v7986 = vpack.c.bf16 %v7931, %v7931
        %v7987 = vpack.c.bf16 %v7957, %v7957
        %v7988 = vpack.c.bf16 %v7983, %v7983
        %v7989 = vld [vmem:[%s57] sm:$0x3]
        %s7990 = scalar_lea.vmem [#allocation44], 240
        %v7991 = vld [vmem:[%s7990] sm:$0xff]
        %v7992 = vld [vmem:[%s7990 + $0x8] sm:$0xf]
        %v7993 = vld [vmem:[%s7990 + $0xc] sm:$0xff]
        %v7994 = vld [vmem:[%s7990 + $0x14] sm:$0xf]
        %v7995 = vld [vmem:[%s7990 + $0x18] sm:$0xff]
        %v7996 = vld [vmem:[%s7990 + $0x20] sm:$0xf]
        %v7997 = vld [vmem:[%s7990 + $0x24] sm:$0xff]
        %v7998 = vld [vmem:[%s7990 + $0x2c] sm:$0xf]
        %v7999 = vld [vmem:[%s7990 + $0x30] sm:$0xff]
        %v8000 = vld [vmem:[%s7990 + $0x38] sm:$0xf]
        %v8001 = vld [vmem:[%s7990 + $0x3c] sm:$0xff]
        %v8002 = vld [vmem:[%s7990 + $0x44] sm:$0xf]
        %v8003 = vld [vmem:[%s7990 + $0x48] sm:$0xff]
        %v8004 = vld [vmem:[%s7990 + $0x50] sm:$0xf]
        %v8005 = vld [vmem:[%s7990 + $0x54] sm:$0xff]
        %v8006 = vld [vmem:[%s7990 + $0x5c] sm:$0xf]
        %v8007 = vld [vmem:[%s7990 + $0x60] sm:$0xff]
        %v8008 = vld [vmem:[%s7990 + $0x68] sm:$0xf]
        %v8009 = vld [vmem:[%s7990 + $0x6c] sm:$0xff]
        %v8010 = vld [vmem:[%s7990 + $0x74] sm:$0xf]
        %v8011 = vld [vmem:[%s7990 + $0x78] sm:$0xff]
        %v8012 = vld [vmem:[%s7990 + $0x80] sm:$0xf]
        %v8013 = vld [vmem:[%s7990 + $0x84] sm:$0xff]
        %v8014 = vld [vmem:[%s7990 + $0x8c] sm:$0xf]
        %v8015 = vld [vmem:[%s7990 + $0x90] sm:$0xff]
        %v8016 = vld [vmem:[%s7990 + $0x98] sm:$0xf]
        %v8017 = vld [vmem:[%s7990 + $0x9c] sm:$0xff]
        %v8018 = vld [vmem:[%s7990 + $0xa4] sm:$0xf]
        %v8019 = vld [vmem:[%s7990 + $0xa8] sm:$0xff]
        %v8020 = vld [vmem:[%s7990 + $0xb0] sm:$0xf]
        %v8021 = vld [vmem:[%s7990 + $0xb4] sm:$0xff]
        %v8022 = vld [vmem:[%s7990 + $0xbc] sm:$0xf]
        %v8023 = vld [vmem:[%s7990 + $0xc0] sm:$0xff]
        %v8024 = vld [vmem:[%s7990 + $0xc8] sm:$0xf]
        %v8025 = vld [vmem:[%s7990 + $0xcc] sm:$0xff]
        %v8026 = vld [vmem:[%s7990 + $0xd4] sm:$0xf]
        %v8027 = vld [vmem:[%s7990 + $0xd8] sm:$0xff]
        %v8028 = vld [vmem:[%s7990 + $0xe0] sm:$0xf]
        %v8029 = vld [vmem:[%s7990 + $0xe4] sm:$0xff]
        %v8030 = vld [vmem:[%s7990 + $0xec] sm:$0xf]
        %v8071 = vunpack.c.l.b16 %v7991
        %v8072 = vunpack.c.h.b16 %v7991
        %v8073 = vunpack.c.l.b16 %v7992
        %v8074 = vunpack.c.l.b16 %v7993
        %v8075 = vunpack.c.h.b16 %v7993
        %v8076 = vunpack.c.l.b16 %v7994
        %v8077 = vunpack.c.l.b16 %v7995
        %v8078 = vunpack.c.h.b16 %v7995
        %v8079 = vunpack.c.l.b16 %v7996
        %v8080 = vunpack.c.l.b16 %v7997
        %v8081 = vunpack.c.h.b16 %v7997
        %v8082 = vunpack.c.l.b16 %v7998
        %v8083 = vunpack.c.l.b16 %v7999
        %v8084 = vunpack.c.h.b16 %v7999
        %v8085 = vunpack.c.l.b16 %v8000
        %v8086 = vunpack.c.l.b16 %v8001
        %v8087 = vunpack.c.h.b16 %v8001
        %v8088 = vunpack.c.l.b16 %v8002
        %v8089 = vunpack.c.l.b16 %v8003
        %v8090 = vunpack.c.h.b16 %v8003
        %v8091 = vunpack.c.l.b16 %v8004
        %v8092 = vunpack.c.l.b16 %v8005
        %v8093 = vunpack.c.h.b16 %v8005
        %v8094 = vunpack.c.l.b16 %v8006
        %v8095 = vunpack.c.l.b16 %v8007
        %v8096 = vunpack.c.h.b16 %v8007
        %v8097 = vunpack.c.l.b16 %v8008
        %v8098 = vunpack.c.l.b16 %v8009
        %v8099 = vunpack.c.h.b16 %v8009
        %v8100 = vunpack.c.l.b16 %v8010
        %v8101 = vunpack.c.l.b16 %v8011
        %v8102 = vunpack.c.h.b16 %v8011
        %v8103 = vunpack.c.l.b16 %v8012
        %v8104 = vunpack.c.l.b16 %v8013
        %v8105 = vunpack.c.h.b16 %v8013
        %v8106 = vunpack.c.l.b16 %v8014
        %v8107 = vunpack.c.l.b16 %v8015
        %v8108 = vunpack.c.h.b16 %v8015
        %v8109 = vunpack.c.l.b16 %v8016
        %v8110 = vunpack.c.l.b16 %v8017
        %v8111 = vunpack.c.h.b16 %v8017
        %v8112 = vunpack.c.l.b16 %v8018
        %v8113 = vunpack.c.l.b16 %v8019
        %v8114 = vunpack.c.h.b16 %v8019
        %v8115 = vunpack.c.l.b16 %v8020
        %v8116 = vunpack.c.l.b16 %v8021
        %v8117 = vunpack.c.h.b16 %v8021
        %v8118 = vunpack.c.l.b16 %v8022
        %v8119 = vunpack.c.l.b16 %v8023
        %v8120 = vunpack.c.h.b16 %v8023
        %v8121 = vunpack.c.l.b16 %v8024
        %v8122 = vunpack.c.l.b16 %v8025
        %v8123 = vunpack.c.h.b16 %v8025
        %v8124 = vunpack.c.l.b16 %v8026
        %v8125 = vunpack.c.l.b16 %v8027
        %v8126 = vunpack.c.h.b16 %v8027
        %v8127 = vunpack.c.l.b16 %v8028
        %v8128 = vunpack.c.l.b16 %v8029
        %v8129 = vunpack.c.h.b16 %v8029
        %v8130 = vunpack.c.l.b16 %v8030
        %v8131 = vpack.c.b16 %v8074, %v8071
        %v8132 = vpack.c.b16 %v8075, %v8072
        %v8133 = vpack.c.b16 %v8076, %v8073
        %v8134 = vpack.c.b16 %v8080, %v8077
        %v8135 = vpack.c.b16 %v8081, %v8078
        %v8136 = vpack.c.b16 %v8082, %v8079
        %v8137 = vpack.c.b16 %v8086, %v8083
        %v8138 = vpack.c.b16 %v8087, %v8084
        %v8139 = vpack.c.b16 %v8088, %v8085
        %v8140 = vpack.c.b16 %v8092, %v8089
        %v8141 = vpack.c.b16 %v8093, %v8090
        %v8142 = vpack.c.b16 %v8094, %v8091
        %v8143 = vpack.c.b16 %v8098, %v8095
        %v8144 = vpack.c.b16 %v8099, %v8096
        %v8145 = vpack.c.b16 %v8100, %v8097
        %v8146 = vpack.c.b16 %v8104, %v8101
        %v8147 = vpack.c.b16 %v8105, %v8102
        %v8148 = vpack.c.b16 %v8106, %v8103
        %v8149 = vpack.c.b16 %v8110, %v8107
        %v8150 = vpack.c.b16 %v8111, %v8108
        %v8151 = vpack.c.b16 %v8112, %v8109
        %v8152 = vpack.c.b16 %v8116, %v8113
        %v8153 = vpack.c.b16 %v8117, %v8114
        %v8154 = vpack.c.b16 %v8118, %v8115
        %v8155 = vpack.c.b16 %v8122, %v8119
        %v8156 = vpack.c.b16 %v8123, %v8120
        %v8157 = vpack.c.b16 %v8124, %v8121
        %v8158 = vpack.c.b16 %v8128, %v8125
        %v8159 = vpack.c.b16 %v8129, %v8126
        %v8160 = vpack.c.b16 %v8130, %v8127
        %8191 = vmatpush.bf16.msra.mxu0 %v8152
        %8192 = vmatpush.bf16.msra.mxu0 %v8149
        %8193 = vmatpush.bf16.msra.mxu0 %v8146
        %8194 = vmatpush.bf16.msra.mxu0 %v8143
        %8195 = vmatpush.bf16.msra.mxu0 %v8140
        %8196 = vmatpush.bf16.msra.mxu0 %v8137
        %8197 = vmatpush.bf16.msra.mxu0 %v8134
        %8198 = vmatpush.bf16.msra.mxu0 %v8131
        %8199 = vmatmul.bf16.gmra.mxu0 %v7703
        %v8200 = vpop.f32.mrf.mxu0
        %v8201 = vadd.f32 0.0, %v8200
        %v8202 = vpop.f32.mrf.mxu0
        %8203 = vdwg.mxu0
        %8204 = vmatpush.bf16.msra.mxu0 0
        %8205 = vmatpush.bf16.msra.mxu0 0
        %8206 = vmatpush.bf16.msra.mxu0 0
        %8207 = vmatpush.bf16.msra.mxu0 0
        %8208 = vmatpush.bf16.msra.mxu0 0
        %8209 = vmatpush.bf16.msra.mxu0 0
        %8210 = vmatpush.bf16.msra.mxu0 %v8158
        %8211 = vmatpush.bf16.msra.mxu0 %v8155
        %8212 = vmatmul.bf16.gmra.mxu0 %v7906
        %v8213 = vpop.f32.mrf.mxu0
        %v8214 = vadd.f32 %v8201, %v8213
        %v8215 = vpop.f32.mrf.mxu0
        %8216 = vdwg.mxu0
        %8217 = vmatpush.bf16.msra.mxu0 %v8153
        %8218 = vmatpush.bf16.msra.mxu0 %v8150
        %8219 = vmatpush.bf16.msra.mxu0 %v8147
        %8220 = vmatpush.bf16.msra.mxu0 %v8144
        %8221 = vmatpush.bf16.msra.mxu0 %v8141
        %8222 = vmatpush.bf16.msra.mxu0 %v8138
        %8223 = vmatpush.bf16.msra.mxu0 %v8135
        %8224 = vmatpush.bf16.msra.mxu0 %v8132
        %8225 = vmatmul.bf16.gmra.mxu0 %v7703
        %v8226 = vpop.f32.mrf.mxu0
        %v8227 = vadd.f32 0.0, %v8226
        %v8228 = vpop.f32.mrf.mxu0
        %8229 = vdwg.mxu0
        %8230 = vmatpush.bf16.msra.mxu0 0
        %8231 = vmatpush.bf16.msra.mxu0 0
        %8232 = vmatpush.bf16.msra.mxu0 0
        %8233 = vmatpush.bf16.msra.mxu0 0
        %8234 = vmatpush.bf16.msra.mxu0 0
        %8235 = vmatpush.bf16.msra.mxu0 0
        %8236 = vmatpush.bf16.msra.mxu0 %v8159
        %8237 = vmatpush.bf16.msra.mxu0 %v8156
        %8238 = vmatmul.bf16.gmra.mxu0 %v7906
        %v8239 = vpop.f32.mrf.mxu0
        %v8240 = vadd.f32 %v8227, %v8239
        %v8241 = vpop.f32.mrf.mxu0
        %8242 = vdwg.mxu0
        %8243 = vmatpush.bf16.msra.mxu0 %v8154
        %8244 = vmatpush.bf16.msra.mxu0 %v8151
        %8245 = vmatpush.bf16.msra.mxu0 %v8148
        %8246 = vmatpush.bf16.msra.mxu0 %v8145
        %8247 = vmatpush.bf16.msra.mxu0 %v8142
        %8248 = vmatpush.bf16.msra.mxu0 %v8139
        %8249 = vmatpush.bf16.msra.mxu0 %v8136
        %8250 = vmatpush.bf16.msra.mxu0 %v8133
        %8251 = vmatmul.bf16.gmra.mxu0 %v7703
        %v8252 = vpop.f32.mrf.mxu0
        %v8253 = vadd.f32 0.0, %v8252
        %v8254 = vpop.f32.mrf.mxu0
        %8255 = vdwg.mxu0
        %8256 = vmatpush.bf16.msra.mxu0 0
        %8257 = vmatpush.bf16.msra.mxu0 0
        %8258 = vmatpush.bf16.msra.mxu0 0
        %8259 = vmatpush.bf16.msra.mxu0 0
        %8260 = vmatpush.bf16.msra.mxu0 0
        %8261 = vmatpush.bf16.msra.mxu0 0
        %8262 = vmatpush.bf16.msra.mxu0 %v8160
        %8263 = vmatpush.bf16.msra.mxu0 %v8157
        %8264 = vmatmul.bf16.gmra.mxu0 %v7906
        %v8265 = vpop.f32.mrf.mxu0
        %v8266 = vadd.f32 %v8253, %v8265
        %v8267 = vpop.f32.mrf.mxu0
        %8268 = vdwg.mxu0
        %v8269 = vpack.c.bf16 %v8214, %v8214
        %v8270 = vpack.c.bf16 %v8240, %v8240
        %v8271 = vpack.c.bf16 %v8266, %v8266
        %s8272 = scalar_lea.vmem %s57, 2
        %v8273 = vld [vmem:[%s8272] sm:$0x3]
        %v8275 = vsel %vm2095, %v8273, 0
        %v8278 = vsel %vm2099, %v8269, 0
        %v8281 = vsel %vm2099, %v8270, 0
        %v8284 = vsel %vm2099, %v8271, 0
        %8286 = vmatpush.bf16.msra.mxu0 0
        %8287 = vmatpush.bf16.msra.mxu0 0
        %8288 = vmatpush.bf16.msra.mxu0 0
        %8289 = vmatpush.bf16.msra.mxu0 0
        %8290 = vmatpush.bf16.msra.mxu0 0
        %8291 = vmatpush.bf16.msra.mxu0 0
        %8292 = vmatpush.bf16.msra.mxu0 0
        %8293 = vmatpush.bf16.msra.mxu0 %v8278
        %8294 = vmatmul.bf16.gmra.mxu0 %v8275
        %v8295 = vpop.f32.mrf.mxu0
        %v8296 = vadd.f32 0.0, %v8295
        %v8297 = vpop.f32.mrf.mxu0
        %8298 = vdwg.mxu0
        %8299 = vmatpush.bf16.msra.mxu0 0
        %8300 = vmatpush.bf16.msra.mxu0 0
        %8301 = vmatpush.bf16.msra.mxu0 0
        %8302 = vmatpush.bf16.msra.mxu0 0
        %8303 = vmatpush.bf16.msra.mxu0 0
        %8304 = vmatpush.bf16.msra.mxu0 0
        %8305 = vmatpush.bf16.msra.mxu0 0
        %8306 = vmatpush.bf16.msra.mxu0 %v8281
        %8307 = vmatmul.bf16.gmra.mxu0 %v8275
        %v8308 = vpop.f32.mrf.mxu0
        %v8309 = vadd.f32 0.0, %v8308
        %v8310 = vpop.f32.mrf.mxu0
        %8311 = vdwg.mxu0
        %8312 = vmatpush.bf16.msra.mxu0 0
        %8313 = vmatpush.bf16.msra.mxu0 0
        %8314 = vmatpush.bf16.msra.mxu0 0
        %8315 = vmatpush.bf16.msra.mxu0 0
        %8316 = vmatpush.bf16.msra.mxu0 0
        %8317 = vmatpush.bf16.msra.mxu0 0
        %8318 = vmatpush.bf16.msra.mxu0 0
        %8319 = vmatpush.bf16.msra.mxu0 %v8284
        %8320 = vmatmul.bf16.gmra.mxu0 %v8275
        %v8321 = vpop.f32.mrf.mxu0
        %v8322 = vadd.f32 0.0, %v8321
        %v8323 = vpop.f32.mrf.mxu0
        %8324 = vdwg.mxu0
        %v8326 = vsel %vm2095, %v7989, 0
        %v8329 = vsel %vm2099, %v7986, 0
        %v8332 = vsel %vm2099, %v7987, 0
        %v8335 = vsel %vm2099, %v7988, 0
        %8337 = vmatpush.bf16.msra.mxu0 0
        %8338 = vmatpush.bf16.msra.mxu0 0
        %8339 = vmatpush.bf16.msra.mxu0 0
        %8340 = vmatpush.bf16.msra.mxu0 0
        %8341 = vmatpush.bf16.msra.mxu0 0
        %8342 = vmatpush.bf16.msra.mxu0 0
        %8343 = vmatpush.bf16.msra.mxu0 0
        %8344 = vmatpush.bf16.msra.mxu0 %v8329
        %8345 = vmatmul.bf16.gmra.mxu0 %v8326
        %v8346 = vpop.f32.mrf.mxu0
        %v8347 = vadd.f32 %v8296, %v8346
        %v8348 = vpop.f32.mrf.mxu0
        %8349 = vdwg.mxu0
        %8350 = vmatpush.bf16.msra.mxu0 0
        %8351 = vmatpush.bf16.msra.mxu0 0
        %8352 = vmatpush.bf16.msra.mxu0 0
        %8353 = vmatpush.bf16.msra.mxu0 0
        %8354 = vmatpush.bf16.msra.mxu0 0
        %8355 = vmatpush.bf16.msra.mxu0 0
        %8356 = vmatpush.bf16.msra.mxu0 0
        %8357 = vmatpush.bf16.msra.mxu0 %v8332
        %8358 = vmatmul.bf16.gmra.mxu0 %v8326
        %v8359 = vpop.f32.mrf.mxu0
        %v8360 = vadd.f32 %v8309, %v8359
        %v8361 = vpop.f32.mrf.mxu0
        %8362 = vdwg.mxu0
        %8363 = vmatpush.bf16.msra.mxu0 0
        %8364 = vmatpush.bf16.msra.mxu0 0
        %8365 = vmatpush.bf16.msra.mxu0 0
        %8366 = vmatpush.bf16.msra.mxu0 0
        %8367 = vmatpush.bf16.msra.mxu0 0
        %8368 = vmatpush.bf16.msra.mxu0 0
        %8369 = vmatpush.bf16.msra.mxu0 0
        %8370 = vmatpush.bf16.msra.mxu0 %v8335
        %8371 = vmatmul.bf16.gmra.mxu0 %v8326
        %v8372 = vpop.f32.mrf.mxu0
        %v8373 = vadd.f32 %v8322, %v8372
        %v8374 = vpop.f32.mrf.mxu0
        %8375 = vdwg.mxu0
        %s8376 = scalar_lea.vmem [#allocation44], 480
        %v8377 = vld [vmem:[%s8376] sm:$0xff]
        %v8378 = vld [vmem:[%s8376 + $0x8] sm:$0xf]
        %v8379 = vld [vmem:[%s8376 + $0xc] sm:$0xff]
        %v8380 = vld [vmem:[%s8376 + $0x14] sm:$0xf]
        %v8381 = vld [vmem:[%s8376 + $0x18] sm:$0xff]
        %v8382 = vld [vmem:[%s8376 + $0x20] sm:$0xf]
        %v8383 = vld [vmem:[%s8376 + $0x24] sm:$0xff]
        %v8384 = vld [vmem:[%s8376 + $0x2c] sm:$0xf]
        %v8385 = vld [vmem:[%s8376 + $0x30] sm:$0xff]
        %v8386 = vld [vmem:[%s8376 + $0x38] sm:$0xf]
        %v8387 = vld [vmem:[%s8376 + $0x3c] sm:$0xff]
        %v8388 = vld [vmem:[%s8376 + $0x44] sm:$0xf]
        %v8389 = vld [vmem:[%s8376 + $0x48] sm:$0xff]
        %v8390 = vld [vmem:[%s8376 + $0x50] sm:$0xf]
        %v8391 = vld [vmem:[%s8376 + $0x54] sm:$0xff]
        %v8392 = vld [vmem:[%s8376 + $0x5c] sm:$0xf]
        %v8393 = vld [vmem:[%s8376 + $0x60] sm:$0xff]
        %v8394 = vld [vmem:[%s8376 + $0x68] sm:$0xf]
        %v8395 = vld [vmem:[%s8376 + $0x6c] sm:$0xff]
        %v8396 = vld [vmem:[%s8376 + $0x74] sm:$0xf]
        %v8397 = vld [vmem:[%s8376 + $0x78] sm:$0xff]
        %v8398 = vld [vmem:[%s8376 + $0x80] sm:$0xf]
        %v8399 = vld [vmem:[%s8376 + $0x84] sm:$0xff]
        %v8400 = vld [vmem:[%s8376 + $0x8c] sm:$0xf]
        %v8401 = vld [vmem:[%s8376 + $0x90] sm:$0xff]
        %v8402 = vld [vmem:[%s8376 + $0x98] sm:$0xf]
        %v8403 = vld [vmem:[%s8376 + $0x9c] sm:$0xff]
        %v8404 = vld [vmem:[%s8376 + $0xa4] sm:$0xf]
        %v8405 = vld [vmem:[%s8376 + $0xa8] sm:$0xff]
        %v8406 = vld [vmem:[%s8376 + $0xb0] sm:$0xf]
        %v8407 = vld [vmem:[%s8376 + $0xb4] sm:$0xff]
        %v8408 = vld [vmem:[%s8376 + $0xbc] sm:$0xf]
        %v8409 = vld [vmem:[%s8376 + $0xc0] sm:$0xff]
        %v8410 = vld [vmem:[%s8376 + $0xc8] sm:$0xf]
        %v8411 = vld [vmem:[%s8376 + $0xcc] sm:$0xff]
        %v8412 = vld [vmem:[%s8376 + $0xd4] sm:$0xf]
        %v8413 = vld [vmem:[%s8376 + $0xd8] sm:$0xff]
        %v8414 = vld [vmem:[%s8376 + $0xe0] sm:$0xf]
        %v8415 = vld [vmem:[%s8376 + $0xe4] sm:$0xff]
        %v8416 = vld [vmem:[%s8376 + $0xec] sm:$0xf]
        %v8457 = vunpack.c.l.b16 %v8377
        %v8458 = vunpack.c.h.b16 %v8377
        %v8459 = vunpack.c.l.b16 %v8378
        %v8460 = vunpack.c.l.b16 %v8379
        %v8461 = vunpack.c.h.b16 %v8379
        %v8462 = vunpack.c.l.b16 %v8380
        %v8463 = vunpack.c.l.b16 %v8381
        %v8464 = vunpack.c.h.b16 %v8381
        %v8465 = vunpack.c.l.b16 %v8382
        %v8466 = vunpack.c.l.b16 %v8383
        %v8467 = vunpack.c.h.b16 %v8383
        %v8468 = vunpack.c.l.b16 %v8384
        %v8469 = vunpack.c.l.b16 %v8385
        %v8470 = vunpack.c.h.b16 %v8385
        %v8471 = vunpack.c.l.b16 %v8386
        %v8472 = vunpack.c.l.b16 %v8387
        %v8473 = vunpack.c.h.b16 %v8387
        %v8474 = vunpack.c.l.b16 %v8388
        %v8475 = vunpack.c.l.b16 %v8389
        %v8476 = vunpack.c.h.b16 %v8389
        %v8477 = vunpack.c.l.b16 %v8390
        %v8478 = vunpack.c.l.b16 %v8391
        %v8479 = vunpack.c.h.b16 %v8391
        %v8480 = vunpack.c.l.b16 %v8392
        %v8481 = vunpack.c.l.b16 %v8393
        %v8482 = vunpack.c.h.b16 %v8393
        %v8483 = vunpack.c.l.b16 %v8394
        %v8484 = vunpack.c.l.b16 %v8395
        %v8485 = vunpack.c.h.b16 %v8395
        %v8486 = vunpack.c.l.b16 %v8396
        %v8487 = vunpack.c.l.b16 %v8397
        %v8488 = vunpack.c.h.b16 %v8397
        %v8489 = vunpack.c.l.b16 %v8398
        %v8490 = vunpack.c.l.b16 %v8399
        %v8491 = vunpack.c.h.b16 %v8399
        %v8492 = vunpack.c.l.b16 %v8400
        %v8493 = vunpack.c.l.b16 %v8401
        %v8494 = vunpack.c.h.b16 %v8401
        %v8495 = vunpack.c.l.b16 %v8402
        %v8496 = vunpack.c.l.b16 %v8403
        %v8497 = vunpack.c.h.b16 %v8403
        %v8498 = vunpack.c.l.b16 %v8404
        %v8499 = vunpack.c.l.b16 %v8405
        %v8500 = vunpack.c.h.b16 %v8405
        %v8501 = vunpack.c.l.b16 %v8406
        %v8502 = vunpack.c.l.b16 %v8407
        %v8503 = vunpack.c.h.b16 %v8407
        %v8504 = vunpack.c.l.b16 %v8408
        %v8505 = vunpack.c.l.b16 %v8409
        %v8506 = vunpack.c.h.b16 %v8409
        %v8507 = vunpack.c.l.b16 %v8410
        %v8508 = vunpack.c.l.b16 %v8411
        %v8509 = vunpack.c.h.b16 %v8411
        %v8510 = vunpack.c.l.b16 %v8412
        %v8511 = vunpack.c.l.b16 %v8413
        %v8512 = vunpack.c.h.b16 %v8413
        %v8513 = vunpack.c.l.b16 %v8414
        %v8514 = vunpack.c.l.b16 %v8415
        %v8515 = vunpack.c.h.b16 %v8415
        %v8516 = vunpack.c.l.b16 %v8416
        %v8517 = vpack.c.b16 %v8460, %v8457
        %v8518 = vpack.c.b16 %v8461, %v8458
        %v8519 = vpack.c.b16 %v8462, %v8459
        %v8520 = vpack.c.b16 %v8466, %v8463
        %v8521 = vpack.c.b16 %v8467, %v8464
        %v8522 = vpack.c.b16 %v8468, %v8465
        %v8523 = vpack.c.b16 %v8472, %v8469
        %v8524 = vpack.c.b16 %v8473, %v8470
        %v8525 = vpack.c.b16 %v8474, %v8471
        %v8526 = vpack.c.b16 %v8478, %v8475
        %v8527 = vpack.c.b16 %v8479, %v8476
        %v8528 = vpack.c.b16 %v8480, %v8477
        %v8529 = vpack.c.b16 %v8484, %v8481
        %v8530 = vpack.c.b16 %v8485, %v8482
        %v8531 = vpack.c.b16 %v8486, %v8483
        %v8532 = vpack.c.b16 %v8490, %v8487
        %v8533 = vpack.c.b16 %v8491, %v8488
        %v8534 = vpack.c.b16 %v8492, %v8489
        %v8535 = vpack.c.b16 %v8496, %v8493
        %v8536 = vpack.c.b16 %v8497, %v8494
        %v8537 = vpack.c.b16 %v8498, %v8495
        %v8538 = vpack.c.b16 %v8502, %v8499
        %v8539 = vpack.c.b16 %v8503, %v8500
        %v8540 = vpack.c.b16 %v8504, %v8501
        %v8541 = vpack.c.b16 %v8508, %v8505
        %v8542 = vpack.c.b16 %v8509, %v8506
        %v8543 = vpack.c.b16 %v8510, %v8507
        %v8544 = vpack.c.b16 %v8514, %v8511
        %v8545 = vpack.c.b16 %v8515, %v8512
        %v8546 = vpack.c.b16 %v8516, %v8513
        %8577 = vmatpush.bf16.msra.mxu0 %v8538
        %8578 = vmatpush.bf16.msra.mxu0 %v8535
        %8579 = vmatpush.bf16.msra.mxu0 %v8532
        %8580 = vmatpush.bf16.msra.mxu0 %v8529
        %8581 = vmatpush.bf16.msra.mxu0 %v8526
        %8582 = vmatpush.bf16.msra.mxu0 %v8523
        %8583 = vmatpush.bf16.msra.mxu0 %v8520
        %8584 = vmatpush.bf16.msra.mxu0 %v8517
        %8585 = vmatmul.bf16.gmra.mxu0 %v7703
        %v8586 = vpop.f32.mrf.mxu0
        %v8587 = vadd.f32 0.0, %v8586
        %v8588 = vpop.f32.mrf.mxu0
        %8589 = vdwg.mxu0
        %8590 = vmatpush.bf16.msra.mxu0 0
        %8591 = vmatpush.bf16.msra.mxu0 0
        %8592 = vmatpush.bf16.msra.mxu0 0
        %8593 = vmatpush.bf16.msra.mxu0 0
        %8594 = vmatpush.bf16.msra.mxu0 0
        %8595 = vmatpush.bf16.msra.mxu0 0
        %8596 = vmatpush.bf16.msra.mxu0 %v8544
        %8597 = vmatpush.bf16.msra.mxu0 %v8541
        %8598 = vmatmul.bf16.gmra.mxu0 %v7906
        %v8599 = vpop.f32.mrf.mxu0
        %v8600 = vadd.f32 %v8587, %v8599
        %v8601 = vpop.f32.mrf.mxu0
        %8602 = vdwg.mxu0
        %8603 = vmatpush.bf16.msra.mxu0 %v8539
        %8604 = vmatpush.bf16.msra.mxu0 %v8536
        %8605 = vmatpush.bf16.msra.mxu0 %v8533
        %8606 = vmatpush.bf16.msra.mxu0 %v8530
        %8607 = vmatpush.bf16.msra.mxu0 %v8527
        %8608 = vmatpush.bf16.msra.mxu0 %v8524
        %8609 = vmatpush.bf16.msra.mxu0 %v8521
        %8610 = vmatpush.bf16.msra.mxu0 %v8518
        %8611 = vmatmul.bf16.gmra.mxu0 %v7703
        %v8612 = vpop.f32.mrf.mxu0
        %v8613 = vadd.f32 0.0, %v8612
        %v8614 = vpop.f32.mrf.mxu0
        %8615 = vdwg.mxu0
        %8616 = vmatpush.bf16.msra.mxu0 0
        %8617 = vmatpush.bf16.msra.mxu0 0
        %8618 = vmatpush.bf16.msra.mxu0 0
        %8619 = vmatpush.bf16.msra.mxu0 0
        %8620 = vmatpush.bf16.msra.mxu0 0
        %8621 = vmatpush.bf16.msra.mxu0 0
        %8622 = vmatpush.bf16.msra.mxu0 %v8545
        %8623 = vmatpush.bf16.msra.mxu0 %v8542
        %8624 = vmatmul.bf16.gmra.mxu0 %v7906
        %v8625 = vpop.f32.mrf.mxu0
        %v8626 = vadd.f32 %v8613, %v8625
        %v8627 = vpop.f32.mrf.mxu0
        %8628 = vdwg.mxu0
        %8629 = vmatpush.bf16.msra.mxu0 %v8540
        %8630 = vmatpush.bf16.msra.mxu0 %v8537
        %8631 = vmatpush.bf16.msra.mxu0 %v8534
        %8632 = vmatpush.bf16.msra.mxu0 %v8531
        %8633 = vmatpush.bf16.msra.mxu0 %v8528
        %8634 = vmatpush.bf16.msra.mxu0 %v8525
        %8635 = vmatpush.bf16.msra.mxu0 %v8522
        %8636 = vmatpush.bf16.msra.mxu0 %v8519
        %8637 = vmatmul.bf16.gmra.mxu0 %v7703
        %v8638 = vpop.f32.mrf.mxu0
        %v8639 = vadd.f32 0.0, %v8638
        %v8640 = vpop.f32.mrf.mxu0
        %8641 = vdwg.mxu0
        %8642 = vmatpush.bf16.msra.mxu0 0
        %8643 = vmatpush.bf16.msra.mxu0 0
        %8644 = vmatpush.bf16.msra.mxu0 0
        %8645 = vmatpush.bf16.msra.mxu0 0
        %8646 = vmatpush.bf16.msra.mxu0 0
        %8647 = vmatpush.bf16.msra.mxu0 0
        %8648 = vmatpush.bf16.msra.mxu0 %v8546
        %8649 = vmatpush.bf16.msra.mxu0 %v8543
        %8650 = vmatmul.bf16.gmra.mxu0 %v7906
        %v8651 = vpop.f32.mrf.mxu0
        %v8652 = vadd.f32 %v8639, %v8651
        %v8653 = vpop.f32.mrf.mxu0
        %8654 = vdwg.mxu0
        %v8655 = vpack.c.bf16 %v8600, %v8600
        %v8656 = vpack.c.bf16 %v8626, %v8626
        %v8657 = vpack.c.bf16 %v8652, %v8652
        %s8658 = scalar_lea.vmem %s57, 4
        %v8659 = vld [vmem:[%s8658] sm:$0x3]
        %v8661 = vsel %vm2095, %v8659, 0
        %v8664 = vsel %vm2099, %v8655, 0
        %v8667 = vsel %vm2099, %v8656, 0
        %v8670 = vsel %vm2099, %v8657, 0
        %8672 = vmatpush.bf16.msra.mxu0 0
        %8673 = vmatpush.bf16.msra.mxu0 0
        %8674 = vmatpush.bf16.msra.mxu0 0
        %8675 = vmatpush.bf16.msra.mxu0 0
        %8676 = vmatpush.bf16.msra.mxu0 0
        %8677 = vmatpush.bf16.msra.mxu0 0
        %8678 = vmatpush.bf16.msra.mxu0 0
        %8679 = vmatpush.bf16.msra.mxu0 %v8664
        %8680 = vmatmul.bf16.gmra.mxu0 %v8661
        %v8681 = vpop.f32.mrf.mxu0
        %v8682 = vadd.f32 0.0, %v8681
        %v8683 = vpop.f32.mrf.mxu0
        %8684 = vdwg.mxu0
        %8685 = vmatpush.bf16.msra.mxu0 0
        %8686 = vmatpush.bf16.msra.mxu0 0
        %8687 = vmatpush.bf16.msra.mxu0 0
        %8688 = vmatpush.bf16.msra.mxu0 0
        %8689 = vmatpush.bf16.msra.mxu0 0
        %8690 = vmatpush.bf16.msra.mxu0 0
        %8691 = vmatpush.bf16.msra.mxu0 0
        %8692 = vmatpush.bf16.msra.mxu0 %v8667
        %8693 = vmatmul.bf16.gmra.mxu0 %v8661
        %v8694 = vpop.f32.mrf.mxu0
        %v8695 = vadd.f32 0.0, %v8694
        %v8696 = vpop.f32.mrf.mxu0
        %8697 = vdwg.mxu0
        %8698 = vmatpush.bf16.msra.mxu0 0
        %8699 = vmatpush.bf16.msra.mxu0 0
        %8700 = vmatpush.bf16.msra.mxu0 0
        %8701 = vmatpush.bf16.msra.mxu0 0
        %8702 = vmatpush.bf16.msra.mxu0 0
        %8703 = vmatpush.bf16.msra.mxu0 0
        %8704 = vmatpush.bf16.msra.mxu0 0
        %8705 = vmatpush.bf16.msra.mxu0 %v8670
        %8706 = vmatmul.bf16.gmra.mxu0 %v8661
        %v8707 = vpop.f32.mrf.mxu0
        %v8708 = vadd.f32 0.0, %v8707
        %v8709 = vpop.f32.mrf.mxu0
        %8710 = vdwg.mxu0
        %v8711 = vadd.f32 %v8347, %v8682
        %v8712 = vadd.f32 %v8360, %v8695
        %v8713 = vadd.f32 %v8373, %v8708
        %s8714 = scalar_lea.vmem [#allocation44], 720
        %v8715 = vld [vmem:[%s8714] sm:$0xff]
        %v8716 = vld [vmem:[%s8714 + $0x8] sm:$0xf]
        %v8717 = vld [vmem:[%s8714 + $0xc] sm:$0xff]
        %v8718 = vld [vmem:[%s8714 + $0x14] sm:$0xf]
        %v8719 = vld [vmem:[%s8714 + $0x18] sm:$0xff]
        %v8720 = vld [vmem:[%s8714 + $0x20] sm:$0xf]
        %v8721 = vld [vmem:[%s8714 + $0x24] sm:$0xff]
        %v8722 = vld [vmem:[%s8714 + $0x2c] sm:$0xf]
        %v8723 = vld [vmem:[%s8714 + $0x30] sm:$0xff]
        %v8724 = vld [vmem:[%s8714 + $0x38] sm:$0xf]
        %v8725 = vld [vmem:[%s8714 + $0x3c] sm:$0xff]
        %v8726 = vld [vmem:[%s8714 + $0x44] sm:$0xf]
        %v8727 = vld [vmem:[%s8714 + $0x48] sm:$0xff]
        %v8728 = vld [vmem:[%s8714 + $0x50] sm:$0xf]
        %v8729 = vld [vmem:[%s8714 + $0x54] sm:$0xff]
        %v8730 = vld [vmem:[%s8714 + $0x5c] sm:$0xf]
        %v8731 = vld [vmem:[%s8714 + $0x60] sm:$0xff]
        %v8732 = vld [vmem:[%s8714 + $0x68] sm:$0xf]
        %v8733 = vld [vmem:[%s8714 + $0x6c] sm:$0xff]
        %v8734 = vld [vmem:[%s8714 + $0x74] sm:$0xf]
        %v8735 = vld [vmem:[%s8714 + $0x78] sm:$0xff]
        %v8736 = vld [vmem:[%s8714 + $0x80] sm:$0xf]
        %v8737 = vld [vmem:[%s8714 + $0x84] sm:$0xff]
        %v8738 = vld [vmem:[%s8714 + $0x8c] sm:$0xf]
        %v8739 = vld [vmem:[%s8714 + $0x90] sm:$0xff]
        %v8740 = vld [vmem:[%s8714 + $0x98] sm:$0xf]
        %v8741 = vld [vmem:[%s8714 + $0x9c] sm:$0xff]
        %v8742 = vld [vmem:[%s8714 + $0xa4] sm:$0xf]
        %v8743 = vld [vmem:[%s8714 + $0xa8] sm:$0xff]
        %v8744 = vld [vmem:[%s8714 + $0xb0] sm:$0xf]
        %v8745 = vld [vmem:[%s8714 + $0xb4] sm:$0xff]
        %v8746 = vld [vmem:[%s8714 + $0xbc] sm:$0xf]
        %v8747 = vld [vmem:[%s8714 + $0xc0] sm:$0xff]
        %v8748 = vld [vmem:[%s8714 + $0xc8] sm:$0xf]
        %v8749 = vld [vmem:[%s8714 + $0xcc] sm:$0xff]
        %v8750 = vld [vmem:[%s8714 + $0xd4] sm:$0xf]
        %v8751 = vld [vmem:[%s8714 + $0xd8] sm:$0xff]
        %v8752 = vld [vmem:[%s8714 + $0xe0] sm:$0xf]
        %v8753 = vld [vmem:[%s8714 + $0xe4] sm:$0xff]
        %v8754 = vld [vmem:[%s8714 + $0xec] sm:$0xf]
        %v8795 = vunpack.c.l.b16 %v8715
        %v8796 = vunpack.c.h.b16 %v8715
        %v8797 = vunpack.c.l.b16 %v8716
        %v8798 = vunpack.c.l.b16 %v8717
        %v8799 = vunpack.c.h.b16 %v8717
        %v8800 = vunpack.c.l.b16 %v8718
        %v8801 = vunpack.c.l.b16 %v8719
        %v8802 = vunpack.c.h.b16 %v8719
        %v8803 = vunpack.c.l.b16 %v8720
        %v8804 = vunpack.c.l.b16 %v8721
        %v8805 = vunpack.c.h.b16 %v8721
        %v8806 = vunpack.c.l.b16 %v8722
        %v8807 = vunpack.c.l.b16 %v8723
        %v8808 = vunpack.c.h.b16 %v8723
        %v8809 = vunpack.c.l.b16 %v8724
        %v8810 = vunpack.c.l.b16 %v8725
        %v8811 = vunpack.c.h.b16 %v8725
        %v8812 = vunpack.c.l.b16 %v8726
        %v8813 = vunpack.c.l.b16 %v8727
        %v8814 = vunpack.c.h.b16 %v8727
        %v8815 = vunpack.c.l.b16 %v8728
        %v8816 = vunpack.c.l.b16 %v8729
        %v8817 = vunpack.c.h.b16 %v8729
        %v8818 = vunpack.c.l.b16 %v8730
        %v8819 = vunpack.c.l.b16 %v8731
        %v8820 = vunpack.c.h.b16 %v8731
        %v8821 = vunpack.c.l.b16 %v8732
        %v8822 = vunpack.c.l.b16 %v8733
        %v8823 = vunpack.c.h.b16 %v8733
        %v8824 = vunpack.c.l.b16 %v8734
        %v8825 = vunpack.c.l.b16 %v8735
        %v8826 = vunpack.c.h.b16 %v8735
        %v8827 = vunpack.c.l.b16 %v8736
        %v8828 = vunpack.c.l.b16 %v8737
        %v8829 = vunpack.c.h.b16 %v8737
        %v8830 = vunpack.c.l.b16 %v8738
        %v8831 = vunpack.c.l.b16 %v8739
        %v8832 = vunpack.c.h.b16 %v8739
        %v8833 = vunpack.c.l.b16 %v8740
        %v8834 = vunpack.c.l.b16 %v8741
        %v8835 = vunpack.c.h.b16 %v8741
        %v8836 = vunpack.c.l.b16 %v8742
        %v8837 = vunpack.c.l.b16 %v8743
        %v8838 = vunpack.c.h.b16 %v8743
        %v8839 = vunpack.c.l.b16 %v8744
        %v8840 = vunpack.c.l.b16 %v8745
        %v8841 = vunpack.c.h.b16 %v8745
        %v8842 = vunpack.c.l.b16 %v8746
        %v8843 = vunpack.c.l.b16 %v8747
        %v8844 = vunpack.c.h.b16 %v8747
        %v8845 = vunpack.c.l.b16 %v8748
        %v8846 = vunpack.c.l.b16 %v8749
        %v8847 = vunpack.c.h.b16 %v8749
        %v8848 = vunpack.c.l.b16 %v8750
        %v8849 = vunpack.c.l.b16 %v8751
        %v8850 = vunpack.c.h.b16 %v8751
        %v8851 = vunpack.c.l.b16 %v8752
        %v8852 = vunpack.c.l.b16 %v8753
        %v8853 = vunpack.c.h.b16 %v8753
        %v8854 = vunpack.c.l.b16 %v8754
        %v8855 = vpack.c.b16 %v8798, %v8795
        %v8856 = vpack.c.b16 %v8799, %v8796
        %v8857 = vpack.c.b16 %v8800, %v8797
        %v8858 = vpack.c.b16 %v8804, %v8801
        %v8859 = vpack.c.b16 %v8805, %v8802
        %v8860 = vpack.c.b16 %v8806, %v8803
        %v8861 = vpack.c.b16 %v8810, %v8807
        %v8862 = vpack.c.b16 %v8811, %v8808
        %v8863 = vpack.c.b16 %v8812, %v8809
        %v8864 = vpack.c.b16 %v8816, %v8813
        %v8865 = vpack.c.b16 %v8817, %v8814
        %v8866 = vpack.c.b16 %v8818, %v8815
        %v8867 = vpack.c.b16 %v8822, %v8819
        %v8868 = vpack.c.b16 %v8823, %v8820
        %v8869 = vpack.c.b16 %v8824, %v8821
        %v8870 = vpack.c.b16 %v8828, %v8825
        %v8871 = vpack.c.b16 %v8829, %v8826
        %v8872 = vpack.c.b16 %v8830, %v8827
        %v8873 = vpack.c.b16 %v8834, %v8831
        %v8874 = vpack.c.b16 %v8835, %v8832
        %v8875 = vpack.c.b16 %v8836, %v8833
        %v8876 = vpack.c.b16 %v8840, %v8837
        %v8877 = vpack.c.b16 %v8841, %v8838
        %v8878 = vpack.c.b16 %v8842, %v8839
        %v8879 = vpack.c.b16 %v8846, %v8843
        %v8880 = vpack.c.b16 %v8847, %v8844
        %v8881 = vpack.c.b16 %v8848, %v8845
        %v8882 = vpack.c.b16 %v8852, %v8849
        %v8883 = vpack.c.b16 %v8853, %v8850
        %v8884 = vpack.c.b16 %v8854, %v8851
        %8915 = vmatpush.bf16.msra.mxu0 %v8876
        %8916 = vmatpush.bf16.msra.mxu0 %v8873
        %8917 = vmatpush.bf16.msra.mxu0 %v8870
        %8918 = vmatpush.bf16.msra.mxu0 %v8867
        %8919 = vmatpush.bf16.msra.mxu0 %v8864
        %8920 = vmatpush.bf16.msra.mxu0 %v8861
        %8921 = vmatpush.bf16.msra.mxu0 %v8858
        %8922 = vmatpush.bf16.msra.mxu0 %v8855
        %8923 = vmatmul.bf16.gmra.mxu0 %v7703
        %v8924 = vpop.f32.mrf.mxu0
        %v8925 = vadd.f32 0.0, %v8924
        %v8926 = vpop.f32.mrf.mxu0
        %8927 = vdwg.mxu0
        %8928 = vmatpush.bf16.msra.mxu0 0
        %8929 = vmatpush.bf16.msra.mxu0 0
        %8930 = vmatpush.bf16.msra.mxu0 0
        %8931 = vmatpush.bf16.msra.mxu0 0
        %8932 = vmatpush.bf16.msra.mxu0 0
        %8933 = vmatpush.bf16.msra.mxu0 0
        %8934 = vmatpush.bf16.msra.mxu0 %v8882
        %8935 = vmatpush.bf16.msra.mxu0 %v8879
        %8936 = vmatmul.bf16.gmra.mxu0 %v7906
        %v8937 = vpop.f32.mrf.mxu0
        %v8938 = vadd.f32 %v8925, %v8937
        %v8939 = vpop.f32.mrf.mxu0
        %8940 = vdwg.mxu0
        %8941 = vmatpush.bf16.msra.mxu0 %v8877
        %8942 = vmatpush.bf16.msra.mxu0 %v8874
        %8943 = vmatpush.bf16.msra.mxu0 %v8871
        %8944 = vmatpush.bf16.msra.mxu0 %v8868
        %8945 = vmatpush.bf16.msra.mxu0 %v8865
        %8946 = vmatpush.bf16.msra.mxu0 %v8862
        %8947 = vmatpush.bf16.msra.mxu0 %v8859
        %8948 = vmatpush.bf16.msra.mxu0 %v8856
        %8949 = vmatmul.bf16.gmra.mxu0 %v7703
        %v8950 = vpop.f32.mrf.mxu0
        %v8951 = vadd.f32 0.0, %v8950
        %v8952 = vpop.f32.mrf.mxu0
        %8953 = vdwg.mxu0
        %8954 = vmatpush.bf16.msra.mxu0 0
        %8955 = vmatpush.bf16.msra.mxu0 0
        %8956 = vmatpush.bf16.msra.mxu0 0
        %8957 = vmatpush.bf16.msra.mxu0 0
        %8958 = vmatpush.bf16.msra.mxu0 0
        %8959 = vmatpush.bf16.msra.mxu0 0
        %8960 = vmatpush.bf16.msra.mxu0 %v8883
        %8961 = vmatpush.bf16.msra.mxu0 %v8880
        %8962 = vmatmul.bf16.gmra.mxu0 %v7906
        %v8963 = vpop.f32.mrf.mxu0
        %v8964 = vadd.f32 %v8951, %v8963
        %v8965 = vpop.f32.mrf.mxu0
        %8966 = vdwg.mxu0
        %8967 = vmatpush.bf16.msra.mxu0 %v8878
        %8968 = vmatpush.bf16.msra.mxu0 %v8875
        %8969 = vmatpush.bf16.msra.mxu0 %v8872
        %8970 = vmatpush.bf16.msra.mxu0 %v8869
        %8971 = vmatpush.bf16.msra.mxu0 %v8866
        %8972 = vmatpush.bf16.msra.mxu0 %v8863
        %8973 = vmatpush.bf16.msra.mxu0 %v8860
        %8974 = vmatpush.bf16.msra.mxu0 %v8857
        %8975 = vmatmul.bf16.gmra.mxu0 %v7703
        %v8976 = vpop.f32.mrf.mxu0
        %v8977 = vadd.f32 0.0, %v8976
        %v8978 = vpop.f32.mrf.mxu0
        %8979 = vdwg.mxu0
        %8980 = vmatpush.bf16.msra.mxu0 0
        %8981 = vmatpush.bf16.msra.mxu0 0
        %8982 = vmatpush.bf16.msra.mxu0 0
        %8983 = vmatpush.bf16.msra.mxu0 0
        %8984 = vmatpush.bf16.msra.mxu0 0
        %8985 = vmatpush.bf16.msra.mxu0 0
        %8986 = vmatpush.bf16.msra.mxu0 %v8884
        %8987 = vmatpush.bf16.msra.mxu0 %v8881
        %8988 = vmatmul.bf16.gmra.mxu0 %v7906
        %v8989 = vpop.f32.mrf.mxu0
        %v8990 = vadd.f32 %v8977, %v8989
        %v8991 = vpop.f32.mrf.mxu0
        %8992 = vdwg.mxu0
        %v8993 = vpack.c.bf16 %v8938, %v8938
        %v8994 = vpack.c.bf16 %v8964, %v8964
        %v8995 = vpack.c.bf16 %v8990, %v8990
        %s8996 = scalar_lea.vmem %s57, 6
        %v8997 = vld [vmem:[%s8996] sm:$0x3]
        %v8999 = vsel %vm2095, %v8997, 0
        %v9002 = vsel %vm2099, %v8993, 0
        %v9005 = vsel %vm2099, %v8994, 0
        %v9008 = vsel %vm2099, %v8995, 0
        %9010 = vmatpush.bf16.msra.mxu0 0
        %9011 = vmatpush.bf16.msra.mxu0 0
        %9012 = vmatpush.bf16.msra.mxu0 0
        %9013 = vmatpush.bf16.msra.mxu0 0
        %9014 = vmatpush.bf16.msra.mxu0 0
        %9015 = vmatpush.bf16.msra.mxu0 0
        %9016 = vmatpush.bf16.msra.mxu0 0
        %9017 = vmatpush.bf16.msra.mxu0 %v9002
        %9018 = vmatmul.bf16.gmra.mxu0 %v8999
        %v9019 = vpop.f32.mrf.mxu0
        %v9020 = vadd.f32 0.0, %v9019
        %v9021 = vpop.f32.mrf.mxu0
        %9022 = vdwg.mxu0
        %9023 = vmatpush.bf16.msra.mxu0 0
        %9024 = vmatpush.bf16.msra.mxu0 0
        %9025 = vmatpush.bf16.msra.mxu0 0
        %9026 = vmatpush.bf16.msra.mxu0 0
        %9027 = vmatpush.bf16.msra.mxu0 0
        %9028 = vmatpush.bf16.msra.mxu0 0
        %9029 = vmatpush.bf16.msra.mxu0 0
        %9030 = vmatpush.bf16.msra.mxu0 %v9005
        %9031 = vmatmul.bf16.gmra.mxu0 %v8999
        %v9032 = vpop.f32.mrf.mxu0
        %v9033 = vadd.f32 0.0, %v9032
        %v9034 = vpop.f32.mrf.mxu0
        %9035 = vdwg.mxu0
        %9036 = vmatpush.bf16.msra.mxu0 0
        %9037 = vmatpush.bf16.msra.mxu0 0
        %9038 = vmatpush.bf16.msra.mxu0 0
        %9039 = vmatpush.bf16.msra.mxu0 0
        %9040 = vmatpush.bf16.msra.mxu0 0
        %9041 = vmatpush.bf16.msra.mxu0 0
        %9042 = vmatpush.bf16.msra.mxu0 0
        %9043 = vmatpush.bf16.msra.mxu0 %v9008
        %9044 = vmatmul.bf16.gmra.mxu0 %v8999
        %v9045 = vpop.f32.mrf.mxu0
        %v9046 = vadd.f32 0.0, %v9045
        %v9047 = vpop.f32.mrf.mxu0
        %9048 = vdwg.mxu0
        %v9049 = vadd.f32 %v8711, %v9020
        %v9050 = vadd.f32 %v8712, %v9033
        %v9051 = vadd.f32 %v8713, %v9046
        %v9052 = vtanh.pop %v9049
        %v9053 = vtanh.pop %v9050
        %v9054 = vtanh.pop %v9051
        %v9057 = vrot.slane %v9053, 4
        %v9058 = vsel %vm3546, %v9052, %v9057
        %9060 = vst [vmem:[%s1419] sm:$0xff] %v9058
        %vm9061 = vcmask 519168
        %9062 = vst.msk [vmem:[%s1419 + $0x8] sm:$0xf] %vm9061, %v9054
        %s9063 = sand.u32 %s738, 1
        %s9064 = scalar_lea.sflag [#allocation4], %s9063
        %s9065 = sand.u32 %s738, 1
        %s9066 = smul.addr %s9065, 12
        %s9067 = scalar_lea.vmem [#allocation46], %s9066
        %p9068 = scmp.lt.s32.totalorder %s95, 1
        %s9069 = scalar_select %p9068, %s95, 1
        %s9070 = smul.addr %s9069, 8
        %s9071 = scalar_lea.vmem %s63, %s9070
        // Predicated region
        $region253: #{generator_forward.1} parent=139 // pred_check
          %p9072 = pneg %p748
        $region254: #{generator_forward.1} parent=139 // pred_check_branch
          %9074 = sbr.rel (%p9072) target = $region256
        $region255: #{generator_forward.1} parent=139 // pred_region
          %9076 = vsyncadd %s9064, 0
          %s9077 = smul.addr %s95, 3
          %s9078 = smul.addr %s9077, 4
          %s9079 = scalar_lea.hbm %s61, %s9078
          %s9081 = sshll.u32 %s9067, 4
          %s9082 = int_to_ptr.vmem [resolvable:$true] %s9081
          %s9083 = sshll.u32 %s9079, 4
          %s9084 = int_to_ptr.hbm [resolvable:$true] %s9083
          %9086 = dma.vmem_to_hbm [thread:$0]  %s9082, 192, %s9084, %s9064
        $region256: #{generator_forward.1} parent=139 // pred_fallthru
          _
        // Predicated region
        $region257: #{generator_forward.1} parent=139 // pred_check
          %p9087 = pneg %p774
        $region258: #{generator_forward.1} parent=139 // pred_check_branch
          %9089 = sbr.rel (%p9087) target = $region260
        $region259: #{generator_forward.1} parent=139 // pred_region
          _
        $region260: #{generator_forward.1} parent=139 // pred_fallthru
          _
      $region140: #{generator_forward.1} parent=5 // pred_fallthru
        _
      %p9090 = scmp.le.s32.totalorder 2, %s90
      // Predicated region
      $region261: #{generator_forward.1} parent=5 // pred_check
        %p9091 = pneg %p9090
      $region262: #{generator_forward.1} parent=5 // pred_check_branch
        %9093 = sbr.rel (%p9091) target = $region264
      $region263: #{generator_forward.1} parent=5 // pred_region
        %s9094 = ssub.s32 %s90, 2
        // Predicated region
        $region265: #{generator_forward.1} parent=263 // pred_check
          %p9095 = pneg %p754
        $region266: #{generator_forward.1} parent=263 // pred_check_branch
          %9097 = sbr.rel (%p9095) target = $region268
        $region267: #{generator_forward.1} parent=263 // pred_region
          %s9098 = sand.u32 %s739, 1
          %s9099 = scalar_lea.sflag [#allocation4], %s9098
          %s9100 = sand.u32 %s739, 1
          %s9101 = smul.addr %s9100, 12
          %s9102 = scalar_lea.vmem [#allocation46], %s9101
          %9104 = dma.done %s9099, 192
        $region268: #{generator_forward.1} parent=263 // pred_fallthru
          _
        // Predicated region
        $region269: #{generator_forward.1} parent=263 // pred_check
          %p9105 = pneg %p780
        $region270: #{generator_forward.1} parent=263 // pred_check_branch
          %9107 = sbr.rel (%p9105) target = $region272
        $region271: #{generator_forward.1} parent=263 // pred_region
          %p9108 = scmp.lt.s32.totalorder %s96, 1
          %s9109 = scalar_select %p9108, %s96, 1
          %s9110 = smul.addr %s9109, 8
          %s9111 = scalar_lea.vmem %s63, %s9110
        $region272: #{generator_forward.1} parent=263 // pred_fallthru
          _
      $region264: #{generator_forward.1} parent=5 // pred_fallthru
        _
    $region6: #{generator_forward.1} parent=1 // loop_footer
      %s94 = sadd.s32 1, %s90
    $region7: #{generator_forward.1} parent=1 // loop_footer_branch
      %89 = sbr.rel target = $region3
    $region8: #{generator_forward.1} parent=1 // loop_exit
      _
    %9112 = vsyncpa [#allocation3], 1
    %s9113 = scalar_lea.sflag [#allocation3], 1
    %9114 = vsyncpa %s9113, 1
    %9115 = vsyncpa [#allocation6], 1
    %9116 = vsyncpa [#allocation9], 1
    %9117 = vsyncpa [#allocation12], 1
    %9118 = vsyncpa [#allocation15], 1
    %9119 = vsyncpa [#allocation18], 1
    %9120 = vsyncpa [#allocation21], 1
    %9121 = vsyncpa [#allocation24], 1
    %9122 = vsyncpa [#allocation27], 1
    %9123 = vsyncpa [#allocation30], 1
    %9124 = vsyncpa [#allocation33], 1
    %9125 = vsyncpa [#allocation36], 1
    %9126 = vsyncpa [#allocation39], 1
    %9127 = vsyncpa [#allocation42], 1
    %9128 = vsyncpa [#allocation45], 1
    %9129 = vsyncpa [#allocation4], 1
    %s9130 = scalar_lea.sflag [#allocation4], 1
    %9131 = vsyncpa %s9130, 1

</llo_original>
